<compile_context>
chip_gen: v7x
topology: tpu7x:2x2x1
jax: 0.10.0
libtpu: 0.0.40
codegen_flags: <defaults>
</compile_context>

<pallas_src>
import math

import jax
import jax.numpy as jnp
from jax.experimental import pallas as pl
from jax.experimental.pallas import tpu as pltpu

H1 = 128   # hidden size of lstm_1 (per direction)
H2 = 64    # hidden size of lstm_2 (per direction)


# ----------------------------------------------------------------------------
# LSTM cell helpers (gate layout [i | f | o | g]).
# ----------------------------------------------------------------------------
def _lstm_cell_ifog(gates, c_prev, hidden):
    """One LSTM cell update. `gates` is (B, 4*hidden) laid out [i | f | o | g]."""
    sig = jax.nn.sigmoid(gates[:, : 3 * hidden])      # one EUP pass for i/f/o
    g_g = jnp.tanh(gates[:, 3 * hidden:])
    i_g = sig[:, 0:hidden]
    f_g = sig[:, hidden:2 * hidden]
    o_g = sig[:, 2 * hidden:3 * hidden]
    c_new = f_g * c_prev + i_g * g_g
    h_new = o_g * jnp.tanh(c_new)
    return h_new, c_new


def _lstm_cell_ifog_first(gates, hidden):
    """First step of a direction: h_prev = c_prev = 0, so c_new = i * g."""
    sig = jax.nn.sigmoid(gates[:, : 3 * hidden])
    g_g = jnp.tanh(gates[:, 3 * hidden:])
    i_g = sig[:, 0:hidden]
    o_g = sig[:, 2 * hidden:3 * hidden]
    c_new = i_g * g_g
    h_new = o_g * jnp.tanh(c_new)
    return h_new, c_new


# ----------------------------------------------------------------------------
# Fused 2-layer bidirectional LSTM encoder kernel.
# ----------------------------------------------------------------------------
def _make_encoder_kernel(T, B):
    """Builds the fused encoder kernel for static (T, padded-B)."""
    G1, G2 = 4 * H1, 4 * H2
    f32 = jnp.float32

    def kernel(x_ref,        # (T*B, D)      time-major, flattened input
               wih1_ref,     # (D, 8*H1)     [fwd | rev] input->gate weights
               whh1f_ref,    # (H1, 4*H1)
               whh1r_ref,    # (H1, 4*H1)
               b1_ref,       # (1, 8*H1)     [fwd | rev] combined biases
               wih2_ref,     # (2*H1, 8*H2)
               whh2f_ref,    # (H2, 4*H2)
               whh2r_ref,    # (H2, 4*H2)
               b2_ref,       # (1, 8*H2)
               out2_ref,     # (T*B, 2*H2)   layer-2 bidirectional output
               hn_ref,       # (2, B, H2)
               cn_ref,       # (2, B, H2)
               gin1_scr,     # VMEM (T*B, 8*H1)  layer-1 gate pre-activations
               out1_scr,     # VMEM (T*B, 2*H1)  layer-1 bidirectional output
               gin2_scr):    # VMEM (T*B, 8*H2)  layer-2 gate pre-activations

        # ---- layer 1: hoisted input projection (all steps, both directions) --
        gin1_scr[...] = (
            jnp.dot(x_ref[...], wih1_ref[...], preferred_element_type=f32)
            + b1_ref[...])

        # ---- layer 1 recurrence: fwd + rev interleaved, unrolled over T ------
        # First step of each direction: zero initial state -> no recurrent
        # matmul, no f*c term.
        h_f, c_f = _lstm_cell_ifog_first(gin1_scr[0:B, 0:G1], H1)
        h_r, c_r = _lstm_cell_ifog_first(gin1_scr[(T - 1) * B:T * B, G1:2 * G1],
                                         H1)
        out1_scr[0:B, 0:H1] = h_f
        out1_scr[(T - 1) * B:T * B, H1:2 * H1] = h_r

        for t in range(1, T):
            tr = T - 1 - t
            g_f = gin1_scr[t * B:(t + 1) * B, 0:G1] + jnp.dot(
                h_f, whh1f_ref[...], preferred_element_type=f32)
            g_r = gin1_scr[tr * B:(tr + 1) * B, G1:2 * G1] + jnp.dot(
                h_r, whh1r_ref[...], preferred_element_type=f32)
            h_f, c_f = _lstm_cell_ifog(g_f, c_f, H1)
            h_r, c_r = _lstm_cell_ifog(g_r, c_r, H1)
            out1_scr[t * B:(t + 1) * B, 0:H1] = h_f
            out1_scr[tr * B:(tr + 1) * B, H1:2 * H1] = h_r

        # ---- layer 2: hoisted input projection --------------------------------
        gin2_scr[...] = (
            jnp.dot(out1_scr[...], wih2_ref[...], preferred_element_type=f32)
            + b2_ref[...])

        # ---- layer 2 recurrence ------------------------------------------------
        h_f, c_f = _lstm_cell_ifog_first(gin2_scr[0:B, 0:G2], H2)
        h_r, c_r = _lstm_cell_ifog_first(gin2_scr[(T - 1) * B:T * B, G2:2 * G2],
                                         H2)
        # lane-dense 128-wide output buffer: fwd in [0:64], rev in [64:128]
        out2_ref[0:B, 0:H2] = h_f
        out2_ref[(T - 1) * B:T * B, H2:2 * H2] = h_r

        for t in range(1, T):
            tr = T - 1 - t
            g_f = gin2_scr[t * B:(t + 1) * B, 0:G2] + jnp.dot(
                h_f, whh2f_ref[...], preferred_element_type=f32)
            g_r = gin2_scr[tr * B:(tr + 1) * B, G2:2 * G2] + jnp.dot(
                h_r, whh2r_ref[...], preferred_element_type=f32)
            h_f, c_f = _lstm_cell_ifog(g_f, c_f, H2)
            h_r, c_r = _lstm_cell_ifog(g_r, c_r, H2)
            out2_ref[t * B:(t + 1) * B, 0:H2] = h_f
            out2_ref[tr * B:(tr + 1) * B, H2:2 * H2] = h_r

        hn_ref[0] = h_f
        hn_ref[1] = h_r
        cn_ref[0] = c_f
        cn_ref[1] = c_r

    return kernel


# ----------------------------------------------------------------------------
# Host-side weight preparation (gate reorder [i,f,g,o] -> [i,f,o,g], transpose,
# fuse both directions' input weights/biases along the output column axis,
# optionally fold the BatchNorm input scale into the layer-1 input weights).
# ----------------------------------------------------------------------------
def _reorder_ifgo_to_ifog(w, hidden):
    return jnp.concatenate(
        [w[0:2 * hidden], w[3 * hidden:4 * hidden], w[2 * hidden:3 * hidden]],
        axis=0)


def _prep_direction(w_ih, w_hh, b_ih, b_hh, hidden):
    w_ih = _reorder_ifgo_to_ifog(jnp.asarray(w_ih, jnp.float32), hidden)
    w_hh = _reorder_ifgo_to_ifog(jnp.asarray(w_hh, jnp.float32), hidden)
    b = _reorder_ifgo_to_ifog(jnp.asarray(b_ih + b_hh, jnp.float32), hidden)
    return w_ih.T, w_hh.T, b.reshape(1, 4 * hidden)


def _prep_layer(layer_params, hidden, in_scale=None):
    pf, pr = layer_params
    wih_f, whh_f, b_f = _prep_direction(*pf, hidden)
    wih_r, whh_r, b_r = _prep_direction(*pr, hidden)
    wih_both = jnp.concatenate([wih_f, wih_r], axis=1)   # (Din, 8*hidden)
    if in_scale is not None:
        # Fold the (per-feature-uniform) BatchNorm scale into the input weights:
        # W @ (s*x) == (s*W) @ x.  Exact re-parameterisation.
        wih_both = wih_both * jnp.float32(in_scale)
    b_both = jnp.concatenate([b_f, b_r], axis=1)          # (1, 8*hidden)
    return wih_both, whh_f, whh_r, b_both


def _encoder_vmem_bytes(T, Bp, D):
    rows = T * Bp
    n = (rows * D                               # x
         + D * 8 * H1 + 8 * H1                  # wih1, b1
         + 2 * H1 * 4 * H1                      # whh1f + whh1r
         + 2 * H1 * 8 * H2 + 8 * H2             # wih2, b2
         + 2 * H2 * 4 * H2                      # whh2f + whh2r
         + rows * 2 * H2                        # out2
         + 2 * 2 * Bp * H2                      # hn, cn
         + rows * (8 * H1 + 2 * H1 + 8 * H2))   # scratch
    return 4 * n


# ----------------------------------------------------------------------------
# Encoder.forward  (fused single pallas_call per encoder)
# ----------------------------------------------------------------------------
def encoder_forward(params, x, in_scale=None):
    """x: (B, T, D) -> (out_2 (B, T, 128), (h_n (2, B, 64), c_n (2, B, 64)))."""
    B, T, D = x.shape
    Bp = max(8, ((B + 7) // 8) * 8)     # pad batch to fill 8 sublanes

    xt = jnp.transpose(x, (1, 0, 2)).astype(jnp.float32)          # (T, B, D)
    if Bp != B:
        xt = jnp.pad(xt, ((0, 0), (0, Bp - B), (0, 0)))
    x_flat = xt.reshape(T * Bp, D)

    wih1, whh1f, whh1r, b1 = _prep_layer(params["lstm_1"], H1, in_scale)
    wih2, whh2f, whh2r, b2 = _prep_layer(params["lstm_2"], H2)

    # Raise the scoped-VMEM limit only when the footprint actually needs it
    # (e.g. window=45, batch=64); small shapes keep the compiler defaults.
    est = _encoder_vmem_bytes(T, Bp, D)
    compiler_params = None
    if est > 24 * 1024 * 1024:
        compiler_params = pltpu.CompilerParams(
            vmem_limit_bytes=min(int(1.3 * est) + (4 << 20), 100 * 1024 * 1024))

    kernel = _make_encoder_kernel(T, Bp)
    out2_flat, h_n, c_n = pl.pallas_call(
        kernel,
        out_shape=(
            jax.ShapeDtypeStruct((T * Bp, 2 * H2), jnp.float32),
            jax.ShapeDtypeStruct((2, Bp, H2), jnp.float32),
            jax.ShapeDtypeStruct((2, Bp, H2), jnp.float32),
        ),
        in_specs=[pl.BlockSpec(memory_space=pltpu.MemorySpace.VMEM)] * 9,
        out_specs=(
            pl.BlockSpec(memory_space=pltpu.MemorySpace.VMEM),
            pl.BlockSpec(memory_space=pltpu.MemorySpace.VMEM),
            pl.BlockSpec(memory_space=pltpu.MemorySpace.VMEM),
        ),
        scratch_shapes=[
            pltpu.VMEM((T * Bp, 8 * H1), jnp.float32),   # layer-1 gate pre-acts
            pltpu.VMEM((T * Bp, 2 * H1), jnp.float32),   # layer-1 bidir output
            pltpu.VMEM((T * Bp, 8 * H2), jnp.float32),   # layer-2 gate pre-acts
        ],
        compiler_params=compiler_params,
    )(x_flat, wih1, whh1f, whh1r, b1, wih2, whh2f, whh2r, b2)

    out2 = out2_flat.reshape(T, Bp, 2 * H2)[:, :B]
    out2 = jnp.transpose(out2, (1, 0, 2))                # (B, T, 128) batch_first
    return out2, (h_n[:, :B], c_n[:, :B])


# ----------------------------------------------------------------------------
# MM_ED_Bi_LSTM forward (BatchNorm -> three encoders -> h/c concat).
# ----------------------------------------------------------------------------
# nn.BatchNorm1d(affine=False) in eval mode with freshly-initialised running
# statistics (mean=0, var=1):  y = x / sqrt(1 + eps).  The scale is folded
# directly into each encoder's layer-1 input weights (no activation pass).
_BN_SCALE = 1.0 / math.sqrt(1.0 + 1e-5)


def mm_ed_bilstm_encoders_forward(params, x_acc, x_gyr, x_hof):
    """MM_ED_Bi_LSTM.forward up to (and excluding) the decoder call."""
    out_acc, (h_acc, c_acc) = encoder_forward(params["encoder_acc"], x_acc,
                                              in_scale=_BN_SCALE)
    out_gyr, (h_gyr, c_gyr) = encoder_forward(params["encoder_gyr"], x_gyr,
                                              in_scale=_BN_SCALE)
    out_hof, (h_hof, c_hof) = encoder_forward(params["encoder_hof"], x_hof,
                                              in_scale=_BN_SCALE)

    h = jnp.concatenate([h_acc, h_gyr, h_hof], axis=-1)   # (2, B, 192)
    c = jnp.concatenate([c_acc, c_gyr, c_hof], axis=-1)   # (2, B, 192)
    # TODO(synk): LSTMDecoder is not implemented — the reference forward calls
    # self.decoder(h, c, 9), which does not match LSTMDecoder.forward's
    # 6-argument signature, so the decoder path is not executable as written.
    return (out_acc, out_gyr, out_hof), (h, c)


# ----------------------------------------------------------------------------
# Parameter construction (deterministic, PyTorch-style uniform init).
# ----------------------------------------------------------------------------
def _init_lstm_dir_params(key, input_dim, hidden):
    k = 1.0 / math.sqrt(hidden)
    k0, k1, k2, k3 = jax.random.split(key, 4)
    w_ih = jax.random.uniform(k0, (4 * hidden, input_dim), jnp.float32, -k, k)
    w_hh = jax.random.uniform(k1, (4 * hidden, hidden), jnp.float32, -k, k)
    b_ih = jax.random.uniform(k2, (4 * hidden,), jnp.float32, -k, k)
    b_hh = jax.random.uniform(k3, (4 * hidden,), jnp.float32, -k, k)
    return (w_ih, w_hh, b_ih, b_hh)


def init_encoder_params(key, input_dim):
    k1f, k1r, k2f, k2r = jax.random.split(key, 4)
    lstm1 = (_init_lstm_dir_params(k1f, input_dim, H1),
             _init_lstm_dir_params(k1r, input_dim, H1))
    lstm2 = (_init_lstm_dir_params(k2f, 2 * H1, H2),
             _init_lstm_dir_params(k2r, 2 * H1, H2))
    return {"lstm_1": lstm1, "lstm_2": lstm2}


# ----------------------------------------------------------------------------
# Pure-JAX reference (PyTorch nn.LSTM semantics) for the correctness check.
# ----------------------------------------------------------------------------
def _lstm_dir_ref(x_tmajor, w_ih, w_hh, b_ih, b_hh):
    T, B, _ = x_tmajor.shape
    H = w_hh.shape[1]
    h = jnp.zeros((B, H), jnp.float32)
    c = jnp.zeros((B, H), jnp.float32)
    outs = []
    for t in range(T):
        gates = x_tmajor[t] @ w_ih.T + h @ w_hh.T + b_ih + b_hh
        i_g = jax.nn.sigmoid(gates[:, 0:H])
        f_g = jax.nn.sigmoid(gates[:, H:2 * H])
        g_g = jnp.tanh(gates[:, 2 * H:3 * H])
        o_g = jax.nn.sigmoid(gates[:, 3 * H:4 * H])
        c = f_g * c + i_g * g_g
        h = o_g * jnp.tanh(c)
        outs.append(h)
    return jnp.stack(outs, axis=0), h, c


def encoder_forward_ref(params, x):
    def bilayer(x, layer):
        pf, pr = layer
        xt = jnp.transpose(x, (1, 0, 2))
        o_f, h_f, c_f = _lstm_dir_ref(xt, *pf)
        o_r, h_r, c_r = _lstm_dir_ref(xt[::-1], *pr)
        o_r = o_r[::-1]
        out = jnp.concatenate([o_f, o_r], axis=-1)
        return (jnp.transpose(out, (1, 0, 2)),
                jnp.stack([h_f, h_r]), jnp.stack([c_f, c_r]))

    out1, _, _ = bilayer(x, params["lstm_1"])
    out2, h_n, c_n = bilayer(out1, params["lstm_2"])
    return out2, (h_n, c_n)


if __name__ == "__main__":
    B = 2
    T_IMU, T_HOF = 8, 4            # small stand-ins for window=45 / window_hof=15
    D_ACC, D_GYR, D_HOF = 8, 8, 16

    key = jax.random.PRNGKey(0)
    kxa, kxg, kxh, kpa, kpg, kph = jax.random.split(key, 6)
    x_acc = jax.random.normal(kxa, (B, T_IMU, D_ACC), jnp.float32)
    x_gyr = jax.random.normal(kxg, (B, T_IMU, D_GYR), jnp.float32)
    x_hof = jax.random.normal(kxh, (B, T_HOF, D_HOF), jnp.float32)

    params = {
        "encoder_acc": init_encoder_params(kpa, D_ACC),
        "encoder_gyr": init_encoder_params(kpg, D_GYR),
        "encoder_hof": init_encoder_params(kph, D_HOF),
    }

    tol = 2e-2

    # 1) Correctness of the fused Pallas encoder against the pure-JAX reference.
    out_p, (hn_p, cn_p) = jax.jit(encoder_forward)(params["encoder_acc"], x_acc)
    out_r, (hn_r, cn_r) = jax.jit(encoder_forward_ref)(params["encoder_acc"], x_acc)
    out_p = jax.block_until_ready(out_p)
    assert float(jnp.max(jnp.abs(out_p - out_r))) < tol
    assert float(jnp.max(jnp.abs(hn_p - hn_r))) < tol
    assert float(jnp.max(jnp.abs(cn_p - cn_r))) < tol

    # 2) Full multi-modal encoder stack (BN folded into weights -> 3 encoders
    #    -> h/c concat).
    fwd = jax.jit(mm_ed_bilstm_encoders_forward)
    (o_acc, o_gyr, o_hof), (h, c) = fwd(params, x_acc, x_gyr, x_hof)
    h = jax.block_until_ready(h)
    c = jax.block_until_ready(c)
    o_acc = jax.block_until_ready(o_acc)

    # BN-folding path matches "scale input then run reference encoder".
    out_bn_ref, (hn_bn_ref, _) = jax.jit(encoder_forward_ref)(
        params["encoder_acc"], x_acc * _BN_SCALE)
    assert float(jnp.max(jnp.abs(o_acc - out_bn_ref))) < tol
    assert float(jnp.max(jnp.abs(h[:, :, 0:H2] - hn_bn_ref))) < tol

    assert o_acc.shape == (B, T_IMU, 2 * H2)
    assert o_gyr.shape == (B, T_IMU, 2 * H2)
    assert o_hof.shape == (B, T_HOF, 2 * H2)
    assert h.shape == (2, B, 3 * H2)
    assert c.shape == (2, B, 3 * H2)
    assert bool(jnp.all(jnp.isfinite(o_acc)))
    assert bool(jnp.all(jnp.isfinite(o_gyr)))
    assert bool(jnp.all(jnp.isfinite(o_hof)))
    assert bool(jnp.all(jnp.isfinite(h)))
    assert bool(jnp.all(jnp.isfinite(c)))

    print("KERNEL_OK")
</pallas_src>

<mosaic_0001>
module attributes {stable_mosaic.version = 11 : i64} {
  func.func @kernel(%arg0: memref<64x8xf32, #tpu.memory_space<vmem>>, %arg1: memref<8x1024xf32, #tpu.memory_space<vmem>>, %arg2: memref<128x512xf32, #tpu.memory_space<vmem>>, %arg3: memref<128x512xf32, #tpu.memory_space<vmem>>, %arg4: memref<1x1024xf32, #tpu.memory_space<vmem>>, %arg5: memref<256x512xf32, #tpu.memory_space<vmem>>, %arg6: memref<64x256xf32, #tpu.memory_space<vmem>>, %arg7: memref<64x256xf32, #tpu.memory_space<vmem>>, %arg8: memref<1x512xf32, #tpu.memory_space<vmem>>, %arg9: memref<64x128xf32, #tpu.memory_space<vmem>>, %arg10: memref<2x8x64xf32, #tpu.memory_space<vmem>>, %arg11: memref<2x8x64xf32, #tpu.memory_space<vmem>>, %arg12: memref<64x1024xf32, #tpu.memory_space<vmem>>, %arg13: memref<64x256xf32, #tpu.memory_space<vmem>>, %arg14: memref<64x512xf32, #tpu.memory_space<vmem>>) attributes {dimension_semantics = [], scalar_prefetch = 0 : i64, scratch_operands = 3 : i64, tpu.core_type = #tpu.core_type<tc>} {
    %c0 = arith.constant 0 : index
    %c0_0 = arith.constant 0 : index
    %0 = vector.load %arg0[%c0, %c0_0] : memref<64x8xf32, #tpu.memory_space<vmem>>, vector<64x8xf32>
    %c0_1 = arith.constant 0 : index
    %c0_2 = arith.constant 0 : index
    %1 = vector.load %arg1[%c0_1, %c0_2] : memref<8x1024xf32, #tpu.memory_space<vmem>>, vector<8x1024xf32>
    %cst = arith.constant dense<0.000000e+00> : vector<64x1024xf32>
    %2 = tpu.matmul %0, %1, %cst {dimension_numbers = #tpu.dot_dimension_numbers<[1], [0], [0], [1], [0, 0, 1, 1], [], []>} : vector<64x8xf32>, vector<8x1024xf32>, vector<64x1024xf32> -> vector<64x1024xf32>
    %c0_3 = arith.constant 0 : index
    %c0_4 = arith.constant 0 : index
    %3 = vector.load %arg4[%c0_3, %c0_4] : memref<1x1024xf32, #tpu.memory_space<vmem>>, vector<1x1024xf32>
    %4 = vector.broadcast %3 : vector<1x1024xf32> to vector<64x1024xf32>
    %5 = arith.addf %2, %4 : vector<64x1024xf32>
    %c0_5 = arith.constant 0 : index
    %c0_6 = arith.constant 0 : index
    %6 = vector.load %arg12[%c0_5, %c0_6] : memref<64x1024xf32, #tpu.memory_space<vmem>>, vector<64x1024xf32>
    tpu.vector_store %arg12[%c0_5, %c0_6], %5 {strides = array<i32>} : memref<64x1024xf32, #tpu.memory_space<vmem>>, vector<64x1024xf32>,
    %c0_7 = arith.constant 0 : index
    %c0_8 = arith.constant 0 : index
    %7 = vector.load %arg12[%c0_7, %c0_8] : memref<64x1024xf32, #tpu.memory_space<vmem>>, vector<8x512xf32>
    %8 = vector.extract_strided_slice %7 {offsets = [0, 0], sizes = [8, 384], strides = [1, 1]} : vector<8x512xf32> to vector<8x384xf32>
    %9 = arith.negf %8 : vector<8x384xf32>
    %10 = math.exp %9 : vector<8x384xf32>
    %cst_9 = arith.constant 1.000000e+00 : f32
    %11 = vector.broadcast %cst_9 : f32 to vector<8x384xf32>
    %12 = arith.addf %11, %10 : vector<8x384xf32>
    %13 = arith.divf %11, %12 : vector<8x384xf32>
    %14 = vector.extract_strided_slice %7 {offsets = [0, 384], sizes = [8, 128], strides = [1, 1]} : vector<8x512xf32> to vector<8x128xf32>
    %15 = math.tanh %14 : vector<8x128xf32>
    %16 = vector.extract_strided_slice %13 {offsets = [0, 0], sizes = [8, 128], strides = [1, 1]} : vector<8x384xf32> to vector<8x128xf32>
    %17 = vector.extract_strided_slice %13 {offsets = [0, 256], sizes = [8, 128], strides = [1, 1]} : vector<8x384xf32> to vector<8x128xf32>
    %18 = arith.mulf %16, %15 : vector<8x128xf32>
    %19 = math.tanh %18 : vector<8x128xf32>
    %20 = arith.mulf %17, %19 : vector<8x128xf32>
    %c56 = arith.constant 56 : index
    %c512 = arith.constant 512 : index
    %21 = vector.load %arg12[%c56, %c512] : memref<64x1024xf32, #tpu.memory_space<vmem>>, vector<8x512xf32>
    %22 = vector.extract_strided_slice %21 {offsets = [0, 0], sizes = [8, 384], strides = [1, 1]} : vector<8x512xf32> to vector<8x384xf32>
    %23 = arith.negf %22 : vector<8x384xf32>
    %24 = math.exp %23 : vector<8x384xf32>
    %cst_10 = arith.constant 1.000000e+00 : f32
    %25 = vector.broadcast %cst_10 : f32 to vector<8x384xf32>
    %26 = arith.addf %25, %24 : vector<8x384xf32>
    %27 = arith.divf %25, %26 : vector<8x384xf32>
    %28 = vector.extract_strided_slice %21 {offsets = [0, 384], sizes = [8, 128], strides = [1, 1]} : vector<8x512xf32> to vector<8x128xf32>
    %29 = math.tanh %28 : vector<8x128xf32>
    %30 = vector.extract_strided_slice %27 {offsets = [0, 0], sizes = [8, 128], strides = [1, 1]} : vector<8x384xf32> to vector<8x128xf32>
    %31 = vector.extract_strided_slice %27 {offsets = [0, 256], sizes = [8, 128], strides = [1, 1]} : vector<8x384xf32> to vector<8x128xf32>
    %32 = arith.mulf %30, %29 : vector<8x128xf32>
    %33 = math.tanh %32 : vector<8x128xf32>
    %34 = arith.mulf %31, %33 : vector<8x128xf32>
    %c0_11 = arith.constant 0 : index
    %c0_12 = arith.constant 0 : index
    %35 = vector.load %arg13[%c0_11, %c0_12] : memref<64x256xf32, #tpu.memory_space<vmem>>, vector<8x128xf32>
    tpu.vector_store %arg13[%c0_11, %c0_12], %20 {strides = array<i32>} : memref<64x256xf32, #tpu.memory_space<vmem>>, vector<8x128xf32>,
    %c56_13 = arith.constant 56 : index
    %c128 = arith.constant 128 : index
    %36 = vector.load %arg13[%c56_13, %c128] : memref<64x256xf32, #tpu.memory_space<vmem>>, vector<8x128xf32>
    tpu.vector_store %arg13[%c56_13, %c128], %34 {strides = array<i32>} : memref<64x256xf32, #tpu.memory_space<vmem>>, vector<8x128xf32>,
    %c8 = arith.constant 8 : index
    %c0_14 = arith.constant 0 : index
    %37 = vector.load %arg12[%c8, %c0_14] : memref<64x1024xf32, #tpu.memory_space<vmem>>, vector<8x512xf32>
    %c0_15 = arith.constant 0 : index
    %c0_16 = arith.constant 0 : index
    %38 = vector.load %arg2[%c0_15, %c0_16] : memref<128x512xf32, #tpu.memory_space<vmem>>, vector<128x512xf32>
    %cst_17 = arith.constant dense<0.000000e+00> : vector<8x512xf32>
    %39 = tpu.matmul %20, %38, %cst_17 {dimension_numbers = #tpu.dot_dimension_numbers<[1], [0], [0], [1], [0, 0, 1, 1], [], []>} : vector<8x128xf32>, vector<128x512xf32>, vector<8x512xf32> -> vector<8x512xf32>
    %40 = arith.addf %37, %39 : vector<8x512xf32>
    %c48 = arith.constant 48 : index
    %c512_18 = arith.constant 512 : index
    %41 = vector.load %arg12[%c48, %c512_18] : memref<64x1024xf32, #tpu.memory_space<vmem>>, vector<8x512xf32>
    %c0_19 = arith.constant 0 : index
    %c0_20 = arith.constant 0 : index
    %42 = vector.load %arg3[%c0_19, %c0_20] : memref<128x512xf32, #tpu.memory_space<vmem>>, vector<128x512xf32>
    %cst_21 = arith.constant dense<0.000000e+00> : vector<8x512xf32>
    %43 = tpu.matmul %34, %42, %cst_21 {dimension_numbers = #tpu.dot_dimension_numbers<[1], [0], [0], [1], [0, 0, 1, 1], [], []>} : vector<8x128xf32>, vector<128x512xf32>, vector<8x512xf32> -> vector<8x512xf32>
    %44 = arith.addf %41, %43 : vector<8x512xf32>
    %45 = vector.extract_strided_slice %40 {offsets = [0, 0], sizes = [8, 384], strides = [1, 1]} : vector<8x512xf32> to vector<8x384xf32>
    %46 = arith.negf %45 : vector<8x384xf32>
    %47 = math.exp %46 : vector<8x384xf32>
    %cst_22 = arith.constant 1.000000e+00 : f32
    %48 = vector.broadcast %cst_22 : f32 to vector<8x384xf32>
    %49 = arith.addf %48, %47 : vector<8x384xf32>
    %50 = arith.divf %48, %49 : vector<8x384xf32>
    %51 = vector.extract_strided_slice %40 {offsets = [0, 384], sizes = [8, 128], strides = [1, 1]} : vector<8x512xf32> to vector<8x128xf32>
    %52 = math.tanh %51 : vector<8x128xf32>
    %53 = vector.extract_strided_slice %50 {offsets = [0, 0], sizes = [8, 128], strides = [1, 1]} : vector<8x384xf32> to vector<8x128xf32>
    %54 = vector.extract_strided_slice %50 {offsets = [0, 128], sizes = [8, 128], strides = [1, 1]} : vector<8x384xf32> to vector<8x128xf32>
    %55 = vector.extract_strided_slice %50 {offsets = [0, 256], sizes = [8, 128], strides = [1, 1]} : vector<8x384xf32> to vector<8x128xf32>
    %56 = arith.mulf %54, %18 : vector<8x128xf32>
    %57 = arith.mulf %53, %52 : vector<8x128xf32>
    %58 = arith.addf %56, %57 : vector<8x128xf32>
    %59 = math.tanh %58 : vector<8x128xf32>
    %60 = arith.mulf %55, %59 : vector<8x128xf32>
    %61 = vector.extract_strided_slice %44 {offsets = [0, 0], sizes = [8, 384], strides = [1, 1]} : vector<8x512xf32> to vector<8x384xf32>
    %62 = arith.negf %61 : vector<8x384xf32>
    %63 = math.exp %62 : vector<8x384xf32>
    %cst_23 = arith.constant 1.000000e+00 : f32
    %64 = vector.broadcast %cst_23 : f32 to vector<8x384xf32>
    %65 = arith.addf %64, %63 : vector<8x384xf32>
    %66 = arith.divf %64, %65 : vector<8x384xf32>
    %67 = vector.extract_strided_slice %44 {offsets = [0, 384], sizes = [8, 128], strides = [1, 1]} : vector<8x512xf32> to vector<8x128xf32>
    %68 = math.tanh %67 : vector<8x128xf32>
    %69 = vector.extract_strided_slice %66 {offsets = [0, 0], sizes = [8, 128], strides = [1, 1]} : vector<8x384xf32> to vector<8x128xf32>
    %70 = vector.extract_strided_slice %66 {offsets = [0, 128], sizes = [8, 128], strides = [1, 1]} : vector<8x384xf32> to vector<8x128xf32>
    %71 = vector.extract_strided_slice %66 {offsets = [0, 256], sizes = [8, 128], strides = [1, 1]} : vector<8x384xf32> to vector<8x128xf32>
    %72 = arith.mulf %70, %32 : vector<8x128xf32>
    %73 = arith.mulf %69, %68 : vector<8x128xf32>
    %74 = arith.addf %72, %73 : vector<8x128xf32>
    %75 = math.tanh %74 : vector<8x128xf32>
    %76 = arith.mulf %71, %75 : vector<8x128xf32>
    %c8_24 = arith.constant 8 : index
    %c0_25 = arith.constant 0 : index
    %77 = vector.load %arg13[%c8_24, %c0_25] : memref<64x256xf32, #tpu.memory_space<vmem>>, vector<8x128xf32>
    tpu.vector_store %arg13[%c8_24, %c0_25], %60 {strides = array<i32>} : memref<64x256xf32, #tpu.memory_space<vmem>>, vector<8x128xf32>,
    %c48_26 = arith.constant 48 : index
    %c128_27 = arith.constant 128 : index
    %78 = vector.load %arg13[%c48_26, %c128_27] : memref<64x256xf32, #tpu.memory_space<vmem>>, vector<8x128xf32>
    tpu.vector_store %arg13[%c48_26, %c128_27], %76 {strides = array<i32>} : memref<64x256xf32, #tpu.memory_space<vmem>>, vector<8x128xf32>,
    %c16 = arith.constant 16 : index
    %c0_28 = arith.constant 0 : index
    %79 = vector.load %arg12[%c16, %c0_28] : memref<64x1024xf32, #tpu.memory_space<vmem>>, vector<8x512xf32>
    %c0_29 = arith.constant 0 : index
    %c0_30 = arith.constant 0 : index
    %80 = vector.load %arg2[%c0_29, %c0_30] : memref<128x512xf32, #tpu.memory_space<vmem>>, vector<128x512xf32>
    %cst_31 = arith.constant dense<0.000000e+00> : vector<8x512xf32>
    %81 = tpu.matmul %60, %80, %cst_31 {dimension_numbers = #tpu.dot_dimension_numbers<[1], [0], [0], [1], [0, 0, 1, 1], [], []>} : vector<8x128xf32>, vector<128x512xf32>, vector<8x512xf32> -> vector<8x512xf32>
    %82 = arith.addf %79, %81 : vector<8x512xf32>
    %c40 = arith.constant 40 : index
    %c512_32 = arith.constant 512 : index
    %83 = vector.load %arg12[%c40, %c512_32] : memref<64x1024xf32, #tpu.memory_space<vmem>>, vector<8x512xf32>
    %c0_33 = arith.constant 0 : index
    %c0_34 = arith.constant 0 : index
    %84 = vector.load %arg3[%c0_33, %c0_34] : memref<128x512xf32, #tpu.memory_space<vmem>>, vector<128x512xf32>
    %cst_35 = arith.constant dense<0.000000e+00> : vector<8x512xf32>
    %85 = tpu.matmul %76, %84, %cst_35 {dimension_numbers = #tpu.dot_dimension_numbers<[1], [0], [0], [1], [0, 0, 1, 1], [], []>} : vector<8x128xf32>, vector<128x512xf32>, vector<8x512xf32> -> vector<8x512xf32>
    %86 = arith.addf %83, %85 : vector<8x512xf32>
    %87 = vector.extract_strided_slice %82 {offsets = [0, 0], sizes = [8, 384], strides = [1, 1]} : vector<8x512xf32> to vector<8x384xf32>
    %88 = arith.negf %87 : vector<8x384xf32>
    %89 = math.exp %88 : vector<8x384xf32>
    %cst_36 = arith.constant 1.000000e+00 : f32
    %90 = vector.broadcast %cst_36 : f32 to vector<8x384xf32>
    %91 = arith.addf %90, %89 : vector<8x384xf32>
    %92 = arith.divf %90, %91 : vector<8x384xf32>
    %93 = vector.extract_strided_slice %82 {offsets = [0, 384], sizes = [8, 128], strides = [1, 1]} : vector<8x512xf32> to vector<8x128xf32>
    %94 = math.tanh %93 : vector<8x128xf32>
    %95 = vector.extract_strided_slice %92 {offsets = [0, 0], sizes = [8, 128], strides = [1, 1]} : vector<8x384xf32> to vector<8x128xf32>
    %96 = vector.extract_strided_slice %92 {offsets = [0, 128], sizes = [8, 128], strides = [1, 1]} : vector<8x384xf32> to vector<8x128xf32>
    %97 = vector.extract_strided_slice %92 {offsets = [0, 256], sizes = [8, 128], strides = [1, 1]} : vector<8x384xf32> to vector<8x128xf32>
    %98 = arith.mulf %96, %58 : vector<8x128xf32>
    %99 = arith.mulf %95, %94 : vector<8x128xf32>
    %100 = arith.addf %98, %99 : vector<8x128xf32>
    %101 = math.tanh %100 : vector<8x128xf32>
    %102 = arith.mulf %97, %101 : vector<8x128xf32>
    %103 = vector.extract_strided_slice %86 {offsets = [0, 0], sizes = [8, 384], strides = [1, 1]} : vector<8x512xf32> to vector<8x384xf32>
    %104 = arith.negf %103 : vector<8x384xf32>
    %105 = math.exp %104 : vector<8x384xf32>
    %cst_37 = arith.constant 1.000000e+00 : f32
    %106 = vector.broadcast %cst_37 : f32 to vector<8x384xf32>
    %107 = arith.addf %106, %105 : vector<8x384xf32>
    %108 = arith.divf %106, %107 : vector<8x384xf32>
    %109 = vector.extract_strided_slice %86 {offsets = [0, 384], sizes = [8, 128], strides = [1, 1]} : vector<8x512xf32> to vector<8x128xf32>
    %110 = math.tanh %109 : vector<8x128xf32>
    %111 = vector.extract_strided_slice %108 {offsets = [0, 0], sizes = [8, 128], strides = [1, 1]} : vector<8x384xf32> to vector<8x128xf32>
    %112 = vector.extract_strided_slice %108 {offsets = [0, 128], sizes = [8, 128], strides = [1, 1]} : vector<8x384xf32> to vector<8x128xf32>
    %113 = vector.extract_strided_slice %108 {offsets = [0, 256], sizes = [8, 128], strides = [1, 1]} : vector<8x384xf32> to vector<8x128xf32>
    %114 = arith.mulf %112, %74 : vector<8x128xf32>
    %115 = arith.mulf %111, %110 : vector<8x128xf32>
    %116 = arith.addf %114, %115 : vector<8x128xf32>
    %117 = math.tanh %116 : vector<8x128xf32>
    %118 = arith.mulf %113, %117 : vector<8x128xf32>
    %c16_38 = arith.constant 16 : index
    %c0_39 = arith.constant 0 : index
    %119 = vector.load %arg13[%c16_38, %c0_39] : memref<64x256xf32, #tpu.memory_space<vmem>>, vector<8x128xf32>
    tpu.vector_store %arg13[%c16_38, %c0_39], %102 {strides = array<i32>} : memref<64x256xf32, #tpu.memory_space<vmem>>, vector<8x128xf32>,
    %c40_40 = arith.constant 40 : index
    %c128_41 = arith.constant 128 : index
    %120 = vector.load %arg13[%c40_40, %c128_41] : memref<64x256xf32, #tpu.memory_space<vmem>>, vector<8x128xf32>
    tpu.vector_store %arg13[%c40_40, %c128_41], %118 {strides = array<i32>} : memref<64x256xf32, #tpu.memory_space<vmem>>, vector<8x128xf32>,
    %c24 = arith.constant 24 : index
    %c0_42 = arith.constant 0 : index
    %121 = vector.load %arg12[%c24, %c0_42] : memref<64x1024xf32, #tpu.memory_space<vmem>>, vector<8x512xf32>
    %c0_43 = arith.constant 0 : index
    %c0_44 = arith.constant 0 : index
    %122 = vector.load %arg2[%c0_43, %c0_44] : memref<128x512xf32, #tpu.memory_space<vmem>>, vector<128x512xf32>
    %cst_45 = arith.constant dense<0.000000e+00> : vector<8x512xf32>
    %123 = tpu.matmul %102, %122, %cst_45 {dimension_numbers = #tpu.dot_dimension_numbers<[1], [0], [0], [1], [0, 0, 1, 1], [], []>} : vector<8x128xf32>, vector<128x512xf32>, vector<8x512xf32> -> vector<8x512xf32>
    %124 = arith.addf %121, %123 : vector<8x512xf32>
    %c32 = arith.constant 32 : index
    %c512_46 = arith.constant 512 : index
    %125 = vector.load %arg12[%c32, %c512_46] : memref<64x1024xf32, #tpu.memory_space<vmem>>, vector<8x512xf32>
    %c0_47 = arith.constant 0 : index
    %c0_48 = arith.constant 0 : index
    %126 = vector.load %arg3[%c0_47, %c0_48] : memref<128x512xf32, #tpu.memory_space<vmem>>, vector<128x512xf32>
    %cst_49 = arith.constant dense<0.000000e+00> : vector<8x512xf32>
    %127 = tpu.matmul %118, %126, %cst_49 {dimension_numbers = #tpu.dot_dimension_numbers<[1], [0], [0], [1], [0, 0, 1, 1], [], []>} : vector<8x128xf32>, vector<128x512xf32>, vector<8x512xf32> -> vector<8x512xf32>
    %128 = arith.addf %125, %127 : vector<8x512xf32>
    %129 = vector.extract_strided_slice %124 {offsets = [0, 0], sizes = [8, 384], strides = [1, 1]} : vector<8x512xf32> to vector<8x384xf32>
    %130 = arith.negf %129 : vector<8x384xf32>
    %131 = math.exp %130 : vector<8x384xf32>
    %cst_50 = arith.constant 1.000000e+00 : f32
    %132 = vector.broadcast %cst_50 : f32 to vector<8x384xf32>
    %133 = arith.addf %132, %131 : vector<8x384xf32>
    %134 = arith.divf %132, %133 : vector<8x384xf32>
    %135 = vector.extract_strided_slice %124 {offsets = [0, 384], sizes = [8, 128], strides = [1, 1]} : vector<8x512xf32> to vector<8x128xf32>
    %136 = math.tanh %135 : vector<8x128xf32>
    %137 = vector.extract_strided_slice %134 {offsets = [0, 0], sizes = [8, 128], strides = [1, 1]} : vector<8x384xf32> to vector<8x128xf32>
    %138 = vector.extract_strided_slice %134 {offsets = [0, 128], sizes = [8, 128], strides = [1, 1]} : vector<8x384xf32> to vector<8x128xf32>
    %139 = vector.extract_strided_slice %134 {offsets = [0, 256], sizes = [8, 128], strides = [1, 1]} : vector<8x384xf32> to vector<8x128xf32>
    %140 = arith.mulf %138, %100 : vector<8x128xf32>
    %141 = arith.mulf %137, %136 : vector<8x128xf32>
    %142 = arith.addf %140, %141 : vector<8x128xf32>
    %143 = math.tanh %142 : vector<8x128xf32>
    %144 = arith.mulf %139, %143 : vector<8x128xf32>
    %145 = vector.extract_strided_slice %128 {offsets = [0, 0], sizes = [8, 384], strides = [1, 1]} : vector<8x512xf32> to vector<8x384xf32>
    %146 = arith.negf %145 : vector<8x384xf32>
    %147 = math.exp %146 : vector<8x384xf32>
    %cst_51 = arith.constant 1.000000e+00 : f32
    %148 = vector.broadcast %cst_51 : f32 to vector<8x384xf32>
    %149 = arith.addf %148, %147 : vector<8x384xf32>
    %150 = arith.divf %148, %149 : vector<8x384xf32>
    %151 = vector.extract_strided_slice %128 {offsets = [0, 384], sizes = [8, 128], strides = [1, 1]} : vector<8x512xf32> to vector<8x128xf32>
    %152 = math.tanh %151 : vector<8x128xf32>
    %153 = vector.extract_strided_slice %150 {offsets = [0, 0], sizes = [8, 128], strides = [1, 1]} : vector<8x384xf32> to vector<8x128xf32>
    %154 = vector.extract_strided_slice %150 {offsets = [0, 128], sizes = [8, 128], strides = [1, 1]} : vector<8x384xf32> to vector<8x128xf32>
    %155 = vector.extract_strided_slice %150 {offsets = [0, 256], sizes = [8, 128], strides = [1, 1]} : vector<8x384xf32> to vector<8x128xf32>
    %156 = arith.mulf %154, %116 : vector<8x128xf32>
    %157 = arith.mulf %153, %152 : vector<8x128xf32>
    %158 = arith.addf %156, %157 : vector<8x128xf32>
    %159 = math.tanh %158 : vector<8x128xf32>
    %160 = arith.mulf %155, %159 : vector<8x128xf32>
    %c24_52 = arith.constant 24 : index
    %c0_53 = arith.constant 0 : index
    %161 = vector.load %arg13[%c24_52, %c0_53] : memref<64x256xf32, #tpu.memory_space<vmem>>, vector<8x128xf32>
    tpu.vector_store %arg13[%c24_52, %c0_53], %144 {strides = array<i32>} : memref<64x256xf32, #tpu.memory_space<vmem>>, vector<8x128xf32>,
    %c32_54 = arith.constant 32 : index
    %c128_55 = arith.constant 128 : index
    %162 = vector.load %arg13[%c32_54, %c128_55] : memref<64x256xf32, #tpu.memory_space<vmem>>, vector<8x128xf32>
    tpu.vector_store %arg13[%c32_54, %c128_55], %160 {strides = array<i32>} : memref<64x256xf32, #tpu.memory_space<vmem>>, vector<8x128xf32>,
    %c32_56 = arith.constant 32 : index
    %c0_57 = arith.constant 0 : index
    %163 = vector.load %arg12[%c32_56, %c0_57] : memref<64x1024xf32, #tpu.memory_space<vmem>>, vector<8x512xf32>
    %c0_58 = arith.constant 0 : index
    %c0_59 = arith.constant 0 : index
    %164 = vector.load %arg2[%c0_58, %c0_59] : memref<128x512xf32, #tpu.memory_space<vmem>>, vector<128x512xf32>
    %cst_60 = arith.constant dense<0.000000e+00> : vector<8x512xf32>
    %165 = tpu.matmul %144, %164, %cst_60 {dimension_numbers = #tpu.dot_dimension_numbers<[1], [0], [0], [1], [0, 0, 1, 1], [], []>} : vector<8x128xf32>, vector<128x512xf32>, vector<8x512xf32> -> vector<8x512xf32>
    %166 = arith.addf %163, %165 : vector<8x512xf32>
    %c24_61 = arith.constant 24 : index
    %c512_62 = arith.constant 512 : index
    %167 = vector.load %arg12[%c24_61, %c512_62] : memref<64x1024xf32, #tpu.memory_space<vmem>>, vector<8x512xf32>
    %c0_63 = arith.constant 0 : index
    %c0_64 = arith.constant 0 : index
    %168 = vector.load %arg3[%c0_63, %c0_64] : memref<128x512xf32, #tpu.memory_space<vmem>>, vector<128x512xf32>
    %cst_65 = arith.constant dense<0.000000e+00> : vector<8x512xf32>
    %169 = tpu.matmul %160, %168, %cst_65 {dimension_numbers = #tpu.dot_dimension_numbers<[1], [0], [0], [1], [0, 0, 1, 1], [], []>} : vector<8x128xf32>, vector<128x512xf32>, vector<8x512xf32> -> vector<8x512xf32>
    %170 = arith.addf %167, %169 : vector<8x512xf32>
    %171 = vector.extract_strided_slice %166 {offsets = [0, 0], sizes = [8, 384], strides = [1, 1]} : vector<8x512xf32> to vector<8x384xf32>
    %172 = arith.negf %171 : vector<8x384xf32>
    %173 = math.exp %172 : vector<8x384xf32>
    %cst_66 = arith.constant 1.000000e+00 : f32
    %174 = vector.broadcast %cst_66 : f32 to vector<8x384xf32>
    %175 = arith.addf %174, %173 : vector<8x384xf32>
    %176 = arith.divf %174, %175 : vector<8x384xf32>
    %177 = vector.extract_strided_slice %166 {offsets = [0, 384], sizes = [8, 128], strides = [1, 1]} : vector<8x512xf32> to vector<8x128xf32>
    %178 = math.tanh %177 : vector<8x128xf32>
    %179 = vector.extract_strided_slice %176 {offsets = [0, 0], sizes = [8, 128], strides = [1, 1]} : vector<8x384xf32> to vector<8x128xf32>
    %180 = vector.extract_strided_slice %176 {offsets = [0, 128], sizes = [8, 128], strides = [1, 1]} : vector<8x384xf32> to vector<8x128xf32>
    %181 = vector.extract_strided_slice %176 {offsets = [0, 256], sizes = [8, 128], strides = [1, 1]} : vector<8x384xf32> to vector<8x128xf32>
    %182 = arith.mulf %180, %142 : vector<8x128xf32>
    %183 = arith.mulf %179, %178 : vector<8x128xf32>
    %184 = arith.addf %182, %183 : vector<8x128xf32>
    %185 = math.tanh %184 : vector<8x128xf32>
    %186 = arith.mulf %181, %185 : vector<8x128xf32>
    %187 = vector.extract_strided_slice %170 {offsets = [0, 0], sizes = [8, 384], strides = [1, 1]} : vector<8x512xf32> to vector<8x384xf32>
    %188 = arith.negf %187 : vector<8x384xf32>
    %189 = math.exp %188 : vector<8x384xf32>
    %cst_67 = arith.constant 1.000000e+00 : f32
    %190 = vector.broadcast %cst_67 : f32 to vector<8x384xf32>
    %191 = arith.addf %190, %189 : vector<8x384xf32>
    %192 = arith.divf %190, %191 : vector<8x384xf32>
    %193 = vector.extract_strided_slice %170 {offsets = [0, 384], sizes = [8, 128], strides = [1, 1]} : vector<8x512xf32> to vector<8x128xf32>
    %194 = math.tanh %193 : vector<8x128xf32>
    %195 = vector.extract_strided_slice %192 {offsets = [0, 0], sizes = [8, 128], strides = [1, 1]} : vector<8x384xf32> to vector<8x128xf32>
    %196 = vector.extract_strided_slice %192 {offsets = [0, 128], sizes = [8, 128], strides = [1, 1]} : vector<8x384xf32> to vector<8x128xf32>
    %197 = vector.extract_strided_slice %192 {offsets = [0, 256], sizes = [8, 128], strides = [1, 1]} : vector<8x384xf32> to vector<8x128xf32>
    %198 = arith.mulf %196, %158 : vector<8x128xf32>
    %199 = arith.mulf %195, %194 : vector<8x128xf32>
    %200 = arith.addf %198, %199 : vector<8x128xf32>
    %201 = math.tanh %200 : vector<8x128xf32>
    %202 = arith.mulf %197, %201 : vector<8x128xf32>
    %c32_68 = arith.constant 32 : index
    %c0_69 = arith.constant 0 : index
    %203 = vector.load %arg13[%c32_68, %c0_69] : memref<64x256xf32, #tpu.memory_space<vmem>>, vector<8x128xf32>
    tpu.vector_store %arg13[%c32_68, %c0_69], %186 {strides = array<i32>} : memref<64x256xf32, #tpu.memory_space<vmem>>, vector<8x128xf32>,
    %c24_70 = arith.constant 24 : index
    %c128_71 = arith.constant 128 : index
    %204 = vector.load %arg13[%c24_70, %c128_71] : memref<64x256xf32, #tpu.memory_space<vmem>>, vector<8x128xf32>
    tpu.vector_store %arg13[%c24_70, %c128_71], %202 {strides = array<i32>} : memref<64x256xf32, #tpu.memory_space<vmem>>, vector<8x128xf32>,
    %c40_72 = arith.constant 40 : index
    %c0_73 = arith.constant 0 : index
    %205 = vector.load %arg12[%c40_72, %c0_73] : memref<64x1024xf32, #tpu.memory_space<vmem>>, vector<8x512xf32>
    %c0_74 = arith.constant 0 : index
    %c0_75 = arith.constant 0 : index
    %206 = vector.load %arg2[%c0_74, %c0_75] : memref<128x512xf32, #tpu.memory_space<vmem>>, vector<128x512xf32>
    %cst_76 = arith.constant dense<0.000000e+00> : vector<8x512xf32>
    %207 = tpu.matmul %186, %206, %cst_76 {dimension_numbers = #tpu.dot_dimension_numbers<[1], [0], [0], [1], [0, 0, 1, 1], [], []>} : vector<8x128xf32>, vector<128x512xf32>, vector<8x512xf32> -> vector<8x512xf32>
    %208 = arith.addf %205, %207 : vector<8x512xf32>
    %c16_77 = arith.constant 16 : index
    %c512_78 = arith.constant 512 : index
    %209 = vector.load %arg12[%c16_77, %c512_78] : memref<64x1024xf32, #tpu.memory_space<vmem>>, vector<8x512xf32>
    %c0_79 = arith.constant 0 : index
    %c0_80 = arith.constant 0 : index
    %210 = vector.load %arg3[%c0_79, %c0_80] : memref<128x512xf32, #tpu.memory_space<vmem>>, vector<128x512xf32>
    %cst_81 = arith.constant dense<0.000000e+00> : vector<8x512xf32>
    %211 = tpu.matmul %202, %210, %cst_81 {dimension_numbers = #tpu.dot_dimension_numbers<[1], [0], [0], [1], [0, 0, 1, 1], [], []>} : vector<8x128xf32>, vector<128x512xf32>, vector<8x512xf32> -> vector<8x512xf32>
    %212 = arith.addf %209, %211 : vector<8x512xf32>
    %213 = vector.extract_strided_slice %208 {offsets = [0, 0], sizes = [8, 384], strides = [1, 1]} : vector<8x512xf32> to vector<8x384xf32>
    %214 = arith.negf %213 : vector<8x384xf32>
    %215 = math.exp %214 : vector<8x384xf32>
    %cst_82 = arith.constant 1.000000e+00 : f32
    %216 = vector.broadcast %cst_82 : f32 to vector<8x384xf32>
    %217 = arith.addf %216, %215 : vector<8x384xf32>
    %218 = arith.divf %216, %217 : vector<8x384xf32>
    %219 = vector.extract_strided_slice %208 {offsets = [0, 384], sizes = [8, 128], strides = [1, 1]} : vector<8x512xf32> to vector<8x128xf32>
    %220 = math.tanh %219 : vector<8x128xf32>
    %221 = vector.extract_strided_slice %218 {offsets = [0, 0], sizes = [8, 128], strides = [1, 1]} : vector<8x384xf32> to vector<8x128xf32>
    %222 = vector.extract_strided_slice %218 {offsets = [0, 128], sizes = [8, 128], strides = [1, 1]} : vector<8x384xf32> to vector<8x128xf32>
    %223 = vector.extract_strided_slice %218 {offsets = [0, 256], sizes = [8, 128], strides = [1, 1]} : vector<8x384xf32> to vector<8x128xf32>
    %224 = arith.mulf %222, %184 : vector<8x128xf32>
    %225 = arith.mulf %221, %220 : vector<8x128xf32>
    %226 = arith.addf %224, %225 : vector<8x128xf32>
    %227 = math.tanh %226 : vector<8x128xf32>
    %228 = arith.mulf %223, %227 : vector<8x128xf32>
    %229 = vector.extract_strided_slice %212 {offsets = [0, 0], sizes = [8, 384], strides = [1, 1]} : vector<8x512xf32> to vector<8x384xf32>
    %230 = arith.negf %229 : vector<8x384xf32>
    %231 = math.exp %230 : vector<8x384xf32>
    %cst_83 = arith.constant 1.000000e+00 : f32
    %232 = vector.broadcast %cst_83 : f32 to vector<8x384xf32>
    %233 = arith.addf %232, %231 : vector<8x384xf32>
    %234 = arith.divf %232, %233 : vector<8x384xf32>
    %235 = vector.extract_strided_slice %212 {offsets = [0, 384], sizes = [8, 128], strides = [1, 1]} : vector<8x512xf32> to vector<8x128xf32>
    %236 = math.tanh %235 : vector<8x128xf32>
    %237 = vector.extract_strided_slice %234 {offsets = [0, 0], sizes = [8, 128], strides = [1, 1]} : vector<8x384xf32> to vector<8x128xf32>
    %238 = vector.extract_strided_slice %234 {offsets = [0, 128], sizes = [8, 128], strides = [1, 1]} : vector<8x384xf32> to vector<8x128xf32>
    %239 = vector.extract_strided_slice %234 {offsets = [0, 256], sizes = [8, 128], strides = [1, 1]} : vector<8x384xf32> to vector<8x128xf32>
    %240 = arith.mulf %238, %200 : vector<8x128xf32>
    %241 = arith.mulf %237, %236 : vector<8x128xf32>
    %242 = arith.addf %240, %241 : vector<8x128xf32>
    %243 = math.tanh %242 : vector<8x128xf32>
    %244 = arith.mulf %239, %243 : vector<8x128xf32>
    %c40_84 = arith.constant 40 : index
    %c0_85 = arith.constant 0 : index
    %245 = vector.load %arg13[%c40_84, %c0_85] : memref<64x256xf32, #tpu.memory_space<vmem>>, vector<8x128xf32>
    tpu.vector_store %arg13[%c40_84, %c0_85], %228 {strides = array<i32>} : memref<64x256xf32, #tpu.memory_space<vmem>>, vector<8x128xf32>,
    %c16_86 = arith.constant 16 : index
    %c128_87 = arith.constant 128 : index
    %246 = vector.load %arg13[%c16_86, %c128_87] : memref<64x256xf32, #tpu.memory_space<vmem>>, vector<8x128xf32>
    tpu.vector_store %arg13[%c16_86, %c128_87], %244 {strides = array<i32>} : memref<64x256xf32, #tpu.memory_space<vmem>>, vector<8x128xf32>,
    %c48_88 = arith.constant 48 : index
    %c0_89 = arith.constant 0 : index
    %247 = vector.load %arg12[%c48_88, %c0_89] : memref<64x1024xf32, #tpu.memory_space<vmem>>, vector<8x512xf32>
    %c0_90 = arith.constant 0 : index
    %c0_91 = arith.constant 0 : index
    %248 = vector.load %arg2[%c0_90, %c0_91] : memref<128x512xf32, #tpu.memory_space<vmem>>, vector<128x512xf32>
    %cst_92 = arith.constant dense<0.000000e+00> : vector<8x512xf32>
    %249 = tpu.matmul %228, %248, %cst_92 {dimension_numbers = #tpu.dot_dimension_numbers<[1], [0], [0], [1], [0, 0, 1, 1], [], []>} : vector<8x128xf32>, vector<128x512xf32>, vector<8x512xf32> -> vector<8x512xf32>
    %250 = arith.addf %247, %249 : vector<8x512xf32>
    %c8_93 = arith.constant 8 : index
    %c512_94 = arith.constant 512 : index
    %251 = vector.load %arg12[%c8_93, %c512_94] : memref<64x1024xf32, #tpu.memory_space<vmem>>, vector<8x512xf32>
    %c0_95 = arith.constant 0 : index
    %c0_96 = arith.constant 0 : index
    %252 = vector.load %arg3[%c0_95, %c0_96] : memref<128x512xf32, #tpu.memory_space<vmem>>, vector<128x512xf32>
    %cst_97 = arith.constant dense<0.000000e+00> : vector<8x512xf32>
    %253 = tpu.matmul %244, %252, %cst_97 {dimension_numbers = #tpu.dot_dimension_numbers<[1], [0], [0], [1], [0, 0, 1, 1], [], []>} : vector<8x128xf32>, vector<128x512xf32>, vector<8x512xf32> -> vector<8x512xf32>
    %254 = arith.addf %251, %253 : vector<8x512xf32>
    %255 = vector.extract_strided_slice %250 {offsets = [0, 0], sizes = [8, 384], strides = [1, 1]} : vector<8x512xf32> to vector<8x384xf32>
    %256 = arith.negf %255 : vector<8x384xf32>
    %257 = math.exp %256 : vector<8x384xf32>
    %cst_98 = arith.constant 1.000000e+00 : f32
    %258 = vector.broadcast %cst_98 : f32 to vector<8x384xf32>
    %259 = arith.addf %258, %257 : vector<8x384xf32>
    %260 = arith.divf %258, %259 : vector<8x384xf32>
    %261 = vector.extract_strided_slice %250 {offsets = [0, 384], sizes = [8, 128], strides = [1, 1]} : vector<8x512xf32> to vector<8x128xf32>
    %262 = math.tanh %261 : vector<8x128xf32>
    %263 = vector.extract_strided_slice %260 {offsets = [0, 0], sizes = [8, 128], strides = [1, 1]} : vector<8x384xf32> to vector<8x128xf32>
    %264 = vector.extract_strided_slice %260 {offsets = [0, 128], sizes = [8, 128], strides = [1, 1]} : vector<8x384xf32> to vector<8x128xf32>
    %265 = vector.extract_strided_slice %260 {offsets = [0, 256], sizes = [8, 128], strides = [1, 1]} : vector<8x384xf32> to vector<8x128xf32>
    %266 = arith.mulf %264, %226 : vector<8x128xf32>
    %267 = arith.mulf %263, %262 : vector<8x128xf32>
    %268 = arith.addf %266, %267 : vector<8x128xf32>
    %269 = math.tanh %268 : vector<8x128xf32>
    %270 = arith.mulf %265, %269 : vector<8x128xf32>
    %271 = vector.extract_strided_slice %254 {offsets = [0, 0], sizes = [8, 384], strides = [1, 1]} : vector<8x512xf32> to vector<8x384xf32>
    %272 = arith.negf %271 : vector<8x384xf32>
    %273 = math.exp %272 : vector<8x384xf32>
    %cst_99 = arith.constant 1.000000e+00 : f32
    %274 = vector.broadcast %cst_99 : f32 to vector<8x384xf32>
    %275 = arith.addf %274, %273 : vector<8x384xf32>
    %276 = arith.divf %274, %275 : vector<8x384xf32>
    %277 = vector.extract_strided_slice %254 {offsets = [0, 384], sizes = [8, 128], strides = [1, 1]} : vector<8x512xf32> to vector<8x128xf32>
    %278 = math.tanh %277 : vector<8x128xf32>
    %279 = vector.extract_strided_slice %276 {offsets = [0, 0], sizes = [8, 128], strides = [1, 1]} : vector<8x384xf32> to vector<8x128xf32>
    %280 = vector.extract_strided_slice %276 {offsets = [0, 128], sizes = [8, 128], strides = [1, 1]} : vector<8x384xf32> to vector<8x128xf32>
    %281 = vector.extract_strided_slice %276 {offsets = [0, 256], sizes = [8, 128], strides = [1, 1]} : vector<8x384xf32> to vector<8x128xf32>
    %282 = arith.mulf %280, %242 : vector<8x128xf32>
    %283 = arith.mulf %279, %278 : vector<8x128xf32>
    %284 = arith.addf %282, %283 : vector<8x128xf32>
    %285 = math.tanh %284 : vector<8x128xf32>
    %286 = arith.mulf %281, %285 : vector<8x128xf32>
    %c48_100 = arith.constant 48 : index
    %c0_101 = arith.constant 0 : index
    %287 = vector.load %arg13[%c48_100, %c0_101] : memref<64x256xf32, #tpu.memory_space<vmem>>, vector<8x128xf32>
    tpu.vector_store %arg13[%c48_100, %c0_101], %270 {strides = array<i32>} : memref<64x256xf32, #tpu.memory_space<vmem>>, vector<8x128xf32>,
    %c8_102 = arith.constant 8 : index
    %c128_103 = arith.constant 128 : index
    %288 = vector.load %arg13[%c8_102, %c128_103] : memref<64x256xf32, #tpu.memory_space<vmem>>, vector<8x128xf32>
    tpu.vector_store %arg13[%c8_102, %c128_103], %286 {strides = array<i32>} : memref<64x256xf32, #tpu.memory_space<vmem>>, vector<8x128xf32>,
    %c56_104 = arith.constant 56 : index
    %c0_105 = arith.constant 0 : index
    %289 = vector.load %arg12[%c56_104, %c0_105] : memref<64x1024xf32, #tpu.memory_space<vmem>>, vector<8x512xf32>
    %c0_106 = arith.constant 0 : index
    %c0_107 = arith.constant 0 : index
    %290 = vector.load %arg2[%c0_106, %c0_107] : memref<128x512xf32, #tpu.memory_space<vmem>>, vector<128x512xf32>
    %cst_108 = arith.constant dense<0.000000e+00> : vector<8x512xf32>
    %291 = tpu.matmul %270, %290, %cst_108 {dimension_numbers = #tpu.dot_dimension_numbers<[1], [0], [0], [1], [0, 0, 1, 1], [], []>} : vector<8x128xf32>, vector<128x512xf32>, vector<8x512xf32> -> vector<8x512xf32>
    %292 = arith.addf %289, %291 : vector<8x512xf32>
    %c0_109 = arith.constant 0 : index
    %c512_110 = arith.constant 512 : index
    %293 = vector.load %arg12[%c0_109, %c512_110] : memref<64x1024xf32, #tpu.memory_space<vmem>>, vector<8x512xf32>
    %c0_111 = arith.constant 0 : index
    %c0_112 = arith.constant 0 : index
    %294 = vector.load %arg3[%c0_111, %c0_112] : memref<128x512xf32, #tpu.memory_space<vmem>>, vector<128x512xf32>
    %cst_113 = arith.constant dense<0.000000e+00> : vector<8x512xf32>
    %295 = tpu.matmul %286, %294, %cst_113 {dimension_numbers = #tpu.dot_dimension_numbers<[1], [0], [0], [1], [0, 0, 1, 1], [], []>} : vector<8x128xf32>, vector<128x512xf32>, vector<8x512xf32> -> vector<8x512xf32>
    %296 = arith.addf %293, %295 : vector<8x512xf32>
    %297 = vector.extract_strided_slice %292 {offsets = [0, 0], sizes = [8, 384], strides = [1, 1]} : vector<8x512xf32> to vector<8x384xf32>
    %298 = arith.negf %297 : vector<8x384xf32>
    %299 = math.exp %298 : vector<8x384xf32>
    %cst_114 = arith.constant 1.000000e+00 : f32
    %300 = vector.broadcast %cst_114 : f32 to vector<8x384xf32>
    %301 = arith.addf %300, %299 : vector<8x384xf32>
    %302 = arith.divf %300, %301 : vector<8x384xf32>
    %303 = vector.extract_strided_slice %292 {offsets = [0, 384], sizes = [8, 128], strides = [1, 1]} : vector<8x512xf32> to vector<8x128xf32>
    %304 = math.tanh %303 : vector<8x128xf32>
    %305 = vector.extract_strided_slice %302 {offsets = [0, 0], sizes = [8, 128], strides = [1, 1]} : vector<8x384xf32> to vector<8x128xf32>
    %306 = vector.extract_strided_slice %302 {offsets = [0, 128], sizes = [8, 128], strides = [1, 1]} : vector<8x384xf32> to vector<8x128xf32>
    %307 = vector.extract_strided_slice %302 {offsets = [0, 256], sizes = [8, 128], strides = [1, 1]} : vector<8x384xf32> to vector<8x128xf32>
    %308 = arith.mulf %306, %268 : vector<8x128xf32>
    %309 = arith.mulf %305, %304 : vector<8x128xf32>
    %310 = arith.addf %308, %309 : vector<8x128xf32>
    %311 = math.tanh %310 : vector<8x128xf32>
    %312 = arith.mulf %307, %311 : vector<8x128xf32>
    %313 = vector.extract_strided_slice %296 {offsets = [0, 0], sizes = [8, 384], strides = [1, 1]} : vector<8x512xf32> to vector<8x384xf32>
    %314 = arith.negf %313 : vector<8x384xf32>
    %315 = math.exp %314 : vector<8x384xf32>
    %cst_115 = arith.constant 1.000000e+00 : f32
    %316 = vector.broadcast %cst_115 : f32 to vector<8x384xf32>
    %317 = arith.addf %316, %315 : vector<8x384xf32>
    %318 = arith.divf %316, %317 : vector<8x384xf32>
    %319 = vector.extract_strided_slice %296 {offsets = [0, 384], sizes = [8, 128], strides = [1, 1]} : vector<8x512xf32> to vector<8x128xf32>
    %320 = math.tanh %319 : vector<8x128xf32>
    %321 = vector.extract_strided_slice %318 {offsets = [0, 0], sizes = [8, 128], strides = [1, 1]} : vector<8x384xf32> to vector<8x128xf32>
    %322 = vector.extract_strided_slice %318 {offsets = [0, 128], sizes = [8, 128], strides = [1, 1]} : vector<8x384xf32> to vector<8x128xf32>
    %323 = vector.extract_strided_slice %318 {offsets = [0, 256], sizes = [8, 128], strides = [1, 1]} : vector<8x384xf32> to vector<8x128xf32>
    %324 = arith.mulf %322, %284 : vector<8x128xf32>
    %325 = arith.mulf %321, %320 : vector<8x128xf32>
    %326 = arith.addf %324, %325 : vector<8x128xf32>
    %327 = math.tanh %326 : vector<8x128xf32>
    %328 = arith.mulf %323, %327 : vector<8x128xf32>
    %c56_116 = arith.constant 56 : index
    %c0_117 = arith.constant 0 : index
    %329 = vector.load %arg13[%c56_116, %c0_117] : memref<64x256xf32, #tpu.memory_space<vmem>>, vector<8x128xf32>
    tpu.vector_store %arg13[%c56_116, %c0_117], %312 {strides = array<i32>} : memref<64x256xf32, #tpu.memory_space<vmem>>, vector<8x128xf32>,
    %c0_118 = arith.constant 0 : index
    %c128_119 = arith.constant 128 : index
    %330 = vector.load %arg13[%c0_118, %c128_119] : memref<64x256xf32, #tpu.memory_space<vmem>>, vector<8x128xf32>
    tpu.vector_store %arg13[%c0_118, %c128_119], %328 {strides = array<i32>} : memref<64x256xf32, #tpu.memory_space<vmem>>, vector<8x128xf32>,
    %c0_120 = arith.constant 0 : index
    %c0_121 = arith.constant 0 : index
    %331 = vector.load %arg13[%c0_120, %c0_121] : memref<64x256xf32, #tpu.memory_space<vmem>>, vector<64x256xf32>
    %c0_122 = arith.constant 0 : index
    %c0_123 = arith.constant 0 : index
    %332 = vector.load %arg5[%c0_122, %c0_123] : memref<256x512xf32, #tpu.memory_space<vmem>>, vector<256x512xf32>
    %cst_124 = arith.constant dense<0.000000e+00> : vector<64x512xf32>
    %333 = tpu.matmul %331, %332, %cst_124 {dimension_numbers = #tpu.dot_dimension_numbers<[1], [0], [0], [1], [0, 0, 1, 1], [], []>} : vector<64x256xf32>, vector<256x512xf32>, vector<64x512xf32> -> vector<64x512xf32>
    %c0_125 = arith.constant 0 : index
    %c0_126 = arith.constant 0 : index
    %334 = vector.load %arg8[%c0_125, %c0_126] : memref<1x512xf32, #tpu.memory_space<vmem>>, vector<1x512xf32>
    %335 = vector.broadcast %334 : vector<1x512xf32> to vector<64x512xf32>
    %336 = arith.addf %333, %335 : vector<64x512xf32>
    %c0_127 = arith.constant 0 : index
    %c0_128 = arith.constant 0 : index
    %337 = vector.load %arg14[%c0_127, %c0_128] : memref<64x512xf32, #tpu.memory_space<vmem>>, vector<64x512xf32>
    tpu.vector_store %arg14[%c0_127, %c0_128], %336 {strides = array<i32>} : memref<64x512xf32, #tpu.memory_space<vmem>>, vector<64x512xf32>,
    %c0_129 = arith.constant 0 : index
    %c0_130 = arith.constant 0 : index
    %338 = vector.load %arg14[%c0_129, %c0_130] : memref<64x512xf32, #tpu.memory_space<vmem>>, vector<8x256xf32>
    %339 = vector.extract_strided_slice %338 {offsets = [0, 0], sizes = [8, 192], strides = [1, 1]} : vector<8x256xf32> to vector<8x192xf32>
    %340 = arith.negf %339 : vector<8x192xf32>
    %341 = math.exp %340 : vector<8x192xf32>
    %cst_131 = arith.constant 1.000000e+00 : f32
    %342 = vector.broadcast %cst_131 : f32 to vector<8x192xf32>
    %343 = arith.addf %342, %341 : vector<8x192xf32>
    %344 = arith.divf %342, %343 : vector<8x192xf32>
    %345 = vector.extract_strided_slice %338 {offsets = [0, 192], sizes = [8, 64], strides = [1, 1]} : vector<8x256xf32> to vector<8x64xf32>
    %346 = math.tanh %345 : vector<8x64xf32>
    %347 = vector.extract_strided_slice %344 {offsets = [0, 0], sizes = [8, 64], strides = [1, 1]} : vector<8x192xf32> to vector<8x64xf32>
    %348 = vector.extract_strided_slice %344 {offsets = [0, 128], sizes = [8, 64], strides = [1, 1]} : vector<8x192xf32> to vector<8x64xf32>
    %349 = arith.mulf %347, %346 : vector<8x64xf32>
    %350 = math.tanh %349 : vector<8x64xf32>
    %351 = arith.mulf %348, %350 : vector<8x64xf32>
    %c56_132 = arith.constant 56 : index
    %c256 = arith.constant 256 : index
    %352 = vector.load %arg14[%c56_132, %c256] : memref<64x512xf32, #tpu.memory_space<vmem>>, vector<8x256xf32>
    %353 = vector.extract_strided_slice %352 {offsets = [0, 0], sizes = [8, 192], strides = [1, 1]} : vector<8x256xf32> to vector<8x192xf32>
    %354 = arith.negf %353 : vector<8x192xf32>
    %355 = math.exp %354 : vector<8x192xf32>
    %cst_133 = arith.constant 1.000000e+00 : f32
    %356 = vector.broadcast %cst_133 : f32 to vector<8x192xf32>
    %357 = arith.addf %356, %355 : vector<8x192xf32>
    %358 = arith.divf %356, %357 : vector<8x192xf32>
    %359 = vector.extract_strided_slice %352 {offsets = [0, 192], sizes = [8, 64], strides = [1, 1]} : vector<8x256xf32> to vector<8x64xf32>
    %360 = math.tanh %359 : vector<8x64xf32>
    %361 = vector.extract_strided_slice %358 {offsets = [0, 0], sizes = [8, 64], strides = [1, 1]} : vector<8x192xf32> to vector<8x64xf32>
    %362 = vector.extract_strided_slice %358 {offsets = [0, 128], sizes = [8, 64], strides = [1, 1]} : vector<8x192xf32> to vector<8x64xf32>
    %363 = arith.mulf %361, %360 : vector<8x64xf32>
    %364 = math.tanh %363 : vector<8x64xf32>
    %365 = arith.mulf %362, %364 : vector<8x64xf32>
    %c0_134 = arith.constant 0 : index
    %c0_135 = arith.constant 0 : index
    %366 = vector.load %arg9[%c0_134, %c0_135] : memref<64x128xf32, #tpu.memory_space<vmem>>, vector<8x64xf32>
    tpu.vector_store %arg9[%c0_134, %c0_135], %351 {strides = array<i32>} : memref<64x128xf32, #tpu.memory_space<vmem>>, vector<8x64xf32>,
    %c56_136 = arith.constant 56 : index
    %c64 = arith.constant 64 : index
    %367 = vector.load %arg9[%c56_136, %c64] : memref<64x128xf32, #tpu.memory_space<vmem>>, vector<8x64xf32>
    tpu.vector_store %arg9[%c56_136, %c64], %365 {strides = array<i32>} : memref<64x128xf32, #tpu.memory_space<vmem>>, vector<8x64xf32>,
    %c8_137 = arith.constant 8 : index
    %c0_138 = arith.constant 0 : index
    %368 = vector.load %arg14[%c8_137, %c0_138] : memref<64x512xf32, #tpu.memory_space<vmem>>, vector<8x256xf32>
    %c0_139 = arith.constant 0 : index
    %c0_140 = arith.constant 0 : index
    %369 = vector.load %arg6[%c0_139, %c0_140] : memref<64x256xf32, #tpu.memory_space<vmem>>, vector<64x256xf32>
    %cst_141 = arith.constant dense<0.000000e+00> : vector<8x256xf32>
    %370 = tpu.matmul %351, %369, %cst_141 {dimension_numbers = #tpu.dot_dimension_numbers<[1], [0], [0], [1], [0, 0, 1, 1], [], []>} : vector<8x64xf32>, vector<64x256xf32>, vector<8x256xf32> -> vector<8x256xf32>
    %371 = arith.addf %368, %370 : vector<8x256xf32>
    %c48_142 = arith.constant 48 : index
    %c256_143 = arith.constant 256 : index
    %372 = vector.load %arg14[%c48_142, %c256_143] : memref<64x512xf32, #tpu.memory_space<vmem>>, vector<8x256xf32>
    %c0_144 = arith.constant 0 : index
    %c0_145 = arith.constant 0 : index
    %373 = vector.load %arg7[%c0_144, %c0_145] : memref<64x256xf32, #tpu.memory_space<vmem>>, vector<64x256xf32>
    %cst_146 = arith.constant dense<0.000000e+00> : vector<8x256xf32>
    %374 = tpu.matmul %365, %373, %cst_146 {dimension_numbers = #tpu.dot_dimension_numbers<[1], [0], [0], [1], [0, 0, 1, 1], [], []>} : vector<8x64xf32>, vector<64x256xf32>, vector<8x256xf32> -> vector<8x256xf32>
    %375 = arith.addf %372, %374 : vector<8x256xf32>
    %376 = vector.extract_strided_slice %371 {offsets = [0, 0], sizes = [8, 192], strides = [1, 1]} : vector<8x256xf32> to vector<8x192xf32>
    %377 = arith.negf %376 : vector<8x192xf32>
    %378 = math.exp %377 : vector<8x192xf32>
    %cst_147 = arith.constant 1.000000e+00 : f32
    %379 = vector.broadcast %cst_147 : f32 to vector<8x192xf32>
    %380 = arith.addf %379, %378 : vector<8x192xf32>
    %381 = arith.divf %379, %380 : vector<8x192xf32>
    %382 = vector.extract_strided_slice %371 {offsets = [0, 192], sizes = [8, 64], strides = [1, 1]} : vector<8x256xf32> to vector<8x64xf32>
    %383 = math.tanh %382 : vector<8x64xf32>
    %384 = vector.extract_strided_slice %381 {offsets = [0, 0], sizes = [8, 64], strides = [1, 1]} : vector<8x192xf32> to vector<8x64xf32>
    %385 = vector.extract_strided_slice %381 {offsets = [0, 64], sizes = [8, 64], strides = [1, 1]} : vector<8x192xf32> to vector<8x64xf32>
    %386 = vector.extract_strided_slice %381 {offsets = [0, 128], sizes = [8, 64], strides = [1, 1]} : vector<8x192xf32> to vector<8x64xf32>
    %387 = arith.mulf %385, %349 : vector<8x64xf32>
    %388 = arith.mulf %384, %383 : vector<8x64xf32>
    %389 = arith.addf %387, %388 : vector<8x64xf32>
    %390 = math.tanh %389 : vector<8x64xf32>
    %391 = arith.mulf %386, %390 : vector<8x64xf32>
    %392 = vector.extract_strided_slice %375 {offsets = [0, 0], sizes = [8, 192], strides = [1, 1]} : vector<8x256xf32> to vector<8x192xf32>
    %393 = arith.negf %392 : vector<8x192xf32>
    %394 = math.exp %393 : vector<8x192xf32>
    %cst_148 = arith.constant 1.000000e+00 : f32
    %395 = vector.broadcast %cst_148 : f32 to vector<8x192xf32>
    %396 = arith.addf %395, %394 : vector<8x192xf32>
    %397 = arith.divf %395, %396 : vector<8x192xf32>
    %398 = vector.extract_strided_slice %375 {offsets = [0, 192], sizes = [8, 64], strides = [1, 1]} : vector<8x256xf32> to vector<8x64xf32>
    %399 = math.tanh %398 : vector<8x64xf32>
    %400 = vector.extract_strided_slice %397 {offsets = [0, 0], sizes = [8, 64], strides = [1, 1]} : vector<8x192xf32> to vector<8x64xf32>
    %401 = vector.extract_strided_slice %397 {offsets = [0, 64], sizes = [8, 64], strides = [1, 1]} : vector<8x192xf32> to vector<8x64xf32>
    %402 = vector.extract_strided_slice %397 {offsets = [0, 128], sizes = [8, 64], strides = [1, 1]} : vector<8x192xf32> to vector<8x64xf32>
    %403 = arith.mulf %401, %363 : vector<8x64xf32>
    %404 = arith.mulf %400, %399 : vector<8x64xf32>
    %405 = arith.addf %403, %404 : vector<8x64xf32>
    %406 = math.tanh %405 : vector<8x64xf32>
    %407 = arith.mulf %402, %406 : vector<8x64xf32>
    %c8_149 = arith.constant 8 : index
    %c0_150 = arith.constant 0 : index
    %408 = vector.load %arg9[%c8_149, %c0_150] : memref<64x128xf32, #tpu.memory_space<vmem>>, vector<8x64xf32>
    tpu.vector_store %arg9[%c8_149, %c0_150], %391 {strides = array<i32>} : memref<64x128xf32, #tpu.memory_space<vmem>>, vector<8x64xf32>,
    %c48_151 = arith.constant 48 : index
    %c64_152 = arith.constant 64 : index
    %409 = vector.load %arg9[%c48_151, %c64_152] : memref<64x128xf32, #tpu.memory_space<vmem>>, vector<8x64xf32>
    tpu.vector_store %arg9[%c48_151, %c64_152], %407 {strides = array<i32>} : memref<64x128xf32, #tpu.memory_space<vmem>>, vector<8x64xf32>,
    %c16_153 = arith.constant 16 : index
    %c0_154 = arith.constant 0 : index
    %410 = vector.load %arg14[%c16_153, %c0_154] : memref<64x512xf32, #tpu.memory_space<vmem>>, vector<8x256xf32>
    %c0_155 = arith.constant 0 : index
    %c0_156 = arith.constant 0 : index
    %411 = vector.load %arg6[%c0_155, %c0_156] : memref<64x256xf32, #tpu.memory_space<vmem>>, vector<64x256xf32>
    %cst_157 = arith.constant dense<0.000000e+00> : vector<8x256xf32>
    %412 = tpu.matmul %391, %411, %cst_157 {dimension_numbers = #tpu.dot_dimension_numbers<[1], [0], [0], [1], [0, 0, 1, 1], [], []>} : vector<8x64xf32>, vector<64x256xf32>, vector<8x256xf32> -> vector<8x256xf32>
    %413 = arith.addf %410, %412 : vector<8x256xf32>
    %c40_158 = arith.constant 40 : index
    %c256_159 = arith.constant 256 : index
    %414 = vector.load %arg14[%c40_158, %c256_159] : memref<64x512xf32, #tpu.memory_space<vmem>>, vector<8x256xf32>
    %c0_160 = arith.constant 0 : index
    %c0_161 = arith.constant 0 : index
    %415 = vector.load %arg7[%c0_160, %c0_161] : memref<64x256xf32, #tpu.memory_space<vmem>>, vector<64x256xf32>
    %cst_162 = arith.constant dense<0.000000e+00> : vector<8x256xf32>
    %416 = tpu.matmul %407, %415, %cst_162 {dimension_numbers = #tpu.dot_dimension_numbers<[1], [0], [0], [1], [0, 0, 1, 1], [], []>} : vector<8x64xf32>, vector<64x256xf32>, vector<8x256xf32> -> vector<8x256xf32>
    %417 = arith.addf %414, %416 : vector<8x256xf32>
    %418 = vector.extract_strided_slice %413 {offsets = [0, 0], sizes = [8, 192], strides = [1, 1]} : vector<8x256xf32> to vector<8x192xf32>
    %419 = arith.negf %418 : vector<8x192xf32>
    %420 = math.exp %419 : vector<8x192xf32>
    %cst_163 = arith.constant 1.000000e+00 : f32
    %421 = vector.broadcast %cst_163 : f32 to vector<8x192xf32>
    %422 = arith.addf %421, %420 : vector<8x192xf32>
    %423 = arith.divf %421, %422 : vector<8x192xf32>
    %424 = vector.extract_strided_slice %413 {offsets = [0, 192], sizes = [8, 64], strides = [1, 1]} : vector<8x256xf32> to vector<8x64xf32>
    %425 = math.tanh %424 : vector<8x64xf32>
    %426 = vector.extract_strided_slice %423 {offsets = [0, 0], sizes = [8, 64], strides = [1, 1]} : vector<8x192xf32> to vector<8x64xf32>
    %427 = vector.extract_strided_slice %423 {offsets = [0, 64], sizes = [8, 64], strides = [1, 1]} : vector<8x192xf32> to vector<8x64xf32>
    %428 = vector.extract_strided_slice %423 {offsets = [0, 128], sizes = [8, 64], strides = [1, 1]} : vector<8x192xf32> to vector<8x64xf32>
    %429 = arith.mulf %427, %389 : vector<8x64xf32>
    %430 = arith.mulf %426, %425 : vector<8x64xf32>
    %431 = arith.addf %429, %430 : vector<8x64xf32>
    %432 = math.tanh %431 : vector<8x64xf32>
    %433 = arith.mulf %428, %432 : vector<8x64xf32>
    %434 = vector.extract_strided_slice %417 {offsets = [0, 0], sizes = [8, 192], strides = [1, 1]} : vector<8x256xf32> to vector<8x192xf32>
    %435 = arith.negf %434 : vector<8x192xf32>
    %436 = math.exp %435 : vector<8x192xf32>
    %cst_164 = arith.constant 1.000000e+00 : f32
    %437 = vector.broadcast %cst_164 : f32 to vector<8x192xf32>
    %438 = arith.addf %437, %436 : vector<8x192xf32>
    %439 = arith.divf %437, %438 : vector<8x192xf32>
    %440 = vector.extract_strided_slice %417 {offsets = [0, 192], sizes = [8, 64], strides = [1, 1]} : vector<8x256xf32> to vector<8x64xf32>
    %441 = math.tanh %440 : vector<8x64xf32>
    %442 = vector.extract_strided_slice %439 {offsets = [0, 0], sizes = [8, 64], strides = [1, 1]} : vector<8x192xf32> to vector<8x64xf32>
    %443 = vector.extract_strided_slice %439 {offsets = [0, 64], sizes = [8, 64], strides = [1, 1]} : vector<8x192xf32> to vector<8x64xf32>
    %444 = vector.extract_strided_slice %439 {offsets = [0, 128], sizes = [8, 64], strides = [1, 1]} : vector<8x192xf32> to vector<8x64xf32>
    %445 = arith.mulf %443, %405 : vector<8x64xf32>
    %446 = arith.mulf %442, %441 : vector<8x64xf32>
    %447 = arith.addf %445, %446 : vector<8x64xf32>
    %448 = math.tanh %447 : vector<8x64xf32>
    %449 = arith.mulf %444, %448 : vector<8x64xf32>
    %c16_165 = arith.constant 16 : index
    %c0_166 = arith.constant 0 : index
    %450 = vector.load %arg9[%c16_165, %c0_166] : memref<64x128xf32, #tpu.memory_space<vmem>>, vector<8x64xf32>
    tpu.vector_store %arg9[%c16_165, %c0_166], %433 {strides = array<i32>} : memref<64x128xf32, #tpu.memory_space<vmem>>, vector<8x64xf32>,
    %c40_167 = arith.constant 40 : index
    %c64_168 = arith.constant 64 : index
    %451 = vector.load %arg9[%c40_167, %c64_168] : memref<64x128xf32, #tpu.memory_space<vmem>>, vector<8x64xf32>
    tpu.vector_store %arg9[%c40_167, %c64_168], %449 {strides = array<i32>} : memref<64x128xf32, #tpu.memory_space<vmem>>, vector<8x64xf32>,
    %c24_169 = arith.constant 24 : index
    %c0_170 = arith.constant 0 : index
    %452 = vector.load %arg14[%c24_169, %c0_170] : memref<64x512xf32, #tpu.memory_space<vmem>>, vector<8x256xf32>
    %c0_171 = arith.constant 0 : index
    %c0_172 = arith.constant 0 : index
    %453 = vector.load %arg6[%c0_171, %c0_172] : memref<64x256xf32, #tpu.memory_space<vmem>>, vector<64x256xf32>
    %cst_173 = arith.constant dense<0.000000e+00> : vector<8x256xf32>
    %454 = tpu.matmul %433, %453, %cst_173 {dimension_numbers = #tpu.dot_dimension_numbers<[1], [0], [0], [1], [0, 0, 1, 1], [], []>} : vector<8x64xf32>, vector<64x256xf32>, vector<8x256xf32> -> vector<8x256xf32>
    %455 = arith.addf %452, %454 : vector<8x256xf32>
    %c32_174 = arith.constant 32 : index
    %c256_175 = arith.constant 256 : index
    %456 = vector.load %arg14[%c32_174, %c256_175] : memref<64x512xf32, #tpu.memory_space<vmem>>, vector<8x256xf32>
    %c0_176 = arith.constant 0 : index
    %c0_177 = arith.constant 0 : index
    %457 = vector.load %arg7[%c0_176, %c0_177] : memref<64x256xf32, #tpu.memory_space<vmem>>, vector<64x256xf32>
    %cst_178 = arith.constant dense<0.000000e+00> : vector<8x256xf32>
    %458 = tpu.matmul %449, %457, %cst_178 {dimension_numbers = #tpu.dot_dimension_numbers<[1], [0], [0], [1], [0, 0, 1, 1], [], []>} : vector<8x64xf32>, vector<64x256xf32>, vector<8x256xf32> -> vector<8x256xf32>
    %459 = arith.addf %456, %458 : vector<8x256xf32>
    %460 = vector.extract_strided_slice %455 {offsets = [0, 0], sizes = [8, 192], strides = [1, 1]} : vector<8x256xf32> to vector<8x192xf32>
    %461 = arith.negf %460 : vector<8x192xf32>
    %462 = math.exp %461 : vector<8x192xf32>
    %cst_179 = arith.constant 1.000000e+00 : f32
    %463 = vector.broadcast %cst_179 : f32 to vector<8x192xf32>
    %464 = arith.addf %463, %462 : vector<8x192xf32>
    %465 = arith.divf %463, %464 : vector<8x192xf32>
    %466 = vector.extract_strided_slice %455 {offsets = [0, 192], sizes = [8, 64], strides = [1, 1]} : vector<8x256xf32> to vector<8x64xf32>
    %467 = math.tanh %466 : vector<8x64xf32>
    %468 = vector.extract_strided_slice %465 {offsets = [0, 0], sizes = [8, 64], strides = [1, 1]} : vector<8x192xf32> to vector<8x64xf32>
    %469 = vector.extract_strided_slice %465 {offsets = [0, 64], sizes = [8, 64], strides = [1, 1]} : vector<8x192xf32> to vector<8x64xf32>
    %470 = vector.extract_strided_slice %465 {offsets = [0, 128], sizes = [8, 64], strides = [1, 1]} : vector<8x192xf32> to vector<8x64xf32>
    %471 = arith.mulf %469, %431 : vector<8x64xf32>
    %472 = arith.mulf %468, %467 : vector<8x64xf32>
    %473 = arith.addf %471, %472 : vector<8x64xf32>
    %474 = math.tanh %473 : vector<8x64xf32>
    %475 = arith.mulf %470, %474 : vector<8x64xf32>
    %476 = vector.extract_strided_slice %459 {offsets = [0, 0], sizes = [8, 192], strides = [1, 1]} : vector<8x256xf32> to vector<8x192xf32>
    %477 = arith.negf %476 : vector<8x192xf32>
    %478 = math.exp %477 : vector<8x192xf32>
    %cst_180 = arith.constant 1.000000e+00 : f32
    %479 = vector.broadcast %cst_180 : f32 to vector<8x192xf32>
    %480 = arith.addf %479, %478 : vector<8x192xf32>
    %481 = arith.divf %479, %480 : vector<8x192xf32>
    %482 = vector.extract_strided_slice %459 {offsets = [0, 192], sizes = [8, 64], strides = [1, 1]} : vector<8x256xf32> to vector<8x64xf32>
    %483 = math.tanh %482 : vector<8x64xf32>
    %484 = vector.extract_strided_slice %481 {offsets = [0, 0], sizes = [8, 64], strides = [1, 1]} : vector<8x192xf32> to vector<8x64xf32>
    %485 = vector.extract_strided_slice %481 {offsets = [0, 64], sizes = [8, 64], strides = [1, 1]} : vector<8x192xf32> to vector<8x64xf32>
    %486 = vector.extract_strided_slice %481 {offsets = [0, 128], sizes = [8, 64], strides = [1, 1]} : vector<8x192xf32> to vector<8x64xf32>
    %487 = arith.mulf %485, %447 : vector<8x64xf32>
    %488 = arith.mulf %484, %483 : vector<8x64xf32>
    %489 = arith.addf %487, %488 : vector<8x64xf32>
    %490 = math.tanh %489 : vector<8x64xf32>
    %491 = arith.mulf %486, %490 : vector<8x64xf32>
    %c24_181 = arith.constant 24 : index
    %c0_182 = arith.constant 0 : index
    %492 = vector.load %arg9[%c24_181, %c0_182] : memref<64x128xf32, #tpu.memory_space<vmem>>, vector<8x64xf32>
    tpu.vector_store %arg9[%c24_181, %c0_182], %475 {strides = array<i32>} : memref<64x128xf32, #tpu.memory_space<vmem>>, vector<8x64xf32>,
    %c32_183 = arith.constant 32 : index
    %c64_184 = arith.constant 64 : index
    %493 = vector.load %arg9[%c32_183, %c64_184] : memref<64x128xf32, #tpu.memory_space<vmem>>, vector<8x64xf32>
    tpu.vector_store %arg9[%c32_183, %c64_184], %491 {strides = array<i32>} : memref<64x128xf32, #tpu.memory_space<vmem>>, vector<8x64xf32>,
    %c32_185 = arith.constant 32 : index
    %c0_186 = arith.constant 0 : index
    %494 = vector.load %arg14[%c32_185, %c0_186] : memref<64x512xf32, #tpu.memory_space<vmem>>, vector<8x256xf32>
    %c0_187 = arith.constant 0 : index
    %c0_188 = arith.constant 0 : index
    %495 = vector.load %arg6[%c0_187, %c0_188] : memref<64x256xf32, #tpu.memory_space<vmem>>, vector<64x256xf32>
    %cst_189 = arith.constant dense<0.000000e+00> : vector<8x256xf32>
    %496 = tpu.matmul %475, %495, %cst_189 {dimension_numbers = #tpu.dot_dimension_numbers<[1], [0], [0], [1], [0, 0, 1, 1], [], []>} : vector<8x64xf32>, vector<64x256xf32>, vector<8x256xf32> -> vector<8x256xf32>
    %497 = arith.addf %494, %496 : vector<8x256xf32>
    %c24_190 = arith.constant 24 : index
    %c256_191 = arith.constant 256 : index
    %498 = vector.load %arg14[%c24_190, %c256_191] : memref<64x512xf32, #tpu.memory_space<vmem>>, vector<8x256xf32>
    %c0_192 = arith.constant 0 : index
    %c0_193 = arith.constant 0 : index
    %499 = vector.load %arg7[%c0_192, %c0_193] : memref<64x256xf32, #tpu.memory_space<vmem>>, vector<64x256xf32>
    %cst_194 = arith.constant dense<0.000000e+00> : vector<8x256xf32>
    %500 = tpu.matmul %491, %499, %cst_194 {dimension_numbers = #tpu.dot_dimension_numbers<[1], [0], [0], [1], [0, 0, 1, 1], [], []>} : vector<8x64xf32>, vector<64x256xf32>, vector<8x256xf32> -> vector<8x256xf32>
    %501 = arith.addf %498, %500 : vector<8x256xf32>
    %502 = vector.extract_strided_slice %497 {offsets = [0, 0], sizes = [8, 192], strides = [1, 1]} : vector<8x256xf32> to vector<8x192xf32>
    %503 = arith.negf %502 : vector<8x192xf32>
    %504 = math.exp %503 : vector<8x192xf32>
    %cst_195 = arith.constant 1.000000e+00 : f32
    %505 = vector.broadcast %cst_195 : f32 to vector<8x192xf32>
    %506 = arith.addf %505, %504 : vector<8x192xf32>
    %507 = arith.divf %505, %506 : vector<8x192xf32>
    %508 = vector.extract_strided_slice %497 {offsets = [0, 192], sizes = [8, 64], strides = [1, 1]} : vector<8x256xf32> to vector<8x64xf32>
    %509 = math.tanh %508 : vector<8x64xf32>
    %510 = vector.extract_strided_slice %507 {offsets = [0, 0], sizes = [8, 64], strides = [1, 1]} : vector<8x192xf32> to vector<8x64xf32>
    %511 = vector.extract_strided_slice %507 {offsets = [0, 64], sizes = [8, 64], strides = [1, 1]} : vector<8x192xf32> to vector<8x64xf32>
    %512 = vector.extract_strided_slice %507 {offsets = [0, 128], sizes = [8, 64], strides = [1, 1]} : vector<8x192xf32> to vector<8x64xf32>
    %513 = arith.mulf %511, %473 : vector<8x64xf32>
    %514 = arith.mulf %510, %509 : vector<8x64xf32>
    %515 = arith.addf %513, %514 : vector<8x64xf32>
    %516 = math.tanh %515 : vector<8x64xf32>
    %517 = arith.mulf %512, %516 : vector<8x64xf32>
    %518 = vector.extract_strided_slice %501 {offsets = [0, 0], sizes = [8, 192], strides = [1, 1]} : vector<8x256xf32> to vector<8x192xf32>
    %519 = arith.negf %518 : vector<8x192xf32>
    %520 = math.exp %519 : vector<8x192xf32>
    %cst_196 = arith.constant 1.000000e+00 : f32
    %521 = vector.broadcast %cst_196 : f32 to vector<8x192xf32>
    %522 = arith.addf %521, %520 : vector<8x192xf32>
    %523 = arith.divf %521, %522 : vector<8x192xf32>
    %524 = vector.extract_strided_slice %501 {offsets = [0, 192], sizes = [8, 64], strides = [1, 1]} : vector<8x256xf32> to vector<8x64xf32>
    %525 = math.tanh %524 : vector<8x64xf32>
    %526 = vector.extract_strided_slice %523 {offsets = [0, 0], sizes = [8, 64], strides = [1, 1]} : vector<8x192xf32> to vector<8x64xf32>
    %527 = vector.extract_strided_slice %523 {offsets = [0, 64], sizes = [8, 64], strides = [1, 1]} : vector<8x192xf32> to vector<8x64xf32>
    %528 = vector.extract_strided_slice %523 {offsets = [0, 128], sizes = [8, 64], strides = [1, 1]} : vector<8x192xf32> to vector<8x64xf32>
    %529 = arith.mulf %527, %489 : vector<8x64xf32>
    %530 = arith.mulf %526, %525 : vector<8x64xf32>
    %531 = arith.addf %529, %530 : vector<8x64xf32>
    %532 = math.tanh %531 : vector<8x64xf32>
    %533 = arith.mulf %528, %532 : vector<8x64xf32>
    %c32_197 = arith.constant 32 : index
    %c0_198 = arith.constant 0 : index
    %534 = vector.load %arg9[%c32_197, %c0_198] : memref<64x128xf32, #tpu.memory_space<vmem>>, vector<8x64xf32>
    tpu.vector_store %arg9[%c32_197, %c0_198], %517 {strides = array<i32>} : memref<64x128xf32, #tpu.memory_space<vmem>>, vector<8x64xf32>,
    %c24_199 = arith.constant 24 : index
    %c64_200 = arith.constant 64 : index
    %535 = vector.load %arg9[%c24_199, %c64_200] : memref<64x128xf32, #tpu.memory_space<vmem>>, vector<8x64xf32>
    tpu.vector_store %arg9[%c24_199, %c64_200], %533 {strides = array<i32>} : memref<64x128xf32, #tpu.memory_space<vmem>>, vector<8x64xf32>,
    %c40_201 = arith.constant 40 : index
    %c0_202 = arith.constant 0 : index
    %536 = vector.load %arg14[%c40_201, %c0_202] : memref<64x512xf32, #tpu.memory_space<vmem>>, vector<8x256xf32>
    %c0_203 = arith.constant 0 : index
    %c0_204 = arith.constant 0 : index
    %537 = vector.load %arg6[%c0_203, %c0_204] : memref<64x256xf32, #tpu.memory_space<vmem>>, vector<64x256xf32>
    %cst_205 = arith.constant dense<0.000000e+00> : vector<8x256xf32>
    %538 = tpu.matmul %517, %537, %cst_205 {dimension_numbers = #tpu.dot_dimension_numbers<[1], [0], [0], [1], [0, 0, 1, 1], [], []>} : vector<8x64xf32>, vector<64x256xf32>, vector<8x256xf32> -> vector<8x256xf32>
    %539 = arith.addf %536, %538 : vector<8x256xf32>
    %c16_206 = arith.constant 16 : index
    %c256_207 = arith.constant 256 : index
    %540 = vector.load %arg14[%c16_206, %c256_207] : memref<64x512xf32, #tpu.memory_space<vmem>>, vector<8x256xf32>
    %c0_208 = arith.constant 0 : index
    %c0_209 = arith.constant 0 : index
    %541 = vector.load %arg7[%c0_208, %c0_209] : memref<64x256xf32, #tpu.memory_space<vmem>>, vector<64x256xf32>
    %cst_210 = arith.constant dense<0.000000e+00> : vector<8x256xf32>
    %542 = tpu.matmul %533, %541, %cst_210 {dimension_numbers = #tpu.dot_dimension_numbers<[1], [0], [0], [1], [0, 0, 1, 1], [], []>} : vector<8x64xf32>, vector<64x256xf32>, vector<8x256xf32> -> vector<8x256xf32>
    %543 = arith.addf %540, %542 : vector<8x256xf32>
    %544 = vector.extract_strided_slice %539 {offsets = [0, 0], sizes = [8, 192], strides = [1, 1]} : vector<8x256xf32> to vector<8x192xf32>
    %545 = arith.negf %544 : vector<8x192xf32>
    %546 = math.exp %545 : vector<8x192xf32>
    %cst_211 = arith.constant 1.000000e+00 : f32
    %547 = vector.broadcast %cst_211 : f32 to vector<8x192xf32>
    %548 = arith.addf %547, %546 : vector<8x192xf32>
    %549 = arith.divf %547, %548 : vector<8x192xf32>
    %550 = vector.extract_strided_slice %539 {offsets = [0, 192], sizes = [8, 64], strides = [1, 1]} : vector<8x256xf32> to vector<8x64xf32>
    %551 = math.tanh %550 : vector<8x64xf32>
    %552 = vector.extract_strided_slice %549 {offsets = [0, 0], sizes = [8, 64], strides = [1, 1]} : vector<8x192xf32> to vector<8x64xf32>
    %553 = vector.extract_strided_slice %549 {offsets = [0, 64], sizes = [8, 64], strides = [1, 1]} : vector<8x192xf32> to vector<8x64xf32>
    %554 = vector.extract_strided_slice %549 {offsets = [0, 128], sizes = [8, 64], strides = [1, 1]} : vector<8x192xf32> to vector<8x64xf32>
    %555 = arith.mulf %553, %515 : vector<8x64xf32>
    %556 = arith.mulf %552, %551 : vector<8x64xf32>
    %557 = arith.addf %555, %556 : vector<8x64xf32>
    %558 = math.tanh %557 : vector<8x64xf32>
    %559 = arith.mulf %554, %558 : vector<8x64xf32>
    %560 = vector.extract_strided_slice %543 {offsets = [0, 0], sizes = [8, 192], strides = [1, 1]} : vector<8x256xf32> to vector<8x192xf32>
    %561 = arith.negf %560 : vector<8x192xf32>
    %562 = math.exp %561 : vector<8x192xf32>
    %cst_212 = arith.constant 1.000000e+00 : f32
    %563 = vector.broadcast %cst_212 : f32 to vector<8x192xf32>
    %564 = arith.addf %563, %562 : vector<8x192xf32>
    %565 = arith.divf %563, %564 : vector<8x192xf32>
    %566 = vector.extract_strided_slice %543 {offsets = [0, 192], sizes = [8, 64], strides = [1, 1]} : vector<8x256xf32> to vector<8x64xf32>
    %567 = math.tanh %566 : vector<8x64xf32>
    %568 = vector.extract_strided_slice %565 {offsets = [0, 0], sizes = [8, 64], strides = [1, 1]} : vector<8x192xf32> to vector<8x64xf32>
    %569 = vector.extract_strided_slice %565 {offsets = [0, 64], sizes = [8, 64], strides = [1, 1]} : vector<8x192xf32> to vector<8x64xf32>
    %570 = vector.extract_strided_slice %565 {offsets = [0, 128], sizes = [8, 64], strides = [1, 1]} : vector<8x192xf32> to vector<8x64xf32>
    %571 = arith.mulf %569, %531 : vector<8x64xf32>
    %572 = arith.mulf %568, %567 : vector<8x64xf32>
    %573 = arith.addf %571, %572 : vector<8x64xf32>
    %574 = math.tanh %573 : vector<8x64xf32>
    %575 = arith.mulf %570, %574 : vector<8x64xf32>
    %c40_213 = arith.constant 40 : index
    %c0_214 = arith.constant 0 : index
    %576 = vector.load %arg9[%c40_213, %c0_214] : memref<64x128xf32, #tpu.memory_space<vmem>>, vector<8x64xf32>
    tpu.vector_store %arg9[%c40_213, %c0_214], %559 {strides = array<i32>} : memref<64x128xf32, #tpu.memory_space<vmem>>, vector<8x64xf32>,
    %c16_215 = arith.constant 16 : index
    %c64_216 = arith.constant 64 : index
    %577 = vector.load %arg9[%c16_215, %c64_216] : memref<64x128xf32, #tpu.memory_space<vmem>>, vector<8x64xf32>
    tpu.vector_store %arg9[%c16_215, %c64_216], %575 {strides = array<i32>} : memref<64x128xf32, #tpu.memory_space<vmem>>, vector<8x64xf32>,
    %c48_217 = arith.constant 48 : index
    %c0_218 = arith.constant 0 : index
    %578 = vector.load %arg14[%c48_217, %c0_218] : memref<64x512xf32, #tpu.memory_space<vmem>>, vector<8x256xf32>
    %c0_219 = arith.constant 0 : index
    %c0_220 = arith.constant 0 : index
    %579 = vector.load %arg6[%c0_219, %c0_220] : memref<64x256xf32, #tpu.memory_space<vmem>>, vector<64x256xf32>
    %cst_221 = arith.constant dense<0.000000e+00> : vector<8x256xf32>
    %580 = tpu.matmul %559, %579, %cst_221 {dimension_numbers = #tpu.dot_dimension_numbers<[1], [0], [0], [1], [0, 0, 1, 1], [], []>} : vector<8x64xf32>, vector<64x256xf32>, vector<8x256xf32> -> vector<8x256xf32>
    %581 = arith.addf %578, %580 : vector<8x256xf32>
    %c8_222 = arith.constant 8 : index
    %c256_223 = arith.constant 256 : index
    %582 = vector.load %arg14[%c8_222, %c256_223] : memref<64x512xf32, #tpu.memory_space<vmem>>, vector<8x256xf32>
    %c0_224 = arith.constant 0 : index
    %c0_225 = arith.constant 0 : index
    %583 = vector.load %arg7[%c0_224, %c0_225] : memref<64x256xf32, #tpu.memory_space<vmem>>, vector<64x256xf32>
    %cst_226 = arith.constant dense<0.000000e+00> : vector<8x256xf32>
    %584 = tpu.matmul %575, %583, %cst_226 {dimension_numbers = #tpu.dot_dimension_numbers<[1], [0], [0], [1], [0, 0, 1, 1], [], []>} : vector<8x64xf32>, vector<64x256xf32>, vector<8x256xf32> -> vector<8x256xf32>
    %585 = arith.addf %582, %584 : vector<8x256xf32>
    %586 = vector.extract_strided_slice %581 {offsets = [0, 0], sizes = [8, 192], strides = [1, 1]} : vector<8x256xf32> to vector<8x192xf32>
    %587 = arith.negf %586 : vector<8x192xf32>
    %588 = math.exp %587 : vector<8x192xf32>
    %cst_227 = arith.constant 1.000000e+00 : f32
    %589 = vector.broadcast %cst_227 : f32 to vector<8x192xf32>
    %590 = arith.addf %589, %588 : vector<8x192xf32>
    %591 = arith.divf %589, %590 : vector<8x192xf32>
    %592 = vector.extract_strided_slice %581 {offsets = [0, 192], sizes = [8, 64], strides = [1, 1]} : vector<8x256xf32> to vector<8x64xf32>
    %593 = math.tanh %592 : vector<8x64xf32>
    %594 = vector.extract_strided_slice %591 {offsets = [0, 0], sizes = [8, 64], strides = [1, 1]} : vector<8x192xf32> to vector<8x64xf32>
    %595 = vector.extract_strided_slice %591 {offsets = [0, 64], sizes = [8, 64], strides = [1, 1]} : vector<8x192xf32> to vector<8x64xf32>
    %596 = vector.extract_strided_slice %591 {offsets = [0, 128], sizes = [8, 64], strides = [1, 1]} : vector<8x192xf32> to vector<8x64xf32>
    %597 = arith.mulf %595, %557 : vector<8x64xf32>
    %598 = arith.mulf %594, %593 : vector<8x64xf32>
    %599 = arith.addf %597, %598 : vector<8x64xf32>
    %600 = math.tanh %599 : vector<8x64xf32>
    %601 = arith.mulf %596, %600 : vector<8x64xf32>
    %602 = vector.extract_strided_slice %585 {offsets = [0, 0], sizes = [8, 192], strides = [1, 1]} : vector<8x256xf32> to vector<8x192xf32>
    %603 = arith.negf %602 : vector<8x192xf32>
    %604 = math.exp %603 : vector<8x192xf32>
    %cst_228 = arith.constant 1.000000e+00 : f32
    %605 = vector.broadcast %cst_228 : f32 to vector<8x192xf32>
    %606 = arith.addf %605, %604 : vector<8x192xf32>
    %607 = arith.divf %605, %606 : vector<8x192xf32>
    %608 = vector.extract_strided_slice %585 {offsets = [0, 192], sizes = [8, 64], strides = [1, 1]} : vector<8x256xf32> to vector<8x64xf32>
    %609 = math.tanh %608 : vector<8x64xf32>
    %610 = vector.extract_strided_slice %607 {offsets = [0, 0], sizes = [8, 64], strides = [1, 1]} : vector<8x192xf32> to vector<8x64xf32>
    %611 = vector.extract_strided_slice %607 {offsets = [0, 64], sizes = [8, 64], strides = [1, 1]} : vector<8x192xf32> to vector<8x64xf32>
    %612 = vector.extract_strided_slice %607 {offsets = [0, 128], sizes = [8, 64], strides = [1, 1]} : vector<8x192xf32> to vector<8x64xf32>
    %613 = arith.mulf %611, %573 : vector<8x64xf32>
    %614 = arith.mulf %610, %609 : vector<8x64xf32>
    %615 = arith.addf %613, %614 : vector<8x64xf32>
    %616 = math.tanh %615 : vector<8x64xf32>
    %617 = arith.mulf %612, %616 : vector<8x64xf32>
    %c48_229 = arith.constant 48 : index
    %c0_230 = arith.constant 0 : index
    %618 = vector.load %arg9[%c48_229, %c0_230] : memref<64x128xf32, #tpu.memory_space<vmem>>, vector<8x64xf32>
    tpu.vector_store %arg9[%c48_229, %c0_230], %601 {strides = array<i32>} : memref<64x128xf32, #tpu.memory_space<vmem>>, vector<8x64xf32>,
    %c8_231 = arith.constant 8 : index
    %c64_232 = arith.constant 64 : index
    %619 = vector.load %arg9[%c8_231, %c64_232] : memref<64x128xf32, #tpu.memory_space<vmem>>, vector<8x64xf32>
    tpu.vector_store %arg9[%c8_231, %c64_232], %617 {strides = array<i32>} : memref<64x128xf32, #tpu.memory_space<vmem>>, vector<8x64xf32>,
    %c56_233 = arith.constant 56 : index
    %c0_234 = arith.constant 0 : index
    %620 = vector.load %arg14[%c56_233, %c0_234] : memref<64x512xf32, #tpu.memory_space<vmem>>, vector<8x256xf32>
    %c0_235 = arith.constant 0 : index
    %c0_236 = arith.constant 0 : index
    %621 = vector.load %arg6[%c0_235, %c0_236] : memref<64x256xf32, #tpu.memory_space<vmem>>, vector<64x256xf32>
    %cst_237 = arith.constant dense<0.000000e+00> : vector<8x256xf32>
    %622 = tpu.matmul %601, %621, %cst_237 {dimension_numbers = #tpu.dot_dimension_numbers<[1], [0], [0], [1], [0, 0, 1, 1], [], []>} : vector<8x64xf32>, vector<64x256xf32>, vector<8x256xf32> -> vector<8x256xf32>
    %623 = arith.addf %620, %622 : vector<8x256xf32>
    %c0_238 = arith.constant 0 : index
    %c256_239 = arith.constant 256 : index
    %624 = vector.load %arg14[%c0_238, %c256_239] : memref<64x512xf32, #tpu.memory_space<vmem>>, vector<8x256xf32>
    %c0_240 = arith.constant 0 : index
    %c0_241 = arith.constant 0 : index
    %625 = vector.load %arg7[%c0_240, %c0_241] : memref<64x256xf32, #tpu.memory_space<vmem>>, vector<64x256xf32>
    %cst_242 = arith.constant dense<0.000000e+00> : vector<8x256xf32>
    %626 = tpu.matmul %617, %625, %cst_242 {dimension_numbers = #tpu.dot_dimension_numbers<[1], [0], [0], [1], [0, 0, 1, 1], [], []>} : vector<8x64xf32>, vector<64x256xf32>, vector<8x256xf32> -> vector<8x256xf32>
    %627 = arith.addf %624, %626 : vector<8x256xf32>
    %628 = vector.extract_strided_slice %623 {offsets = [0, 0], sizes = [8, 192], strides = [1, 1]} : vector<8x256xf32> to vector<8x192xf32>
    %629 = arith.negf %628 : vector<8x192xf32>
    %630 = math.exp %629 : vector<8x192xf32>
    %cst_243 = arith.constant 1.000000e+00 : f32
    %631 = vector.broadcast %cst_243 : f32 to vector<8x192xf32>
    %632 = arith.addf %631, %630 : vector<8x192xf32>
    %633 = arith.divf %631, %632 : vector<8x192xf32>
    %634 = vector.extract_strided_slice %623 {offsets = [0, 192], sizes = [8, 64], strides = [1, 1]} : vector<8x256xf32> to vector<8x64xf32>
    %635 = math.tanh %634 : vector<8x64xf32>
    %636 = vector.extract_strided_slice %633 {offsets = [0, 0], sizes = [8, 64], strides = [1, 1]} : vector<8x192xf32> to vector<8x64xf32>
    %637 = vector.extract_strided_slice %633 {offsets = [0, 64], sizes = [8, 64], strides = [1, 1]} : vector<8x192xf32> to vector<8x64xf32>
    %638 = vector.extract_strided_slice %633 {offsets = [0, 128], sizes = [8, 64], strides = [1, 1]} : vector<8x192xf32> to vector<8x64xf32>
    %639 = arith.mulf %637, %599 : vector<8x64xf32>
    %640 = arith.mulf %636, %635 : vector<8x64xf32>
    %641 = arith.addf %639, %640 : vector<8x64xf32>
    %642 = math.tanh %641 : vector<8x64xf32>
    %643 = arith.mulf %638, %642 : vector<8x64xf32>
    %644 = vector.extract_strided_slice %627 {offsets = [0, 0], sizes = [8, 192], strides = [1, 1]} : vector<8x256xf32> to vector<8x192xf32>
    %645 = arith.negf %644 : vector<8x192xf32>
    %646 = math.exp %645 : vector<8x192xf32>
    %cst_244 = arith.constant 1.000000e+00 : f32
    %647 = vector.broadcast %cst_244 : f32 to vector<8x192xf32>
    %648 = arith.addf %647, %646 : vector<8x192xf32>
    %649 = arith.divf %647, %648 : vector<8x192xf32>
    %650 = vector.extract_strided_slice %627 {offsets = [0, 192], sizes = [8, 64], strides = [1, 1]} : vector<8x256xf32> to vector<8x64xf32>
    %651 = math.tanh %650 : vector<8x64xf32>
    %652 = vector.extract_strided_slice %649 {offsets = [0, 0], sizes = [8, 64], strides = [1, 1]} : vector<8x192xf32> to vector<8x64xf32>
    %653 = vector.extract_strided_slice %649 {offsets = [0, 64], sizes = [8, 64], strides = [1, 1]} : vector<8x192xf32> to vector<8x64xf32>
    %654 = vector.extract_strided_slice %649 {offsets = [0, 128], sizes = [8, 64], strides = [1, 1]} : vector<8x192xf32> to vector<8x64xf32>
    %655 = arith.mulf %653, %615 : vector<8x64xf32>
    %656 = arith.mulf %652, %651 : vector<8x64xf32>
    %657 = arith.addf %655, %656 : vector<8x64xf32>
    %658 = math.tanh %657 : vector<8x64xf32>
    %659 = arith.mulf %654, %658 : vector<8x64xf32>
    %c56_245 = arith.constant 56 : index
    %c0_246 = arith.constant 0 : index
    %660 = vector.load %arg9[%c56_245, %c0_246] : memref<64x128xf32, #tpu.memory_space<vmem>>, vector<8x64xf32>
    tpu.vector_store %arg9[%c56_245, %c0_246], %643 {strides = array<i32>} : memref<64x128xf32, #tpu.memory_space<vmem>>, vector<8x64xf32>,
    %c0_247 = arith.constant 0 : index
    %c64_248 = arith.constant 64 : index
    %661 = vector.load %arg9[%c0_247, %c64_248] : memref<64x128xf32, #tpu.memory_space<vmem>>, vector<8x64xf32>
    tpu.vector_store %arg9[%c0_247, %c64_248], %659 {strides = array<i32>} : memref<64x128xf32, #tpu.memory_space<vmem>>, vector<8x64xf32>,
    %c0_249 = arith.constant 0 : index
    %c0_250 = arith.constant 0 : index
    %c0_251 = arith.constant 0 : index
    %662 = vector.load %arg10[%c0_249, %c0_250, %c0_251] : memref<2x8x64xf32, #tpu.memory_space<vmem>>, vector<1x8x64xf32>
    %663 = vector.shape_cast %662 : vector<1x8x64xf32> to vector<8x64xf32>
    %664 = vector.shape_cast %643 : vector<8x64xf32> to vector<1x8x64xf32>
    tpu.vector_store %arg10[%c0_249, %c0_250, %c0_251], %664 {strides = array<i32>} : memref<2x8x64xf32, #tpu.memory_space<vmem>>, vector<1x8x64xf32>,
    %c1 = arith.constant 1 : index
    %c0_252 = arith.constant 0 : index
    %c0_253 = arith.constant 0 : index
    %665 = vector.load %arg10[%c1, %c0_252, %c0_253] : memref<2x8x64xf32, #tpu.memory_space<vmem>>, vector<1x8x64xf32>
    %666 = vector.shape_cast %665 : vector<1x8x64xf32> to vector<8x64xf32>
    %667 = vector.shape_cast %659 : vector<8x64xf32> to vector<1x8x64xf32>
    tpu.vector_store %arg10[%c1, %c0_252, %c0_253], %667 {strides = array<i32>} : memref<2x8x64xf32, #tpu.memory_space<vmem>>, vector<1x8x64xf32>,
    %c0_254 = arith.constant 0 : index
    %c0_255 = arith.constant 0 : index
    %c0_256 = arith.constant 0 : index
    %668 = vector.load %arg11[%c0_254, %c0_255, %c0_256] : memref<2x8x64xf32, #tpu.memory_space<vmem>>, vector<1x8x64xf32>
    %669 = vector.shape_cast %668 : vector<1x8x64xf32> to vector<8x64xf32>
    %670 = vector.shape_cast %641 : vector<8x64xf32> to vector<1x8x64xf32>
    tpu.vector_store %arg11[%c0_254, %c0_255, %c0_256], %670 {strides = array<i32>} : memref<2x8x64xf32, #tpu.memory_space<vmem>>, vector<1x8x64xf32>,
    %c1_257 = arith.constant 1 : index
    %c0_258 = arith.constant 0 : index
    %c0_259 = arith.constant 0 : index
    %671 = vector.load %arg11[%c1_257, %c0_258, %c0_259] : memref<2x8x64xf32, #tpu.memory_space<vmem>>, vector<1x8x64xf32>
    %672 = vector.shape_cast %671 : vector<1x8x64xf32> to vector<8x64xf32>
    %673 = vector.shape_cast %657 : vector<8x64xf32> to vector<1x8x64xf32>
    tpu.vector_store %arg11[%c1_257, %c0_258, %c0_259], %673 {strides = array<i32>} : memref<2x8x64xf32, #tpu.memory_space<vmem>>, vector<1x8x64xf32>,
    return
  }
}

</mosaic_0001>

<llo_original>
// kernel: encoder_forward.1
$region0: #{encoder_forward.1}
  #allocation0 [shape = 'u32[]', space=smem, size = 0x4, offset = 0x4, fixed_abs, tag = 'smem constant byte address 0x4 - core index']
  #allocation1 [shape = 'u32[144,128]{1,0:T(1,128)}', space=vmem, size = 0x12000, scoped, tag = 'internal scratch']
  #allocation2 [shape = 'f32[64,1024]{1,0:T(8,128)}', space=vmem, size = 0x40000, scoped, tag = 'scratch operand']
  #allocation3 [shape = 'f32[64,256]{1,0:T(8,128)}', space=vmem, size = 0x10000, scoped, tag = 'scratch operand']
  #allocation4 [shape = 'f32[64,512]{1,0:T(8,128)}', space=vmem, size = 0x20000, scoped, tag = 'scratch operand']
  %s0 = inlined_call_operand.vmem [shape: f32[64,8], index: 0, kind: input, shape index: {}]
  %s1 = inlined_call_operand.vmem [shape: f32[8,1024], index: 1, kind: input, shape index: {}]
  %s2 = inlined_call_operand.vmem [shape: f32[128,512], index: 2, kind: input, shape index: {}]
  %s3 = inlined_call_operand.vmem [shape: f32[128,512], index: 3, kind: input, shape index: {}]
  %s4 = inlined_call_operand.vmem [shape: f32[1,1024], index: 4, kind: input, shape index: {}]
  %s5 = inlined_call_operand.vmem [shape: f32[256,512], index: 5, kind: input, shape index: {}]
  %s6 = inlined_call_operand.vmem [shape: f32[64,256], index: 6, kind: input, shape index: {}]
  %s7 = inlined_call_operand.vmem [shape: f32[64,256], index: 7, kind: input, shape index: {}]
  %s8 = inlined_call_operand.vmem [shape: f32[1,512], index: 8, kind: input, shape index: {}]
  %s9 = inlined_call_operand.vmem [shape: f32[64,128], index: 9, kind: output, shape index: {0}]
  %s10 = inlined_call_operand.vmem [shape: f32[2,8,64], index: 10, kind: output, shape index: {1}]
  %s11 = inlined_call_operand.vmem [shape: f32[2,8,64], index: 11, kind: output, shape index: {2}]
  %12 = xla_tuple %s9, %s10, %s11
  %s13 = sld [smem:[#allocation0]]
  $region62: #{encoder_forward.1} parent=0
    _
  %s15 = ssub.s32 1, %s13
  %s16 = scalar_select 0, %s15, %s13
  // Predicated region
  $region2: #{encoder_forward.1} parent=0 // pred_check
    _
  $region3: #{encoder_forward.1} parent=0 // pred_check_branch
    %18 = sbr.rel (0) target = $region5
  $region4: #{encoder_forward.1} parent=0 // pred_region
    _
  $region5: #{encoder_forward.1} parent=0 // pred_fallthru
    _
  // Predicated region
  $region6: #{encoder_forward.1} parent=0 // pred_check
    _
  $region7: #{encoder_forward.1} parent=0 // pred_check_branch
    %20 = sbr.rel (0) target = $region9
  $region8: #{encoder_forward.1} parent=0 // pred_region
    _
  $region9: #{encoder_forward.1} parent=0 // pred_fallthru
    _
  // Predicated region
  $region10: #{encoder_forward.1} parent=0 // pred_check
    _
  $region11: #{encoder_forward.1} parent=0 // pred_check_branch
    %22 = sbr.rel (0) target = $region13
  $region12: #{encoder_forward.1} parent=0 // pred_region
    _
  $region13: #{encoder_forward.1} parent=0 // pred_fallthru
    _
  // Predicated region
  $region14: #{encoder_forward.1} parent=0 // pred_check
    _
  $region15: #{encoder_forward.1} parent=0 // pred_check_branch
    %24 = sbr.rel (0) target = $region17
  $region16: #{encoder_forward.1} parent=0 // pred_region
    _
  $region17: #{encoder_forward.1} parent=0 // pred_fallthru
    _
  // Predicated region
  $region18: #{encoder_forward.1} parent=0 // pred_check
    _
  $region19: #{encoder_forward.1} parent=0 // pred_check_branch
    %26 = sbr.rel (0) target = $region21
  $region20: #{encoder_forward.1} parent=0 // pred_region
    _
  $region21: #{encoder_forward.1} parent=0 // pred_fallthru
    _
  // Predicated region
  $region22: #{encoder_forward.1} parent=0 // pred_check
    _
  $region23: #{encoder_forward.1} parent=0 // pred_check_branch
    %28 = sbr.rel (0) target = $region25
  $region24: #{encoder_forward.1} parent=0 // pred_region
    _
  $region25: #{encoder_forward.1} parent=0 // pred_fallthru
    _
  // Predicated region
  $region26: #{encoder_forward.1} parent=0 // pred_check
    _
  $region27: #{encoder_forward.1} parent=0 // pred_check_branch
    %30 = sbr.rel (0) target = $region29
  $region28: #{encoder_forward.1} parent=0 // pred_region
    _
  $region29: #{encoder_forward.1} parent=0 // pred_fallthru
    _
  // Predicated region
  $region30: #{encoder_forward.1} parent=0 // pred_check
    _
  $region31: #{encoder_forward.1} parent=0 // pred_check_branch
    %32 = sbr.rel (0) target = $region33
  $region32: #{encoder_forward.1} parent=0 // pred_region
    _
  $region33: #{encoder_forward.1} parent=0 // pred_fallthru
    _
  // Predicated region
  $region34: #{encoder_forward.1} parent=0 // pred_check
    _
  $region35: #{encoder_forward.1} parent=0 // pred_check_branch
    %34 = sbr.rel (0) target = $region37
  $region36: #{encoder_forward.1} parent=0 // pred_region
    _
  $region37: #{encoder_forward.1} parent=0 // pred_fallthru
    _
  %v35 = vld [vmem:[%s0] sm:$0xff]
  %v36 = vld [vmem:[%s0 + $0x8] sm:$0xff]
  %v37 = vld [vmem:[%s0 + $0x10] sm:$0xff]
  %v38 = vld [vmem:[%s0 + $0x18] sm:$0xff]
  %v39 = vld [vmem:[%s0 + $0x20] sm:$0xff]
  %v40 = vld [vmem:[%s0 + $0x28] sm:$0xff]
  %v41 = vld [vmem:[%s0 + $0x30] sm:$0xff]
  %v42 = vld [vmem:[%s0 + $0x38] sm:$0xff]
  %v43 = vld [vmem:[%s1] sm:$0xff]
  %v44 = vld [vmem:[%s1 + $0x8] sm:$0xff]
  %v45 = vld [vmem:[%s1 + $0x10] sm:$0xff]
  %v46 = vld [vmem:[%s1 + $0x18] sm:$0xff]
  %v47 = vld [vmem:[%s1 + $0x20] sm:$0xff]
  %v48 = vld [vmem:[%s1 + $0x28] sm:$0xff]
  %v49 = vld [vmem:[%s1 + $0x30] sm:$0xff]
  %v50 = vld [vmem:[%s1 + $0x38] sm:$0xff]
  %v51 = vld [vmem:[%s4] sm:$0xff]
  %v53 = vlaneseq
  %v54 = vshrl.u32 %v53, 7
  %v55 = vsub.s32 0, %v54
  %v56 = vrot.slane %v51, %v55
  %v57 = vlaneseq
  %v58 = vshrl.u32 %v57, 7
  %v59 = vsub.s32 1, %v58
  %v60 = vrot.slane %v51, %v59
  %v61 = vlaneseq
  %v62 = vshrl.u32 %v61, 7
  %v63 = vsub.s32 2, %v62
  %v64 = vrot.slane %v51, %v63
  %v65 = vlaneseq
  %v66 = vshrl.u32 %v65, 7
  %v67 = vsub.s32 3, %v66
  %v68 = vrot.slane %v51, %v67
  %v69 = vlaneseq
  %v70 = vshrl.u32 %v69, 7
  %v71 = vsub.s32 4, %v70
  %v72 = vrot.slane %v51, %v71
  %v73 = vlaneseq
  %v74 = vshrl.u32 %v73, 7
  %v75 = vsub.s32 5, %v74
  %v76 = vrot.slane %v51, %v75
  %v77 = vlaneseq
  %v78 = vshrl.u32 %v77, 7
  %v79 = vsub.s32 6, %v78
  %v80 = vrot.slane %v51, %v79
  %v81 = vlaneseq
  %v82 = vshrl.u32 %v81, 7
  %v83 = vsub.s32 7, %v82
  %v84 = vrot.slane %v51, %v83
  %vm93 = vcmask 64512
  %v95 = vsel %vm93, %v35, 0
  %v98 = vsel %vm93, %v36, 0
  %v101 = vsel %vm93, %v37, 0
  %v104 = vsel %vm93, %v38, 0
  %v107 = vsel %vm93, %v39, 0
  %v110 = vsel %vm93, %v40, 0
  %v113 = vsel %vm93, %v41, 0
  %v116 = vsel %vm93, %v42, 0
  %118 = vmatprep.subr.mxu0 %v44
  %119 = vmatpush1.msra.mxu0 %v43
  %120 = vmatprep.subr.mxu0 0.0
  %121 = vmatpush1.msra.mxu0 0.0
  %122 = vmatprep.subr.mxu0 0.0
  %123 = vmatpush1.msra.mxu0 0.0
  %124 = vmatprep.subr.mxu0 0.0
  %125 = vmatpush1.msra.mxu0 0.0
  %126 = vmatprep.subr.mxu0 0.0
  %127 = vmatpush1.msra.mxu0 0.0
  %128 = vmatprep.subr.mxu0 0.0
  %129 = vmatpush1.msra.mxu0 0.0
  %130 = vmatprep.subr.mxu0 0.0
  %131 = vmatpush1.msra.mxu0 0.0
  %132 = vmatprep.subr.mxu0 0.0
  %133 = vmatpush1.msra.mxu0 0.0
  %134 = vmatprep.subr.mxu0 0.0
  %135 = vmatpush1.msra.mxu0 0.0
  %136 = vmatprep.subr.mxu0 0.0
  %137 = vmatpush1.msra.mxu0 0.0
  %138 = vmatprep.subr.mxu0 0.0
  %139 = vmatpush1.msra.mxu0 0.0
  %140 = vmatprep.subr.mxu0 0.0
  %141 = vmatpush1.msra.mxu0 0.0
  %142 = vmatprep.subr.mxu0 0.0
  %143 = vmatpush1.msra.mxu0 0.0
  %144 = vmatprep.subr.mxu0 0.0
  %145 = vmatpush1.msra.mxu0 0.0
  %146 = vmatprep.subr.mxu0 0.0
  %147 = vmatpush1.msra.mxu0 0.0
  %148 = vmatprep.subr.mxu0 0.0
  %149 = vmatpush1.msra.mxu0 0.0
  %150 = vmatprep.subr.mxu0 0.0
  %151 = vmatpush1.msra.mxu0 0.0
  %152 = vmatprep.subr.mxu0 0.0
  %153 = vmatpush1.msra.mxu0 0.0
  %154 = vmatprep.subr.mxu0 0.0
  %155 = vmatpush1.msra.mxu0 0.0
  %156 = vmatprep.subr.mxu0 0.0
  %157 = vmatpush1.msra.mxu0 0.0
  %158 = vmatprep.subr.mxu0 0.0
  %159 = vmatpush1.msra.mxu0 0.0
  %160 = vmatprep.subr.mxu0 0.0
  %161 = vmatpush1.msra.mxu0 0.0
  %162 = vmatprep.subr.mxu0 0.0
  %163 = vmatpush1.msra.mxu0 0.0
  %164 = vmatprep.subr.mxu0 0.0
  %165 = vmatpush1.msra.mxu0 0.0
  %166 = vmatprep.subr.mxu0 0.0
  %167 = vmatpush1.msra.mxu0 0.0
  %168 = vmatprep.subr.mxu0 0.0
  %169 = vmatpush1.msra.mxu0 0.0
  %170 = vmatprep.subr.mxu0 0.0
  %171 = vmatpush1.msra.mxu0 0.0
  %172 = vmatprep.subr.mxu0 0.0
  %173 = vmatpush1.msra.mxu0 0.0
  %174 = vmatprep.subr.mxu0 0.0
  %175 = vmatpush1.msra.mxu0 0.0
  %176 = vmatprep.subr.mxu0 0.0
  %177 = vmatpush1.msra.mxu0 0.0
  %178 = vmatprep.subr.mxu0 0.0
  %179 = vmatpush1.msra.mxu0 0.0
  %180 = vmatprep.subr.mxu0 0.0
  %181 = vmatpush1.msra.mxu0 0.0
  %182 = vmatprep.mubr.f32.mxu0 0.0
  %183 = vmatmul.mubr.f32.gmra.mrb[0].mxu0 %v95
  %v184 = vpop.f32.mrb[0].mxu0
  %v185 = vadd.f32 %v56, %v184
  %v186 = vpop.f32.mrb[0].mxu0
  %v187 = vadd.f32 %v60, %v186
  %188 = vmatprep.mubr.f32.mxu0 0.0
  %189 = vmatmul.mubr.f32.gmra.mrb[0].mxu0 %v98
  %v190 = vpop.f32.mrb[0].mxu0
  %v191 = vadd.f32 %v56, %v190
  %v192 = vpop.f32.mrb[0].mxu0
  %v193 = vadd.f32 %v60, %v192
  %194 = vmatprep.mubr.f32.mxu0 0.0
  %195 = vmatmul.mubr.f32.gmra.mrb[0].mxu0 %v101
  %v196 = vpop.f32.mrb[0].mxu0
  %v197 = vadd.f32 %v56, %v196
  %v198 = vpop.f32.mrb[0].mxu0
  %v199 = vadd.f32 %v60, %v198
  %200 = vmatprep.mubr.f32.mxu0 0.0
  %201 = vmatmul.mubr.f32.gmra.mrb[0].mxu0 %v104
  %v202 = vpop.f32.mrb[0].mxu0
  %v203 = vadd.f32 %v56, %v202
  %v204 = vpop.f32.mrb[0].mxu0
  %v205 = vadd.f32 %v60, %v204
  %206 = vmatprep.mubr.f32.mxu0 0.0
  %207 = vmatmul.mubr.f32.gmra.mrb[0].mxu0 %v107
  %v208 = vpop.f32.mrb[0].mxu0
  %v209 = vadd.f32 %v56, %v208
  %v210 = vpop.f32.mrb[0].mxu0
  %v211 = vadd.f32 %v60, %v210
  %212 = vmatprep.mubr.f32.mxu0 0.0
  %213 = vmatmul.mubr.f32.gmra.mrb[0].mxu0 %v110
  %v214 = vpop.f32.mrb[0].mxu0
  %v215 = vadd.f32 %v56, %v214
  %v216 = vpop.f32.mrb[0].mxu0
  %v217 = vadd.f32 %v60, %v216
  %218 = vmatprep.mubr.f32.mxu0 0.0
  %219 = vmatmul.mubr.f32.gmra.mrb[0].mxu0 %v113
  %v220 = vpop.f32.mrb[0].mxu0
  %v221 = vadd.f32 %v56, %v220
  %v222 = vpop.f32.mrb[0].mxu0
  %v223 = vadd.f32 %v60, %v222
  %224 = vmatprep.mubr.f32.mxu0 0.0
  %225 = vmatmul.mubr.f32.gmra.mrb[0].mxu0 %v116
  %v226 = vpop.f32.mrb[0].mxu0
  %v227 = vadd.f32 %v56, %v226
  %v228 = vpop.f32.mrb[0].mxu0
  %v229 = vadd.f32 %v60, %v228
  %230 = vdwg.mxu0
  %231 = vmatprep.subr.mxu0 %v46
  %232 = vmatpush1.msra.mxu0 %v45
  %233 = vmatprep.subr.mxu0 0.0
  %234 = vmatpush1.msra.mxu0 0.0
  %235 = vmatprep.subr.mxu0 0.0
  %236 = vmatpush1.msra.mxu0 0.0
  %237 = vmatprep.subr.mxu0 0.0
  %238 = vmatpush1.msra.mxu0 0.0
  %239 = vmatprep.subr.mxu0 0.0
  %240 = vmatpush1.msra.mxu0 0.0
  %241 = vmatprep.subr.mxu0 0.0
  %242 = vmatpush1.msra.mxu0 0.0
  %243 = vmatprep.subr.mxu0 0.0
  %244 = vmatpush1.msra.mxu0 0.0
  %245 = vmatprep.subr.mxu0 0.0
  %246 = vmatpush1.msra.mxu0 0.0
  %247 = vmatprep.subr.mxu0 0.0
  %248 = vmatpush1.msra.mxu0 0.0
  %249 = vmatprep.subr.mxu0 0.0
  %250 = vmatpush1.msra.mxu0 0.0
  %251 = vmatprep.subr.mxu0 0.0
  %252 = vmatpush1.msra.mxu0 0.0
  %253 = vmatprep.subr.mxu0 0.0
  %254 = vmatpush1.msra.mxu0 0.0
  %255 = vmatprep.subr.mxu0 0.0
  %256 = vmatpush1.msra.mxu0 0.0
  %257 = vmatprep.subr.mxu0 0.0
  %258 = vmatpush1.msra.mxu0 0.0
  %259 = vmatprep.subr.mxu0 0.0
  %260 = vmatpush1.msra.mxu0 0.0
  %261 = vmatprep.subr.mxu0 0.0
  %262 = vmatpush1.msra.mxu0 0.0
  %263 = vmatprep.subr.mxu0 0.0
  %264 = vmatpush1.msra.mxu0 0.0
  %265 = vmatprep.subr.mxu0 0.0
  %266 = vmatpush1.msra.mxu0 0.0
  %267 = vmatprep.subr.mxu0 0.0
  %268 = vmatpush1.msra.mxu0 0.0
  %269 = vmatprep.subr.mxu0 0.0
  %270 = vmatpush1.msra.mxu0 0.0
  %271 = vmatprep.subr.mxu0 0.0
  %272 = vmatpush1.msra.mxu0 0.0
  %273 = vmatprep.subr.mxu0 0.0
  %274 = vmatpush1.msra.mxu0 0.0
  %275 = vmatprep.subr.mxu0 0.0
  %276 = vmatpush1.msra.mxu0 0.0
  %277 = vmatprep.subr.mxu0 0.0
  %278 = vmatpush1.msra.mxu0 0.0
  %279 = vmatprep.subr.mxu0 0.0
  %280 = vmatpush1.msra.mxu0 0.0
  %281 = vmatprep.subr.mxu0 0.0
  %282 = vmatpush1.msra.mxu0 0.0
  %283 = vmatprep.subr.mxu0 0.0
  %284 = vmatpush1.msra.mxu0 0.0
  %285 = vmatprep.subr.mxu0 0.0
  %286 = vmatpush1.msra.mxu0 0.0
  %287 = vmatprep.subr.mxu0 0.0
  %288 = vmatpush1.msra.mxu0 0.0
  %289 = vmatprep.subr.mxu0 0.0
  %290 = vmatpush1.msra.mxu0 0.0
  %291 = vmatprep.subr.mxu0 0.0
  %292 = vmatpush1.msra.mxu0 0.0
  %293 = vmatprep.subr.mxu0 0.0
  %294 = vmatpush1.msra.mxu0 0.0
  %295 = vmatprep.mubr.f32.mxu0 0.0
  %296 = vmatmul.mubr.f32.gmra.mrb[0].mxu0 %v95
  %v297 = vpop.f32.mrb[0].mxu0
  %v298 = vadd.f32 %v64, %v297
  %v299 = vpop.f32.mrb[0].mxu0
  %v300 = vadd.f32 %v68, %v299
  %301 = vmatprep.mubr.f32.mxu0 0.0
  %302 = vmatmul.mubr.f32.gmra.mrb[0].mxu0 %v98
  %v303 = vpop.f32.mrb[0].mxu0
  %v304 = vadd.f32 %v64, %v303
  %v305 = vpop.f32.mrb[0].mxu0
  %v306 = vadd.f32 %v68, %v305
  %307 = vmatprep.mubr.f32.mxu0 0.0
  %308 = vmatmul.mubr.f32.gmra.mrb[0].mxu0 %v101
  %v309 = vpop.f32.mrb[0].mxu0
  %v310 = vadd.f32 %v64, %v309
  %v311 = vpop.f32.mrb[0].mxu0
  %v312 = vadd.f32 %v68, %v311
  %313 = vmatprep.mubr.f32.mxu0 0.0
  %314 = vmatmul.mubr.f32.gmra.mrb[0].mxu0 %v104
  %v315 = vpop.f32.mrb[0].mxu0
  %v316 = vadd.f32 %v64, %v315
  %v317 = vpop.f32.mrb[0].mxu0
  %v318 = vadd.f32 %v68, %v317
  %319 = vmatprep.mubr.f32.mxu0 0.0
  %320 = vmatmul.mubr.f32.gmra.mrb[0].mxu0 %v107
  %v321 = vpop.f32.mrb[0].mxu0
  %v322 = vadd.f32 %v64, %v321
  %v323 = vpop.f32.mrb[0].mxu0
  %v324 = vadd.f32 %v68, %v323
  %325 = vmatprep.mubr.f32.mxu0 0.0
  %326 = vmatmul.mubr.f32.gmra.mrb[0].mxu0 %v110
  %v327 = vpop.f32.mrb[0].mxu0
  %v328 = vadd.f32 %v64, %v327
  %v329 = vpop.f32.mrb[0].mxu0
  %v330 = vadd.f32 %v68, %v329
  %331 = vmatprep.mubr.f32.mxu0 0.0
  %332 = vmatmul.mubr.f32.gmra.mrb[0].mxu0 %v113
  %v333 = vpop.f32.mrb[0].mxu0
  %v334 = vadd.f32 %v64, %v333
  %v335 = vpop.f32.mrb[0].mxu0
  %v336 = vadd.f32 %v68, %v335
  %337 = vmatprep.mubr.f32.mxu0 0.0
  %338 = vmatmul.mubr.f32.gmra.mrb[0].mxu0 %v116
  %v339 = vpop.f32.mrb[0].mxu0
  %v340 = vadd.f32 %v64, %v339
  %v341 = vpop.f32.mrb[0].mxu0
  %v342 = vadd.f32 %v68, %v341
  %343 = vdwg.mxu0
  %344 = vmatprep.subr.mxu0 %v48
  %345 = vmatpush1.msra.mxu0 %v47
  %346 = vmatprep.subr.mxu0 0.0
  %347 = vmatpush1.msra.mxu0 0.0
  %348 = vmatprep.subr.mxu0 0.0
  %349 = vmatpush1.msra.mxu0 0.0
  %350 = vmatprep.subr.mxu0 0.0
  %351 = vmatpush1.msra.mxu0 0.0
  %352 = vmatprep.subr.mxu0 0.0
  %353 = vmatpush1.msra.mxu0 0.0
  %354 = vmatprep.subr.mxu0 0.0
  %355 = vmatpush1.msra.mxu0 0.0
  %356 = vmatprep.subr.mxu0 0.0
  %357 = vmatpush1.msra.mxu0 0.0
  %358 = vmatprep.subr.mxu0 0.0
  %359 = vmatpush1.msra.mxu0 0.0
  %360 = vmatprep.subr.mxu0 0.0
  %361 = vmatpush1.msra.mxu0 0.0
  %362 = vmatprep.subr.mxu0 0.0
  %363 = vmatpush1.msra.mxu0 0.0
  %364 = vmatprep.subr.mxu0 0.0
  %365 = vmatpush1.msra.mxu0 0.0
  %366 = vmatprep.subr.mxu0 0.0
  %367 = vmatpush1.msra.mxu0 0.0
  %368 = vmatprep.subr.mxu0 0.0
  %369 = vmatpush1.msra.mxu0 0.0
  %370 = vmatprep.subr.mxu0 0.0
  %371 = vmatpush1.msra.mxu0 0.0
  %372 = vmatprep.subr.mxu0 0.0
  %373 = vmatpush1.msra.mxu0 0.0
  %374 = vmatprep.subr.mxu0 0.0
  %375 = vmatpush1.msra.mxu0 0.0
  %376 = vmatprep.subr.mxu0 0.0
  %377 = vmatpush1.msra.mxu0 0.0
  %378 = vmatprep.subr.mxu0 0.0
  %379 = vmatpush1.msra.mxu0 0.0
  %380 = vmatprep.subr.mxu0 0.0
  %381 = vmatpush1.msra.mxu0 0.0
  %382 = vmatprep.subr.mxu0 0.0
  %383 = vmatpush1.msra.mxu0 0.0
  %384 = vmatprep.subr.mxu0 0.0
  %385 = vmatpush1.msra.mxu0 0.0
  %386 = vmatprep.subr.mxu0 0.0
  %387 = vmatpush1.msra.mxu0 0.0
  %388 = vmatprep.subr.mxu0 0.0
  %389 = vmatpush1.msra.mxu0 0.0
  %390 = vmatprep.subr.mxu0 0.0
  %391 = vmatpush1.msra.mxu0 0.0
  %392 = vmatprep.subr.mxu0 0.0
  %393 = vmatpush1.msra.mxu0 0.0
  %394 = vmatprep.subr.mxu0 0.0
  %395 = vmatpush1.msra.mxu0 0.0
  %396 = vmatprep.subr.mxu0 0.0
  %397 = vmatpush1.msra.mxu0 0.0
  %398 = vmatprep.subr.mxu0 0.0
  %399 = vmatpush1.msra.mxu0 0.0
  %400 = vmatprep.subr.mxu0 0.0
  %401 = vmatpush1.msra.mxu0 0.0
  %402 = vmatprep.subr.mxu0 0.0
  %403 = vmatpush1.msra.mxu0 0.0
  %404 = vmatprep.subr.mxu0 0.0
  %405 = vmatpush1.msra.mxu0 0.0
  %406 = vmatprep.subr.mxu0 0.0
  %407 = vmatpush1.msra.mxu0 0.0
  %408 = vmatprep.mubr.f32.mxu0 0.0
  %409 = vmatmul.mubr.f32.gmra.mrb[0].mxu0 %v95
  %v410 = vpop.f32.mrb[0].mxu0
  %v411 = vadd.f32 %v72, %v410
  %v412 = vpop.f32.mrb[0].mxu0
  %v413 = vadd.f32 %v76, %v412
  %414 = vmatprep.mubr.f32.mxu0 0.0
  %415 = vmatmul.mubr.f32.gmra.mrb[0].mxu0 %v98
  %v416 = vpop.f32.mrb[0].mxu0
  %v417 = vadd.f32 %v72, %v416
  %v418 = vpop.f32.mrb[0].mxu0
  %v419 = vadd.f32 %v76, %v418
  %420 = vmatprep.mubr.f32.mxu0 0.0
  %421 = vmatmul.mubr.f32.gmra.mrb[0].mxu0 %v101
  %v422 = vpop.f32.mrb[0].mxu0
  %v423 = vadd.f32 %v72, %v422
  %v424 = vpop.f32.mrb[0].mxu0
  %v425 = vadd.f32 %v76, %v424
  %426 = vmatprep.mubr.f32.mxu0 0.0
  %427 = vmatmul.mubr.f32.gmra.mrb[0].mxu0 %v104
  %v428 = vpop.f32.mrb[0].mxu0
  %v429 = vadd.f32 %v72, %v428
  %v430 = vpop.f32.mrb[0].mxu0
  %v431 = vadd.f32 %v76, %v430
  %432 = vmatprep.mubr.f32.mxu0 0.0
  %433 = vmatmul.mubr.f32.gmra.mrb[0].mxu0 %v107
  %v434 = vpop.f32.mrb[0].mxu0
  %v435 = vadd.f32 %v72, %v434
  %v436 = vpop.f32.mrb[0].mxu0
  %v437 = vadd.f32 %v76, %v436
  %438 = vmatprep.mubr.f32.mxu0 0.0
  %439 = vmatmul.mubr.f32.gmra.mrb[0].mxu0 %v110
  %v440 = vpop.f32.mrb[0].mxu0
  %v441 = vadd.f32 %v72, %v440
  %v442 = vpop.f32.mrb[0].mxu0
  %v443 = vadd.f32 %v76, %v442
  %444 = vmatprep.mubr.f32.mxu0 0.0
  %445 = vmatmul.mubr.f32.gmra.mrb[0].mxu0 %v113
  %v446 = vpop.f32.mrb[0].mxu0
  %v447 = vadd.f32 %v72, %v446
  %v448 = vpop.f32.mrb[0].mxu0
  %v449 = vadd.f32 %v76, %v448
  %450 = vmatprep.mubr.f32.mxu0 0.0
  %451 = vmatmul.mubr.f32.gmra.mrb[0].mxu0 %v116
  %v452 = vpop.f32.mrb[0].mxu0
  %v453 = vadd.f32 %v72, %v452
  %v454 = vpop.f32.mrb[0].mxu0
  %v455 = vadd.f32 %v76, %v454
  %456 = vdwg.mxu0
  %457 = vmatprep.subr.mxu0 %v50
  %458 = vmatpush1.msra.mxu0 %v49
  %459 = vmatprep.subr.mxu0 0.0
  %460 = vmatpush1.msra.mxu0 0.0
  %461 = vmatprep.subr.mxu0 0.0
  %462 = vmatpush1.msra.mxu0 0.0
  %463 = vmatprep.subr.mxu0 0.0
  %464 = vmatpush1.msra.mxu0 0.0
  %465 = vmatprep.subr.mxu0 0.0
  %466 = vmatpush1.msra.mxu0 0.0
  %467 = vmatprep.subr.mxu0 0.0
  %468 = vmatpush1.msra.mxu0 0.0
  %469 = vmatprep.subr.mxu0 0.0
  %470 = vmatpush1.msra.mxu0 0.0
  %471 = vmatprep.subr.mxu0 0.0
  %472 = vmatpush1.msra.mxu0 0.0
  %473 = vmatprep.subr.mxu0 0.0
  %474 = vmatpush1.msra.mxu0 0.0
  %475 = vmatprep.subr.mxu0 0.0
  %476 = vmatpush1.msra.mxu0 0.0
  %477 = vmatprep.subr.mxu0 0.0
  %478 = vmatpush1.msra.mxu0 0.0
  %479 = vmatprep.subr.mxu0 0.0
  %480 = vmatpush1.msra.mxu0 0.0
  %481 = vmatprep.subr.mxu0 0.0
  %482 = vmatpush1.msra.mxu0 0.0
  %483 = vmatprep.subr.mxu0 0.0
  %484 = vmatpush1.msra.mxu0 0.0
  %485 = vmatprep.subr.mxu0 0.0
  %486 = vmatpush1.msra.mxu0 0.0
  %487 = vmatprep.subr.mxu0 0.0
  %488 = vmatpush1.msra.mxu0 0.0
  %489 = vmatprep.subr.mxu0 0.0
  %490 = vmatpush1.msra.mxu0 0.0
  %491 = vmatprep.subr.mxu0 0.0
  %492 = vmatpush1.msra.mxu0 0.0
  %493 = vmatprep.subr.mxu0 0.0
  %494 = vmatpush1.msra.mxu0 0.0
  %495 = vmatprep.subr.mxu0 0.0
  %496 = vmatpush1.msra.mxu0 0.0
  %497 = vmatprep.subr.mxu0 0.0
  %498 = vmatpush1.msra.mxu0 0.0
  %499 = vmatprep.subr.mxu0 0.0
  %500 = vmatpush1.msra.mxu0 0.0
  %501 = vmatprep.subr.mxu0 0.0
  %502 = vmatpush1.msra.mxu0 0.0
  %503 = vmatprep.subr.mxu0 0.0
  %504 = vmatpush1.msra.mxu0 0.0
  %505 = vmatprep.subr.mxu0 0.0
  %506 = vmatpush1.msra.mxu0 0.0
  %507 = vmatprep.subr.mxu0 0.0
  %508 = vmatpush1.msra.mxu0 0.0
  %509 = vmatprep.subr.mxu0 0.0
  %510 = vmatpush1.msra.mxu0 0.0
  %511 = vmatprep.subr.mxu0 0.0
  %512 = vmatpush1.msra.mxu0 0.0
  %513 = vmatprep.subr.mxu0 0.0
  %514 = vmatpush1.msra.mxu0 0.0
  %515 = vmatprep.subr.mxu0 0.0
  %516 = vmatpush1.msra.mxu0 0.0
  %517 = vmatprep.subr.mxu0 0.0
  %518 = vmatpush1.msra.mxu0 0.0
  %519 = vmatprep.subr.mxu0 0.0
  %520 = vmatpush1.msra.mxu0 0.0
  %521 = vmatprep.mubr.f32.mxu0 0.0
  %522 = vmatmul.mubr.f32.gmra.mrb[0].mxu0 %v95
  %v523 = vpop.f32.mrb[0].mxu0
  %v524 = vadd.f32 %v80, %v523
  %v525 = vpop.f32.mrb[0].mxu0
  %v526 = vadd.f32 %v84, %v525
  %527 = vmatprep.mubr.f32.mxu0 0.0
  %528 = vmatmul.mubr.f32.gmra.mrb[0].mxu0 %v98
  %v529 = vpop.f32.mrb[0].mxu0
  %v530 = vadd.f32 %v80, %v529
  %v531 = vpop.f32.mrb[0].mxu0
  %v532 = vadd.f32 %v84, %v531
  %533 = vmatprep.mubr.f32.mxu0 0.0
  %534 = vmatmul.mubr.f32.gmra.mrb[0].mxu0 %v101
  %v535 = vpop.f32.mrb[0].mxu0
  %v536 = vadd.f32 %v80, %v535
  %v537 = vpop.f32.mrb[0].mxu0
  %v538 = vadd.f32 %v84, %v537
  %539 = vmatprep.mubr.f32.mxu0 0.0
  %540 = vmatmul.mubr.f32.gmra.mrb[0].mxu0 %v104
  %v541 = vpop.f32.mrb[0].mxu0
  %v542 = vadd.f32 %v80, %v541
  %v543 = vpop.f32.mrb[0].mxu0
  %v544 = vadd.f32 %v84, %v543
  %545 = vmatprep.mubr.f32.mxu0 0.0
  %546 = vmatmul.mubr.f32.gmra.mrb[0].mxu0 %v107
  %v547 = vpop.f32.mrb[0].mxu0
  %v548 = vadd.f32 %v80, %v547
  %v549 = vpop.f32.mrb[0].mxu0
  %v550 = vadd.f32 %v84, %v549
  %551 = vmatprep.mubr.f32.mxu0 0.0
  %552 = vmatmul.mubr.f32.gmra.mrb[0].mxu0 %v110
  %v553 = vpop.f32.mrb[0].mxu0
  %v554 = vadd.f32 %v80, %v553
  %v555 = vpop.f32.mrb[0].mxu0
  %v556 = vadd.f32 %v84, %v555
  %557 = vmatprep.mubr.f32.mxu0 0.0
  %558 = vmatmul.mubr.f32.gmra.mrb[0].mxu0 %v113
  %v559 = vpop.f32.mrb[0].mxu0
  %v560 = vadd.f32 %v80, %v559
  %v561 = vpop.f32.mrb[0].mxu0
  %v562 = vadd.f32 %v84, %v561
  %563 = vmatprep.mubr.f32.mxu0 0.0
  %564 = vmatmul.mubr.f32.gmra.mrb[0].mxu0 %v116
  %v565 = vpop.f32.mrb[0].mxu0
  %v566 = vadd.f32 %v80, %v565
  %v567 = vpop.f32.mrb[0].mxu0
  %v568 = vadd.f32 %v84, %v567
  %569 = vdwg.mxu0
  %570 = vst [vmem:[#allocation2] sm:$0xff] %v185
  %571 = vst [vmem:[#allocation2 + $0x8] sm:$0xff] %v187
  %572 = vst [vmem:[#allocation2 + $0x10] sm:$0xff] %v298
  %573 = vst [vmem:[#allocation2 + $0x18] sm:$0xff] %v300
  %574 = vst [vmem:[#allocation2 + $0x20] sm:$0xff] %v411
  %575 = vst [vmem:[#allocation2 + $0x28] sm:$0xff] %v413
  %576 = vst [vmem:[#allocation2 + $0x30] sm:$0xff] %v524
  %577 = vst [vmem:[#allocation2 + $0x38] sm:$0xff] %v526
  %578 = vst [vmem:[#allocation2 + $0x40] sm:$0xff] %v191
  %579 = vst [vmem:[#allocation2 + $0x48] sm:$0xff] %v193
  %580 = vst [vmem:[#allocation2 + $0x50] sm:$0xff] %v304
  %581 = vst [vmem:[#allocation2 + $0x58] sm:$0xff] %v306
  %582 = vst [vmem:[#allocation2 + $0x60] sm:$0xff] %v417
  %583 = vst [vmem:[#allocation2 + $0x68] sm:$0xff] %v419
  %584 = vst [vmem:[#allocation2 + $0x70] sm:$0xff] %v530
  %585 = vst [vmem:[#allocation2 + $0x78] sm:$0xff] %v532
  %586 = vst [vmem:[#allocation2 + $0x80] sm:$0xff] %v197
  %587 = vst [vmem:[#allocation2 + $0x88] sm:$0xff] %v199
  %588 = vst [vmem:[#allocation2 + $0x90] sm:$0xff] %v310
  %589 = vst [vmem:[#allocation2 + $0x98] sm:$0xff] %v312
  %590 = vst [vmem:[#allocation2 + $0xa0] sm:$0xff] %v423
  %591 = vst [vmem:[#allocation2 + $0xa8] sm:$0xff] %v425
  %592 = vst [vmem:[#allocation2 + $0xb0] sm:$0xff] %v536
  %593 = vst [vmem:[#allocation2 + $0xb8] sm:$0xff] %v538
  %594 = vst [vmem:[#allocation2 + $0xc0] sm:$0xff] %v203
  %595 = vst [vmem:[#allocation2 + $0xc8] sm:$0xff] %v205
  %596 = vst [vmem:[#allocation2 + $0xd0] sm:$0xff] %v316
  %597 = vst [vmem:[#allocation2 + $0xd8] sm:$0xff] %v318
  %598 = vst [vmem:[#allocation2 + $0xe0] sm:$0xff] %v429
  %599 = vst [vmem:[#allocation2 + $0xe8] sm:$0xff] %v431
  %600 = vst [vmem:[#allocation2 + $0xf0] sm:$0xff] %v542
  %601 = vst [vmem:[#allocation2 + $0xf8] sm:$0xff] %v544
  %602 = vst [vmem:[#allocation2 + $0x100] sm:$0xff] %v209
  %603 = vst [vmem:[#allocation2 + $0x108] sm:$0xff] %v211
  %604 = vst [vmem:[#allocation2 + $0x110] sm:$0xff] %v322
  %605 = vst [vmem:[#allocation2 + $0x118] sm:$0xff] %v324
  %606 = vst [vmem:[#allocation2 + $0x120] sm:$0xff] %v435
  %607 = vst [vmem:[#allocation2 + $0x128] sm:$0xff] %v437
  %608 = vst [vmem:[#allocation2 + $0x130] sm:$0xff] %v548
  %609 = vst [vmem:[#allocation2 + $0x138] sm:$0xff] %v550
  %610 = vst [vmem:[#allocation2 + $0x140] sm:$0xff] %v215
  %611 = vst [vmem:[#allocation2 + $0x148] sm:$0xff] %v217
  %612 = vst [vmem:[#allocation2 + $0x150] sm:$0xff] %v328
  %613 = vst [vmem:[#allocation2 + $0x158] sm:$0xff] %v330
  %614 = vst [vmem:[#allocation2 + $0x160] sm:$0xff] %v441
  %615 = vst [vmem:[#allocation2 + $0x168] sm:$0xff] %v443
  %616 = vst [vmem:[#allocation2 + $0x170] sm:$0xff] %v554
  %617 = vst [vmem:[#allocation2 + $0x178] sm:$0xff] %v556
  %618 = vst [vmem:[#allocation2 + $0x180] sm:$0xff] %v221
  %619 = vst [vmem:[#allocation2 + $0x188] sm:$0xff] %v223
  %620 = vst [vmem:[#allocation2 + $0x190] sm:$0xff] %v334
  %621 = vst [vmem:[#allocation2 + $0x198] sm:$0xff] %v336
  %622 = vst [vmem:[#allocation2 + $0x1a0] sm:$0xff] %v447
  %623 = vst [vmem:[#allocation2 + $0x1a8] sm:$0xff] %v449
  %624 = vst [vmem:[#allocation2 + $0x1b0] sm:$0xff] %v560
  %625 = vst [vmem:[#allocation2 + $0x1b8] sm:$0xff] %v562
  %626 = vst [vmem:[#allocation2 + $0x1c0] sm:$0xff] %v227
  %627 = vst [vmem:[#allocation2 + $0x1c8] sm:$0xff] %v229
  %628 = vst [vmem:[#allocation2 + $0x1d0] sm:$0xff] %v340
  %629 = vst [vmem:[#allocation2 + $0x1d8] sm:$0xff] %v342
  %630 = vst [vmem:[#allocation2 + $0x1e0] sm:$0xff] %v453
  %631 = vst [vmem:[#allocation2 + $0x1e8] sm:$0xff] %v455
  %632 = vst [vmem:[#allocation2 + $0x1f0] sm:$0xff] %v566
  %633 = vst [vmem:[#allocation2 + $0x1f8] sm:$0xff] %v568
  %v634 = vld [vmem:[#allocation2] sm:$0xff]
  %v635 = vld [vmem:[#allocation2 + $0x10] sm:$0xff]
  %v636 = vld [vmem:[#allocation2 + $0x18] sm:$0xff]
  %v637 = vxor.u32 %v634, 2147483648
  %v638 = vxor.u32 %v635, 2147483648
  %v639 = vmul.f32 %v637, 1.442695
  %v640 = vpow.pop %v639
  %v641 = vmul.f32 %v638, 1.442695
  %v642 = vpow.pop %v641
  %v643 = vadd.f32 %v640, 1.0
  %v644 = vadd.f32 %v642, 1.0
  %v645 = vrcp.pop %v643
  %v646 = vmul.f32 1.0, %v645
  %v647 = vrcp.pop %v644
  %v648 = vmul.f32 1.0, %v647
  %v649 = vtanh.pop %v636
  %v650 = vmul.f32 %v646, %v649
  %v651 = vtanh.pop %v650
  %v652 = vmul.f32 %v648, %v651
  %v653 = vld [vmem:[#allocation2 + $0x1e0] sm:$0xff]
  %v654 = vld [vmem:[#allocation2 + $0x1f0] sm:$0xff]
  %v655 = vld [vmem:[#allocation2 + $0x1f8] sm:$0xff]
  %v656 = vxor.u32 %v653, 2147483648
  %v657 = vxor.u32 %v654, 2147483648
  %v658 = vmul.f32 %v656, 1.442695
  %v659 = vpow.pop %v658
  %v660 = vmul.f32 %v657, 1.442695
  %v661 = vpow.pop %v660
  %v662 = vadd.f32 %v659, 1.0
  %v663 = vadd.f32 %v661, 1.0
  %v664 = vrcp.pop %v662
  %v665 = vmul.f32 1.0, %v664
  %v666 = vrcp.pop %v663
  %v667 = vmul.f32 1.0, %v666
  %v668 = vtanh.pop %v655
  %v669 = vmul.f32 %v665, %v668
  %v670 = vtanh.pop %v669
  %v671 = vmul.f32 %v667, %v670
  %672 = vst [vmem:[#allocation3] sm:$0xff] %v652
  %673 = vst [vmem:[#allocation3 + $0x78] sm:$0xff] %v671
  %v674 = vld [vmem:[#allocation2 + $0x40] sm:$0xff]
  %v675 = vld [vmem:[#allocation2 + $0x48] sm:$0xff]
  %v676 = vld [vmem:[#allocation2 + $0x50] sm:$0xff]
  %v677 = vld [vmem:[#allocation2 + $0x58] sm:$0xff]
  %v678 = vld [vmem:[%s2] sm:$0xff]
  %v679 = vld [vmem:[%s2 + $0x8] sm:$0xff]
  %v680 = vld [vmem:[%s2 + $0x10] sm:$0xff]
  %v681 = vld [vmem:[%s2 + $0x18] sm:$0xff]
  %v682 = vld [vmem:[%s2 + $0x20] sm:$0xff]
  %v683 = vld [vmem:[%s2 + $0x28] sm:$0xff]
  %v684 = vld [vmem:[%s2 + $0x30] sm:$0xff]
  %v685 = vld [vmem:[%s2 + $0x38] sm:$0xff]
  %v686 = vld [vmem:[%s2 + $0x40] sm:$0xff]
  %v687 = vld [vmem:[%s2 + $0x48] sm:$0xff]
  %v688 = vld [vmem:[%s2 + $0x50] sm:$0xff]
  %v689 = vld [vmem:[%s2 + $0x58] sm:$0xff]
  %v690 = vld [vmem:[%s2 + $0x60] sm:$0xff]
  %v691 = vld [vmem:[%s2 + $0x68] sm:$0xff]
  %v692 = vld [vmem:[%s2 + $0x70] sm:$0xff]
  %v693 = vld [vmem:[%s2 + $0x78] sm:$0xff]
  %v694 = vld [vmem:[%s2 + $0x80] sm:$0xff]
  %v695 = vld [vmem:[%s2 + $0x88] sm:$0xff]
  %v696 = vld [vmem:[%s2 + $0x90] sm:$0xff]
  %v697 = vld [vmem:[%s2 + $0x98] sm:$0xff]
  %v698 = vld [vmem:[%s2 + $0xa0] sm:$0xff]
  %v699 = vld [vmem:[%s2 + $0xa8] sm:$0xff]
  %v700 = vld [vmem:[%s2 + $0xb0] sm:$0xff]
  %v701 = vld [vmem:[%s2 + $0xb8] sm:$0xff]
  %v702 = vld [vmem:[%s2 + $0xc0] sm:$0xff]
  %v703 = vld [vmem:[%s2 + $0xc8] sm:$0xff]
  %v704 = vld [vmem:[%s2 + $0xd0] sm:$0xff]
  %v705 = vld [vmem:[%s2 + $0xd8] sm:$0xff]
  %v706 = vld [vmem:[%s2 + $0xe0] sm:$0xff]
  %v707 = vld [vmem:[%s2 + $0xe8] sm:$0xff]
  %v708 = vld [vmem:[%s2 + $0xf0] sm:$0xff]
  %v709 = vld [vmem:[%s2 + $0xf8] sm:$0xff]
  %v710 = vld [vmem:[%s2 + $0x100] sm:$0xff]
  %v711 = vld [vmem:[%s2 + $0x108] sm:$0xff]
  %v712 = vld [vmem:[%s2 + $0x110] sm:$0xff]
  %v713 = vld [vmem:[%s2 + $0x118] sm:$0xff]
  %v714 = vld [vmem:[%s2 + $0x120] sm:$0xff]
  %v715 = vld [vmem:[%s2 + $0x128] sm:$0xff]
  %v716 = vld [vmem:[%s2 + $0x130] sm:$0xff]
  %v717 = vld [vmem:[%s2 + $0x138] sm:$0xff]
  %v718 = vld [vmem:[%s2 + $0x140] sm:$0xff]
  %v719 = vld [vmem:[%s2 + $0x148] sm:$0xff]
  %v720 = vld [vmem:[%s2 + $0x150] sm:$0xff]
  %v721 = vld [vmem:[%s2 + $0x158] sm:$0xff]
  %v722 = vld [vmem:[%s2 + $0x160] sm:$0xff]
  %v723 = vld [vmem:[%s2 + $0x168] sm:$0xff]
  %v724 = vld [vmem:[%s2 + $0x170] sm:$0xff]
  %v725 = vld [vmem:[%s2 + $0x178] sm:$0xff]
  %v726 = vld [vmem:[%s2 + $0x180] sm:$0xff]
  %v727 = vld [vmem:[%s2 + $0x188] sm:$0xff]
  %v728 = vld [vmem:[%s2 + $0x190] sm:$0xff]
  %v729 = vld [vmem:[%s2 + $0x198] sm:$0xff]
  %v730 = vld [vmem:[%s2 + $0x1a0] sm:$0xff]
  %v731 = vld [vmem:[%s2 + $0x1a8] sm:$0xff]
  %v732 = vld [vmem:[%s2 + $0x1b0] sm:$0xff]
  %v733 = vld [vmem:[%s2 + $0x1b8] sm:$0xff]
  %v734 = vld [vmem:[%s2 + $0x1c0] sm:$0xff]
  %v735 = vld [vmem:[%s2 + $0x1c8] sm:$0xff]
  %v736 = vld [vmem:[%s2 + $0x1d0] sm:$0xff]
  %v737 = vld [vmem:[%s2 + $0x1d8] sm:$0xff]
  %v738 = vld [vmem:[%s2 + $0x1e0] sm:$0xff]
  %v739 = vld [vmem:[%s2 + $0x1e8] sm:$0xff]
  %v740 = vld [vmem:[%s2 + $0x1f0] sm:$0xff]
  %v741 = vld [vmem:[%s2 + $0x1f8] sm:$0xff]
  %742 = vmatprep.subr.mxu0 %v679
  %743 = vmatpush1.msra.mxu0 %v678
  %744 = vmatprep.subr.mxu0 %v683
  %745 = vmatpush1.msra.mxu0 %v682
  %746 = vmatprep.subr.mxu0 %v687
  %747 = vmatpush1.msra.mxu0 %v686
  %748 = vmatprep.subr.mxu0 %v691
  %749 = vmatpush1.msra.mxu0 %v690
  %750 = vmatprep.subr.mxu0 %v695
  %751 = vmatpush1.msra.mxu0 %v694
  %752 = vmatprep.subr.mxu0 %v699
  %753 = vmatpush1.msra.mxu0 %v698
  %754 = vmatprep.subr.mxu0 %v703
  %755 = vmatpush1.msra.mxu0 %v702
  %756 = vmatprep.subr.mxu0 %v707
  %757 = vmatpush1.msra.mxu0 %v706
  %758 = vmatprep.subr.mxu0 %v711
  %759 = vmatpush1.msra.mxu0 %v710
  %760 = vmatprep.subr.mxu0 %v715
  %761 = vmatpush1.msra.mxu0 %v714
  %762 = vmatprep.subr.mxu0 %v719
  %763 = vmatpush1.msra.mxu0 %v718
  %764 = vmatprep.subr.mxu0 %v723
  %765 = vmatpush1.msra.mxu0 %v722
  %766 = vmatprep.subr.mxu0 %v727
  %767 = vmatpush1.msra.mxu0 %v726
  %768 = vmatprep.subr.mxu0 %v731
  %769 = vmatpush1.msra.mxu0 %v730
  %770 = vmatprep.subr.mxu0 %v735
  %771 = vmatpush1.msra.mxu0 %v734
  %772 = vmatprep.subr.mxu0 %v739
  %773 = vmatpush1.msra.mxu0 %v738
  %774 = vmatprep.subr.mxu0 0.0
  %775 = vmatpush1.msra.mxu0 0.0
  %776 = vmatprep.subr.mxu0 0.0
  %777 = vmatpush1.msra.mxu0 0.0
  %778 = vmatprep.subr.mxu0 0.0
  %779 = vmatpush1.msra.mxu0 0.0
  %780 = vmatprep.subr.mxu0 0.0
  %781 = vmatpush1.msra.mxu0 0.0
  %782 = vmatprep.subr.mxu0 0.0
  %783 = vmatpush1.msra.mxu0 0.0
  %784 = vmatprep.subr.mxu0 0.0
  %785 = vmatpush1.msra.mxu0 0.0
  %786 = vmatprep.subr.mxu0 0.0
  %787 = vmatpush1.msra.mxu0 0.0
  %788 = vmatprep.subr.mxu0 0.0
  %789 = vmatpush1.msra.mxu0 0.0
  %790 = vmatprep.subr.mxu0 0.0
  %791 = vmatpush1.msra.mxu0 0.0
  %792 = vmatprep.subr.mxu0 0.0
  %793 = vmatpush1.msra.mxu0 0.0
  %794 = vmatprep.subr.mxu0 0.0
  %795 = vmatpush1.msra.mxu0 0.0
  %796 = vmatprep.subr.mxu0 0.0
  %797 = vmatpush1.msra.mxu0 0.0
  %798 = vmatprep.subr.mxu0 0.0
  %799 = vmatpush1.msra.mxu0 0.0
  %800 = vmatprep.subr.mxu0 0.0
  %801 = vmatpush1.msra.mxu0 0.0
  %802 = vmatprep.subr.mxu0 0.0
  %803 = vmatpush1.msra.mxu0 0.0
  %804 = vmatprep.subr.mxu0 0.0
  %805 = vmatpush1.msra.mxu0 0.0
  %806 = vmatprep.mubr.f32.mxu0 0.0
  %807 = vmatmul.mubr.f32.gmra.mrb[0].mxu0 %v652
  %v808 = vpop.f32.mrb[0].mxu0
  %v809 = vadd.f32 0.0, %v808
  %v810 = vpop.f32.mrb[0].mxu0
  %v811 = vadd.f32 0.0, %v810
  %812 = vdwg.mxu0
  %813 = vmatprep.subr.mxu0 %v681
  %814 = vmatpush1.msra.mxu0 %v680
  %815 = vmatprep.subr.mxu0 %v685
  %816 = vmatpush1.msra.mxu0 %v684
  %817 = vmatprep.subr.mxu0 %v689
  %818 = vmatpush1.msra.mxu0 %v688
  %819 = vmatprep.subr.mxu0 %v693
  %820 = vmatpush1.msra.mxu0 %v692
  %821 = vmatprep.subr.mxu0 %v697
  %822 = vmatpush1.msra.mxu0 %v696
  %823 = vmatprep.subr.mxu0 %v701
  %824 = vmatpush1.msra.mxu0 %v700
  %825 = vmatprep.subr.mxu0 %v705
  %826 = vmatpush1.msra.mxu0 %v704
  %827 = vmatprep.subr.mxu0 %v709
  %828 = vmatpush1.msra.mxu0 %v708
  %829 = vmatprep.subr.mxu0 %v713
  %830 = vmatpush1.msra.mxu0 %v712
  %831 = vmatprep.subr.mxu0 %v717
  %832 = vmatpush1.msra.mxu0 %v716
  %833 = vmatprep.subr.mxu0 %v721
  %834 = vmatpush1.msra.mxu0 %v720
  %835 = vmatprep.subr.mxu0 %v725
  %836 = vmatpush1.msra.mxu0 %v724
  %837 = vmatprep.subr.mxu0 %v729
  %838 = vmatpush1.msra.mxu0 %v728
  %839 = vmatprep.subr.mxu0 %v733
  %840 = vmatpush1.msra.mxu0 %v732
  %841 = vmatprep.subr.mxu0 %v737
  %842 = vmatpush1.msra.mxu0 %v736
  %843 = vmatprep.subr.mxu0 %v741
  %844 = vmatpush1.msra.mxu0 %v740
  %845 = vmatprep.subr.mxu0 0.0
  %846 = vmatpush1.msra.mxu0 0.0
  %847 = vmatprep.subr.mxu0 0.0
  %848 = vmatpush1.msra.mxu0 0.0
  %849 = vmatprep.subr.mxu0 0.0
  %850 = vmatpush1.msra.mxu0 0.0
  %851 = vmatprep.subr.mxu0 0.0
  %852 = vmatpush1.msra.mxu0 0.0
  %853 = vmatprep.subr.mxu0 0.0
  %854 = vmatpush1.msra.mxu0 0.0
  %855 = vmatprep.subr.mxu0 0.0
  %856 = vmatpush1.msra.mxu0 0.0
  %857 = vmatprep.subr.mxu0 0.0
  %858 = vmatpush1.msra.mxu0 0.0
  %859 = vmatprep.subr.mxu0 0.0
  %860 = vmatpush1.msra.mxu0 0.0
  %861 = vmatprep.subr.mxu0 0.0
  %862 = vmatpush1.msra.mxu0 0.0
  %863 = vmatprep.subr.mxu0 0.0
  %864 = vmatpush1.msra.mxu0 0.0
  %865 = vmatprep.subr.mxu0 0.0
  %866 = vmatpush1.msra.mxu0 0.0
  %867 = vmatprep.subr.mxu0 0.0
  %868 = vmatpush1.msra.mxu0 0.0
  %869 = vmatprep.subr.mxu0 0.0
  %870 = vmatpush1.msra.mxu0 0.0
  %871 = vmatprep.subr.mxu0 0.0
  %872 = vmatpush1.msra.mxu0 0.0
  %873 = vmatprep.subr.mxu0 0.0
  %874 = vmatpush1.msra.mxu0 0.0
  %875 = vmatprep.subr.mxu0 0.0
  %876 = vmatpush1.msra.mxu0 0.0
  %877 = vmatprep.mubr.f32.mxu0 0.0
  %878 = vmatmul.mubr.f32.gmra.mrb[0].mxu0 %v652
  %v879 = vpop.f32.mrb[0].mxu0
  %v880 = vadd.f32 0.0, %v879
  %v881 = vpop.f32.mrb[0].mxu0
  %v882 = vadd.f32 0.0, %v881
  %883 = vdwg.mxu0
  %v884 = vadd.f32 %v674, %v809
  %v885 = vadd.f32 %v675, %v811
  %v886 = vadd.f32 %v676, %v880
  %v887 = vadd.f32 %v677, %v882
  %v888 = vld [vmem:[#allocation2 + $0x1a0] sm:$0xff]
  %v889 = vld [vmem:[#allocation2 + $0x1a8] sm:$0xff]
  %v890 = vld [vmem:[#allocation2 + $0x1b0] sm:$0xff]
  %v891 = vld [vmem:[#allocation2 + $0x1b8] sm:$0xff]
  %v892 = vld [vmem:[%s3] sm:$0xff]
  %v893 = vld [vmem:[%s3 + $0x8] sm:$0xff]
  %v894 = vld [vmem:[%s3 + $0x10] sm:$0xff]
  %v895 = vld [vmem:[%s3 + $0x18] sm:$0xff]
  %v896 = vld [vmem:[%s3 + $0x20] sm:$0xff]
  %v897 = vld [vmem:[%s3 + $0x28] sm:$0xff]
  %v898 = vld [vmem:[%s3 + $0x30] sm:$0xff]
  %v899 = vld [vmem:[%s3 + $0x38] sm:$0xff]
  %v900 = vld [vmem:[%s3 + $0x40] sm:$0xff]
  %v901 = vld [vmem:[%s3 + $0x48] sm:$0xff]
  %v902 = vld [vmem:[%s3 + $0x50] sm:$0xff]
  %v903 = vld [vmem:[%s3 + $0x58] sm:$0xff]
  %v904 = vld [vmem:[%s3 + $0x60] sm:$0xff]
  %v905 = vld [vmem:[%s3 + $0x68] sm:$0xff]
  %v906 = vld [vmem:[%s3 + $0x70] sm:$0xff]
  %v907 = vld [vmem:[%s3 + $0x78] sm:$0xff]
  %v908 = vld [vmem:[%s3 + $0x80] sm:$0xff]
  %v909 = vld [vmem:[%s3 + $0x88] sm:$0xff]
  %v910 = vld [vmem:[%s3 + $0x90] sm:$0xff]
  %v911 = vld [vmem:[%s3 + $0x98] sm:$0xff]
  %v912 = vld [vmem:[%s3 + $0xa0] sm:$0xff]
  %v913 = vld [vmem:[%s3 + $0xa8] sm:$0xff]
  %v914 = vld [vmem:[%s3 + $0xb0] sm:$0xff]
  %v915 = vld [vmem:[%s3 + $0xb8] sm:$0xff]
  %v916 = vld [vmem:[%s3 + $0xc0] sm:$0xff]
  %v917 = vld [vmem:[%s3 + $0xc8] sm:$0xff]
  %v918 = vld [vmem:[%s3 + $0xd0] sm:$0xff]
  %v919 = vld [vmem:[%s3 + $0xd8] sm:$0xff]
  %v920 = vld [vmem:[%s3 + $0xe0] sm:$0xff]
  %v921 = vld [vmem:[%s3 + $0xe8] sm:$0xff]
  %v922 = vld [vmem:[%s3 + $0xf0] sm:$0xff]
  %v923 = vld [vmem:[%s3 + $0xf8] sm:$0xff]
  %v924 = vld [vmem:[%s3 + $0x100] sm:$0xff]
  %v925 = vld [vmem:[%s3 + $0x108] sm:$0xff]
  %v926 = vld [vmem:[%s3 + $0x110] sm:$0xff]
  %v927 = vld [vmem:[%s3 + $0x118] sm:$0xff]
  %v928 = vld [vmem:[%s3 + $0x120] sm:$0xff]
  %v929 = vld [vmem:[%s3 + $0x128] sm:$0xff]
  %v930 = vld [vmem:[%s3 + $0x130] sm:$0xff]
  %v931 = vld [vmem:[%s3 + $0x138] sm:$0xff]
  %v932 = vld [vmem:[%s3 + $0x140] sm:$0xff]
  %v933 = vld [vmem:[%s3 + $0x148] sm:$0xff]
  %v934 = vld [vmem:[%s3 + $0x150] sm:$0xff]
  %v935 = vld [vmem:[%s3 + $0x158] sm:$0xff]
  %v936 = vld [vmem:[%s3 + $0x160] sm:$0xff]
  %v937 = vld [vmem:[%s3 + $0x168] sm:$0xff]
  %v938 = vld [vmem:[%s3 + $0x170] sm:$0xff]
  %v939 = vld [vmem:[%s3 + $0x178] sm:$0xff]
  %v940 = vld [vmem:[%s3 + $0x180] sm:$0xff]
  %v941 = vld [vmem:[%s3 + $0x188] sm:$0xff]
  %v942 = vld [vmem:[%s3 + $0x190] sm:$0xff]
  %v943 = vld [vmem:[%s3 + $0x198] sm:$0xff]
  %v944 = vld [vmem:[%s3 + $0x1a0] sm:$0xff]
  %v945 = vld [vmem:[%s3 + $0x1a8] sm:$0xff]
  %v946 = vld [vmem:[%s3 + $0x1b0] sm:$0xff]
  %v947 = vld [vmem:[%s3 + $0x1b8] sm:$0xff]
  %v948 = vld [vmem:[%s3 + $0x1c0] sm:$0xff]
  %v949 = vld [vmem:[%s3 + $0x1c8] sm:$0xff]
  %v950 = vld [vmem:[%s3 + $0x1d0] sm:$0xff]
  %v951 = vld [vmem:[%s3 + $0x1d8] sm:$0xff]
  %v952 = vld [vmem:[%s3 + $0x1e0] sm:$0xff]
  %v953 = vld [vmem:[%s3 + $0x1e8] sm:$0xff]
  %v954 = vld [vmem:[%s3 + $0x1f0] sm:$0xff]
  %v955 = vld [vmem:[%s3 + $0x1f8] sm:$0xff]
  %956 = vmatprep.subr.mxu0 %v893
  %957 = vmatpush1.msra.mxu0 %v892
  %958 = vmatprep.subr.mxu0 %v897
  %959 = vmatpush1.msra.mxu0 %v896
  %960 = vmatprep.subr.mxu0 %v901
  %961 = vmatpush1.msra.mxu0 %v900
  %962 = vmatprep.subr.mxu0 %v905
  %963 = vmatpush1.msra.mxu0 %v904
  %964 = vmatprep.subr.mxu0 %v909
  %965 = vmatpush1.msra.mxu0 %v908
  %966 = vmatprep.subr.mxu0 %v913
  %967 = vmatpush1.msra.mxu0 %v912
  %968 = vmatprep.subr.mxu0 %v917
  %969 = vmatpush1.msra.mxu0 %v916
  %970 = vmatprep.subr.mxu0 %v921
  %971 = vmatpush1.msra.mxu0 %v920
  %972 = vmatprep.subr.mxu0 %v925
  %973 = vmatpush1.msra.mxu0 %v924
  %974 = vmatprep.subr.mxu0 %v929
  %975 = vmatpush1.msra.mxu0 %v928
  %976 = vmatprep.subr.mxu0 %v933
  %977 = vmatpush1.msra.mxu0 %v932
  %978 = vmatprep.subr.mxu0 %v937
  %979 = vmatpush1.msra.mxu0 %v936
  %980 = vmatprep.subr.mxu0 %v941
  %981 = vmatpush1.msra.mxu0 %v940
  %982 = vmatprep.subr.mxu0 %v945
  %983 = vmatpush1.msra.mxu0 %v944
  %984 = vmatprep.subr.mxu0 %v949
  %985 = vmatpush1.msra.mxu0 %v948
  %986 = vmatprep.subr.mxu0 %v953
  %987 = vmatpush1.msra.mxu0 %v952
  %988 = vmatprep.subr.mxu0 0.0
  %989 = vmatpush1.msra.mxu0 0.0
  %990 = vmatprep.subr.mxu0 0.0
  %991 = vmatpush1.msra.mxu0 0.0
  %992 = vmatprep.subr.mxu0 0.0
  %993 = vmatpush1.msra.mxu0 0.0
  %994 = vmatprep.subr.mxu0 0.0
  %995 = vmatpush1.msra.mxu0 0.0
  %996 = vmatprep.subr.mxu0 0.0
  %997 = vmatpush1.msra.mxu0 0.0
  %998 = vmatprep.subr.mxu0 0.0
  %999 = vmatpush1.msra.mxu0 0.0
  %1000 = vmatprep.subr.mxu0 0.0
  %1001 = vmatpush1.msra.mxu0 0.0
  %1002 = vmatprep.subr.mxu0 0.0
  %1003 = vmatpush1.msra.mxu0 0.0
  %1004 = vmatprep.subr.mxu0 0.0
  %1005 = vmatpush1.msra.mxu0 0.0
  %1006 = vmatprep.subr.mxu0 0.0
  %1007 = vmatpush1.msra.mxu0 0.0
  %1008 = vmatprep.subr.mxu0 0.0
  %1009 = vmatpush1.msra.mxu0 0.0
  %1010 = vmatprep.subr.mxu0 0.0
  %1011 = vmatpush1.msra.mxu0 0.0
  %1012 = vmatprep.subr.mxu0 0.0
  %1013 = vmatpush1.msra.mxu0 0.0
  %1014 = vmatprep.subr.mxu0 0.0
  %1015 = vmatpush1.msra.mxu0 0.0
  %1016 = vmatprep.subr.mxu0 0.0
  %1017 = vmatpush1.msra.mxu0 0.0
  %1018 = vmatprep.subr.mxu0 0.0
  %1019 = vmatpush1.msra.mxu0 0.0
  %1020 = vmatprep.mubr.f32.mxu0 0.0
  %1021 = vmatmul.mubr.f32.gmra.mrb[0].mxu0 %v671
  %v1022 = vpop.f32.mrb[0].mxu0
  %v1023 = vadd.f32 0.0, %v1022
  %v1024 = vpop.f32.mrb[0].mxu0
  %v1025 = vadd.f32 0.0, %v1024
  %1026 = vdwg.mxu0
  %1027 = vmatprep.subr.mxu0 %v895
  %1028 = vmatpush1.msra.mxu0 %v894
  %1029 = vmatprep.subr.mxu0 %v899
  %1030 = vmatpush1.msra.mxu0 %v898
  %1031 = vmatprep.subr.mxu0 %v903
  %1032 = vmatpush1.msra.mxu0 %v902
  %1033 = vmatprep.subr.mxu0 %v907
  %1034 = vmatpush1.msra.mxu0 %v906
  %1035 = vmatprep.subr.mxu0 %v911
  %1036 = vmatpush1.msra.mxu0 %v910
  %1037 = vmatprep.subr.mxu0 %v915
  %1038 = vmatpush1.msra.mxu0 %v914
  %1039 = vmatprep.subr.mxu0 %v919
  %1040 = vmatpush1.msra.mxu0 %v918
  %1041 = vmatprep.subr.mxu0 %v923
  %1042 = vmatpush1.msra.mxu0 %v922
  %1043 = vmatprep.subr.mxu0 %v927
  %1044 = vmatpush1.msra.mxu0 %v926
  %1045 = vmatprep.subr.mxu0 %v931
  %1046 = vmatpush1.msra.mxu0 %v930
  %1047 = vmatprep.subr.mxu0 %v935
  %1048 = vmatpush1.msra.mxu0 %v934
  %1049 = vmatprep.subr.mxu0 %v939
  %1050 = vmatpush1.msra.mxu0 %v938
  %1051 = vmatprep.subr.mxu0 %v943
  %1052 = vmatpush1.msra.mxu0 %v942
  %1053 = vmatprep.subr.mxu0 %v947
  %1054 = vmatpush1.msra.mxu0 %v946
  %1055 = vmatprep.subr.mxu0 %v951
  %1056 = vmatpush1.msra.mxu0 %v950
  %1057 = vmatprep.subr.mxu0 %v955
  %1058 = vmatpush1.msra.mxu0 %v954
  %1059 = vmatprep.subr.mxu0 0.0
  %1060 = vmatpush1.msra.mxu0 0.0
  %1061 = vmatprep.subr.mxu0 0.0
  %1062 = vmatpush1.msra.mxu0 0.0
  %1063 = vmatprep.subr.mxu0 0.0
  %1064 = vmatpush1.msra.mxu0 0.0
  %1065 = vmatprep.subr.mxu0 0.0
  %1066 = vmatpush1.msra.mxu0 0.0
  %1067 = vmatprep.subr.mxu0 0.0
  %1068 = vmatpush1.msra.mxu0 0.0
  %1069 = vmatprep.subr.mxu0 0.0
  %1070 = vmatpush1.msra.mxu0 0.0
  %1071 = vmatprep.subr.mxu0 0.0
  %1072 = vmatpush1.msra.mxu0 0.0
  %1073 = vmatprep.subr.mxu0 0.0
  %1074 = vmatpush1.msra.mxu0 0.0
  %1075 = vmatprep.subr.mxu0 0.0
  %1076 = vmatpush1.msra.mxu0 0.0
  %1077 = vmatprep.subr.mxu0 0.0
  %1078 = vmatpush1.msra.mxu0 0.0
  %1079 = vmatprep.subr.mxu0 0.0
  %1080 = vmatpush1.msra.mxu0 0.0
  %1081 = vmatprep.subr.mxu0 0.0
  %1082 = vmatpush1.msra.mxu0 0.0
  %1083 = vmatprep.subr.mxu0 0.0
  %1084 = vmatpush1.msra.mxu0 0.0
  %1085 = vmatprep.subr.mxu0 0.0
  %1086 = vmatpush1.msra.mxu0 0.0
  %1087 = vmatprep.subr.mxu0 0.0
  %1088 = vmatpush1.msra.mxu0 0.0
  %1089 = vmatprep.subr.mxu0 0.0
  %1090 = vmatpush1.msra.mxu0 0.0
  %1091 = vmatprep.mubr.f32.mxu0 0.0
  %1092 = vmatmul.mubr.f32.gmra.mrb[0].mxu0 %v671
  %v1093 = vpop.f32.mrb[0].mxu0
  %v1094 = vadd.f32 0.0, %v1093
  %v1095 = vpop.f32.mrb[0].mxu0
  %v1096 = vadd.f32 0.0, %v1095
  %1097 = vdwg.mxu0
  %v1098 = vadd.f32 %v888, %v1023
  %v1099 = vadd.f32 %v889, %v1025
  %v1100 = vadd.f32 %v890, %v1094
  %v1101 = vadd.f32 %v891, %v1096
  %v1102 = vxor.u32 %v884, 2147483648
  %v1103 = vxor.u32 %v885, 2147483648
  %v1104 = vxor.u32 %v886, 2147483648
  %v1105 = vmul.f32 %v1102, 1.442695
  %v1106 = vpow.pop %v1105
  %v1107 = vmul.f32 %v1103, 1.442695
  %v1108 = vpow.pop %v1107
  %v1109 = vmul.f32 %v1104, 1.442695
  %v1110 = vpow.pop %v1109
  %v1111 = vadd.f32 %v1106, 1.0
  %v1112 = vadd.f32 %v1108, 1.0
  %v1113 = vadd.f32 %v1110, 1.0
  %v1114 = vrcp.pop %v1111
  %v1115 = vmul.f32 1.0, %v1114
  %v1116 = vrcp.pop %v1112
  %v1117 = vmul.f32 1.0, %v1116
  %v1118 = vrcp.pop %v1113
  %v1119 = vmul.f32 1.0, %v1118
  %v1120 = vtanh.pop %v887
  %v1121 = vmul.f32 %v1117, %v650
  %v1122 = vmul.f32 %v1115, %v1120
  %v1123 = vadd.f32 %v1121, %v1122
  %v1124 = vtanh.pop %v1123
  %v1125 = vmul.f32 %v1119, %v1124
  %v1126 = vxor.u32 %v1098, 2147483648
  %v1127 = vxor.u32 %v1099, 2147483648
  %v1128 = vxor.u32 %v1100, 2147483648
  %v1129 = vmul.f32 %v1126, 1.442695
  %v1130 = vpow.pop %v1129
  %v1131 = vmul.f32 %v1127, 1.442695
  %v1132 = vpow.pop %v1131
  %v1133 = vmul.f32 %v1128, 1.442695
  %v1134 = vpow.pop %v1133
  %v1135 = vadd.f32 %v1130, 1.0
  %v1136 = vadd.f32 %v1132, 1.0
  %v1137 = vadd.f32 %v1134, 1.0
  %v1138 = vrcp.pop %v1135
  %v1139 = vmul.f32 1.0, %v1138
  %v1140 = vrcp.pop %v1136
  %v1141 = vmul.f32 1.0, %v1140
  %v1142 = vrcp.pop %v1137
  %v1143 = vmul.f32 1.0, %v1142
  %v1144 = vtanh.pop %v1101
  %v1145 = vmul.f32 %v1141, %v669
  %v1146 = vmul.f32 %v1139, %v1144
  %v1147 = vadd.f32 %v1145, %v1146
  %v1148 = vtanh.pop %v1147
  %v1149 = vmul.f32 %v1143, %v1148
  %1150 = vst [vmem:[#allocation3 + $0x10] sm:$0xff] %v1125
  %1151 = vst [vmem:[#allocation3 + $0x68] sm:$0xff] %v1149
  %v1152 = vld [vmem:[#allocation2 + $0x80] sm:$0xff]
  %v1153 = vld [vmem:[#allocation2 + $0x88] sm:$0xff]
  %v1154 = vld [vmem:[#allocation2 + $0x90] sm:$0xff]
  %v1155 = vld [vmem:[#allocation2 + $0x98] sm:$0xff]
  %v1156 = vld [vmem:[%s2] sm:$0xff]
  %v1157 = vld [vmem:[%s2 + $0x8] sm:$0xff]
  %v1158 = vld [vmem:[%s2 + $0x10] sm:$0xff]
  %v1159 = vld [vmem:[%s2 + $0x18] sm:$0xff]
  %v1160 = vld [vmem:[%s2 + $0x20] sm:$0xff]
  %v1161 = vld [vmem:[%s2 + $0x28] sm:$0xff]
  %v1162 = vld [vmem:[%s2 + $0x30] sm:$0xff]
  %v1163 = vld [vmem:[%s2 + $0x38] sm:$0xff]
  %v1164 = vld [vmem:[%s2 + $0x40] sm:$0xff]
  %v1165 = vld [vmem:[%s2 + $0x48] sm:$0xff]
  %v1166 = vld [vmem:[%s2 + $0x50] sm:$0xff]
  %v1167 = vld [vmem:[%s2 + $0x58] sm:$0xff]
  %v1168 = vld [vmem:[%s2 + $0x60] sm:$0xff]
  %v1169 = vld [vmem:[%s2 + $0x68] sm:$0xff]
  %v1170 = vld [vmem:[%s2 + $0x70] sm:$0xff]
  %v1171 = vld [vmem:[%s2 + $0x78] sm:$0xff]
  %v1172 = vld [vmem:[%s2 + $0x80] sm:$0xff]
  %v1173 = vld [vmem:[%s2 + $0x88] sm:$0xff]
  %v1174 = vld [vmem:[%s2 + $0x90] sm:$0xff]
  %v1175 = vld [vmem:[%s2 + $0x98] sm:$0xff]
  %v1176 = vld [vmem:[%s2 + $0xa0] sm:$0xff]
  %v1177 = vld [vmem:[%s2 + $0xa8] sm:$0xff]
  %v1178 = vld [vmem:[%s2 + $0xb0] sm:$0xff]
  %v1179 = vld [vmem:[%s2 + $0xb8] sm:$0xff]
  %v1180 = vld [vmem:[%s2 + $0xc0] sm:$0xff]
  %v1181 = vld [vmem:[%s2 + $0xc8] sm:$0xff]
  %v1182 = vld [vmem:[%s2 + $0xd0] sm:$0xff]
  %v1183 = vld [vmem:[%s2 + $0xd8] sm:$0xff]
  %v1184 = vld [vmem:[%s2 + $0xe0] sm:$0xff]
  %v1185 = vld [vmem:[%s2 + $0xe8] sm:$0xff]
  %v1186 = vld [vmem:[%s2 + $0xf0] sm:$0xff]
  %v1187 = vld [vmem:[%s2 + $0xf8] sm:$0xff]
  %v1188 = vld [vmem:[%s2 + $0x100] sm:$0xff]
  %v1189 = vld [vmem:[%s2 + $0x108] sm:$0xff]
  %v1190 = vld [vmem:[%s2 + $0x110] sm:$0xff]
  %v1191 = vld [vmem:[%s2 + $0x118] sm:$0xff]
  %v1192 = vld [vmem:[%s2 + $0x120] sm:$0xff]
  %v1193 = vld [vmem:[%s2 + $0x128] sm:$0xff]
  %v1194 = vld [vmem:[%s2 + $0x130] sm:$0xff]
  %v1195 = vld [vmem:[%s2 + $0x138] sm:$0xff]
  %v1196 = vld [vmem:[%s2 + $0x140] sm:$0xff]
  %v1197 = vld [vmem:[%s2 + $0x148] sm:$0xff]
  %v1198 = vld [vmem:[%s2 + $0x150] sm:$0xff]
  %v1199 = vld [vmem:[%s2 + $0x158] sm:$0xff]
  %v1200 = vld [vmem:[%s2 + $0x160] sm:$0xff]
  %v1201 = vld [vmem:[%s2 + $0x168] sm:$0xff]
  %v1202 = vld [vmem:[%s2 + $0x170] sm:$0xff]
  %v1203 = vld [vmem:[%s2 + $0x178] sm:$0xff]
  %v1204 = vld [vmem:[%s2 + $0x180] sm:$0xff]
  %v1205 = vld [vmem:[%s2 + $0x188] sm:$0xff]
  %v1206 = vld [vmem:[%s2 + $0x190] sm:$0xff]
  %v1207 = vld [vmem:[%s2 + $0x198] sm:$0xff]
  %v1208 = vld [vmem:[%s2 + $0x1a0] sm:$0xff]
  %v1209 = vld [vmem:[%s2 + $0x1a8] sm:$0xff]
  %v1210 = vld [vmem:[%s2 + $0x1b0] sm:$0xff]
  %v1211 = vld [vmem:[%s2 + $0x1b8] sm:$0xff]
  %v1212 = vld [vmem:[%s2 + $0x1c0] sm:$0xff]
  %v1213 = vld [vmem:[%s2 + $0x1c8] sm:$0xff]
  %v1214 = vld [vmem:[%s2 + $0x1d0] sm:$0xff]
  %v1215 = vld [vmem:[%s2 + $0x1d8] sm:$0xff]
  %v1216 = vld [vmem:[%s2 + $0x1e0] sm:$0xff]
  %v1217 = vld [vmem:[%s2 + $0x1e8] sm:$0xff]
  %v1218 = vld [vmem:[%s2 + $0x1f0] sm:$0xff]
  %v1219 = vld [vmem:[%s2 + $0x1f8] sm:$0xff]
  %1220 = vmatprep.subr.mxu0 %v1157
  %1221 = vmatpush1.msra.mxu0 %v1156
  %1222 = vmatprep.subr.mxu0 %v1161
  %1223 = vmatpush1.msra.mxu0 %v1160
  %1224 = vmatprep.subr.mxu0 %v1165
  %1225 = vmatpush1.msra.mxu0 %v1164
  %1226 = vmatprep.subr.mxu0 %v1169
  %1227 = vmatpush1.msra.mxu0 %v1168
  %1228 = vmatprep.subr.mxu0 %v1173
  %1229 = vmatpush1.msra.mxu0 %v1172
  %1230 = vmatprep.subr.mxu0 %v1177
  %1231 = vmatpush1.msra.mxu0 %v1176
  %1232 = vmatprep.subr.mxu0 %v1181
  %1233 = vmatpush1.msra.mxu0 %v1180
  %1234 = vmatprep.subr.mxu0 %v1185
  %1235 = vmatpush1.msra.mxu0 %v1184
  %1236 = vmatprep.subr.mxu0 %v1189
  %1237 = vmatpush1.msra.mxu0 %v1188
  %1238 = vmatprep.subr.mxu0 %v1193
  %1239 = vmatpush1.msra.mxu0 %v1192
  %1240 = vmatprep.subr.mxu0 %v1197
  %1241 = vmatpush1.msra.mxu0 %v1196
  %1242 = vmatprep.subr.mxu0 %v1201
  %1243 = vmatpush1.msra.mxu0 %v1200
  %1244 = vmatprep.subr.mxu0 %v1205
  %1245 = vmatpush1.msra.mxu0 %v1204
  %1246 = vmatprep.subr.mxu0 %v1209
  %1247 = vmatpush1.msra.mxu0 %v1208
  %1248 = vmatprep.subr.mxu0 %v1213
  %1249 = vmatpush1.msra.mxu0 %v1212
  %1250 = vmatprep.subr.mxu0 %v1217
  %1251 = vmatpush1.msra.mxu0 %v1216
  %1252 = vmatprep.subr.mxu0 0.0
  %1253 = vmatpush1.msra.mxu0 0.0
  %1254 = vmatprep.subr.mxu0 0.0
  %1255 = vmatpush1.msra.mxu0 0.0
  %1256 = vmatprep.subr.mxu0 0.0
  %1257 = vmatpush1.msra.mxu0 0.0
  %1258 = vmatprep.subr.mxu0 0.0
  %1259 = vmatpush1.msra.mxu0 0.0
  %1260 = vmatprep.subr.mxu0 0.0
  %1261 = vmatpush1.msra.mxu0 0.0
  %1262 = vmatprep.subr.mxu0 0.0
  %1263 = vmatpush1.msra.mxu0 0.0
  %1264 = vmatprep.subr.mxu0 0.0
  %1265 = vmatpush1.msra.mxu0 0.0
  %1266 = vmatprep.subr.mxu0 0.0
  %1267 = vmatpush1.msra.mxu0 0.0
  %1268 = vmatprep.subr.mxu0 0.0
  %1269 = vmatpush1.msra.mxu0 0.0
  %1270 = vmatprep.subr.mxu0 0.0
  %1271 = vmatpush1.msra.mxu0 0.0
  %1272 = vmatprep.subr.mxu0 0.0
  %1273 = vmatpush1.msra.mxu0 0.0
  %1274 = vmatprep.subr.mxu0 0.0
  %1275 = vmatpush1.msra.mxu0 0.0
  %1276 = vmatprep.subr.mxu0 0.0
  %1277 = vmatpush1.msra.mxu0 0.0
  %1278 = vmatprep.subr.mxu0 0.0
  %1279 = vmatpush1.msra.mxu0 0.0
  %1280 = vmatprep.subr.mxu0 0.0
  %1281 = vmatpush1.msra.mxu0 0.0
  %1282 = vmatprep.subr.mxu0 0.0
  %1283 = vmatpush1.msra.mxu0 0.0
  %1284 = vmatprep.mubr.f32.mxu0 0.0
  %1285 = vmatmul.mubr.f32.gmra.mrb[0].mxu0 %v1125
  %v1286 = vpop.f32.mrb[0].mxu0
  %v1287 = vadd.f32 0.0, %v1286
  %v1288 = vpop.f32.mrb[0].mxu0
  %v1289 = vadd.f32 0.0, %v1288
  %1290 = vdwg.mxu0
  %1291 = vmatprep.subr.mxu0 %v1159
  %1292 = vmatpush1.msra.mxu0 %v1158
  %1293 = vmatprep.subr.mxu0 %v1163
  %1294 = vmatpush1.msra.mxu0 %v1162
  %1295 = vmatprep.subr.mxu0 %v1167
  %1296 = vmatpush1.msra.mxu0 %v1166
  %1297 = vmatprep.subr.mxu0 %v1171
  %1298 = vmatpush1.msra.mxu0 %v1170
  %1299 = vmatprep.subr.mxu0 %v1175
  %1300 = vmatpush1.msra.mxu0 %v1174
  %1301 = vmatprep.subr.mxu0 %v1179
  %1302 = vmatpush1.msra.mxu0 %v1178
  %1303 = vmatprep.subr.mxu0 %v1183
  %1304 = vmatpush1.msra.mxu0 %v1182
  %1305 = vmatprep.subr.mxu0 %v1187
  %1306 = vmatpush1.msra.mxu0 %v1186
  %1307 = vmatprep.subr.mxu0 %v1191
  %1308 = vmatpush1.msra.mxu0 %v1190
  %1309 = vmatprep.subr.mxu0 %v1195
  %1310 = vmatpush1.msra.mxu0 %v1194
  %1311 = vmatprep.subr.mxu0 %v1199
  %1312 = vmatpush1.msra.mxu0 %v1198
  %1313 = vmatprep.subr.mxu0 %v1203
  %1314 = vmatpush1.msra.mxu0 %v1202
  %1315 = vmatprep.subr.mxu0 %v1207
  %1316 = vmatpush1.msra.mxu0 %v1206
  %1317 = vmatprep.subr.mxu0 %v1211
  %1318 = vmatpush1.msra.mxu0 %v1210
  %1319 = vmatprep.subr.mxu0 %v1215
  %1320 = vmatpush1.msra.mxu0 %v1214
  %1321 = vmatprep.subr.mxu0 %v1219
  %1322 = vmatpush1.msra.mxu0 %v1218
  %1323 = vmatprep.subr.mxu0 0.0
  %1324 = vmatpush1.msra.mxu0 0.0
  %1325 = vmatprep.subr.mxu0 0.0
  %1326 = vmatpush1.msra.mxu0 0.0
  %1327 = vmatprep.subr.mxu0 0.0
  %1328 = vmatpush1.msra.mxu0 0.0
  %1329 = vmatprep.subr.mxu0 0.0
  %1330 = vmatpush1.msra.mxu0 0.0
  %1331 = vmatprep.subr.mxu0 0.0
  %1332 = vmatpush1.msra.mxu0 0.0
  %1333 = vmatprep.subr.mxu0 0.0
  %1334 = vmatpush1.msra.mxu0 0.0
  %1335 = vmatprep.subr.mxu0 0.0
  %1336 = vmatpush1.msra.mxu0 0.0
  %1337 = vmatprep.subr.mxu0 0.0
  %1338 = vmatpush1.msra.mxu0 0.0
  %1339 = vmatprep.subr.mxu0 0.0
  %1340 = vmatpush1.msra.mxu0 0.0
  %1341 = vmatprep.subr.mxu0 0.0
  %1342 = vmatpush1.msra.mxu0 0.0
  %1343 = vmatprep.subr.mxu0 0.0
  %1344 = vmatpush1.msra.mxu0 0.0
  %1345 = vmatprep.subr.mxu0 0.0
  %1346 = vmatpush1.msra.mxu0 0.0
  %1347 = vmatprep.subr.mxu0 0.0
  %1348 = vmatpush1.msra.mxu0 0.0
  %1349 = vmatprep.subr.mxu0 0.0
  %1350 = vmatpush1.msra.mxu0 0.0
  %1351 = vmatprep.subr.mxu0 0.0
  %1352 = vmatpush1.msra.mxu0 0.0
  %1353 = vmatprep.subr.mxu0 0.0
  %1354 = vmatpush1.msra.mxu0 0.0
  %1355 = vmatprep.mubr.f32.mxu0 0.0
  %1356 = vmatmul.mubr.f32.gmra.mrb[0].mxu0 %v1125
  %v1357 = vpop.f32.mrb[0].mxu0
  %v1358 = vadd.f32 0.0, %v1357
  %v1359 = vpop.f32.mrb[0].mxu0
  %v1360 = vadd.f32 0.0, %v1359
  %1361 = vdwg.mxu0
  %v1362 = vadd.f32 %v1152, %v1287
  %v1363 = vadd.f32 %v1153, %v1289
  %v1364 = vadd.f32 %v1154, %v1358
  %v1365 = vadd.f32 %v1155, %v1360
  %v1366 = vld [vmem:[#allocation2 + $0x160] sm:$0xff]
  %v1367 = vld [vmem:[#allocation2 + $0x168] sm:$0xff]
  %v1368 = vld [vmem:[#allocation2 + $0x170] sm:$0xff]
  %v1369 = vld [vmem:[#allocation2 + $0x178] sm:$0xff]
  %v1370 = vld [vmem:[%s3] sm:$0xff]
  %v1371 = vld [vmem:[%s3 + $0x8] sm:$0xff]
  %v1372 = vld [vmem:[%s3 + $0x10] sm:$0xff]
  %v1373 = vld [vmem:[%s3 + $0x18] sm:$0xff]
  %v1374 = vld [vmem:[%s3 + $0x20] sm:$0xff]
  %v1375 = vld [vmem:[%s3 + $0x28] sm:$0xff]
  %v1376 = vld [vmem:[%s3 + $0x30] sm:$0xff]
  %v1377 = vld [vmem:[%s3 + $0x38] sm:$0xff]
  %v1378 = vld [vmem:[%s3 + $0x40] sm:$0xff]
  %v1379 = vld [vmem:[%s3 + $0x48] sm:$0xff]
  %v1380 = vld [vmem:[%s3 + $0x50] sm:$0xff]
  %v1381 = vld [vmem:[%s3 + $0x58] sm:$0xff]
  %v1382 = vld [vmem:[%s3 + $0x60] sm:$0xff]
  %v1383 = vld [vmem:[%s3 + $0x68] sm:$0xff]
  %v1384 = vld [vmem:[%s3 + $0x70] sm:$0xff]
  %v1385 = vld [vmem:[%s3 + $0x78] sm:$0xff]
  %v1386 = vld [vmem:[%s3 + $0x80] sm:$0xff]
  %v1387 = vld [vmem:[%s3 + $0x88] sm:$0xff]
  %v1388 = vld [vmem:[%s3 + $0x90] sm:$0xff]
  %v1389 = vld [vmem:[%s3 + $0x98] sm:$0xff]
  %v1390 = vld [vmem:[%s3 + $0xa0] sm:$0xff]
  %v1391 = vld [vmem:[%s3 + $0xa8] sm:$0xff]
  %v1392 = vld [vmem:[%s3 + $0xb0] sm:$0xff]
  %v1393 = vld [vmem:[%s3 + $0xb8] sm:$0xff]
  %v1394 = vld [vmem:[%s3 + $0xc0] sm:$0xff]
  %v1395 = vld [vmem:[%s3 + $0xc8] sm:$0xff]
  %v1396 = vld [vmem:[%s3 + $0xd0] sm:$0xff]
  %v1397 = vld [vmem:[%s3 + $0xd8] sm:$0xff]
  %v1398 = vld [vmem:[%s3 + $0xe0] sm:$0xff]
  %v1399 = vld [vmem:[%s3 + $0xe8] sm:$0xff]
  %v1400 = vld [vmem:[%s3 + $0xf0] sm:$0xff]
  %v1401 = vld [vmem:[%s3 + $0xf8] sm:$0xff]
  %v1402 = vld [vmem:[%s3 + $0x100] sm:$0xff]
  %v1403 = vld [vmem:[%s3 + $0x108] sm:$0xff]
  %v1404 = vld [vmem:[%s3 + $0x110] sm:$0xff]
  %v1405 = vld [vmem:[%s3 + $0x118] sm:$0xff]
  %v1406 = vld [vmem:[%s3 + $0x120] sm:$0xff]
  %v1407 = vld [vmem:[%s3 + $0x128] sm:$0xff]
  %v1408 = vld [vmem:[%s3 + $0x130] sm:$0xff]
  %v1409 = vld [vmem:[%s3 + $0x138] sm:$0xff]
  %v1410 = vld [vmem:[%s3 + $0x140] sm:$0xff]
  %v1411 = vld [vmem:[%s3 + $0x148] sm:$0xff]
  %v1412 = vld [vmem:[%s3 + $0x150] sm:$0xff]
  %v1413 = vld [vmem:[%s3 + $0x158] sm:$0xff]
  %v1414 = vld [vmem:[%s3 + $0x160] sm:$0xff]
  %v1415 = vld [vmem:[%s3 + $0x168] sm:$0xff]
  %v1416 = vld [vmem:[%s3 + $0x170] sm:$0xff]
  %v1417 = vld [vmem:[%s3 + $0x178] sm:$0xff]
  %v1418 = vld [vmem:[%s3 + $0x180] sm:$0xff]
  %v1419 = vld [vmem:[%s3 + $0x188] sm:$0xff]
  %v1420 = vld [vmem:[%s3 + $0x190] sm:$0xff]
  %v1421 = vld [vmem:[%s3 + $0x198] sm:$0xff]
  %v1422 = vld [vmem:[%s3 + $0x1a0] sm:$0xff]
  %v1423 = vld [vmem:[%s3 + $0x1a8] sm:$0xff]
  %v1424 = vld [vmem:[%s3 + $0x1b0] sm:$0xff]
  %v1425 = vld [vmem:[%s3 + $0x1b8] sm:$0xff]
  %v1426 = vld [vmem:[%s3 + $0x1c0] sm:$0xff]
  %v1427 = vld [vmem:[%s3 + $0x1c8] sm:$0xff]
  %v1428 = vld [vmem:[%s3 + $0x1d0] sm:$0xff]
  %v1429 = vld [vmem:[%s3 + $0x1d8] sm:$0xff]
  %v1430 = vld [vmem:[%s3 + $0x1e0] sm:$0xff]
  %v1431 = vld [vmem:[%s3 + $0x1e8] sm:$0xff]
  %v1432 = vld [vmem:[%s3 + $0x1f0] sm:$0xff]
  %v1433 = vld [vmem:[%s3 + $0x1f8] sm:$0xff]
  %1434 = vmatprep.subr.mxu0 %v1371
  %1435 = vmatpush1.msra.mxu0 %v1370
  %1436 = vmatprep.subr.mxu0 %v1375
  %1437 = vmatpush1.msra.mxu0 %v1374
  %1438 = vmatprep.subr.mxu0 %v1379
  %1439 = vmatpush1.msra.mxu0 %v1378
  %1440 = vmatprep.subr.mxu0 %v1383
  %1441 = vmatpush1.msra.mxu0 %v1382
  %1442 = vmatprep.subr.mxu0 %v1387
  %1443 = vmatpush1.msra.mxu0 %v1386
  %1444 = vmatprep.subr.mxu0 %v1391
  %1445 = vmatpush1.msra.mxu0 %v1390
  %1446 = vmatprep.subr.mxu0 %v1395
  %1447 = vmatpush1.msra.mxu0 %v1394
  %1448 = vmatprep.subr.mxu0 %v1399
  %1449 = vmatpush1.msra.mxu0 %v1398
  %1450 = vmatprep.subr.mxu0 %v1403
  %1451 = vmatpush1.msra.mxu0 %v1402
  %1452 = vmatprep.subr.mxu0 %v1407
  %1453 = vmatpush1.msra.mxu0 %v1406
  %1454 = vmatprep.subr.mxu0 %v1411
  %1455 = vmatpush1.msra.mxu0 %v1410
  %1456 = vmatprep.subr.mxu0 %v1415
  %1457 = vmatpush1.msra.mxu0 %v1414
  %1458 = vmatprep.subr.mxu0 %v1419
  %1459 = vmatpush1.msra.mxu0 %v1418
  %1460 = vmatprep.subr.mxu0 %v1423
  %1461 = vmatpush1.msra.mxu0 %v1422
  %1462 = vmatprep.subr.mxu0 %v1427
  %1463 = vmatpush1.msra.mxu0 %v1426
  %1464 = vmatprep.subr.mxu0 %v1431
  %1465 = vmatpush1.msra.mxu0 %v1430
  %1466 = vmatprep.subr.mxu0 0.0
  %1467 = vmatpush1.msra.mxu0 0.0
  %1468 = vmatprep.subr.mxu0 0.0
  %1469 = vmatpush1.msra.mxu0 0.0
  %1470 = vmatprep.subr.mxu0 0.0
  %1471 = vmatpush1.msra.mxu0 0.0
  %1472 = vmatprep.subr.mxu0 0.0
  %1473 = vmatpush1.msra.mxu0 0.0
  %1474 = vmatprep.subr.mxu0 0.0
  %1475 = vmatpush1.msra.mxu0 0.0
  %1476 = vmatprep.subr.mxu0 0.0
  %1477 = vmatpush1.msra.mxu0 0.0
  %1478 = vmatprep.subr.mxu0 0.0
  %1479 = vmatpush1.msra.mxu0 0.0
  %1480 = vmatprep.subr.mxu0 0.0
  %1481 = vmatpush1.msra.mxu0 0.0
  %1482 = vmatprep.subr.mxu0 0.0
  %1483 = vmatpush1.msra.mxu0 0.0
  %1484 = vmatprep.subr.mxu0 0.0
  %1485 = vmatpush1.msra.mxu0 0.0
  %1486 = vmatprep.subr.mxu0 0.0
  %1487 = vmatpush1.msra.mxu0 0.0
  %1488 = vmatprep.subr.mxu0 0.0
  %1489 = vmatpush1.msra.mxu0 0.0
  %1490 = vmatprep.subr.mxu0 0.0
  %1491 = vmatpush1.msra.mxu0 0.0
  %1492 = vmatprep.subr.mxu0 0.0
  %1493 = vmatpush1.msra.mxu0 0.0
  %1494 = vmatprep.subr.mxu0 0.0
  %1495 = vmatpush1.msra.mxu0 0.0
  %1496 = vmatprep.subr.mxu0 0.0
  %1497 = vmatpush1.msra.mxu0 0.0
  %1498 = vmatprep.mubr.f32.mxu0 0.0
  %1499 = vmatmul.mubr.f32.gmra.mrb[0].mxu0 %v1149
  %v1500 = vpop.f32.mrb[0].mxu0
  %v1501 = vadd.f32 0.0, %v1500
  %v1502 = vpop.f32.mrb[0].mxu0
  %v1503 = vadd.f32 0.0, %v1502
  %1504 = vdwg.mxu0
  %1505 = vmatprep.subr.mxu0 %v1373
  %1506 = vmatpush1.msra.mxu0 %v1372
  %1507 = vmatprep.subr.mxu0 %v1377
  %1508 = vmatpush1.msra.mxu0 %v1376
  %1509 = vmatprep.subr.mxu0 %v1381
  %1510 = vmatpush1.msra.mxu0 %v1380
  %1511 = vmatprep.subr.mxu0 %v1385
  %1512 = vmatpush1.msra.mxu0 %v1384
  %1513 = vmatprep.subr.mxu0 %v1389
  %1514 = vmatpush1.msra.mxu0 %v1388
  %1515 = vmatprep.subr.mxu0 %v1393
  %1516 = vmatpush1.msra.mxu0 %v1392
  %1517 = vmatprep.subr.mxu0 %v1397
  %1518 = vmatpush1.msra.mxu0 %v1396
  %1519 = vmatprep.subr.mxu0 %v1401
  %1520 = vmatpush1.msra.mxu0 %v1400
  %1521 = vmatprep.subr.mxu0 %v1405
  %1522 = vmatpush1.msra.mxu0 %v1404
  %1523 = vmatprep.subr.mxu0 %v1409
  %1524 = vmatpush1.msra.mxu0 %v1408
  %1525 = vmatprep.subr.mxu0 %v1413
  %1526 = vmatpush1.msra.mxu0 %v1412
  %1527 = vmatprep.subr.mxu0 %v1417
  %1528 = vmatpush1.msra.mxu0 %v1416
  %1529 = vmatprep.subr.mxu0 %v1421
  %1530 = vmatpush1.msra.mxu0 %v1420
  %1531 = vmatprep.subr.mxu0 %v1425
  %1532 = vmatpush1.msra.mxu0 %v1424
  %1533 = vmatprep.subr.mxu0 %v1429
  %1534 = vmatpush1.msra.mxu0 %v1428
  %1535 = vmatprep.subr.mxu0 %v1433
  %1536 = vmatpush1.msra.mxu0 %v1432
  %1537 = vmatprep.subr.mxu0 0.0
  %1538 = vmatpush1.msra.mxu0 0.0
  %1539 = vmatprep.subr.mxu0 0.0
  %1540 = vmatpush1.msra.mxu0 0.0
  %1541 = vmatprep.subr.mxu0 0.0
  %1542 = vmatpush1.msra.mxu0 0.0
  %1543 = vmatprep.subr.mxu0 0.0
  %1544 = vmatpush1.msra.mxu0 0.0
  %1545 = vmatprep.subr.mxu0 0.0
  %1546 = vmatpush1.msra.mxu0 0.0
  %1547 = vmatprep.subr.mxu0 0.0
  %1548 = vmatpush1.msra.mxu0 0.0
  %1549 = vmatprep.subr.mxu0 0.0
  %1550 = vmatpush1.msra.mxu0 0.0
  %1551 = vmatprep.subr.mxu0 0.0
  %1552 = vmatpush1.msra.mxu0 0.0
  %1553 = vmatprep.subr.mxu0 0.0
  %1554 = vmatpush1.msra.mxu0 0.0
  %1555 = vmatprep.subr.mxu0 0.0
  %1556 = vmatpush1.msra.mxu0 0.0
  %1557 = vmatprep.subr.mxu0 0.0
  %1558 = vmatpush1.msra.mxu0 0.0
  %1559 = vmatprep.subr.mxu0 0.0
  %1560 = vmatpush1.msra.mxu0 0.0
  %1561 = vmatprep.subr.mxu0 0.0
  %1562 = vmatpush1.msra.mxu0 0.0
  %1563 = vmatprep.subr.mxu0 0.0
  %1564 = vmatpush1.msra.mxu0 0.0
  %1565 = vmatprep.subr.mxu0 0.0
  %1566 = vmatpush1.msra.mxu0 0.0
  %1567 = vmatprep.subr.mxu0 0.0
  %1568 = vmatpush1.msra.mxu0 0.0
  %1569 = vmatprep.mubr.f32.mxu0 0.0
  %1570 = vmatmul.mubr.f32.gmra.mrb[0].mxu0 %v1149
  %v1571 = vpop.f32.mrb[0].mxu0
  %v1572 = vadd.f32 0.0, %v1571
  %v1573 = vpop.f32.mrb[0].mxu0
  %v1574 = vadd.f32 0.0, %v1573
  %1575 = vdwg.mxu0
  %v1576 = vadd.f32 %v1366, %v1501
  %v1577 = vadd.f32 %v1367, %v1503
  %v1578 = vadd.f32 %v1368, %v1572
  %v1579 = vadd.f32 %v1369, %v1574
  %v1580 = vxor.u32 %v1362, 2147483648
  %v1581 = vxor.u32 %v1363, 2147483648
  %v1582 = vxor.u32 %v1364, 2147483648
  %v1583 = vmul.f32 %v1580, 1.442695
  %v1584 = vpow.pop %v1583
  %v1585 = vmul.f32 %v1581, 1.442695
  %v1586 = vpow.pop %v1585
  %v1587 = vmul.f32 %v1582, 1.442695
  %v1588 = vpow.pop %v1587
  %v1589 = vadd.f32 %v1584, 1.0
  %v1590 = vadd.f32 %v1586, 1.0
  %v1591 = vadd.f32 %v1588, 1.0
  %v1592 = vrcp.pop %v1589
  %v1593 = vmul.f32 1.0, %v1592
  %v1594 = vrcp.pop %v1590
  %v1595 = vmul.f32 1.0, %v1594
  %v1596 = vrcp.pop %v1591
  %v1597 = vmul.f32 1.0, %v1596
  %v1598 = vtanh.pop %v1365
  %v1599 = vmul.f32 %v1595, %v1123
  %v1600 = vmul.f32 %v1593, %v1598
  %v1601 = vadd.f32 %v1599, %v1600
  %v1602 = vtanh.pop %v1601
  %v1603 = vmul.f32 %v1597, %v1602
  %v1604 = vxor.u32 %v1576, 2147483648
  %v1605 = vxor.u32 %v1577, 2147483648
  %v1606 = vxor.u32 %v1578, 2147483648
  %v1607 = vmul.f32 %v1604, 1.442695
  %v1608 = vpow.pop %v1607
  %v1609 = vmul.f32 %v1605, 1.442695
  %v1610 = vpow.pop %v1609
  %v1611 = vmul.f32 %v1606, 1.442695
  %v1612 = vpow.pop %v1611
  %v1613 = vadd.f32 %v1608, 1.0
  %v1614 = vadd.f32 %v1610, 1.0
  %v1615 = vadd.f32 %v1612, 1.0
  %v1616 = vrcp.pop %v1613
  %v1617 = vmul.f32 1.0, %v1616
  %v1618 = vrcp.pop %v1614
  %v1619 = vmul.f32 1.0, %v1618
  %v1620 = vrcp.pop %v1615
  %v1621 = vmul.f32 1.0, %v1620
  %v1622 = vtanh.pop %v1579
  %v1623 = vmul.f32 %v1619, %v1147
  %v1624 = vmul.f32 %v1617, %v1622
  %v1625 = vadd.f32 %v1623, %v1624
  %v1626 = vtanh.pop %v1625
  %v1627 = vmul.f32 %v1621, %v1626
  %1628 = vst [vmem:[#allocation3 + $0x20] sm:$0xff] %v1603
  %1629 = vst [vmem:[#allocation3 + $0x58] sm:$0xff] %v1627
  %v1630 = vld [vmem:[#allocation2 + $0xc0] sm:$0xff]
  %v1631 = vld [vmem:[#allocation2 + $0xc8] sm:$0xff]
  %v1632 = vld [vmem:[#allocation2 + $0xd0] sm:$0xff]
  %v1633 = vld [vmem:[#allocation2 + $0xd8] sm:$0xff]
  %v1634 = vld [vmem:[%s2] sm:$0xff]
  %v1635 = vld [vmem:[%s2 + $0x8] sm:$0xff]
  %v1636 = vld [vmem:[%s2 + $0x10] sm:$0xff]
  %v1637 = vld [vmem:[%s2 + $0x18] sm:$0xff]
  %v1638 = vld [vmem:[%s2 + $0x20] sm:$0xff]
  %v1639 = vld [vmem:[%s2 + $0x28] sm:$0xff]
  %v1640 = vld [vmem:[%s2 + $0x30] sm:$0xff]
  %v1641 = vld [vmem:[%s2 + $0x38] sm:$0xff]
  %v1642 = vld [vmem:[%s2 + $0x40] sm:$0xff]
  %v1643 = vld [vmem:[%s2 + $0x48] sm:$0xff]
  %v1644 = vld [vmem:[%s2 + $0x50] sm:$0xff]
  %v1645 = vld [vmem:[%s2 + $0x58] sm:$0xff]
  %v1646 = vld [vmem:[%s2 + $0x60] sm:$0xff]
  %v1647 = vld [vmem:[%s2 + $0x68] sm:$0xff]
  %v1648 = vld [vmem:[%s2 + $0x70] sm:$0xff]
  %v1649 = vld [vmem:[%s2 + $0x78] sm:$0xff]
  %v1650 = vld [vmem:[%s2 + $0x80] sm:$0xff]
  %v1651 = vld [vmem:[%s2 + $0x88] sm:$0xff]
  %v1652 = vld [vmem:[%s2 + $0x90] sm:$0xff]
  %v1653 = vld [vmem:[%s2 + $0x98] sm:$0xff]
  %v1654 = vld [vmem:[%s2 + $0xa0] sm:$0xff]
  %v1655 = vld [vmem:[%s2 + $0xa8] sm:$0xff]
  %v1656 = vld [vmem:[%s2 + $0xb0] sm:$0xff]
  %v1657 = vld [vmem:[%s2 + $0xb8] sm:$0xff]
  %v1658 = vld [vmem:[%s2 + $0xc0] sm:$0xff]
  %v1659 = vld [vmem:[%s2 + $0xc8] sm:$0xff]
  %v1660 = vld [vmem:[%s2 + $0xd0] sm:$0xff]
  %v1661 = vld [vmem:[%s2 + $0xd8] sm:$0xff]
  %v1662 = vld [vmem:[%s2 + $0xe0] sm:$0xff]
  %v1663 = vld [vmem:[%s2 + $0xe8] sm:$0xff]
  %v1664 = vld [vmem:[%s2 + $0xf0] sm:$0xff]
  %v1665 = vld [vmem:[%s2 + $0xf8] sm:$0xff]
  %v1666 = vld [vmem:[%s2 + $0x100] sm:$0xff]
  %v1667 = vld [vmem:[%s2 + $0x108] sm:$0xff]
  %v1668 = vld [vmem:[%s2 + $0x110] sm:$0xff]
  %v1669 = vld [vmem:[%s2 + $0x118] sm:$0xff]
  %v1670 = vld [vmem:[%s2 + $0x120] sm:$0xff]
  %v1671 = vld [vmem:[%s2 + $0x128] sm:$0xff]
  %v1672 = vld [vmem:[%s2 + $0x130] sm:$0xff]
  %v1673 = vld [vmem:[%s2 + $0x138] sm:$0xff]
  %v1674 = vld [vmem:[%s2 + $0x140] sm:$0xff]
  %v1675 = vld [vmem:[%s2 + $0x148] sm:$0xff]
  %v1676 = vld [vmem:[%s2 + $0x150] sm:$0xff]
  %v1677 = vld [vmem:[%s2 + $0x158] sm:$0xff]
  %v1678 = vld [vmem:[%s2 + $0x160] sm:$0xff]
  %v1679 = vld [vmem:[%s2 + $0x168] sm:$0xff]
  %v1680 = vld [vmem:[%s2 + $0x170] sm:$0xff]
  %v1681 = vld [vmem:[%s2 + $0x178] sm:$0xff]
  %v1682 = vld [vmem:[%s2 + $0x180] sm:$0xff]
  %v1683 = vld [vmem:[%s2 + $0x188] sm:$0xff]
  %v1684 = vld [vmem:[%s2 + $0x190] sm:$0xff]
  %v1685 = vld [vmem:[%s2 + $0x198] sm:$0xff]
  %v1686 = vld [vmem:[%s2 + $0x1a0] sm:$0xff]
  %v1687 = vld [vmem:[%s2 + $0x1a8] sm:$0xff]
  %v1688 = vld [vmem:[%s2 + $0x1b0] sm:$0xff]
  %v1689 = vld [vmem:[%s2 + $0x1b8] sm:$0xff]
  %v1690 = vld [vmem:[%s2 + $0x1c0] sm:$0xff]
  %v1691 = vld [vmem:[%s2 + $0x1c8] sm:$0xff]
  %v1692 = vld [vmem:[%s2 + $0x1d0] sm:$0xff]
  %v1693 = vld [vmem:[%s2 + $0x1d8] sm:$0xff]
  %v1694 = vld [vmem:[%s2 + $0x1e0] sm:$0xff]
  %v1695 = vld [vmem:[%s2 + $0x1e8] sm:$0xff]
  %v1696 = vld [vmem:[%s2 + $0x1f0] sm:$0xff]
  %v1697 = vld [vmem:[%s2 + $0x1f8] sm:$0xff]
  %1698 = vmatprep.subr.mxu0 %v1635
  %1699 = vmatpush1.msra.mxu0 %v1634
  %1700 = vmatprep.subr.mxu0 %v1639
  %1701 = vmatpush1.msra.mxu0 %v1638
  %1702 = vmatprep.subr.mxu0 %v1643
  %1703 = vmatpush1.msra.mxu0 %v1642
  %1704 = vmatprep.subr.mxu0 %v1647
  %1705 = vmatpush1.msra.mxu0 %v1646
  %1706 = vmatprep.subr.mxu0 %v1651
  %1707 = vmatpush1.msra.mxu0 %v1650
  %1708 = vmatprep.subr.mxu0 %v1655
  %1709 = vmatpush1.msra.mxu0 %v1654
  %1710 = vmatprep.subr.mxu0 %v1659
  %1711 = vmatpush1.msra.mxu0 %v1658
  %1712 = vmatprep.subr.mxu0 %v1663
  %1713 = vmatpush1.msra.mxu0 %v1662
  %1714 = vmatprep.subr.mxu0 %v1667
  %1715 = vmatpush1.msra.mxu0 %v1666
  %1716 = vmatprep.subr.mxu0 %v1671
  %1717 = vmatpush1.msra.mxu0 %v1670
  %1718 = vmatprep.subr.mxu0 %v1675
  %1719 = vmatpush1.msra.mxu0 %v1674
  %1720 = vmatprep.subr.mxu0 %v1679
  %1721 = vmatpush1.msra.mxu0 %v1678
  %1722 = vmatprep.subr.mxu0 %v1683
  %1723 = vmatpush1.msra.mxu0 %v1682
  %1724 = vmatprep.subr.mxu0 %v1687
  %1725 = vmatpush1.msra.mxu0 %v1686
  %1726 = vmatprep.subr.mxu0 %v1691
  %1727 = vmatpush1.msra.mxu0 %v1690
  %1728 = vmatprep.subr.mxu0 %v1695
  %1729 = vmatpush1.msra.mxu0 %v1694
  %1730 = vmatprep.subr.mxu0 0.0
  %1731 = vmatpush1.msra.mxu0 0.0
  %1732 = vmatprep.subr.mxu0 0.0
  %1733 = vmatpush1.msra.mxu0 0.0
  %1734 = vmatprep.subr.mxu0 0.0
  %1735 = vmatpush1.msra.mxu0 0.0
  %1736 = vmatprep.subr.mxu0 0.0
  %1737 = vmatpush1.msra.mxu0 0.0
  %1738 = vmatprep.subr.mxu0 0.0
  %1739 = vmatpush1.msra.mxu0 0.0
  %1740 = vmatprep.subr.mxu0 0.0
  %1741 = vmatpush1.msra.mxu0 0.0
  %1742 = vmatprep.subr.mxu0 0.0
  %1743 = vmatpush1.msra.mxu0 0.0
  %1744 = vmatprep.subr.mxu0 0.0
  %1745 = vmatpush1.msra.mxu0 0.0
  %1746 = vmatprep.subr.mxu0 0.0
  %1747 = vmatpush1.msra.mxu0 0.0
  %1748 = vmatprep.subr.mxu0 0.0
  %1749 = vmatpush1.msra.mxu0 0.0
  %1750 = vmatprep.subr.mxu0 0.0
  %1751 = vmatpush1.msra.mxu0 0.0
  %1752 = vmatprep.subr.mxu0 0.0
  %1753 = vmatpush1.msra.mxu0 0.0
  %1754 = vmatprep.subr.mxu0 0.0
  %1755 = vmatpush1.msra.mxu0 0.0
  %1756 = vmatprep.subr.mxu0 0.0
  %1757 = vmatpush1.msra.mxu0 0.0
  %1758 = vmatprep.subr.mxu0 0.0
  %1759 = vmatpush1.msra.mxu0 0.0
  %1760 = vmatprep.subr.mxu0 0.0
  %1761 = vmatpush1.msra.mxu0 0.0
  %1762 = vmatprep.mubr.f32.mxu0 0.0
  %1763 = vmatmul.mubr.f32.gmra.mrb[0].mxu0 %v1603
  %v1764 = vpop.f32.mrb[0].mxu0
  %v1765 = vadd.f32 0.0, %v1764
  %v1766 = vpop.f32.mrb[0].mxu0
  %v1767 = vadd.f32 0.0, %v1766
  %1768 = vdwg.mxu0
  %1769 = vmatprep.subr.mxu0 %v1637
  %1770 = vmatpush1.msra.mxu0 %v1636
  %1771 = vmatprep.subr.mxu0 %v1641
  %1772 = vmatpush1.msra.mxu0 %v1640
  %1773 = vmatprep.subr.mxu0 %v1645
  %1774 = vmatpush1.msra.mxu0 %v1644
  %1775 = vmatprep.subr.mxu0 %v1649
  %1776 = vmatpush1.msra.mxu0 %v1648
  %1777 = vmatprep.subr.mxu0 %v1653
  %1778 = vmatpush1.msra.mxu0 %v1652
  %1779 = vmatprep.subr.mxu0 %v1657
  %1780 = vmatpush1.msra.mxu0 %v1656
  %1781 = vmatprep.subr.mxu0 %v1661
  %1782 = vmatpush1.msra.mxu0 %v1660
  %1783 = vmatprep.subr.mxu0 %v1665
  %1784 = vmatpush1.msra.mxu0 %v1664
  %1785 = vmatprep.subr.mxu0 %v1669
  %1786 = vmatpush1.msra.mxu0 %v1668
  %1787 = vmatprep.subr.mxu0 %v1673
  %1788 = vmatpush1.msra.mxu0 %v1672
  %1789 = vmatprep.subr.mxu0 %v1677
  %1790 = vmatpush1.msra.mxu0 %v1676
  %1791 = vmatprep.subr.mxu0 %v1681
  %1792 = vmatpush1.msra.mxu0 %v1680
  %1793 = vmatprep.subr.mxu0 %v1685
  %1794 = vmatpush1.msra.mxu0 %v1684
  %1795 = vmatprep.subr.mxu0 %v1689
  %1796 = vmatpush1.msra.mxu0 %v1688
  %1797 = vmatprep.subr.mxu0 %v1693
  %1798 = vmatpush1.msra.mxu0 %v1692
  %1799 = vmatprep.subr.mxu0 %v1697
  %1800 = vmatpush1.msra.mxu0 %v1696
  %1801 = vmatprep.subr.mxu0 0.0
  %1802 = vmatpush1.msra.mxu0 0.0
  %1803 = vmatprep.subr.mxu0 0.0
  %1804 = vmatpush1.msra.mxu0 0.0
  %1805 = vmatprep.subr.mxu0 0.0
  %1806 = vmatpush1.msra.mxu0 0.0
  %1807 = vmatprep.subr.mxu0 0.0
  %1808 = vmatpush1.msra.mxu0 0.0
  %1809 = vmatprep.subr.mxu0 0.0
  %1810 = vmatpush1.msra.mxu0 0.0
  %1811 = vmatprep.subr.mxu0 0.0
  %1812 = vmatpush1.msra.mxu0 0.0
  %1813 = vmatprep.subr.mxu0 0.0
  %1814 = vmatpush1.msra.mxu0 0.0
  %1815 = vmatprep.subr.mxu0 0.0
  %1816 = vmatpush1.msra.mxu0 0.0
  %1817 = vmatprep.subr.mxu0 0.0
  %1818 = vmatpush1.msra.mxu0 0.0
  %1819 = vmatprep.subr.mxu0 0.0
  %1820 = vmatpush1.msra.mxu0 0.0
  %1821 = vmatprep.subr.mxu0 0.0
  %1822 = vmatpush1.msra.mxu0 0.0
  %1823 = vmatprep.subr.mxu0 0.0
  %1824 = vmatpush1.msra.mxu0 0.0
  %1825 = vmatprep.subr.mxu0 0.0
  %1826 = vmatpush1.msra.mxu0 0.0
  %1827 = vmatprep.subr.mxu0 0.0
  %1828 = vmatpush1.msra.mxu0 0.0
  %1829 = vmatprep.subr.mxu0 0.0
  %1830 = vmatpush1.msra.mxu0 0.0
  %1831 = vmatprep.subr.mxu0 0.0
  %1832 = vmatpush1.msra.mxu0 0.0
  %1833 = vmatprep.mubr.f32.mxu0 0.0
  %1834 = vmatmul.mubr.f32.gmra.mrb[0].mxu0 %v1603
  %v1835 = vpop.f32.mrb[0].mxu0
  %v1836 = vadd.f32 0.0, %v1835
  %v1837 = vpop.f32.mrb[0].mxu0
  %v1838 = vadd.f32 0.0, %v1837
  %1839 = vdwg.mxu0
  %v1840 = vadd.f32 %v1630, %v1765
  %v1841 = vadd.f32 %v1631, %v1767
  %v1842 = vadd.f32 %v1632, %v1836
  %v1843 = vadd.f32 %v1633, %v1838
  %v1844 = vld [vmem:[#allocation2 + $0x120] sm:$0xff]
  %v1845 = vld [vmem:[#allocation2 + $0x128] sm:$0xff]
  %v1846 = vld [vmem:[#allocation2 + $0x130] sm:$0xff]
  %v1847 = vld [vmem:[#allocation2 + $0x138] sm:$0xff]
  %v1848 = vld [vmem:[%s3] sm:$0xff]
  %v1849 = vld [vmem:[%s3 + $0x8] sm:$0xff]
  %v1850 = vld [vmem:[%s3 + $0x10] sm:$0xff]
  %v1851 = vld [vmem:[%s3 + $0x18] sm:$0xff]
  %v1852 = vld [vmem:[%s3 + $0x20] sm:$0xff]
  %v1853 = vld [vmem:[%s3 + $0x28] sm:$0xff]
  %v1854 = vld [vmem:[%s3 + $0x30] sm:$0xff]
  %v1855 = vld [vmem:[%s3 + $0x38] sm:$0xff]
  %v1856 = vld [vmem:[%s3 + $0x40] sm:$0xff]
  %v1857 = vld [vmem:[%s3 + $0x48] sm:$0xff]
  %v1858 = vld [vmem:[%s3 + $0x50] sm:$0xff]
  %v1859 = vld [vmem:[%s3 + $0x58] sm:$0xff]
  %v1860 = vld [vmem:[%s3 + $0x60] sm:$0xff]
  %v1861 = vld [vmem:[%s3 + $0x68] sm:$0xff]
  %v1862 = vld [vmem:[%s3 + $0x70] sm:$0xff]
  %v1863 = vld [vmem:[%s3 + $0x78] sm:$0xff]
  %v1864 = vld [vmem:[%s3 + $0x80] sm:$0xff]
  %v1865 = vld [vmem:[%s3 + $0x88] sm:$0xff]
  %v1866 = vld [vmem:[%s3 + $0x90] sm:$0xff]
  %v1867 = vld [vmem:[%s3 + $0x98] sm:$0xff]
  %v1868 = vld [vmem:[%s3 + $0xa0] sm:$0xff]
  %v1869 = vld [vmem:[%s3 + $0xa8] sm:$0xff]
  %v1870 = vld [vmem:[%s3 + $0xb0] sm:$0xff]
  %v1871 = vld [vmem:[%s3 + $0xb8] sm:$0xff]
  %v1872 = vld [vmem:[%s3 + $0xc0] sm:$0xff]
  %v1873 = vld [vmem:[%s3 + $0xc8] sm:$0xff]
  %v1874 = vld [vmem:[%s3 + $0xd0] sm:$0xff]
  %v1875 = vld [vmem:[%s3 + $0xd8] sm:$0xff]
  %v1876 = vld [vmem:[%s3 + $0xe0] sm:$0xff]
  %v1877 = vld [vmem:[%s3 + $0xe8] sm:$0xff]
  %v1878 = vld [vmem:[%s3 + $0xf0] sm:$0xff]
  %v1879 = vld [vmem:[%s3 + $0xf8] sm:$0xff]
  %v1880 = vld [vmem:[%s3 + $0x100] sm:$0xff]
  %v1881 = vld [vmem:[%s3 + $0x108] sm:$0xff]
  %v1882 = vld [vmem:[%s3 + $0x110] sm:$0xff]
  %v1883 = vld [vmem:[%s3 + $0x118] sm:$0xff]
  %v1884 = vld [vmem:[%s3 + $0x120] sm:$0xff]
  %v1885 = vld [vmem:[%s3 + $0x128] sm:$0xff]
  %v1886 = vld [vmem:[%s3 + $0x130] sm:$0xff]
  %v1887 = vld [vmem:[%s3 + $0x138] sm:$0xff]
  %v1888 = vld [vmem:[%s3 + $0x140] sm:$0xff]
  %v1889 = vld [vmem:[%s3 + $0x148] sm:$0xff]
  %v1890 = vld [vmem:[%s3 + $0x150] sm:$0xff]
  %v1891 = vld [vmem:[%s3 + $0x158] sm:$0xff]
  %v1892 = vld [vmem:[%s3 + $0x160] sm:$0xff]
  %v1893 = vld [vmem:[%s3 + $0x168] sm:$0xff]
  %v1894 = vld [vmem:[%s3 + $0x170] sm:$0xff]
  %v1895 = vld [vmem:[%s3 + $0x178] sm:$0xff]
  %v1896 = vld [vmem:[%s3 + $0x180] sm:$0xff]
  %v1897 = vld [vmem:[%s3 + $0x188] sm:$0xff]
  %v1898 = vld [vmem:[%s3 + $0x190] sm:$0xff]
  %v1899 = vld [vmem:[%s3 + $0x198] sm:$0xff]
  %v1900 = vld [vmem:[%s3 + $0x1a0] sm:$0xff]
  %v1901 = vld [vmem:[%s3 + $0x1a8] sm:$0xff]
  %v1902 = vld [vmem:[%s3 + $0x1b0] sm:$0xff]
  %v1903 = vld [vmem:[%s3 + $0x1b8] sm:$0xff]
  %v1904 = vld [vmem:[%s3 + $0x1c0] sm:$0xff]
  %v1905 = vld [vmem:[%s3 + $0x1c8] sm:$0xff]
  %v1906 = vld [vmem:[%s3 + $0x1d0] sm:$0xff]
  %v1907 = vld [vmem:[%s3 + $0x1d8] sm:$0xff]
  %v1908 = vld [vmem:[%s3 + $0x1e0] sm:$0xff]
  %v1909 = vld [vmem:[%s3 + $0x1e8] sm:$0xff]
  %v1910 = vld [vmem:[%s3 + $0x1f0] sm:$0xff]
  %v1911 = vld [vmem:[%s3 + $0x1f8] sm:$0xff]
  %1912 = vmatprep.subr.mxu0 %v1849
  %1913 = vmatpush1.msra.mxu0 %v1848
  %1914 = vmatprep.subr.mxu0 %v1853
  %1915 = vmatpush1.msra.mxu0 %v1852
  %1916 = vmatprep.subr.mxu0 %v1857
  %1917 = vmatpush1.msra.mxu0 %v1856
  %1918 = vmatprep.subr.mxu0 %v1861
  %1919 = vmatpush1.msra.mxu0 %v1860
  %1920 = vmatprep.subr.mxu0 %v1865
  %1921 = vmatpush1.msra.mxu0 %v1864
  %1922 = vmatprep.subr.mxu0 %v1869
  %1923 = vmatpush1.msra.mxu0 %v1868
  %1924 = vmatprep.subr.mxu0 %v1873
  %1925 = vmatpush1.msra.mxu0 %v1872
  %1926 = vmatprep.subr.mxu0 %v1877
  %1927 = vmatpush1.msra.mxu0 %v1876
  %1928 = vmatprep.subr.mxu0 %v1881
  %1929 = vmatpush1.msra.mxu0 %v1880
  %1930 = vmatprep.subr.mxu0 %v1885
  %1931 = vmatpush1.msra.mxu0 %v1884
  %1932 = vmatprep.subr.mxu0 %v1889
  %1933 = vmatpush1.msra.mxu0 %v1888
  %1934 = vmatprep.subr.mxu0 %v1893
  %1935 = vmatpush1.msra.mxu0 %v1892
  %1936 = vmatprep.subr.mxu0 %v1897
  %1937 = vmatpush1.msra.mxu0 %v1896
  %1938 = vmatprep.subr.mxu0 %v1901
  %1939 = vmatpush1.msra.mxu0 %v1900
  %1940 = vmatprep.subr.mxu0 %v1905
  %1941 = vmatpush1.msra.mxu0 %v1904
  %1942 = vmatprep.subr.mxu0 %v1909
  %1943 = vmatpush1.msra.mxu0 %v1908
  %1944 = vmatprep.subr.mxu0 0.0
  %1945 = vmatpush1.msra.mxu0 0.0
  %1946 = vmatprep.subr.mxu0 0.0
  %1947 = vmatpush1.msra.mxu0 0.0
  %1948 = vmatprep.subr.mxu0 0.0
  %1949 = vmatpush1.msra.mxu0 0.0
  %1950 = vmatprep.subr.mxu0 0.0
  %1951 = vmatpush1.msra.mxu0 0.0
  %1952 = vmatprep.subr.mxu0 0.0
  %1953 = vmatpush1.msra.mxu0 0.0
  %1954 = vmatprep.subr.mxu0 0.0
  %1955 = vmatpush1.msra.mxu0 0.0
  %1956 = vmatprep.subr.mxu0 0.0
  %1957 = vmatpush1.msra.mxu0 0.0
  %1958 = vmatprep.subr.mxu0 0.0
  %1959 = vmatpush1.msra.mxu0 0.0
  %1960 = vmatprep.subr.mxu0 0.0
  %1961 = vmatpush1.msra.mxu0 0.0
  %1962 = vmatprep.subr.mxu0 0.0
  %1963 = vmatpush1.msra.mxu0 0.0
  %1964 = vmatprep.subr.mxu0 0.0
  %1965 = vmatpush1.msra.mxu0 0.0
  %1966 = vmatprep.subr.mxu0 0.0
  %1967 = vmatpush1.msra.mxu0 0.0
  %1968 = vmatprep.subr.mxu0 0.0
  %1969 = vmatpush1.msra.mxu0 0.0
  %1970 = vmatprep.subr.mxu0 0.0
  %1971 = vmatpush1.msra.mxu0 0.0
  %1972 = vmatprep.subr.mxu0 0.0
  %1973 = vmatpush1.msra.mxu0 0.0
  %1974 = vmatprep.subr.mxu0 0.0
  %1975 = vmatpush1.msra.mxu0 0.0
  %1976 = vmatprep.mubr.f32.mxu0 0.0
  %1977 = vmatmul.mubr.f32.gmra.mrb[0].mxu0 %v1627
  %v1978 = vpop.f32.mrb[0].mxu0
  %v1979 = vadd.f32 0.0, %v1978
  %v1980 = vpop.f32.mrb[0].mxu0
  %v1981 = vadd.f32 0.0, %v1980
  %1982 = vdwg.mxu0
  %1983 = vmatprep.subr.mxu0 %v1851
  %1984 = vmatpush1.msra.mxu0 %v1850
  %1985 = vmatprep.subr.mxu0 %v1855
  %1986 = vmatpush1.msra.mxu0 %v1854
  %1987 = vmatprep.subr.mxu0 %v1859
  %1988 = vmatpush1.msra.mxu0 %v1858
  %1989 = vmatprep.subr.mxu0 %v1863
  %1990 = vmatpush1.msra.mxu0 %v1862
  %1991 = vmatprep.subr.mxu0 %v1867
  %1992 = vmatpush1.msra.mxu0 %v1866
  %1993 = vmatprep.subr.mxu0 %v1871
  %1994 = vmatpush1.msra.mxu0 %v1870
  %1995 = vmatprep.subr.mxu0 %v1875
  %1996 = vmatpush1.msra.mxu0 %v1874
  %1997 = vmatprep.subr.mxu0 %v1879
  %1998 = vmatpush1.msra.mxu0 %v1878
  %1999 = vmatprep.subr.mxu0 %v1883
  %2000 = vmatpush1.msra.mxu0 %v1882
  %2001 = vmatprep.subr.mxu0 %v1887
  %2002 = vmatpush1.msra.mxu0 %v1886
  %2003 = vmatprep.subr.mxu0 %v1891
  %2004 = vmatpush1.msra.mxu0 %v1890
  %2005 = vmatprep.subr.mxu0 %v1895
  %2006 = vmatpush1.msra.mxu0 %v1894
  %2007 = vmatprep.subr.mxu0 %v1899
  %2008 = vmatpush1.msra.mxu0 %v1898
  %2009 = vmatprep.subr.mxu0 %v1903
  %2010 = vmatpush1.msra.mxu0 %v1902
  %2011 = vmatprep.subr.mxu0 %v1907
  %2012 = vmatpush1.msra.mxu0 %v1906
  %2013 = vmatprep.subr.mxu0 %v1911
  %2014 = vmatpush1.msra.mxu0 %v1910
  %2015 = vmatprep.subr.mxu0 0.0
  %2016 = vmatpush1.msra.mxu0 0.0
  %2017 = vmatprep.subr.mxu0 0.0
  %2018 = vmatpush1.msra.mxu0 0.0
  %2019 = vmatprep.subr.mxu0 0.0
  %2020 = vmatpush1.msra.mxu0 0.0
  %2021 = vmatprep.subr.mxu0 0.0
  %2022 = vmatpush1.msra.mxu0 0.0
  %2023 = vmatprep.subr.mxu0 0.0
  %2024 = vmatpush1.msra.mxu0 0.0
  %2025 = vmatprep.subr.mxu0 0.0
  %2026 = vmatpush1.msra.mxu0 0.0
  %2027 = vmatprep.subr.mxu0 0.0
  %2028 = vmatpush1.msra.mxu0 0.0
  %2029 = vmatprep.subr.mxu0 0.0
  %2030 = vmatpush1.msra.mxu0 0.0
  %2031 = vmatprep.subr.mxu0 0.0
  %2032 = vmatpush1.msra.mxu0 0.0
  %2033 = vmatprep.subr.mxu0 0.0
  %2034 = vmatpush1.msra.mxu0 0.0
  %2035 = vmatprep.subr.mxu0 0.0
  %2036 = vmatpush1.msra.mxu0 0.0
  %2037 = vmatprep.subr.mxu0 0.0
  %2038 = vmatpush1.msra.mxu0 0.0
  %2039 = vmatprep.subr.mxu0 0.0
  %2040 = vmatpush1.msra.mxu0 0.0
  %2041 = vmatprep.subr.mxu0 0.0
  %2042 = vmatpush1.msra.mxu0 0.0
  %2043 = vmatprep.subr.mxu0 0.0
  %2044 = vmatpush1.msra.mxu0 0.0
  %2045 = vmatprep.subr.mxu0 0.0
  %2046 = vmatpush1.msra.mxu0 0.0
  %2047 = vmatprep.mubr.f32.mxu0 0.0
  %2048 = vmatmul.mubr.f32.gmra.mrb[0].mxu0 %v1627
  %v2049 = vpop.f32.mrb[0].mxu0
  %v2050 = vadd.f32 0.0, %v2049
  %v2051 = vpop.f32.mrb[0].mxu0
  %v2052 = vadd.f32 0.0, %v2051
  %2053 = vdwg.mxu0
  %v2054 = vadd.f32 %v1844, %v1979
  %v2055 = vadd.f32 %v1845, %v1981
  %v2056 = vadd.f32 %v1846, %v2050
  %v2057 = vadd.f32 %v1847, %v2052
  %v2058 = vxor.u32 %v1840, 2147483648
  %v2059 = vxor.u32 %v1841, 2147483648
  %v2060 = vxor.u32 %v1842, 2147483648
  %v2061 = vmul.f32 %v2058, 1.442695
  %v2062 = vpow.pop %v2061
  %v2063 = vmul.f32 %v2059, 1.442695
  %v2064 = vpow.pop %v2063
  %v2065 = vmul.f32 %v2060, 1.442695
  %v2066 = vpow.pop %v2065
  %v2067 = vadd.f32 %v2062, 1.0
  %v2068 = vadd.f32 %v2064, 1.0
  %v2069 = vadd.f32 %v2066, 1.0
  %v2070 = vrcp.pop %v2067
  %v2071 = vmul.f32 1.0, %v2070
  %v2072 = vrcp.pop %v2068
  %v2073 = vmul.f32 1.0, %v2072
  %v2074 = vrcp.pop %v2069
  %v2075 = vmul.f32 1.0, %v2074
  %v2076 = vtanh.pop %v1843
  %v2077 = vmul.f32 %v2073, %v1601
  %v2078 = vmul.f32 %v2071, %v2076
  %v2079 = vadd.f32 %v2077, %v2078
  %v2080 = vtanh.pop %v2079
  %v2081 = vmul.f32 %v2075, %v2080
  %v2082 = vxor.u32 %v2054, 2147483648
  %v2083 = vxor.u32 %v2055, 2147483648
  %v2084 = vxor.u32 %v2056, 2147483648
  %v2085 = vmul.f32 %v2082, 1.442695
  %v2086 = vpow.pop %v2085
  %v2087 = vmul.f32 %v2083, 1.442695
  %v2088 = vpow.pop %v2087
  %v2089 = vmul.f32 %v2084, 1.442695
  %v2090 = vpow.pop %v2089
  %v2091 = vadd.f32 %v2086, 1.0
  %v2092 = vadd.f32 %v2088, 1.0
  %v2093 = vadd.f32 %v2090, 1.0
  %v2094 = vrcp.pop %v2091
  %v2095 = vmul.f32 1.0, %v2094
  %v2096 = vrcp.pop %v2092
  %v2097 = vmul.f32 1.0, %v2096
  %v2098 = vrcp.pop %v2093
  %v2099 = vmul.f32 1.0, %v2098
  %v2100 = vtanh.pop %v2057
  %v2101 = vmul.f32 %v2097, %v1625
  %v2102 = vmul.f32 %v2095, %v2100
  %v2103 = vadd.f32 %v2101, %v2102
  %v2104 = vtanh.pop %v2103
  %v2105 = vmul.f32 %v2099, %v2104
  %2106 = vst [vmem:[#allocation3 + $0x30] sm:$0xff] %v2081
  %2107 = vst [vmem:[#allocation3 + $0x48] sm:$0xff] %v2105
  %v2108 = vld [vmem:[#allocation2 + $0x100] sm:$0xff]
  %v2109 = vld [vmem:[#allocation2 + $0x108] sm:$0xff]
  %v2110 = vld [vmem:[#allocation2 + $0x110] sm:$0xff]
  %v2111 = vld [vmem:[#allocation2 + $0x118] sm:$0xff]
  %v2112 = vld [vmem:[%s2] sm:$0xff]
  %v2113 = vld [vmem:[%s2 + $0x8] sm:$0xff]
  %v2114 = vld [vmem:[%s2 + $0x10] sm:$0xff]
  %v2115 = vld [vmem:[%s2 + $0x18] sm:$0xff]
  %v2116 = vld [vmem:[%s2 + $0x20] sm:$0xff]
  %v2117 = vld [vmem:[%s2 + $0x28] sm:$0xff]
  %v2118 = vld [vmem:[%s2 + $0x30] sm:$0xff]
  %v2119 = vld [vmem:[%s2 + $0x38] sm:$0xff]
  %v2120 = vld [vmem:[%s2 + $0x40] sm:$0xff]
  %v2121 = vld [vmem:[%s2 + $0x48] sm:$0xff]
  %v2122 = vld [vmem:[%s2 + $0x50] sm:$0xff]
  %v2123 = vld [vmem:[%s2 + $0x58] sm:$0xff]
  %v2124 = vld [vmem:[%s2 + $0x60] sm:$0xff]
  %v2125 = vld [vmem:[%s2 + $0x68] sm:$0xff]
  %v2126 = vld [vmem:[%s2 + $0x70] sm:$0xff]
  %v2127 = vld [vmem:[%s2 + $0x78] sm:$0xff]
  %v2128 = vld [vmem:[%s2 + $0x80] sm:$0xff]
  %v2129 = vld [vmem:[%s2 + $0x88] sm:$0xff]
  %v2130 = vld [vmem:[%s2 + $0x90] sm:$0xff]
  %v2131 = vld [vmem:[%s2 + $0x98] sm:$0xff]
  %v2132 = vld [vmem:[%s2 + $0xa0] sm:$0xff]
  %v2133 = vld [vmem:[%s2 + $0xa8] sm:$0xff]
  %v2134 = vld [vmem:[%s2 + $0xb0] sm:$0xff]
  %v2135 = vld [vmem:[%s2 + $0xb8] sm:$0xff]
  %v2136 = vld [vmem:[%s2 + $0xc0] sm:$0xff]
  %v2137 = vld [vmem:[%s2 + $0xc8] sm:$0xff]
  %v2138 = vld [vmem:[%s2 + $0xd0] sm:$0xff]
  %v2139 = vld [vmem:[%s2 + $0xd8] sm:$0xff]
  %v2140 = vld [vmem:[%s2 + $0xe0] sm:$0xff]
  %v2141 = vld [vmem:[%s2 + $0xe8] sm:$0xff]
  %v2142 = vld [vmem:[%s2 + $0xf0] sm:$0xff]
  %v2143 = vld [vmem:[%s2 + $0xf8] sm:$0xff]
  %v2144 = vld [vmem:[%s2 + $0x100] sm:$0xff]
  %v2145 = vld [vmem:[%s2 + $0x108] sm:$0xff]
  %v2146 = vld [vmem:[%s2 + $0x110] sm:$0xff]
  %v2147 = vld [vmem:[%s2 + $0x118] sm:$0xff]
  %v2148 = vld [vmem:[%s2 + $0x120] sm:$0xff]
  %v2149 = vld [vmem:[%s2 + $0x128] sm:$0xff]
  %v2150 = vld [vmem:[%s2 + $0x130] sm:$0xff]
  %v2151 = vld [vmem:[%s2 + $0x138] sm:$0xff]
  %v2152 = vld [vmem:[%s2 + $0x140] sm:$0xff]
  %v2153 = vld [vmem:[%s2 + $0x148] sm:$0xff]
  %v2154 = vld [vmem:[%s2 + $0x150] sm:$0xff]
  %v2155 = vld [vmem:[%s2 + $0x158] sm:$0xff]
  %v2156 = vld [vmem:[%s2 + $0x160] sm:$0xff]
  %v2157 = vld [vmem:[%s2 + $0x168] sm:$0xff]
  %v2158 = vld [vmem:[%s2 + $0x170] sm:$0xff]
  %v2159 = vld [vmem:[%s2 + $0x178] sm:$0xff]
  %v2160 = vld [vmem:[%s2 + $0x180] sm:$0xff]
  %v2161 = vld [vmem:[%s2 + $0x188] sm:$0xff]
  %v2162 = vld [vmem:[%s2 + $0x190] sm:$0xff]
  %v2163 = vld [vmem:[%s2 + $0x198] sm:$0xff]
  %v2164 = vld [vmem:[%s2 + $0x1a0] sm:$0xff]
  %v2165 = vld [vmem:[%s2 + $0x1a8] sm:$0xff]
  %v2166 = vld [vmem:[%s2 + $0x1b0] sm:$0xff]
  %v2167 = vld [vmem:[%s2 + $0x1b8] sm:$0xff]
  %v2168 = vld [vmem:[%s2 + $0x1c0] sm:$0xff]
  %v2169 = vld [vmem:[%s2 + $0x1c8] sm:$0xff]
  %v2170 = vld [vmem:[%s2 + $0x1d0] sm:$0xff]
  %v2171 = vld [vmem:[%s2 + $0x1d8] sm:$0xff]
  %v2172 = vld [vmem:[%s2 + $0x1e0] sm:$0xff]
  %v2173 = vld [vmem:[%s2 + $0x1e8] sm:$0xff]
  %v2174 = vld [vmem:[%s2 + $0x1f0] sm:$0xff]
  %v2175 = vld [vmem:[%s2 + $0x1f8] sm:$0xff]
  %2176 = vmatprep.subr.mxu0 %v2113
  %2177 = vmatpush1.msra.mxu0 %v2112
  %2178 = vmatprep.subr.mxu0 %v2117
  %2179 = vmatpush1.msra.mxu0 %v2116
  %2180 = vmatprep.subr.mxu0 %v2121
  %2181 = vmatpush1.msra.mxu0 %v2120
  %2182 = vmatprep.subr.mxu0 %v2125
  %2183 = vmatpush1.msra.mxu0 %v2124
  %2184 = vmatprep.subr.mxu0 %v2129
  %2185 = vmatpush1.msra.mxu0 %v2128
  %2186 = vmatprep.subr.mxu0 %v2133
  %2187 = vmatpush1.msra.mxu0 %v2132
  %2188 = vmatprep.subr.mxu0 %v2137
  %2189 = vmatpush1.msra.mxu0 %v2136
  %2190 = vmatprep.subr.mxu0 %v2141
  %2191 = vmatpush1.msra.mxu0 %v2140
  %2192 = vmatprep.subr.mxu0 %v2145
  %2193 = vmatpush1.msra.mxu0 %v2144
  %2194 = vmatprep.subr.mxu0 %v2149
  %2195 = vmatpush1.msra.mxu0 %v2148
  %2196 = vmatprep.subr.mxu0 %v2153
  %2197 = vmatpush1.msra.mxu0 %v2152
  %2198 = vmatprep.subr.mxu0 %v2157
  %2199 = vmatpush1.msra.mxu0 %v2156
  %2200 = vmatprep.subr.mxu0 %v2161
  %2201 = vmatpush1.msra.mxu0 %v2160
  %2202 = vmatprep.subr.mxu0 %v2165
  %2203 = vmatpush1.msra.mxu0 %v2164
  %2204 = vmatprep.subr.mxu0 %v2169
  %2205 = vmatpush1.msra.mxu0 %v2168
  %2206 = vmatprep.subr.mxu0 %v2173
  %2207 = vmatpush1.msra.mxu0 %v2172
  %2208 = vmatprep.subr.mxu0 0.0
  %2209 = vmatpush1.msra.mxu0 0.0
  %2210 = vmatprep.subr.mxu0 0.0
  %2211 = vmatpush1.msra.mxu0 0.0
  %2212 = vmatprep.subr.mxu0 0.0
  %2213 = vmatpush1.msra.mxu0 0.0
  %2214 = vmatprep.subr.mxu0 0.0
  %2215 = vmatpush1.msra.mxu0 0.0
  %2216 = vmatprep.subr.mxu0 0.0
  %2217 = vmatpush1.msra.mxu0 0.0
  %2218 = vmatprep.subr.mxu0 0.0
  %2219 = vmatpush1.msra.mxu0 0.0
  %2220 = vmatprep.subr.mxu0 0.0
  %2221 = vmatpush1.msra.mxu0 0.0
  %2222 = vmatprep.subr.mxu0 0.0
  %2223 = vmatpush1.msra.mxu0 0.0
  %2224 = vmatprep.subr.mxu0 0.0
  %2225 = vmatpush1.msra.mxu0 0.0
  %2226 = vmatprep.subr.mxu0 0.0
  %2227 = vmatpush1.msra.mxu0 0.0
  %2228 = vmatprep.subr.mxu0 0.0
  %2229 = vmatpush1.msra.mxu0 0.0
  %2230 = vmatprep.subr.mxu0 0.0
  %2231 = vmatpush1.msra.mxu0 0.0
  %2232 = vmatprep.subr.mxu0 0.0
  %2233 = vmatpush1.msra.mxu0 0.0
  %2234 = vmatprep.subr.mxu0 0.0
  %2235 = vmatpush1.msra.mxu0 0.0
  %2236 = vmatprep.subr.mxu0 0.0
  %2237 = vmatpush1.msra.mxu0 0.0
  %2238 = vmatprep.subr.mxu0 0.0
  %2239 = vmatpush1.msra.mxu0 0.0
  %2240 = vmatprep.mubr.f32.mxu0 0.0
  %2241 = vmatmul.mubr.f32.gmra.mrb[0].mxu0 %v2081
  %v2242 = vpop.f32.mrb[0].mxu0
  %v2243 = vadd.f32 0.0, %v2242
  %v2244 = vpop.f32.mrb[0].mxu0
  %v2245 = vadd.f32 0.0, %v2244
  %2246 = vdwg.mxu0
  %2247 = vmatprep.subr.mxu0 %v2115
  %2248 = vmatpush1.msra.mxu0 %v2114
  %2249 = vmatprep.subr.mxu0 %v2119
  %2250 = vmatpush1.msra.mxu0 %v2118
  %2251 = vmatprep.subr.mxu0 %v2123
  %2252 = vmatpush1.msra.mxu0 %v2122
  %2253 = vmatprep.subr.mxu0 %v2127
  %2254 = vmatpush1.msra.mxu0 %v2126
  %2255 = vmatprep.subr.mxu0 %v2131
  %2256 = vmatpush1.msra.mxu0 %v2130
  %2257 = vmatprep.subr.mxu0 %v2135
  %2258 = vmatpush1.msra.mxu0 %v2134
  %2259 = vmatprep.subr.mxu0 %v2139
  %2260 = vmatpush1.msra.mxu0 %v2138
  %2261 = vmatprep.subr.mxu0 %v2143
  %2262 = vmatpush1.msra.mxu0 %v2142
  %2263 = vmatprep.subr.mxu0 %v2147
  %2264 = vmatpush1.msra.mxu0 %v2146
  %2265 = vmatprep.subr.mxu0 %v2151
  %2266 = vmatpush1.msra.mxu0 %v2150
  %2267 = vmatprep.subr.mxu0 %v2155
  %2268 = vmatpush1.msra.mxu0 %v2154
  %2269 = vmatprep.subr.mxu0 %v2159
  %2270 = vmatpush1.msra.mxu0 %v2158
  %2271 = vmatprep.subr.mxu0 %v2163
  %2272 = vmatpush1.msra.mxu0 %v2162
  %2273 = vmatprep.subr.mxu0 %v2167
  %2274 = vmatpush1.msra.mxu0 %v2166
  %2275 = vmatprep.subr.mxu0 %v2171
  %2276 = vmatpush1.msra.mxu0 %v2170
  %2277 = vmatprep.subr.mxu0 %v2175
  %2278 = vmatpush1.msra.mxu0 %v2174
  %2279 = vmatprep.subr.mxu0 0.0
  %2280 = vmatpush1.msra.mxu0 0.0
  %2281 = vmatprep.subr.mxu0 0.0
  %2282 = vmatpush1.msra.mxu0 0.0
  %2283 = vmatprep.subr.mxu0 0.0
  %2284 = vmatpush1.msra.mxu0 0.0
  %2285 = vmatprep.subr.mxu0 0.0
  %2286 = vmatpush1.msra.mxu0 0.0
  %2287 = vmatprep.subr.mxu0 0.0
  %2288 = vmatpush1.msra.mxu0 0.0
  %2289 = vmatprep.subr.mxu0 0.0
  %2290 = vmatpush1.msra.mxu0 0.0
  %2291 = vmatprep.subr.mxu0 0.0
  %2292 = vmatpush1.msra.mxu0 0.0
  %2293 = vmatprep.subr.mxu0 0.0
  %2294 = vmatpush1.msra.mxu0 0.0
  %2295 = vmatprep.subr.mxu0 0.0
  %2296 = vmatpush1.msra.mxu0 0.0
  %2297 = vmatprep.subr.mxu0 0.0
  %2298 = vmatpush1.msra.mxu0 0.0
  %2299 = vmatprep.subr.mxu0 0.0
  %2300 = vmatpush1.msra.mxu0 0.0
  %2301 = vmatprep.subr.mxu0 0.0
  %2302 = vmatpush1.msra.mxu0 0.0
  %2303 = vmatprep.subr.mxu0 0.0
  %2304 = vmatpush1.msra.mxu0 0.0
  %2305 = vmatprep.subr.mxu0 0.0
  %2306 = vmatpush1.msra.mxu0 0.0
  %2307 = vmatprep.subr.mxu0 0.0
  %2308 = vmatpush1.msra.mxu0 0.0
  %2309 = vmatprep.subr.mxu0 0.0
  %2310 = vmatpush1.msra.mxu0 0.0
  %2311 = vmatprep.mubr.f32.mxu0 0.0
  %2312 = vmatmul.mubr.f32.gmra.mrb[0].mxu0 %v2081
  %v2313 = vpop.f32.mrb[0].mxu0
  %v2314 = vadd.f32 0.0, %v2313
  %v2315 = vpop.f32.mrb[0].mxu0
  %v2316 = vadd.f32 0.0, %v2315
  %2317 = vdwg.mxu0
  %v2318 = vadd.f32 %v2108, %v2243
  %v2319 = vadd.f32 %v2109, %v2245
  %v2320 = vadd.f32 %v2110, %v2314
  %v2321 = vadd.f32 %v2111, %v2316
  %v2322 = vld [vmem:[#allocation2 + $0xe0] sm:$0xff]
  %v2323 = vld [vmem:[#allocation2 + $0xe8] sm:$0xff]
  %v2324 = vld [vmem:[#allocation2 + $0xf0] sm:$0xff]
  %v2325 = vld [vmem:[#allocation2 + $0xf8] sm:$0xff]
  %v2326 = vld [vmem:[%s3] sm:$0xff]
  %v2327 = vld [vmem:[%s3 + $0x8] sm:$0xff]
  %v2328 = vld [vmem:[%s3 + $0x10] sm:$0xff]
  %v2329 = vld [vmem:[%s3 + $0x18] sm:$0xff]
  %v2330 = vld [vmem:[%s3 + $0x20] sm:$0xff]
  %v2331 = vld [vmem:[%s3 + $0x28] sm:$0xff]
  %v2332 = vld [vmem:[%s3 + $0x30] sm:$0xff]
  %v2333 = vld [vmem:[%s3 + $0x38] sm:$0xff]
  %v2334 = vld [vmem:[%s3 + $0x40] sm:$0xff]
  %v2335 = vld [vmem:[%s3 + $0x48] sm:$0xff]
  %v2336 = vld [vmem:[%s3 + $0x50] sm:$0xff]
  %v2337 = vld [vmem:[%s3 + $0x58] sm:$0xff]
  %v2338 = vld [vmem:[%s3 + $0x60] sm:$0xff]
  %v2339 = vld [vmem:[%s3 + $0x68] sm:$0xff]
  %v2340 = vld [vmem:[%s3 + $0x70] sm:$0xff]
  %v2341 = vld [vmem:[%s3 + $0x78] sm:$0xff]
  %v2342 = vld [vmem:[%s3 + $0x80] sm:$0xff]
  %v2343 = vld [vmem:[%s3 + $0x88] sm:$0xff]
  %v2344 = vld [vmem:[%s3 + $0x90] sm:$0xff]
  %v2345 = vld [vmem:[%s3 + $0x98] sm:$0xff]
  %v2346 = vld [vmem:[%s3 + $0xa0] sm:$0xff]
  %v2347 = vld [vmem:[%s3 + $0xa8] sm:$0xff]
  %v2348 = vld [vmem:[%s3 + $0xb0] sm:$0xff]
  %v2349 = vld [vmem:[%s3 + $0xb8] sm:$0xff]
  %v2350 = vld [vmem:[%s3 + $0xc0] sm:$0xff]
  %v2351 = vld [vmem:[%s3 + $0xc8] sm:$0xff]
  %v2352 = vld [vmem:[%s3 + $0xd0] sm:$0xff]
  %v2353 = vld [vmem:[%s3 + $0xd8] sm:$0xff]
  %v2354 = vld [vmem:[%s3 + $0xe0] sm:$0xff]
  %v2355 = vld [vmem:[%s3 + $0xe8] sm:$0xff]
  %v2356 = vld [vmem:[%s3 + $0xf0] sm:$0xff]
  %v2357 = vld [vmem:[%s3 + $0xf8] sm:$0xff]
  %v2358 = vld [vmem:[%s3 + $0x100] sm:$0xff]
  %v2359 = vld [vmem:[%s3 + $0x108] sm:$0xff]
  %v2360 = vld [vmem:[%s3 + $0x110] sm:$0xff]
  %v2361 = vld [vmem:[%s3 + $0x118] sm:$0xff]
  %v2362 = vld [vmem:[%s3 + $0x120] sm:$0xff]
  %v2363 = vld [vmem:[%s3 + $0x128] sm:$0xff]
  %v2364 = vld [vmem:[%s3 + $0x130] sm:$0xff]
  %v2365 = vld [vmem:[%s3 + $0x138] sm:$0xff]
  %v2366 = vld [vmem:[%s3 + $0x140] sm:$0xff]
  %v2367 = vld [vmem:[%s3 + $0x148] sm:$0xff]
  %v2368 = vld [vmem:[%s3 + $0x150] sm:$0xff]
  %v2369 = vld [vmem:[%s3 + $0x158] sm:$0xff]
  %v2370 = vld [vmem:[%s3 + $0x160] sm:$0xff]
  %v2371 = vld [vmem:[%s3 + $0x168] sm:$0xff]
  %v2372 = vld [vmem:[%s3 + $0x170] sm:$0xff]
  %v2373 = vld [vmem:[%s3 + $0x178] sm:$0xff]
  %v2374 = vld [vmem:[%s3 + $0x180] sm:$0xff]
  %v2375 = vld [vmem:[%s3 + $0x188] sm:$0xff]
  %v2376 = vld [vmem:[%s3 + $0x190] sm:$0xff]
  %v2377 = vld [vmem:[%s3 + $0x198] sm:$0xff]
  %v2378 = vld [vmem:[%s3 + $0x1a0] sm:$0xff]
  %v2379 = vld [vmem:[%s3 + $0x1a8] sm:$0xff]
  %v2380 = vld [vmem:[%s3 + $0x1b0] sm:$0xff]
  %v2381 = vld [vmem:[%s3 + $0x1b8] sm:$0xff]
  %v2382 = vld [vmem:[%s3 + $0x1c0] sm:$0xff]
  %v2383 = vld [vmem:[%s3 + $0x1c8] sm:$0xff]
  %v2384 = vld [vmem:[%s3 + $0x1d0] sm:$0xff]
  %v2385 = vld [vmem:[%s3 + $0x1d8] sm:$0xff]
  %v2386 = vld [vmem:[%s3 + $0x1e0] sm:$0xff]
  %v2387 = vld [vmem:[%s3 + $0x1e8] sm:$0xff]
  %v2388 = vld [vmem:[%s3 + $0x1f0] sm:$0xff]
  %v2389 = vld [vmem:[%s3 + $0x1f8] sm:$0xff]
  %2390 = vmatprep.subr.mxu0 %v2327
  %2391 = vmatpush1.msra.mxu0 %v2326
  %2392 = vmatprep.subr.mxu0 %v2331
  %2393 = vmatpush1.msra.mxu0 %v2330
  %2394 = vmatprep.subr.mxu0 %v2335
  %2395 = vmatpush1.msra.mxu0 %v2334
  %2396 = vmatprep.subr.mxu0 %v2339
  %2397 = vmatpush1.msra.mxu0 %v2338
  %2398 = vmatprep.subr.mxu0 %v2343
  %2399 = vmatpush1.msra.mxu0 %v2342
  %2400 = vmatprep.subr.mxu0 %v2347
  %2401 = vmatpush1.msra.mxu0 %v2346
  %2402 = vmatprep.subr.mxu0 %v2351
  %2403 = vmatpush1.msra.mxu0 %v2350
  %2404 = vmatprep.subr.mxu0 %v2355
  %2405 = vmatpush1.msra.mxu0 %v2354
  %2406 = vmatprep.subr.mxu0 %v2359
  %2407 = vmatpush1.msra.mxu0 %v2358
  %2408 = vmatprep.subr.mxu0 %v2363
  %2409 = vmatpush1.msra.mxu0 %v2362
  %2410 = vmatprep.subr.mxu0 %v2367
  %2411 = vmatpush1.msra.mxu0 %v2366
  %2412 = vmatprep.subr.mxu0 %v2371
  %2413 = vmatpush1.msra.mxu0 %v2370
  %2414 = vmatprep.subr.mxu0 %v2375
  %2415 = vmatpush1.msra.mxu0 %v2374
  %2416 = vmatprep.subr.mxu0 %v2379
  %2417 = vmatpush1.msra.mxu0 %v2378
  %2418 = vmatprep.subr.mxu0 %v2383
  %2419 = vmatpush1.msra.mxu0 %v2382
  %2420 = vmatprep.subr.mxu0 %v2387
  %2421 = vmatpush1.msra.mxu0 %v2386
  %2422 = vmatprep.subr.mxu0 0.0
  %2423 = vmatpush1.msra.mxu0 0.0
  %2424 = vmatprep.subr.mxu0 0.0
  %2425 = vmatpush1.msra.mxu0 0.0
  %2426 = vmatprep.subr.mxu0 0.0
  %2427 = vmatpush1.msra.mxu0 0.0
  %2428 = vmatprep.subr.mxu0 0.0
  %2429 = vmatpush1.msra.mxu0 0.0
  %2430 = vmatprep.subr.mxu0 0.0
  %2431 = vmatpush1.msra.mxu0 0.0
  %2432 = vmatprep.subr.mxu0 0.0
  %2433 = vmatpush1.msra.mxu0 0.0
  %2434 = vmatprep.subr.mxu0 0.0
  %2435 = vmatpush1.msra.mxu0 0.0
  %2436 = vmatprep.subr.mxu0 0.0
  %2437 = vmatpush1.msra.mxu0 0.0
  %2438 = vmatprep.subr.mxu0 0.0
  %2439 = vmatpush1.msra.mxu0 0.0
  %2440 = vmatprep.subr.mxu0 0.0
  %2441 = vmatpush1.msra.mxu0 0.0
  %2442 = vmatprep.subr.mxu0 0.0
  %2443 = vmatpush1.msra.mxu0 0.0
  %2444 = vmatprep.subr.mxu0 0.0
  %2445 = vmatpush1.msra.mxu0 0.0
  %2446 = vmatprep.subr.mxu0 0.0
  %2447 = vmatpush1.msra.mxu0 0.0
  %2448 = vmatprep.subr.mxu0 0.0
  %2449 = vmatpush1.msra.mxu0 0.0
  %2450 = vmatprep.subr.mxu0 0.0
  %2451 = vmatpush1.msra.mxu0 0.0
  %2452 = vmatprep.subr.mxu0 0.0
  %2453 = vmatpush1.msra.mxu0 0.0
  %2454 = vmatprep.mubr.f32.mxu0 0.0
  %2455 = vmatmul.mubr.f32.gmra.mrb[0].mxu0 %v2105
  %v2456 = vpop.f32.mrb[0].mxu0
  %v2457 = vadd.f32 0.0, %v2456
  %v2458 = vpop.f32.mrb[0].mxu0
  %v2459 = vadd.f32 0.0, %v2458
  %2460 = vdwg.mxu0
  %2461 = vmatprep.subr.mxu0 %v2329
  %2462 = vmatpush1.msra.mxu0 %v2328
  %2463 = vmatprep.subr.mxu0 %v2333
  %2464 = vmatpush1.msra.mxu0 %v2332
  %2465 = vmatprep.subr.mxu0 %v2337
  %2466 = vmatpush1.msra.mxu0 %v2336
  %2467 = vmatprep.subr.mxu0 %v2341
  %2468 = vmatpush1.msra.mxu0 %v2340
  %2469 = vmatprep.subr.mxu0 %v2345
  %2470 = vmatpush1.msra.mxu0 %v2344
  %2471 = vmatprep.subr.mxu0 %v2349
  %2472 = vmatpush1.msra.mxu0 %v2348
  %2473 = vmatprep.subr.mxu0 %v2353
  %2474 = vmatpush1.msra.mxu0 %v2352
  %2475 = vmatprep.subr.mxu0 %v2357
  %2476 = vmatpush1.msra.mxu0 %v2356
  %2477 = vmatprep.subr.mxu0 %v2361
  %2478 = vmatpush1.msra.mxu0 %v2360
  %2479 = vmatprep.subr.mxu0 %v2365
  %2480 = vmatpush1.msra.mxu0 %v2364
  %2481 = vmatprep.subr.mxu0 %v2369
  %2482 = vmatpush1.msra.mxu0 %v2368
  %2483 = vmatprep.subr.mxu0 %v2373
  %2484 = vmatpush1.msra.mxu0 %v2372
  %2485 = vmatprep.subr.mxu0 %v2377
  %2486 = vmatpush1.msra.mxu0 %v2376
  %2487 = vmatprep.subr.mxu0 %v2381
  %2488 = vmatpush1.msra.mxu0 %v2380
  %2489 = vmatprep.subr.mxu0 %v2385
  %2490 = vmatpush1.msra.mxu0 %v2384
  %2491 = vmatprep.subr.mxu0 %v2389
  %2492 = vmatpush1.msra.mxu0 %v2388
  %2493 = vmatprep.subr.mxu0 0.0
  %2494 = vmatpush1.msra.mxu0 0.0
  %2495 = vmatprep.subr.mxu0 0.0
  %2496 = vmatpush1.msra.mxu0 0.0
  %2497 = vmatprep.subr.mxu0 0.0
  %2498 = vmatpush1.msra.mxu0 0.0
  %2499 = vmatprep.subr.mxu0 0.0
  %2500 = vmatpush1.msra.mxu0 0.0
  %2501 = vmatprep.subr.mxu0 0.0
  %2502 = vmatpush1.msra.mxu0 0.0
  %2503 = vmatprep.subr.mxu0 0.0
  %2504 = vmatpush1.msra.mxu0 0.0
  %2505 = vmatprep.subr.mxu0 0.0
  %2506 = vmatpush1.msra.mxu0 0.0
  %2507 = vmatprep.subr.mxu0 0.0
  %2508 = vmatpush1.msra.mxu0 0.0
  %2509 = vmatprep.subr.mxu0 0.0
  %2510 = vmatpush1.msra.mxu0 0.0
  %2511 = vmatprep.subr.mxu0 0.0
  %2512 = vmatpush1.msra.mxu0 0.0
  %2513 = vmatprep.subr.mxu0 0.0
  %2514 = vmatpush1.msra.mxu0 0.0
  %2515 = vmatprep.subr.mxu0 0.0
  %2516 = vmatpush1.msra.mxu0 0.0
  %2517 = vmatprep.subr.mxu0 0.0
  %2518 = vmatpush1.msra.mxu0 0.0
  %2519 = vmatprep.subr.mxu0 0.0
  %2520 = vmatpush1.msra.mxu0 0.0
  %2521 = vmatprep.subr.mxu0 0.0
  %2522 = vmatpush1.msra.mxu0 0.0
  %2523 = vmatprep.subr.mxu0 0.0
  %2524 = vmatpush1.msra.mxu0 0.0
  %2525 = vmatprep.mubr.f32.mxu0 0.0
  %2526 = vmatmul.mubr.f32.gmra.mrb[0].mxu0 %v2105
  %v2527 = vpop.f32.mrb[0].mxu0
  %v2528 = vadd.f32 0.0, %v2527
  %v2529 = vpop.f32.mrb[0].mxu0
  %v2530 = vadd.f32 0.0, %v2529
  %2531 = vdwg.mxu0
  %v2532 = vadd.f32 %v2322, %v2457
  %v2533 = vadd.f32 %v2323, %v2459
  %v2534 = vadd.f32 %v2324, %v2528
  %v2535 = vadd.f32 %v2325, %v2530
  %v2536 = vxor.u32 %v2318, 2147483648
  %v2537 = vxor.u32 %v2319, 2147483648
  %v2538 = vxor.u32 %v2320, 2147483648
  %v2539 = vmul.f32 %v2536, 1.442695
  %v2540 = vpow.pop %v2539
  %v2541 = vmul.f32 %v2537, 1.442695
  %v2542 = vpow.pop %v2541
  %v2543 = vmul.f32 %v2538, 1.442695
  %v2544 = vpow.pop %v2543
  %v2545 = vadd.f32 %v2540, 1.0
  %v2546 = vadd.f32 %v2542, 1.0
  %v2547 = vadd.f32 %v2544, 1.0
  %v2548 = vrcp.pop %v2545
  %v2549 = vmul.f32 1.0, %v2548
  %v2550 = vrcp.pop %v2546
  %v2551 = vmul.f32 1.0, %v2550
  %v2552 = vrcp.pop %v2547
  %v2553 = vmul.f32 1.0, %v2552
  %v2554 = vtanh.pop %v2321
  %v2555 = vmul.f32 %v2551, %v2079
  %v2556 = vmul.f32 %v2549, %v2554
  %v2557 = vadd.f32 %v2555, %v2556
  %v2558 = vtanh.pop %v2557
  %v2559 = vmul.f32 %v2553, %v2558
  %v2560 = vxor.u32 %v2532, 2147483648
  %v2561 = vxor.u32 %v2533, 2147483648
  %v2562 = vxor.u32 %v2534, 2147483648
  %v2563 = vmul.f32 %v2560, 1.442695
  %v2564 = vpow.pop %v2563
  %v2565 = vmul.f32 %v2561, 1.442695
  %v2566 = vpow.pop %v2565
  %v2567 = vmul.f32 %v2562, 1.442695
  %v2568 = vpow.pop %v2567
  %v2569 = vadd.f32 %v2564, 1.0
  %v2570 = vadd.f32 %v2566, 1.0
  %v2571 = vadd.f32 %v2568, 1.0
  %v2572 = vrcp.pop %v2569
  %v2573 = vmul.f32 1.0, %v2572
  %v2574 = vrcp.pop %v2570
  %v2575 = vmul.f32 1.0, %v2574
  %v2576 = vrcp.pop %v2571
  %v2577 = vmul.f32 1.0, %v2576
  %v2578 = vtanh.pop %v2535
  %v2579 = vmul.f32 %v2575, %v2103
  %v2580 = vmul.f32 %v2573, %v2578
  %v2581 = vadd.f32 %v2579, %v2580
  %v2582 = vtanh.pop %v2581
  %v2583 = vmul.f32 %v2577, %v2582
  %2584 = vst [vmem:[#allocation3 + $0x40] sm:$0xff] %v2559
  %2585 = vst [vmem:[#allocation3 + $0x38] sm:$0xff] %v2583
  %v2586 = vld [vmem:[#allocation2 + $0x140] sm:$0xff]
  %v2587 = vld [vmem:[#allocation2 + $0x148] sm:$0xff]
  %v2588 = vld [vmem:[#allocation2 + $0x150] sm:$0xff]
  %v2589 = vld [vmem:[#allocation2 + $0x158] sm:$0xff]
  %v2590 = vld [vmem:[%s2] sm:$0xff]
  %v2591 = vld [vmem:[%s2 + $0x8] sm:$0xff]
  %v2592 = vld [vmem:[%s2 + $0x10] sm:$0xff]
  %v2593 = vld [vmem:[%s2 + $0x18] sm:$0xff]
  %v2594 = vld [vmem:[%s2 + $0x20] sm:$0xff]
  %v2595 = vld [vmem:[%s2 + $0x28] sm:$0xff]
  %v2596 = vld [vmem:[%s2 + $0x30] sm:$0xff]
  %v2597 = vld [vmem:[%s2 + $0x38] sm:$0xff]
  %v2598 = vld [vmem:[%s2 + $0x40] sm:$0xff]
  %v2599 = vld [vmem:[%s2 + $0x48] sm:$0xff]
  %v2600 = vld [vmem:[%s2 + $0x50] sm:$0xff]
  %v2601 = vld [vmem:[%s2 + $0x58] sm:$0xff]
  %v2602 = vld [vmem:[%s2 + $0x60] sm:$0xff]
  %v2603 = vld [vmem:[%s2 + $0x68] sm:$0xff]
  %v2604 = vld [vmem:[%s2 + $0x70] sm:$0xff]
  %v2605 = vld [vmem:[%s2 + $0x78] sm:$0xff]
  %v2606 = vld [vmem:[%s2 + $0x80] sm:$0xff]
  %v2607 = vld [vmem:[%s2 + $0x88] sm:$0xff]
  %v2608 = vld [vmem:[%s2 + $0x90] sm:$0xff]
  %v2609 = vld [vmem:[%s2 + $0x98] sm:$0xff]
  %v2610 = vld [vmem:[%s2 + $0xa0] sm:$0xff]
  %v2611 = vld [vmem:[%s2 + $0xa8] sm:$0xff]
  %v2612 = vld [vmem:[%s2 + $0xb0] sm:$0xff]
  %v2613 = vld [vmem:[%s2 + $0xb8] sm:$0xff]
  %v2614 = vld [vmem:[%s2 + $0xc0] sm:$0xff]
  %v2615 = vld [vmem:[%s2 + $0xc8] sm:$0xff]
  %v2616 = vld [vmem:[%s2 + $0xd0] sm:$0xff]
  %v2617 = vld [vmem:[%s2 + $0xd8] sm:$0xff]
  %v2618 = vld [vmem:[%s2 + $0xe0] sm:$0xff]
  %v2619 = vld [vmem:[%s2 + $0xe8] sm:$0xff]
  %v2620 = vld [vmem:[%s2 + $0xf0] sm:$0xff]
  %v2621 = vld [vmem:[%s2 + $0xf8] sm:$0xff]
  %v2622 = vld [vmem:[%s2 + $0x100] sm:$0xff]
  %v2623 = vld [vmem:[%s2 + $0x108] sm:$0xff]
  %v2624 = vld [vmem:[%s2 + $0x110] sm:$0xff]
  %v2625 = vld [vmem:[%s2 + $0x118] sm:$0xff]
  %v2626 = vld [vmem:[%s2 + $0x120] sm:$0xff]
  %v2627 = vld [vmem:[%s2 + $0x128] sm:$0xff]
  %v2628 = vld [vmem:[%s2 + $0x130] sm:$0xff]
  %v2629 = vld [vmem:[%s2 + $0x138] sm:$0xff]
  %v2630 = vld [vmem:[%s2 + $0x140] sm:$0xff]
  %v2631 = vld [vmem:[%s2 + $0x148] sm:$0xff]
  %v2632 = vld [vmem:[%s2 + $0x150] sm:$0xff]
  %v2633 = vld [vmem:[%s2 + $0x158] sm:$0xff]
  %v2634 = vld [vmem:[%s2 + $0x160] sm:$0xff]
  %v2635 = vld [vmem:[%s2 + $0x168] sm:$0xff]
  %v2636 = vld [vmem:[%s2 + $0x170] sm:$0xff]
  %v2637 = vld [vmem:[%s2 + $0x178] sm:$0xff]
  %v2638 = vld [vmem:[%s2 + $0x180] sm:$0xff]
  %v2639 = vld [vmem:[%s2 + $0x188] sm:$0xff]
  %v2640 = vld [vmem:[%s2 + $0x190] sm:$0xff]
  %v2641 = vld [vmem:[%s2 + $0x198] sm:$0xff]
  %v2642 = vld [vmem:[%s2 + $0x1a0] sm:$0xff]
  %v2643 = vld [vmem:[%s2 + $0x1a8] sm:$0xff]
  %v2644 = vld [vmem:[%s2 + $0x1b0] sm:$0xff]
  %v2645 = vld [vmem:[%s2 + $0x1b8] sm:$0xff]
  %v2646 = vld [vmem:[%s2 + $0x1c0] sm:$0xff]
  %v2647 = vld [vmem:[%s2 + $0x1c8] sm:$0xff]
  %v2648 = vld [vmem:[%s2 + $0x1d0] sm:$0xff]
  %v2649 = vld [vmem:[%s2 + $0x1d8] sm:$0xff]
  %v2650 = vld [vmem:[%s2 + $0x1e0] sm:$0xff]
  %v2651 = vld [vmem:[%s2 + $0x1e8] sm:$0xff]
  %v2652 = vld [vmem:[%s2 + $0x1f0] sm:$0xff]
  %v2653 = vld [vmem:[%s2 + $0x1f8] sm:$0xff]
  %2654 = vmatprep.subr.mxu0 %v2591
  %2655 = vmatpush1.msra.mxu0 %v2590
  %2656 = vmatprep.subr.mxu0 %v2595
  %2657 = vmatpush1.msra.mxu0 %v2594
  %2658 = vmatprep.subr.mxu0 %v2599
  %2659 = vmatpush1.msra.mxu0 %v2598
  %2660 = vmatprep.subr.mxu0 %v2603
  %2661 = vmatpush1.msra.mxu0 %v2602
  %2662 = vmatprep.subr.mxu0 %v2607
  %2663 = vmatpush1.msra.mxu0 %v2606
  %2664 = vmatprep.subr.mxu0 %v2611
  %2665 = vmatpush1.msra.mxu0 %v2610
  %2666 = vmatprep.subr.mxu0 %v2615
  %2667 = vmatpush1.msra.mxu0 %v2614
  %2668 = vmatprep.subr.mxu0 %v2619
  %2669 = vmatpush1.msra.mxu0 %v2618
  %2670 = vmatprep.subr.mxu0 %v2623
  %2671 = vmatpush1.msra.mxu0 %v2622
  %2672 = vmatprep.subr.mxu0 %v2627
  %2673 = vmatpush1.msra.mxu0 %v2626
  %2674 = vmatprep.subr.mxu0 %v2631
  %2675 = vmatpush1.msra.mxu0 %v2630
  %2676 = vmatprep.subr.mxu0 %v2635
  %2677 = vmatpush1.msra.mxu0 %v2634
  %2678 = vmatprep.subr.mxu0 %v2639
  %2679 = vmatpush1.msra.mxu0 %v2638
  %2680 = vmatprep.subr.mxu0 %v2643
  %2681 = vmatpush1.msra.mxu0 %v2642
  %2682 = vmatprep.subr.mxu0 %v2647
  %2683 = vmatpush1.msra.mxu0 %v2646
  %2684 = vmatprep.subr.mxu0 %v2651
  %2685 = vmatpush1.msra.mxu0 %v2650
  %2686 = vmatprep.subr.mxu0 0.0
  %2687 = vmatpush1.msra.mxu0 0.0
  %2688 = vmatprep.subr.mxu0 0.0
  %2689 = vmatpush1.msra.mxu0 0.0
  %2690 = vmatprep.subr.mxu0 0.0
  %2691 = vmatpush1.msra.mxu0 0.0
  %2692 = vmatprep.subr.mxu0 0.0
  %2693 = vmatpush1.msra.mxu0 0.0
  %2694 = vmatprep.subr.mxu0 0.0
  %2695 = vmatpush1.msra.mxu0 0.0
  %2696 = vmatprep.subr.mxu0 0.0
  %2697 = vmatpush1.msra.mxu0 0.0
  %2698 = vmatprep.subr.mxu0 0.0
  %2699 = vmatpush1.msra.mxu0 0.0
  %2700 = vmatprep.subr.mxu0 0.0
  %2701 = vmatpush1.msra.mxu0 0.0
  %2702 = vmatprep.subr.mxu0 0.0
  %2703 = vmatpush1.msra.mxu0 0.0
  %2704 = vmatprep.subr.mxu0 0.0
  %2705 = vmatpush1.msra.mxu0 0.0
  %2706 = vmatprep.subr.mxu0 0.0
  %2707 = vmatpush1.msra.mxu0 0.0
  %2708 = vmatprep.subr.mxu0 0.0
  %2709 = vmatpush1.msra.mxu0 0.0
  %2710 = vmatprep.subr.mxu0 0.0
  %2711 = vmatpush1.msra.mxu0 0.0
  %2712 = vmatprep.subr.mxu0 0.0
  %2713 = vmatpush1.msra.mxu0 0.0
  %2714 = vmatprep.subr.mxu0 0.0
  %2715 = vmatpush1.msra.mxu0 0.0
  %2716 = vmatprep.subr.mxu0 0.0
  %2717 = vmatpush1.msra.mxu0 0.0
  %2718 = vmatprep.mubr.f32.mxu0 0.0
  %2719 = vmatmul.mubr.f32.gmra.mrb[0].mxu0 %v2559
  %v2720 = vpop.f32.mrb[0].mxu0
  %v2721 = vadd.f32 0.0, %v2720
  %v2722 = vpop.f32.mrb[0].mxu0
  %v2723 = vadd.f32 0.0, %v2722
  %2724 = vdwg.mxu0
  %2725 = vmatprep.subr.mxu0 %v2593
  %2726 = vmatpush1.msra.mxu0 %v2592
  %2727 = vmatprep.subr.mxu0 %v2597
  %2728 = vmatpush1.msra.mxu0 %v2596
  %2729 = vmatprep.subr.mxu0 %v2601
  %2730 = vmatpush1.msra.mxu0 %v2600
  %2731 = vmatprep.subr.mxu0 %v2605
  %2732 = vmatpush1.msra.mxu0 %v2604
  %2733 = vmatprep.subr.mxu0 %v2609
  %2734 = vmatpush1.msra.mxu0 %v2608
  %2735 = vmatprep.subr.mxu0 %v2613
  %2736 = vmatpush1.msra.mxu0 %v2612
  %2737 = vmatprep.subr.mxu0 %v2617
  %2738 = vmatpush1.msra.mxu0 %v2616
  %2739 = vmatprep.subr.mxu0 %v2621
  %2740 = vmatpush1.msra.mxu0 %v2620
  %2741 = vmatprep.subr.mxu0 %v2625
  %2742 = vmatpush1.msra.mxu0 %v2624
  %2743 = vmatprep.subr.mxu0 %v2629
  %2744 = vmatpush1.msra.mxu0 %v2628
  %2745 = vmatprep.subr.mxu0 %v2633
  %2746 = vmatpush1.msra.mxu0 %v2632
  %2747 = vmatprep.subr.mxu0 %v2637
  %2748 = vmatpush1.msra.mxu0 %v2636
  %2749 = vmatprep.subr.mxu0 %v2641
  %2750 = vmatpush1.msra.mxu0 %v2640
  %2751 = vmatprep.subr.mxu0 %v2645
  %2752 = vmatpush1.msra.mxu0 %v2644
  %2753 = vmatprep.subr.mxu0 %v2649
  %2754 = vmatpush1.msra.mxu0 %v2648
  %2755 = vmatprep.subr.mxu0 %v2653
  %2756 = vmatpush1.msra.mxu0 %v2652
  %2757 = vmatprep.subr.mxu0 0.0
  %2758 = vmatpush1.msra.mxu0 0.0
  %2759 = vmatprep.subr.mxu0 0.0
  %2760 = vmatpush1.msra.mxu0 0.0
  %2761 = vmatprep.subr.mxu0 0.0
  %2762 = vmatpush1.msra.mxu0 0.0
  %2763 = vmatprep.subr.mxu0 0.0
  %2764 = vmatpush1.msra.mxu0 0.0
  %2765 = vmatprep.subr.mxu0 0.0
  %2766 = vmatpush1.msra.mxu0 0.0
  %2767 = vmatprep.subr.mxu0 0.0
  %2768 = vmatpush1.msra.mxu0 0.0
  %2769 = vmatprep.subr.mxu0 0.0
  %2770 = vmatpush1.msra.mxu0 0.0
  %2771 = vmatprep.subr.mxu0 0.0
  %2772 = vmatpush1.msra.mxu0 0.0
  %2773 = vmatprep.subr.mxu0 0.0
  %2774 = vmatpush1.msra.mxu0 0.0
  %2775 = vmatprep.subr.mxu0 0.0
  %2776 = vmatpush1.msra.mxu0 0.0
  %2777 = vmatprep.subr.mxu0 0.0
  %2778 = vmatpush1.msra.mxu0 0.0
  %2779 = vmatprep.subr.mxu0 0.0
  %2780 = vmatpush1.msra.mxu0 0.0
  %2781 = vmatprep.subr.mxu0 0.0
  %2782 = vmatpush1.msra.mxu0 0.0
  %2783 = vmatprep.subr.mxu0 0.0
  %2784 = vmatpush1.msra.mxu0 0.0
  %2785 = vmatprep.subr.mxu0 0.0
  %2786 = vmatpush1.msra.mxu0 0.0
  %2787 = vmatprep.subr.mxu0 0.0
  %2788 = vmatpush1.msra.mxu0 0.0
  %2789 = vmatprep.mubr.f32.mxu0 0.0
  %2790 = vmatmul.mubr.f32.gmra.mrb[0].mxu0 %v2559
  %v2791 = vpop.f32.mrb[0].mxu0
  %v2792 = vadd.f32 0.0, %v2791
  %v2793 = vpop.f32.mrb[0].mxu0
  %v2794 = vadd.f32 0.0, %v2793
  %2795 = vdwg.mxu0
  %v2796 = vadd.f32 %v2586, %v2721
  %v2797 = vadd.f32 %v2587, %v2723
  %v2798 = vadd.f32 %v2588, %v2792
  %v2799 = vadd.f32 %v2589, %v2794
  %v2800 = vld [vmem:[#allocation2 + $0xa0] sm:$0xff]
  %v2801 = vld [vmem:[#allocation2 + $0xa8] sm:$0xff]
  %v2802 = vld [vmem:[#allocation2 + $0xb0] sm:$0xff]
  %v2803 = vld [vmem:[#allocation2 + $0xb8] sm:$0xff]
  %v2804 = vld [vmem:[%s3] sm:$0xff]
  %v2805 = vld [vmem:[%s3 + $0x8] sm:$0xff]
  %v2806 = vld [vmem:[%s3 + $0x10] sm:$0xff]
  %v2807 = vld [vmem:[%s3 + $0x18] sm:$0xff]
  %v2808 = vld [vmem:[%s3 + $0x20] sm:$0xff]
  %v2809 = vld [vmem:[%s3 + $0x28] sm:$0xff]
  %v2810 = vld [vmem:[%s3 + $0x30] sm:$0xff]
  %v2811 = vld [vmem:[%s3 + $0x38] sm:$0xff]
  %v2812 = vld [vmem:[%s3 + $0x40] sm:$0xff]
  %v2813 = vld [vmem:[%s3 + $0x48] sm:$0xff]
  %v2814 = vld [vmem:[%s3 + $0x50] sm:$0xff]
  %v2815 = vld [vmem:[%s3 + $0x58] sm:$0xff]
  %v2816 = vld [vmem:[%s3 + $0x60] sm:$0xff]
  %v2817 = vld [vmem:[%s3 + $0x68] sm:$0xff]
  %v2818 = vld [vmem:[%s3 + $0x70] sm:$0xff]
  %v2819 = vld [vmem:[%s3 + $0x78] sm:$0xff]
  %v2820 = vld [vmem:[%s3 + $0x80] sm:$0xff]
  %v2821 = vld [vmem:[%s3 + $0x88] sm:$0xff]
  %v2822 = vld [vmem:[%s3 + $0x90] sm:$0xff]
  %v2823 = vld [vmem:[%s3 + $0x98] sm:$0xff]
  %v2824 = vld [vmem:[%s3 + $0xa0] sm:$0xff]
  %v2825 = vld [vmem:[%s3 + $0xa8] sm:$0xff]
  %v2826 = vld [vmem:[%s3 + $0xb0] sm:$0xff]
  %v2827 = vld [vmem:[%s3 + $0xb8] sm:$0xff]
  %v2828 = vld [vmem:[%s3 + $0xc0] sm:$0xff]
  %v2829 = vld [vmem:[%s3 + $0xc8] sm:$0xff]
  %v2830 = vld [vmem:[%s3 + $0xd0] sm:$0xff]
  %v2831 = vld [vmem:[%s3 + $0xd8] sm:$0xff]
  %v2832 = vld [vmem:[%s3 + $0xe0] sm:$0xff]
  %v2833 = vld [vmem:[%s3 + $0xe8] sm:$0xff]
  %v2834 = vld [vmem:[%s3 + $0xf0] sm:$0xff]
  %v2835 = vld [vmem:[%s3 + $0xf8] sm:$0xff]
  %v2836 = vld [vmem:[%s3 + $0x100] sm:$0xff]
  %v2837 = vld [vmem:[%s3 + $0x108] sm:$0xff]
  %v2838 = vld [vmem:[%s3 + $0x110] sm:$0xff]
  %v2839 = vld [vmem:[%s3 + $0x118] sm:$0xff]
  %v2840 = vld [vmem:[%s3 + $0x120] sm:$0xff]
  %v2841 = vld [vmem:[%s3 + $0x128] sm:$0xff]
  %v2842 = vld [vmem:[%s3 + $0x130] sm:$0xff]
  %v2843 = vld [vmem:[%s3 + $0x138] sm:$0xff]
  %v2844 = vld [vmem:[%s3 + $0x140] sm:$0xff]
  %v2845 = vld [vmem:[%s3 + $0x148] sm:$0xff]
  %v2846 = vld [vmem:[%s3 + $0x150] sm:$0xff]
  %v2847 = vld [vmem:[%s3 + $0x158] sm:$0xff]
  %v2848 = vld [vmem:[%s3 + $0x160] sm:$0xff]
  %v2849 = vld [vmem:[%s3 + $0x168] sm:$0xff]
  %v2850 = vld [vmem:[%s3 + $0x170] sm:$0xff]
  %v2851 = vld [vmem:[%s3 + $0x178] sm:$0xff]
  %v2852 = vld [vmem:[%s3 + $0x180] sm:$0xff]
  %v2853 = vld [vmem:[%s3 + $0x188] sm:$0xff]
  %v2854 = vld [vmem:[%s3 + $0x190] sm:$0xff]
  %v2855 = vld [vmem:[%s3 + $0x198] sm:$0xff]
  %v2856 = vld [vmem:[%s3 + $0x1a0] sm:$0xff]
  %v2857 = vld [vmem:[%s3 + $0x1a8] sm:$0xff]
  %v2858 = vld [vmem:[%s3 + $0x1b0] sm:$0xff]
  %v2859 = vld [vmem:[%s3 + $0x1b8] sm:$0xff]
  %v2860 = vld [vmem:[%s3 + $0x1c0] sm:$0xff]
  %v2861 = vld [vmem:[%s3 + $0x1c8] sm:$0xff]
  %v2862 = vld [vmem:[%s3 + $0x1d0] sm:$0xff]
  %v2863 = vld [vmem:[%s3 + $0x1d8] sm:$0xff]
  %v2864 = vld [vmem:[%s3 + $0x1e0] sm:$0xff]
  %v2865 = vld [vmem:[%s3 + $0x1e8] sm:$0xff]
  %v2866 = vld [vmem:[%s3 + $0x1f0] sm:$0xff]
  %v2867 = vld [vmem:[%s3 + $0x1f8] sm:$0xff]
  %2868 = vmatprep.subr.mxu0 %v2805
  %2869 = vmatpush1.msra.mxu0 %v2804
  %2870 = vmatprep.subr.mxu0 %v2809
  %2871 = vmatpush1.msra.mxu0 %v2808
  %2872 = vmatprep.subr.mxu0 %v2813
  %2873 = vmatpush1.msra.mxu0 %v2812
  %2874 = vmatprep.subr.mxu0 %v2817
  %2875 = vmatpush1.msra.mxu0 %v2816
  %2876 = vmatprep.subr.mxu0 %v2821
  %2877 = vmatpush1.msra.mxu0 %v2820
  %2878 = vmatprep.subr.mxu0 %v2825
  %2879 = vmatpush1.msra.mxu0 %v2824
  %2880 = vmatprep.subr.mxu0 %v2829
  %2881 = vmatpush1.msra.mxu0 %v2828
  %2882 = vmatprep.subr.mxu0 %v2833
  %2883 = vmatpush1.msra.mxu0 %v2832
  %2884 = vmatprep.subr.mxu0 %v2837
  %2885 = vmatpush1.msra.mxu0 %v2836
  %2886 = vmatprep.subr.mxu0 %v2841
  %2887 = vmatpush1.msra.mxu0 %v2840
  %2888 = vmatprep.subr.mxu0 %v2845
  %2889 = vmatpush1.msra.mxu0 %v2844
  %2890 = vmatprep.subr.mxu0 %v2849
  %2891 = vmatpush1.msra.mxu0 %v2848
  %2892 = vmatprep.subr.mxu0 %v2853
  %2893 = vmatpush1.msra.mxu0 %v2852
  %2894 = vmatprep.subr.mxu0 %v2857
  %2895 = vmatpush1.msra.mxu0 %v2856
  %2896 = vmatprep.subr.mxu0 %v2861
  %2897 = vmatpush1.msra.mxu0 %v2860
  %2898 = vmatprep.subr.mxu0 %v2865
  %2899 = vmatpush1.msra.mxu0 %v2864
  %2900 = vmatprep.subr.mxu0 0.0
  %2901 = vmatpush1.msra.mxu0 0.0
  %2902 = vmatprep.subr.mxu0 0.0
  %2903 = vmatpush1.msra.mxu0 0.0
  %2904 = vmatprep.subr.mxu0 0.0
  %2905 = vmatpush1.msra.mxu0 0.0
  %2906 = vmatprep.subr.mxu0 0.0
  %2907 = vmatpush1.msra.mxu0 0.0
  %2908 = vmatprep.subr.mxu0 0.0
  %2909 = vmatpush1.msra.mxu0 0.0
  %2910 = vmatprep.subr.mxu0 0.0
  %2911 = vmatpush1.msra.mxu0 0.0
  %2912 = vmatprep.subr.mxu0 0.0
  %2913 = vmatpush1.msra.mxu0 0.0
  %2914 = vmatprep.subr.mxu0 0.0
  %2915 = vmatpush1.msra.mxu0 0.0
  %2916 = vmatprep.subr.mxu0 0.0
  %2917 = vmatpush1.msra.mxu0 0.0
  %2918 = vmatprep.subr.mxu0 0.0
  %2919 = vmatpush1.msra.mxu0 0.0
  %2920 = vmatprep.subr.mxu0 0.0
  %2921 = vmatpush1.msra.mxu0 0.0
  %2922 = vmatprep.subr.mxu0 0.0
  %2923 = vmatpush1.msra.mxu0 0.0
  %2924 = vmatprep.subr.mxu0 0.0
  %2925 = vmatpush1.msra.mxu0 0.0
  %2926 = vmatprep.subr.mxu0 0.0
  %2927 = vmatpush1.msra.mxu0 0.0
  %2928 = vmatprep.subr.mxu0 0.0
  %2929 = vmatpush1.msra.mxu0 0.0
  %2930 = vmatprep.subr.mxu0 0.0
  %2931 = vmatpush1.msra.mxu0 0.0
  %2932 = vmatprep.mubr.f32.mxu0 0.0
  %2933 = vmatmul.mubr.f32.gmra.mrb[0].mxu0 %v2583
  %v2934 = vpop.f32.mrb[0].mxu0
  %v2935 = vadd.f32 0.0, %v2934
  %v2936 = vpop.f32.mrb[0].mxu0
  %v2937 = vadd.f32 0.0, %v2936
  %2938 = vdwg.mxu0
  %2939 = vmatprep.subr.mxu0 %v2807
  %2940 = vmatpush1.msra.mxu0 %v2806
  %2941 = vmatprep.subr.mxu0 %v2811
  %2942 = vmatpush1.msra.mxu0 %v2810
  %2943 = vmatprep.subr.mxu0 %v2815
  %2944 = vmatpush1.msra.mxu0 %v2814
  %2945 = vmatprep.subr.mxu0 %v2819
  %2946 = vmatpush1.msra.mxu0 %v2818
  %2947 = vmatprep.subr.mxu0 %v2823
  %2948 = vmatpush1.msra.mxu0 %v2822
  %2949 = vmatprep.subr.mxu0 %v2827
  %2950 = vmatpush1.msra.mxu0 %v2826
  %2951 = vmatprep.subr.mxu0 %v2831
  %2952 = vmatpush1.msra.mxu0 %v2830
  %2953 = vmatprep.subr.mxu0 %v2835
  %2954 = vmatpush1.msra.mxu0 %v2834
  %2955 = vmatprep.subr.mxu0 %v2839
  %2956 = vmatpush1.msra.mxu0 %v2838
  %2957 = vmatprep.subr.mxu0 %v2843
  %2958 = vmatpush1.msra.mxu0 %v2842
  %2959 = vmatprep.subr.mxu0 %v2847
  %2960 = vmatpush1.msra.mxu0 %v2846
  %2961 = vmatprep.subr.mxu0 %v2851
  %2962 = vmatpush1.msra.mxu0 %v2850
  %2963 = vmatprep.subr.mxu0 %v2855
  %2964 = vmatpush1.msra.mxu0 %v2854
  %2965 = vmatprep.subr.mxu0 %v2859
  %2966 = vmatpush1.msra.mxu0 %v2858
  %2967 = vmatprep.subr.mxu0 %v2863
  %2968 = vmatpush1.msra.mxu0 %v2862
  %2969 = vmatprep.subr.mxu0 %v2867
  %2970 = vmatpush1.msra.mxu0 %v2866
  %2971 = vmatprep.subr.mxu0 0.0
  %2972 = vmatpush1.msra.mxu0 0.0
  %2973 = vmatprep.subr.mxu0 0.0
  %2974 = vmatpush1.msra.mxu0 0.0
  %2975 = vmatprep.subr.mxu0 0.0
  %2976 = vmatpush1.msra.mxu0 0.0
  %2977 = vmatprep.subr.mxu0 0.0
  %2978 = vmatpush1.msra.mxu0 0.0
  %2979 = vmatprep.subr.mxu0 0.0
  %2980 = vmatpush1.msra.mxu0 0.0
  %2981 = vmatprep.subr.mxu0 0.0
  %2982 = vmatpush1.msra.mxu0 0.0
  %2983 = vmatprep.subr.mxu0 0.0
  %2984 = vmatpush1.msra.mxu0 0.0
  %2985 = vmatprep.subr.mxu0 0.0
  %2986 = vmatpush1.msra.mxu0 0.0
  %2987 = vmatprep.subr.mxu0 0.0
  %2988 = vmatpush1.msra.mxu0 0.0
  %2989 = vmatprep.subr.mxu0 0.0
  %2990 = vmatpush1.msra.mxu0 0.0
  %2991 = vmatprep.subr.mxu0 0.0
  %2992 = vmatpush1.msra.mxu0 0.0
  %2993 = vmatprep.subr.mxu0 0.0
  %2994 = vmatpush1.msra.mxu0 0.0
  %2995 = vmatprep.subr.mxu0 0.0
  %2996 = vmatpush1.msra.mxu0 0.0
  %2997 = vmatprep.subr.mxu0 0.0
  %2998 = vmatpush1.msra.mxu0 0.0
  %2999 = vmatprep.subr.mxu0 0.0
  %3000 = vmatpush1.msra.mxu0 0.0
  %3001 = vmatprep.subr.mxu0 0.0
  %3002 = vmatpush1.msra.mxu0 0.0
  %3003 = vmatprep.mubr.f32.mxu0 0.0
  %3004 = vmatmul.mubr.f32.gmra.mrb[0].mxu0 %v2583
  %v3005 = vpop.f32.mrb[0].mxu0
  %v3006 = vadd.f32 0.0, %v3005
  %v3007 = vpop.f32.mrb[0].mxu0
  %v3008 = vadd.f32 0.0, %v3007
  %3009 = vdwg.mxu0
  %v3010 = vadd.f32 %v2800, %v2935
  %v3011 = vadd.f32 %v2801, %v2937
  %v3012 = vadd.f32 %v2802, %v3006
  %v3013 = vadd.f32 %v2803, %v3008
  %v3014 = vxor.u32 %v2796, 2147483648
  %v3015 = vxor.u32 %v2797, 2147483648
  %v3016 = vxor.u32 %v2798, 2147483648
  %v3017 = vmul.f32 %v3014, 1.442695
  %v3018 = vpow.pop %v3017
  %v3019 = vmul.f32 %v3015, 1.442695
  %v3020 = vpow.pop %v3019
  %v3021 = vmul.f32 %v3016, 1.442695
  %v3022 = vpow.pop %v3021
  %v3023 = vadd.f32 %v3018, 1.0
  %v3024 = vadd.f32 %v3020, 1.0
  %v3025 = vadd.f32 %v3022, 1.0
  %v3026 = vrcp.pop %v3023
  %v3027 = vmul.f32 1.0, %v3026
  %v3028 = vrcp.pop %v3024
  %v3029 = vmul.f32 1.0, %v3028
  %v3030 = vrcp.pop %v3025
  %v3031 = vmul.f32 1.0, %v3030
  %v3032 = vtanh.pop %v2799
  %v3033 = vmul.f32 %v3029, %v2557
  %v3034 = vmul.f32 %v3027, %v3032
  %v3035 = vadd.f32 %v3033, %v3034
  %v3036 = vtanh.pop %v3035
  %v3037 = vmul.f32 %v3031, %v3036
  %v3038 = vxor.u32 %v3010, 2147483648
  %v3039 = vxor.u32 %v3011, 2147483648
  %v3040 = vxor.u32 %v3012, 2147483648
  %v3041 = vmul.f32 %v3038, 1.442695
  %v3042 = vpow.pop %v3041
  %v3043 = vmul.f32 %v3039, 1.442695
  %v3044 = vpow.pop %v3043
  %v3045 = vmul.f32 %v3040, 1.442695
  %v3046 = vpow.pop %v3045
  %v3047 = vadd.f32 %v3042, 1.0
  %v3048 = vadd.f32 %v3044, 1.0
  %v3049 = vadd.f32 %v3046, 1.0
  %v3050 = vrcp.pop %v3047
  %v3051 = vmul.f32 1.0, %v3050
  %v3052 = vrcp.pop %v3048
  %v3053 = vmul.f32 1.0, %v3052
  %v3054 = vrcp.pop %v3049
  %v3055 = vmul.f32 1.0, %v3054
  %v3056 = vtanh.pop %v3013
  %v3057 = vmul.f32 %v3053, %v2581
  %v3058 = vmul.f32 %v3051, %v3056
  %v3059 = vadd.f32 %v3057, %v3058
  %v3060 = vtanh.pop %v3059
  %v3061 = vmul.f32 %v3055, %v3060
  %3062 = vst [vmem:[#allocation3 + $0x50] sm:$0xff] %v3037
  %3063 = vst [vmem:[#allocation3 + $0x28] sm:$0xff] %v3061
  %v3064 = vld [vmem:[#allocation2 + $0x180] sm:$0xff]
  %v3065 = vld [vmem:[#allocation2 + $0x188] sm:$0xff]
  %v3066 = vld [vmem:[#allocation2 + $0x190] sm:$0xff]
  %v3067 = vld [vmem:[#allocation2 + $0x198] sm:$0xff]
  %v3068 = vld [vmem:[%s2] sm:$0xff]
  %v3069 = vld [vmem:[%s2 + $0x8] sm:$0xff]
  %v3070 = vld [vmem:[%s2 + $0x10] sm:$0xff]
  %v3071 = vld [vmem:[%s2 + $0x18] sm:$0xff]
  %v3072 = vld [vmem:[%s2 + $0x20] sm:$0xff]
  %v3073 = vld [vmem:[%s2 + $0x28] sm:$0xff]
  %v3074 = vld [vmem:[%s2 + $0x30] sm:$0xff]
  %v3075 = vld [vmem:[%s2 + $0x38] sm:$0xff]
  %v3076 = vld [vmem:[%s2 + $0x40] sm:$0xff]
  %v3077 = vld [vmem:[%s2 + $0x48] sm:$0xff]
  %v3078 = vld [vmem:[%s2 + $0x50] sm:$0xff]
  %v3079 = vld [vmem:[%s2 + $0x58] sm:$0xff]
  %v3080 = vld [vmem:[%s2 + $0x60] sm:$0xff]
  %v3081 = vld [vmem:[%s2 + $0x68] sm:$0xff]
  %v3082 = vld [vmem:[%s2 + $0x70] sm:$0xff]
  %v3083 = vld [vmem:[%s2 + $0x78] sm:$0xff]
  %v3084 = vld [vmem:[%s2 + $0x80] sm:$0xff]
  %v3085 = vld [vmem:[%s2 + $0x88] sm:$0xff]
  %v3086 = vld [vmem:[%s2 + $0x90] sm:$0xff]
  %v3087 = vld [vmem:[%s2 + $0x98] sm:$0xff]
  %v3088 = vld [vmem:[%s2 + $0xa0] sm:$0xff]
  %v3089 = vld [vmem:[%s2 + $0xa8] sm:$0xff]
  %v3090 = vld [vmem:[%s2 + $0xb0] sm:$0xff]
  %v3091 = vld [vmem:[%s2 + $0xb8] sm:$0xff]
  %v3092 = vld [vmem:[%s2 + $0xc0] sm:$0xff]
  %v3093 = vld [vmem:[%s2 + $0xc8] sm:$0xff]
  %v3094 = vld [vmem:[%s2 + $0xd0] sm:$0xff]
  %v3095 = vld [vmem:[%s2 + $0xd8] sm:$0xff]
  %v3096 = vld [vmem:[%s2 + $0xe0] sm:$0xff]
  %v3097 = vld [vmem:[%s2 + $0xe8] sm:$0xff]
  %v3098 = vld [vmem:[%s2 + $0xf0] sm:$0xff]
  %v3099 = vld [vmem:[%s2 + $0xf8] sm:$0xff]
  %v3100 = vld [vmem:[%s2 + $0x100] sm:$0xff]
  %v3101 = vld [vmem:[%s2 + $0x108] sm:$0xff]
  %v3102 = vld [vmem:[%s2 + $0x110] sm:$0xff]
  %v3103 = vld [vmem:[%s2 + $0x118] sm:$0xff]
  %v3104 = vld [vmem:[%s2 + $0x120] sm:$0xff]
  %v3105 = vld [vmem:[%s2 + $0x128] sm:$0xff]
  %v3106 = vld [vmem:[%s2 + $0x130] sm:$0xff]
  %v3107 = vld [vmem:[%s2 + $0x138] sm:$0xff]
  %v3108 = vld [vmem:[%s2 + $0x140] sm:$0xff]
  %v3109 = vld [vmem:[%s2 + $0x148] sm:$0xff]
  %v3110 = vld [vmem:[%s2 + $0x150] sm:$0xff]
  %v3111 = vld [vmem:[%s2 + $0x158] sm:$0xff]
  %v3112 = vld [vmem:[%s2 + $0x160] sm:$0xff]
  %v3113 = vld [vmem:[%s2 + $0x168] sm:$0xff]
  %v3114 = vld [vmem:[%s2 + $0x170] sm:$0xff]
  %v3115 = vld [vmem:[%s2 + $0x178] sm:$0xff]
  %v3116 = vld [vmem:[%s2 + $0x180] sm:$0xff]
  %v3117 = vld [vmem:[%s2 + $0x188] sm:$0xff]
  %v3118 = vld [vmem:[%s2 + $0x190] sm:$0xff]
  %v3119 = vld [vmem:[%s2 + $0x198] sm:$0xff]
  %v3120 = vld [vmem:[%s2 + $0x1a0] sm:$0xff]
  %v3121 = vld [vmem:[%s2 + $0x1a8] sm:$0xff]
  %v3122 = vld [vmem:[%s2 + $0x1b0] sm:$0xff]
  %v3123 = vld [vmem:[%s2 + $0x1b8] sm:$0xff]
  %v3124 = vld [vmem:[%s2 + $0x1c0] sm:$0xff]
  %v3125 = vld [vmem:[%s2 + $0x1c8] sm:$0xff]
  %v3126 = vld [vmem:[%s2 + $0x1d0] sm:$0xff]
  %v3127 = vld [vmem:[%s2 + $0x1d8] sm:$0xff]
  %v3128 = vld [vmem:[%s2 + $0x1e0] sm:$0xff]
  %v3129 = vld [vmem:[%s2 + $0x1e8] sm:$0xff]
  %v3130 = vld [vmem:[%s2 + $0x1f0] sm:$0xff]
  %v3131 = vld [vmem:[%s2 + $0x1f8] sm:$0xff]
  %3132 = vmatprep.subr.mxu0 %v3069
  %3133 = vmatpush1.msra.mxu0 %v3068
  %3134 = vmatprep.subr.mxu0 %v3073
  %3135 = vmatpush1.msra.mxu0 %v3072
  %3136 = vmatprep.subr.mxu0 %v3077
  %3137 = vmatpush1.msra.mxu0 %v3076
  %3138 = vmatprep.subr.mxu0 %v3081
  %3139 = vmatpush1.msra.mxu0 %v3080
  %3140 = vmatprep.subr.mxu0 %v3085
  %3141 = vmatpush1.msra.mxu0 %v3084
  %3142 = vmatprep.subr.mxu0 %v3089
  %3143 = vmatpush1.msra.mxu0 %v3088
  %3144 = vmatprep.subr.mxu0 %v3093
  %3145 = vmatpush1.msra.mxu0 %v3092
  %3146 = vmatprep.subr.mxu0 %v3097
  %3147 = vmatpush1.msra.mxu0 %v3096
  %3148 = vmatprep.subr.mxu0 %v3101
  %3149 = vmatpush1.msra.mxu0 %v3100
  %3150 = vmatprep.subr.mxu0 %v3105
  %3151 = vmatpush1.msra.mxu0 %v3104
  %3152 = vmatprep.subr.mxu0 %v3109
  %3153 = vmatpush1.msra.mxu0 %v3108
  %3154 = vmatprep.subr.mxu0 %v3113
  %3155 = vmatpush1.msra.mxu0 %v3112
  %3156 = vmatprep.subr.mxu0 %v3117
  %3157 = vmatpush1.msra.mxu0 %v3116
  %3158 = vmatprep.subr.mxu0 %v3121
  %3159 = vmatpush1.msra.mxu0 %v3120
  %3160 = vmatprep.subr.mxu0 %v3125
  %3161 = vmatpush1.msra.mxu0 %v3124
  %3162 = vmatprep.subr.mxu0 %v3129
  %3163 = vmatpush1.msra.mxu0 %v3128
  %3164 = vmatprep.subr.mxu0 0.0
  %3165 = vmatpush1.msra.mxu0 0.0
  %3166 = vmatprep.subr.mxu0 0.0
  %3167 = vmatpush1.msra.mxu0 0.0
  %3168 = vmatprep.subr.mxu0 0.0
  %3169 = vmatpush1.msra.mxu0 0.0
  %3170 = vmatprep.subr.mxu0 0.0
  %3171 = vmatpush1.msra.mxu0 0.0
  %3172 = vmatprep.subr.mxu0 0.0
  %3173 = vmatpush1.msra.mxu0 0.0
  %3174 = vmatprep.subr.mxu0 0.0
  %3175 = vmatpush1.msra.mxu0 0.0
  %3176 = vmatprep.subr.mxu0 0.0
  %3177 = vmatpush1.msra.mxu0 0.0
  %3178 = vmatprep.subr.mxu0 0.0
  %3179 = vmatpush1.msra.mxu0 0.0
  %3180 = vmatprep.subr.mxu0 0.0
  %3181 = vmatpush1.msra.mxu0 0.0
  %3182 = vmatprep.subr.mxu0 0.0
  %3183 = vmatpush1.msra.mxu0 0.0
  %3184 = vmatprep.subr.mxu0 0.0
  %3185 = vmatpush1.msra.mxu0 0.0
  %3186 = vmatprep.subr.mxu0 0.0
  %3187 = vmatpush1.msra.mxu0 0.0
  %3188 = vmatprep.subr.mxu0 0.0
  %3189 = vmatpush1.msra.mxu0 0.0
  %3190 = vmatprep.subr.mxu0 0.0
  %3191 = vmatpush1.msra.mxu0 0.0
  %3192 = vmatprep.subr.mxu0 0.0
  %3193 = vmatpush1.msra.mxu0 0.0
  %3194 = vmatprep.subr.mxu0 0.0
  %3195 = vmatpush1.msra.mxu0 0.0
  %3196 = vmatprep.mubr.f32.mxu0 0.0
  %3197 = vmatmul.mubr.f32.gmra.mrb[0].mxu0 %v3037
  %v3198 = vpop.f32.mrb[0].mxu0
  %v3199 = vadd.f32 0.0, %v3198
  %v3200 = vpop.f32.mrb[0].mxu0
  %v3201 = vadd.f32 0.0, %v3200
  %3202 = vdwg.mxu0
  %3203 = vmatprep.subr.mxu0 %v3071
  %3204 = vmatpush1.msra.mxu0 %v3070
  %3205 = vmatprep.subr.mxu0 %v3075
  %3206 = vmatpush1.msra.mxu0 %v3074
  %3207 = vmatprep.subr.mxu0 %v3079
  %3208 = vmatpush1.msra.mxu0 %v3078
  %3209 = vmatprep.subr.mxu0 %v3083
  %3210 = vmatpush1.msra.mxu0 %v3082
  %3211 = vmatprep.subr.mxu0 %v3087
  %3212 = vmatpush1.msra.mxu0 %v3086
  %3213 = vmatprep.subr.mxu0 %v3091
  %3214 = vmatpush1.msra.mxu0 %v3090
  %3215 = vmatprep.subr.mxu0 %v3095
  %3216 = vmatpush1.msra.mxu0 %v3094
  %3217 = vmatprep.subr.mxu0 %v3099
  %3218 = vmatpush1.msra.mxu0 %v3098
  %3219 = vmatprep.subr.mxu0 %v3103
  %3220 = vmatpush1.msra.mxu0 %v3102
  %3221 = vmatprep.subr.mxu0 %v3107
  %3222 = vmatpush1.msra.mxu0 %v3106
  %3223 = vmatprep.subr.mxu0 %v3111
  %3224 = vmatpush1.msra.mxu0 %v3110
  %3225 = vmatprep.subr.mxu0 %v3115
  %3226 = vmatpush1.msra.mxu0 %v3114
  %3227 = vmatprep.subr.mxu0 %v3119
  %3228 = vmatpush1.msra.mxu0 %v3118
  %3229 = vmatprep.subr.mxu0 %v3123
  %3230 = vmatpush1.msra.mxu0 %v3122
  %3231 = vmatprep.subr.mxu0 %v3127
  %3232 = vmatpush1.msra.mxu0 %v3126
  %3233 = vmatprep.subr.mxu0 %v3131
  %3234 = vmatpush1.msra.mxu0 %v3130
  %3235 = vmatprep.subr.mxu0 0.0
  %3236 = vmatpush1.msra.mxu0 0.0
  %3237 = vmatprep.subr.mxu0 0.0
  %3238 = vmatpush1.msra.mxu0 0.0
  %3239 = vmatprep.subr.mxu0 0.0
  %3240 = vmatpush1.msra.mxu0 0.0
  %3241 = vmatprep.subr.mxu0 0.0
  %3242 = vmatpush1.msra.mxu0 0.0
  %3243 = vmatprep.subr.mxu0 0.0
  %3244 = vmatpush1.msra.mxu0 0.0
  %3245 = vmatprep.subr.mxu0 0.0
  %3246 = vmatpush1.msra.mxu0 0.0
  %3247 = vmatprep.subr.mxu0 0.0
  %3248 = vmatpush1.msra.mxu0 0.0
  %3249 = vmatprep.subr.mxu0 0.0
  %3250 = vmatpush1.msra.mxu0 0.0
  %3251 = vmatprep.subr.mxu0 0.0
  %3252 = vmatpush1.msra.mxu0 0.0
  %3253 = vmatprep.subr.mxu0 0.0
  %3254 = vmatpush1.msra.mxu0 0.0
  %3255 = vmatprep.subr.mxu0 0.0
  %3256 = vmatpush1.msra.mxu0 0.0
  %3257 = vmatprep.subr.mxu0 0.0
  %3258 = vmatpush1.msra.mxu0 0.0
  %3259 = vmatprep.subr.mxu0 0.0
  %3260 = vmatpush1.msra.mxu0 0.0
  %3261 = vmatprep.subr.mxu0 0.0
  %3262 = vmatpush1.msra.mxu0 0.0
  %3263 = vmatprep.subr.mxu0 0.0
  %3264 = vmatpush1.msra.mxu0 0.0
  %3265 = vmatprep.subr.mxu0 0.0
  %3266 = vmatpush1.msra.mxu0 0.0
  %3267 = vmatprep.mubr.f32.mxu0 0.0
  %3268 = vmatmul.mubr.f32.gmra.mrb[0].mxu0 %v3037
  %v3269 = vpop.f32.mrb[0].mxu0
  %v3270 = vadd.f32 0.0, %v3269
  %v3271 = vpop.f32.mrb[0].mxu0
  %v3272 = vadd.f32 0.0, %v3271
  %3273 = vdwg.mxu0
  %v3274 = vadd.f32 %v3064, %v3199
  %v3275 = vadd.f32 %v3065, %v3201
  %v3276 = vadd.f32 %v3066, %v3270
  %v3277 = vadd.f32 %v3067, %v3272
  %v3278 = vld [vmem:[#allocation2 + $0x60] sm:$0xff]
  %v3279 = vld [vmem:[#allocation2 + $0x68] sm:$0xff]
  %v3280 = vld [vmem:[#allocation2 + $0x70] sm:$0xff]
  %v3281 = vld [vmem:[#allocation2 + $0x78] sm:$0xff]
  %v3282 = vld [vmem:[%s3] sm:$0xff]
  %v3283 = vld [vmem:[%s3 + $0x8] sm:$0xff]
  %v3284 = vld [vmem:[%s3 + $0x10] sm:$0xff]
  %v3285 = vld [vmem:[%s3 + $0x18] sm:$0xff]
  %v3286 = vld [vmem:[%s3 + $0x20] sm:$0xff]
  %v3287 = vld [vmem:[%s3 + $0x28] sm:$0xff]
  %v3288 = vld [vmem:[%s3 + $0x30] sm:$0xff]
  %v3289 = vld [vmem:[%s3 + $0x38] sm:$0xff]
  %v3290 = vld [vmem:[%s3 + $0x40] sm:$0xff]
  %v3291 = vld [vmem:[%s3 + $0x48] sm:$0xff]
  %v3292 = vld [vmem:[%s3 + $0x50] sm:$0xff]
  %v3293 = vld [vmem:[%s3 + $0x58] sm:$0xff]
  %v3294 = vld [vmem:[%s3 + $0x60] sm:$0xff]
  %v3295 = vld [vmem:[%s3 + $0x68] sm:$0xff]
  %v3296 = vld [vmem:[%s3 + $0x70] sm:$0xff]
  %v3297 = vld [vmem:[%s3 + $0x78] sm:$0xff]
  %v3298 = vld [vmem:[%s3 + $0x80] sm:$0xff]
  %v3299 = vld [vmem:[%s3 + $0x88] sm:$0xff]
  %v3300 = vld [vmem:[%s3 + $0x90] sm:$0xff]
  %v3301 = vld [vmem:[%s3 + $0x98] sm:$0xff]
  %v3302 = vld [vmem:[%s3 + $0xa0] sm:$0xff]
  %v3303 = vld [vmem:[%s3 + $0xa8] sm:$0xff]
  %v3304 = vld [vmem:[%s3 + $0xb0] sm:$0xff]
  %v3305 = vld [vmem:[%s3 + $0xb8] sm:$0xff]
  %v3306 = vld [vmem:[%s3 + $0xc0] sm:$0xff]
  %v3307 = vld [vmem:[%s3 + $0xc8] sm:$0xff]
  %v3308 = vld [vmem:[%s3 + $0xd0] sm:$0xff]
  %v3309 = vld [vmem:[%s3 + $0xd8] sm:$0xff]
  %v3310 = vld [vmem:[%s3 + $0xe0] sm:$0xff]
  %v3311 = vld [vmem:[%s3 + $0xe8] sm:$0xff]
  %v3312 = vld [vmem:[%s3 + $0xf0] sm:$0xff]
  %v3313 = vld [vmem:[%s3 + $0xf8] sm:$0xff]
  %v3314 = vld [vmem:[%s3 + $0x100] sm:$0xff]
  %v3315 = vld [vmem:[%s3 + $0x108] sm:$0xff]
  %v3316 = vld [vmem:[%s3 + $0x110] sm:$0xff]
  %v3317 = vld [vmem:[%s3 + $0x118] sm:$0xff]
  %v3318 = vld [vmem:[%s3 + $0x120] sm:$0xff]
  %v3319 = vld [vmem:[%s3 + $0x128] sm:$0xff]
  %v3320 = vld [vmem:[%s3 + $0x130] sm:$0xff]
  %v3321 = vld [vmem:[%s3 + $0x138] sm:$0xff]
  %v3322 = vld [vmem:[%s3 + $0x140] sm:$0xff]
  %v3323 = vld [vmem:[%s3 + $0x148] sm:$0xff]
  %v3324 = vld [vmem:[%s3 + $0x150] sm:$0xff]
  %v3325 = vld [vmem:[%s3 + $0x158] sm:$0xff]
  %v3326 = vld [vmem:[%s3 + $0x160] sm:$0xff]
  %v3327 = vld [vmem:[%s3 + $0x168] sm:$0xff]
  %v3328 = vld [vmem:[%s3 + $0x170] sm:$0xff]
  %v3329 = vld [vmem:[%s3 + $0x178] sm:$0xff]
  %v3330 = vld [vmem:[%s3 + $0x180] sm:$0xff]
  %v3331 = vld [vmem:[%s3 + $0x188] sm:$0xff]
  %v3332 = vld [vmem:[%s3 + $0x190] sm:$0xff]
  %v3333 = vld [vmem:[%s3 + $0x198] sm:$0xff]
  %v3334 = vld [vmem:[%s3 + $0x1a0] sm:$0xff]
  %v3335 = vld [vmem:[%s3 + $0x1a8] sm:$0xff]
  %v3336 = vld [vmem:[%s3 + $0x1b0] sm:$0xff]
  %v3337 = vld [vmem:[%s3 + $0x1b8] sm:$0xff]
  %v3338 = vld [vmem:[%s3 + $0x1c0] sm:$0xff]
  %v3339 = vld [vmem:[%s3 + $0x1c8] sm:$0xff]
  %v3340 = vld [vmem:[%s3 + $0x1d0] sm:$0xff]
  %v3341 = vld [vmem:[%s3 + $0x1d8] sm:$0xff]
  %v3342 = vld [vmem:[%s3 + $0x1e0] sm:$0xff]
  %v3343 = vld [vmem:[%s3 + $0x1e8] sm:$0xff]
  %v3344 = vld [vmem:[%s3 + $0x1f0] sm:$0xff]
  %v3345 = vld [vmem:[%s3 + $0x1f8] sm:$0xff]
  %3346 = vmatprep.subr.mxu0 %v3283
  %3347 = vmatpush1.msra.mxu0 %v3282
  %3348 = vmatprep.subr.mxu0 %v3287
  %3349 = vmatpush1.msra.mxu0 %v3286
  %3350 = vmatprep.subr.mxu0 %v3291
  %3351 = vmatpush1.msra.mxu0 %v3290
  %3352 = vmatprep.subr.mxu0 %v3295
  %3353 = vmatpush1.msra.mxu0 %v3294
  %3354 = vmatprep.subr.mxu0 %v3299
  %3355 = vmatpush1.msra.mxu0 %v3298
  %3356 = vmatprep.subr.mxu0 %v3303
  %3357 = vmatpush1.msra.mxu0 %v3302
  %3358 = vmatprep.subr.mxu0 %v3307
  %3359 = vmatpush1.msra.mxu0 %v3306
  %3360 = vmatprep.subr.mxu0 %v3311
  %3361 = vmatpush1.msra.mxu0 %v3310
  %3362 = vmatprep.subr.mxu0 %v3315
  %3363 = vmatpush1.msra.mxu0 %v3314
  %3364 = vmatprep.subr.mxu0 %v3319
  %3365 = vmatpush1.msra.mxu0 %v3318
  %3366 = vmatprep.subr.mxu0 %v3323
  %3367 = vmatpush1.msra.mxu0 %v3322
  %3368 = vmatprep.subr.mxu0 %v3327
  %3369 = vmatpush1.msra.mxu0 %v3326
  %3370 = vmatprep.subr.mxu0 %v3331
  %3371 = vmatpush1.msra.mxu0 %v3330
  %3372 = vmatprep.subr.mxu0 %v3335
  %3373 = vmatpush1.msra.mxu0 %v3334
  %3374 = vmatprep.subr.mxu0 %v3339
  %3375 = vmatpush1.msra.mxu0 %v3338
  %3376 = vmatprep.subr.mxu0 %v3343
  %3377 = vmatpush1.msra.mxu0 %v3342
  %3378 = vmatprep.subr.mxu0 0.0
  %3379 = vmatpush1.msra.mxu0 0.0
  %3380 = vmatprep.subr.mxu0 0.0
  %3381 = vmatpush1.msra.mxu0 0.0
  %3382 = vmatprep.subr.mxu0 0.0
  %3383 = vmatpush1.msra.mxu0 0.0
  %3384 = vmatprep.subr.mxu0 0.0
  %3385 = vmatpush1.msra.mxu0 0.0
  %3386 = vmatprep.subr.mxu0 0.0
  %3387 = vmatpush1.msra.mxu0 0.0
  %3388 = vmatprep.subr.mxu0 0.0
  %3389 = vmatpush1.msra.mxu0 0.0
  %3390 = vmatprep.subr.mxu0 0.0
  %3391 = vmatpush1.msra.mxu0 0.0
  %3392 = vmatprep.subr.mxu0 0.0
  %3393 = vmatpush1.msra.mxu0 0.0
  %3394 = vmatprep.subr.mxu0 0.0
  %3395 = vmatpush1.msra.mxu0 0.0
  %3396 = vmatprep.subr.mxu0 0.0
  %3397 = vmatpush1.msra.mxu0 0.0
  %3398 = vmatprep.subr.mxu0 0.0
  %3399 = vmatpush1.msra.mxu0 0.0
  %3400 = vmatprep.subr.mxu0 0.0
  %3401 = vmatpush1.msra.mxu0 0.0
  %3402 = vmatprep.subr.mxu0 0.0
  %3403 = vmatpush1.msra.mxu0 0.0
  %3404 = vmatprep.subr.mxu0 0.0
  %3405 = vmatpush1.msra.mxu0 0.0
  %3406 = vmatprep.subr.mxu0 0.0
  %3407 = vmatpush1.msra.mxu0 0.0
  %3408 = vmatprep.subr.mxu0 0.0
  %3409 = vmatpush1.msra.mxu0 0.0
  %3410 = vmatprep.mubr.f32.mxu0 0.0
  %3411 = vmatmul.mubr.f32.gmra.mrb[0].mxu0 %v3061
  %v3412 = vpop.f32.mrb[0].mxu0
  %v3413 = vadd.f32 0.0, %v3412
  %v3414 = vpop.f32.mrb[0].mxu0
  %v3415 = vadd.f32 0.0, %v3414
  %3416 = vdwg.mxu0
  %3417 = vmatprep.subr.mxu0 %v3285
  %3418 = vmatpush1.msra.mxu0 %v3284
  %3419 = vmatprep.subr.mxu0 %v3289
  %3420 = vmatpush1.msra.mxu0 %v3288
  %3421 = vmatprep.subr.mxu0 %v3293
  %3422 = vmatpush1.msra.mxu0 %v3292
  %3423 = vmatprep.subr.mxu0 %v3297
  %3424 = vmatpush1.msra.mxu0 %v3296
  %3425 = vmatprep.subr.mxu0 %v3301
  %3426 = vmatpush1.msra.mxu0 %v3300
  %3427 = vmatprep.subr.mxu0 %v3305
  %3428 = vmatpush1.msra.mxu0 %v3304
  %3429 = vmatprep.subr.mxu0 %v3309
  %3430 = vmatpush1.msra.mxu0 %v3308
  %3431 = vmatprep.subr.mxu0 %v3313
  %3432 = vmatpush1.msra.mxu0 %v3312
  %3433 = vmatprep.subr.mxu0 %v3317
  %3434 = vmatpush1.msra.mxu0 %v3316
  %3435 = vmatprep.subr.mxu0 %v3321
  %3436 = vmatpush1.msra.mxu0 %v3320
  %3437 = vmatprep.subr.mxu0 %v3325
  %3438 = vmatpush1.msra.mxu0 %v3324
  %3439 = vmatprep.subr.mxu0 %v3329
  %3440 = vmatpush1.msra.mxu0 %v3328
  %3441 = vmatprep.subr.mxu0 %v3333
  %3442 = vmatpush1.msra.mxu0 %v3332
  %3443 = vmatprep.subr.mxu0 %v3337
  %3444 = vmatpush1.msra.mxu0 %v3336
  %3445 = vmatprep.subr.mxu0 %v3341
  %3446 = vmatpush1.msra.mxu0 %v3340
  %3447 = vmatprep.subr.mxu0 %v3345
  %3448 = vmatpush1.msra.mxu0 %v3344
  %3449 = vmatprep.subr.mxu0 0.0
  %3450 = vmatpush1.msra.mxu0 0.0
  %3451 = vmatprep.subr.mxu0 0.0
  %3452 = vmatpush1.msra.mxu0 0.0
  %3453 = vmatprep.subr.mxu0 0.0
  %3454 = vmatpush1.msra.mxu0 0.0
  %3455 = vmatprep.subr.mxu0 0.0
  %3456 = vmatpush1.msra.mxu0 0.0
  %3457 = vmatprep.subr.mxu0 0.0
  %3458 = vmatpush1.msra.mxu0 0.0
  %3459 = vmatprep.subr.mxu0 0.0
  %3460 = vmatpush1.msra.mxu0 0.0
  %3461 = vmatprep.subr.mxu0 0.0
  %3462 = vmatpush1.msra.mxu0 0.0
  %3463 = vmatprep.subr.mxu0 0.0
  %3464 = vmatpush1.msra.mxu0 0.0
  %3465 = vmatprep.subr.mxu0 0.0
  %3466 = vmatpush1.msra.mxu0 0.0
  %3467 = vmatprep.subr.mxu0 0.0
  %3468 = vmatpush1.msra.mxu0 0.0
  %3469 = vmatprep.subr.mxu0 0.0
  %3470 = vmatpush1.msra.mxu0 0.0
  %3471 = vmatprep.subr.mxu0 0.0
  %3472 = vmatpush1.msra.mxu0 0.0
  %3473 = vmatprep.subr.mxu0 0.0
  %3474 = vmatpush1.msra.mxu0 0.0
  %3475 = vmatprep.subr.mxu0 0.0
  %3476 = vmatpush1.msra.mxu0 0.0
  %3477 = vmatprep.subr.mxu0 0.0
  %3478 = vmatpush1.msra.mxu0 0.0
  %3479 = vmatprep.subr.mxu0 0.0
  %3480 = vmatpush1.msra.mxu0 0.0
  %3481 = vmatprep.mubr.f32.mxu0 0.0
  %3482 = vmatmul.mubr.f32.gmra.mrb[0].mxu0 %v3061
  %v3483 = vpop.f32.mrb[0].mxu0
  %v3484 = vadd.f32 0.0, %v3483
  %v3485 = vpop.f32.mrb[0].mxu0
  %v3486 = vadd.f32 0.0, %v3485
  %3487 = vdwg.mxu0
  %v3488 = vadd.f32 %v3278, %v3413
  %v3489 = vadd.f32 %v3279, %v3415
  %v3490 = vadd.f32 %v3280, %v3484
  %v3491 = vadd.f32 %v3281, %v3486
  %v3492 = vxor.u32 %v3274, 2147483648
  %v3493 = vxor.u32 %v3275, 2147483648
  %v3494 = vxor.u32 %v3276, 2147483648
  %v3495 = vmul.f32 %v3492, 1.442695
  %v3496 = vpow.pop %v3495
  %v3497 = vmul.f32 %v3493, 1.442695
  %v3498 = vpow.pop %v3497
  %v3499 = vmul.f32 %v3494, 1.442695
  %v3500 = vpow.pop %v3499
  %v3501 = vadd.f32 %v3496, 1.0
  %v3502 = vadd.f32 %v3498, 1.0
  %v3503 = vadd.f32 %v3500, 1.0
  %v3504 = vrcp.pop %v3501
  %v3505 = vmul.f32 1.0, %v3504
  %v3506 = vrcp.pop %v3502
  %v3507 = vmul.f32 1.0, %v3506
  %v3508 = vrcp.pop %v3503
  %v3509 = vmul.f32 1.0, %v3508
  %v3510 = vtanh.pop %v3277
  %v3511 = vmul.f32 %v3507, %v3035
  %v3512 = vmul.f32 %v3505, %v3510
  %v3513 = vadd.f32 %v3511, %v3512
  %v3514 = vtanh.pop %v3513
  %v3515 = vmul.f32 %v3509, %v3514
  %v3516 = vxor.u32 %v3488, 2147483648
  %v3517 = vxor.u32 %v3489, 2147483648
  %v3518 = vxor.u32 %v3490, 2147483648
  %v3519 = vmul.f32 %v3516, 1.442695
  %v3520 = vpow.pop %v3519
  %v3521 = vmul.f32 %v3517, 1.442695
  %v3522 = vpow.pop %v3521
  %v3523 = vmul.f32 %v3518, 1.442695
  %v3524 = vpow.pop %v3523
  %v3525 = vadd.f32 %v3520, 1.0
  %v3526 = vadd.f32 %v3522, 1.0
  %v3527 = vadd.f32 %v3524, 1.0
  %v3528 = vrcp.pop %v3525
  %v3529 = vmul.f32 1.0, %v3528
  %v3530 = vrcp.pop %v3526
  %v3531 = vmul.f32 1.0, %v3530
  %v3532 = vrcp.pop %v3527
  %v3533 = vmul.f32 1.0, %v3532
  %v3534 = vtanh.pop %v3491
  %v3535 = vmul.f32 %v3531, %v3059
  %v3536 = vmul.f32 %v3529, %v3534
  %v3537 = vadd.f32 %v3535, %v3536
  %v3538 = vtanh.pop %v3537
  %v3539 = vmul.f32 %v3533, %v3538
  %3540 = vst [vmem:[#allocation3 + $0x60] sm:$0xff] %v3515
  %3541 = vst [vmem:[#allocation3 + $0x18] sm:$0xff] %v3539
  %v3542 = vld [vmem:[#allocation2 + $0x1c0] sm:$0xff]
  %v3543 = vld [vmem:[#allocation2 + $0x1c8] sm:$0xff]
  %v3544 = vld [vmem:[#allocation2 + $0x1d0] sm:$0xff]
  %v3545 = vld [vmem:[#allocation2 + $0x1d8] sm:$0xff]
  %v3546 = vld [vmem:[%s2] sm:$0xff]
  %v3547 = vld [vmem:[%s2 + $0x8] sm:$0xff]
  %v3548 = vld [vmem:[%s2 + $0x10] sm:$0xff]
  %v3549 = vld [vmem:[%s2 + $0x18] sm:$0xff]
  %v3550 = vld [vmem:[%s2 + $0x20] sm:$0xff]
  %v3551 = vld [vmem:[%s2 + $0x28] sm:$0xff]
  %v3552 = vld [vmem:[%s2 + $0x30] sm:$0xff]
  %v3553 = vld [vmem:[%s2 + $0x38] sm:$0xff]
  %v3554 = vld [vmem:[%s2 + $0x40] sm:$0xff]
  %v3555 = vld [vmem:[%s2 + $0x48] sm:$0xff]
  %v3556 = vld [vmem:[%s2 + $0x50] sm:$0xff]
  %v3557 = vld [vmem:[%s2 + $0x58] sm:$0xff]
  %v3558 = vld [vmem:[%s2 + $0x60] sm:$0xff]
  %v3559 = vld [vmem:[%s2 + $0x68] sm:$0xff]
  %v3560 = vld [vmem:[%s2 + $0x70] sm:$0xff]
  %v3561 = vld [vmem:[%s2 + $0x78] sm:$0xff]
  %v3562 = vld [vmem:[%s2 + $0x80] sm:$0xff]
  %v3563 = vld [vmem:[%s2 + $0x88] sm:$0xff]
  %v3564 = vld [vmem:[%s2 + $0x90] sm:$0xff]
  %v3565 = vld [vmem:[%s2 + $0x98] sm:$0xff]
  %v3566 = vld [vmem:[%s2 + $0xa0] sm:$0xff]
  %v3567 = vld [vmem:[%s2 + $0xa8] sm:$0xff]
  %v3568 = vld [vmem:[%s2 + $0xb0] sm:$0xff]
  %v3569 = vld [vmem:[%s2 + $0xb8] sm:$0xff]
  %v3570 = vld [vmem:[%s2 + $0xc0] sm:$0xff]
  %v3571 = vld [vmem:[%s2 + $0xc8] sm:$0xff]
  %v3572 = vld [vmem:[%s2 + $0xd0] sm:$0xff]
  %v3573 = vld [vmem:[%s2 + $0xd8] sm:$0xff]
  %v3574 = vld [vmem:[%s2 + $0xe0] sm:$0xff]
  %v3575 = vld [vmem:[%s2 + $0xe8] sm:$0xff]
  %v3576 = vld [vmem:[%s2 + $0xf0] sm:$0xff]
  %v3577 = vld [vmem:[%s2 + $0xf8] sm:$0xff]
  %v3578 = vld [vmem:[%s2 + $0x100] sm:$0xff]
  %v3579 = vld [vmem:[%s2 + $0x108] sm:$0xff]
  %v3580 = vld [vmem:[%s2 + $0x110] sm:$0xff]
  %v3581 = vld [vmem:[%s2 + $0x118] sm:$0xff]
  %v3582 = vld [vmem:[%s2 + $0x120] sm:$0xff]
  %v3583 = vld [vmem:[%s2 + $0x128] sm:$0xff]
  %v3584 = vld [vmem:[%s2 + $0x130] sm:$0xff]
  %v3585 = vld [vmem:[%s2 + $0x138] sm:$0xff]
  %v3586 = vld [vmem:[%s2 + $0x140] sm:$0xff]
  %v3587 = vld [vmem:[%s2 + $0x148] sm:$0xff]
  %v3588 = vld [vmem:[%s2 + $0x150] sm:$0xff]
  %v3589 = vld [vmem:[%s2 + $0x158] sm:$0xff]
  %v3590 = vld [vmem:[%s2 + $0x160] sm:$0xff]
  %v3591 = vld [vmem:[%s2 + $0x168] sm:$0xff]
  %v3592 = vld [vmem:[%s2 + $0x170] sm:$0xff]
  %v3593 = vld [vmem:[%s2 + $0x178] sm:$0xff]
  %v3594 = vld [vmem:[%s2 + $0x180] sm:$0xff]
  %v3595 = vld [vmem:[%s2 + $0x188] sm:$0xff]
  %v3596 = vld [vmem:[%s2 + $0x190] sm:$0xff]
  %v3597 = vld [vmem:[%s2 + $0x198] sm:$0xff]
  %v3598 = vld [vmem:[%s2 + $0x1a0] sm:$0xff]
  %v3599 = vld [vmem:[%s2 + $0x1a8] sm:$0xff]
  %v3600 = vld [vmem:[%s2 + $0x1b0] sm:$0xff]
  %v3601 = vld [vmem:[%s2 + $0x1b8] sm:$0xff]
  %v3602 = vld [vmem:[%s2 + $0x1c0] sm:$0xff]
  %v3603 = vld [vmem:[%s2 + $0x1c8] sm:$0xff]
  %v3604 = vld [vmem:[%s2 + $0x1d0] sm:$0xff]
  %v3605 = vld [vmem:[%s2 + $0x1d8] sm:$0xff]
  %v3606 = vld [vmem:[%s2 + $0x1e0] sm:$0xff]
  %v3607 = vld [vmem:[%s2 + $0x1e8] sm:$0xff]
  %v3608 = vld [vmem:[%s2 + $0x1f0] sm:$0xff]
  %v3609 = vld [vmem:[%s2 + $0x1f8] sm:$0xff]
  %3610 = vmatprep.subr.mxu0 %v3547
  %3611 = vmatpush1.msra.mxu0 %v3546
  %3612 = vmatprep.subr.mxu0 %v3551
  %3613 = vmatpush1.msra.mxu0 %v3550
  %3614 = vmatprep.subr.mxu0 %v3555
  %3615 = vmatpush1.msra.mxu0 %v3554
  %3616 = vmatprep.subr.mxu0 %v3559
  %3617 = vmatpush1.msra.mxu0 %v3558
  %3618 = vmatprep.subr.mxu0 %v3563
  %3619 = vmatpush1.msra.mxu0 %v3562
  %3620 = vmatprep.subr.mxu0 %v3567
  %3621 = vmatpush1.msra.mxu0 %v3566
  %3622 = vmatprep.subr.mxu0 %v3571
  %3623 = vmatpush1.msra.mxu0 %v3570
  %3624 = vmatprep.subr.mxu0 %v3575
  %3625 = vmatpush1.msra.mxu0 %v3574
  %3626 = vmatprep.subr.mxu0 %v3579
  %3627 = vmatpush1.msra.mxu0 %v3578
  %3628 = vmatprep.subr.mxu0 %v3583
  %3629 = vmatpush1.msra.mxu0 %v3582
  %3630 = vmatprep.subr.mxu0 %v3587
  %3631 = vmatpush1.msra.mxu0 %v3586
  %3632 = vmatprep.subr.mxu0 %v3591
  %3633 = vmatpush1.msra.mxu0 %v3590
  %3634 = vmatprep.subr.mxu0 %v3595
  %3635 = vmatpush1.msra.mxu0 %v3594
  %3636 = vmatprep.subr.mxu0 %v3599
  %3637 = vmatpush1.msra.mxu0 %v3598
  %3638 = vmatprep.subr.mxu0 %v3603
  %3639 = vmatpush1.msra.mxu0 %v3602
  %3640 = vmatprep.subr.mxu0 %v3607
  %3641 = vmatpush1.msra.mxu0 %v3606
  %3642 = vmatprep.subr.mxu0 0.0
  %3643 = vmatpush1.msra.mxu0 0.0
  %3644 = vmatprep.subr.mxu0 0.0
  %3645 = vmatpush1.msra.mxu0 0.0
  %3646 = vmatprep.subr.mxu0 0.0
  %3647 = vmatpush1.msra.mxu0 0.0
  %3648 = vmatprep.subr.mxu0 0.0
  %3649 = vmatpush1.msra.mxu0 0.0
  %3650 = vmatprep.subr.mxu0 0.0
  %3651 = vmatpush1.msra.mxu0 0.0
  %3652 = vmatprep.subr.mxu0 0.0
  %3653 = vmatpush1.msra.mxu0 0.0
  %3654 = vmatprep.subr.mxu0 0.0
  %3655 = vmatpush1.msra.mxu0 0.0
  %3656 = vmatprep.subr.mxu0 0.0
  %3657 = vmatpush1.msra.mxu0 0.0
  %3658 = vmatprep.subr.mxu0 0.0
  %3659 = vmatpush1.msra.mxu0 0.0
  %3660 = vmatprep.subr.mxu0 0.0
  %3661 = vmatpush1.msra.mxu0 0.0
  %3662 = vmatprep.subr.mxu0 0.0
  %3663 = vmatpush1.msra.mxu0 0.0
  %3664 = vmatprep.subr.mxu0 0.0
  %3665 = vmatpush1.msra.mxu0 0.0
  %3666 = vmatprep.subr.mxu0 0.0
  %3667 = vmatpush1.msra.mxu0 0.0
  %3668 = vmatprep.subr.mxu0 0.0
  %3669 = vmatpush1.msra.mxu0 0.0
  %3670 = vmatprep.subr.mxu0 0.0
  %3671 = vmatpush1.msra.mxu0 0.0
  %3672 = vmatprep.subr.mxu0 0.0
  %3673 = vmatpush1.msra.mxu0 0.0
  %3674 = vmatprep.mubr.f32.mxu0 0.0
  %3675 = vmatmul.mubr.f32.gmra.mrb[0].mxu0 %v3515
  %v3676 = vpop.f32.mrb[0].mxu0
  %v3677 = vadd.f32 0.0, %v3676
  %v3678 = vpop.f32.mrb[0].mxu0
  %v3679 = vadd.f32 0.0, %v3678
  %3680 = vdwg.mxu0
  %3681 = vmatprep.subr.mxu0 %v3549
  %3682 = vmatpush1.msra.mxu0 %v3548
  %3683 = vmatprep.subr.mxu0 %v3553
  %3684 = vmatpush1.msra.mxu0 %v3552
  %3685 = vmatprep.subr.mxu0 %v3557
  %3686 = vmatpush1.msra.mxu0 %v3556
  %3687 = vmatprep.subr.mxu0 %v3561
  %3688 = vmatpush1.msra.mxu0 %v3560
  %3689 = vmatprep.subr.mxu0 %v3565
  %3690 = vmatpush1.msra.mxu0 %v3564
  %3691 = vmatprep.subr.mxu0 %v3569
  %3692 = vmatpush1.msra.mxu0 %v3568
  %3693 = vmatprep.subr.mxu0 %v3573
  %3694 = vmatpush1.msra.mxu0 %v3572
  %3695 = vmatprep.subr.mxu0 %v3577
  %3696 = vmatpush1.msra.mxu0 %v3576
  %3697 = vmatprep.subr.mxu0 %v3581
  %3698 = vmatpush1.msra.mxu0 %v3580
  %3699 = vmatprep.subr.mxu0 %v3585
  %3700 = vmatpush1.msra.mxu0 %v3584
  %3701 = vmatprep.subr.mxu0 %v3589
  %3702 = vmatpush1.msra.mxu0 %v3588
  %3703 = vmatprep.subr.mxu0 %v3593
  %3704 = vmatpush1.msra.mxu0 %v3592
  %3705 = vmatprep.subr.mxu0 %v3597
  %3706 = vmatpush1.msra.mxu0 %v3596
  %3707 = vmatprep.subr.mxu0 %v3601
  %3708 = vmatpush1.msra.mxu0 %v3600
  %3709 = vmatprep.subr.mxu0 %v3605
  %3710 = vmatpush1.msra.mxu0 %v3604
  %3711 = vmatprep.subr.mxu0 %v3609
  %3712 = vmatpush1.msra.mxu0 %v3608
  %3713 = vmatprep.subr.mxu0 0.0
  %3714 = vmatpush1.msra.mxu0 0.0
  %3715 = vmatprep.subr.mxu0 0.0
  %3716 = vmatpush1.msra.mxu0 0.0
  %3717 = vmatprep.subr.mxu0 0.0
  %3718 = vmatpush1.msra.mxu0 0.0
  %3719 = vmatprep.subr.mxu0 0.0
  %3720 = vmatpush1.msra.mxu0 0.0
  %3721 = vmatprep.subr.mxu0 0.0
  %3722 = vmatpush1.msra.mxu0 0.0
  %3723 = vmatprep.subr.mxu0 0.0
  %3724 = vmatpush1.msra.mxu0 0.0
  %3725 = vmatprep.subr.mxu0 0.0
  %3726 = vmatpush1.msra.mxu0 0.0
  %3727 = vmatprep.subr.mxu0 0.0
  %3728 = vmatpush1.msra.mxu0 0.0
  %3729 = vmatprep.subr.mxu0 0.0
  %3730 = vmatpush1.msra.mxu0 0.0
  %3731 = vmatprep.subr.mxu0 0.0
  %3732 = vmatpush1.msra.mxu0 0.0
  %3733 = vmatprep.subr.mxu0 0.0
  %3734 = vmatpush1.msra.mxu0 0.0
  %3735 = vmatprep.subr.mxu0 0.0
  %3736 = vmatpush1.msra.mxu0 0.0
  %3737 = vmatprep.subr.mxu0 0.0
  %3738 = vmatpush1.msra.mxu0 0.0
  %3739 = vmatprep.subr.mxu0 0.0
  %3740 = vmatpush1.msra.mxu0 0.0
  %3741 = vmatprep.subr.mxu0 0.0
  %3742 = vmatpush1.msra.mxu0 0.0
  %3743 = vmatprep.subr.mxu0 0.0
  %3744 = vmatpush1.msra.mxu0 0.0
  %3745 = vmatprep.mubr.f32.mxu0 0.0
  %3746 = vmatmul.mubr.f32.gmra.mrb[0].mxu0 %v3515
  %v3747 = vpop.f32.mrb[0].mxu0
  %v3748 = vadd.f32 0.0, %v3747
  %v3749 = vpop.f32.mrb[0].mxu0
  %v3750 = vadd.f32 0.0, %v3749
  %3751 = vdwg.mxu0
  %v3752 = vadd.f32 %v3542, %v3677
  %v3753 = vadd.f32 %v3543, %v3679
  %v3754 = vadd.f32 %v3544, %v3748
  %v3755 = vadd.f32 %v3545, %v3750
  %v3756 = vld [vmem:[#allocation2 + $0x20] sm:$0xff]
  %v3757 = vld [vmem:[#allocation2 + $0x28] sm:$0xff]
  %v3758 = vld [vmem:[#allocation2 + $0x30] sm:$0xff]
  %v3759 = vld [vmem:[#allocation2 + $0x38] sm:$0xff]
  %v3760 = vld [vmem:[%s3] sm:$0xff]
  %v3761 = vld [vmem:[%s3 + $0x8] sm:$0xff]
  %v3762 = vld [vmem:[%s3 + $0x10] sm:$0xff]
  %v3763 = vld [vmem:[%s3 + $0x18] sm:$0xff]
  %v3764 = vld [vmem:[%s3 + $0x20] sm:$0xff]
  %v3765 = vld [vmem:[%s3 + $0x28] sm:$0xff]
  %v3766 = vld [vmem:[%s3 + $0x30] sm:$0xff]
  %v3767 = vld [vmem:[%s3 + $0x38] sm:$0xff]
  %v3768 = vld [vmem:[%s3 + $0x40] sm:$0xff]
  %v3769 = vld [vmem:[%s3 + $0x48] sm:$0xff]
  %v3770 = vld [vmem:[%s3 + $0x50] sm:$0xff]
  %v3771 = vld [vmem:[%s3 + $0x58] sm:$0xff]
  %v3772 = vld [vmem:[%s3 + $0x60] sm:$0xff]
  %v3773 = vld [vmem:[%s3 + $0x68] sm:$0xff]
  %v3774 = vld [vmem:[%s3 + $0x70] sm:$0xff]
  %v3775 = vld [vmem:[%s3 + $0x78] sm:$0xff]
  %v3776 = vld [vmem:[%s3 + $0x80] sm:$0xff]
  %v3777 = vld [vmem:[%s3 + $0x88] sm:$0xff]
  %v3778 = vld [vmem:[%s3 + $0x90] sm:$0xff]
  %v3779 = vld [vmem:[%s3 + $0x98] sm:$0xff]
  %v3780 = vld [vmem:[%s3 + $0xa0] sm:$0xff]
  %v3781 = vld [vmem:[%s3 + $0xa8] sm:$0xff]
  %v3782 = vld [vmem:[%s3 + $0xb0] sm:$0xff]
  %v3783 = vld [vmem:[%s3 + $0xb8] sm:$0xff]
  %v3784 = vld [vmem:[%s3 + $0xc0] sm:$0xff]
  %v3785 = vld [vmem:[%s3 + $0xc8] sm:$0xff]
  %v3786 = vld [vmem:[%s3 + $0xd0] sm:$0xff]
  %v3787 = vld [vmem:[%s3 + $0xd8] sm:$0xff]
  %v3788 = vld [vmem:[%s3 + $0xe0] sm:$0xff]
  %v3789 = vld [vmem:[%s3 + $0xe8] sm:$0xff]
  %v3790 = vld [vmem:[%s3 + $0xf0] sm:$0xff]
  %v3791 = vld [vmem:[%s3 + $0xf8] sm:$0xff]
  %v3792 = vld [vmem:[%s3 + $0x100] sm:$0xff]
  %v3793 = vld [vmem:[%s3 + $0x108] sm:$0xff]
  %v3794 = vld [vmem:[%s3 + $0x110] sm:$0xff]
  %v3795 = vld [vmem:[%s3 + $0x118] sm:$0xff]
  %v3796 = vld [vmem:[%s3 + $0x120] sm:$0xff]
  %v3797 = vld [vmem:[%s3 + $0x128] sm:$0xff]
  %v3798 = vld [vmem:[%s3 + $0x130] sm:$0xff]
  %v3799 = vld [vmem:[%s3 + $0x138] sm:$0xff]
  %v3800 = vld [vmem:[%s3 + $0x140] sm:$0xff]
  %v3801 = vld [vmem:[%s3 + $0x148] sm:$0xff]
  %v3802 = vld [vmem:[%s3 + $0x150] sm:$0xff]
  %v3803 = vld [vmem:[%s3 + $0x158] sm:$0xff]
  %v3804 = vld [vmem:[%s3 + $0x160] sm:$0xff]
  %v3805 = vld [vmem:[%s3 + $0x168] sm:$0xff]
  %v3806 = vld [vmem:[%s3 + $0x170] sm:$0xff]
  %v3807 = vld [vmem:[%s3 + $0x178] sm:$0xff]
  %v3808 = vld [vmem:[%s3 + $0x180] sm:$0xff]
  %v3809 = vld [vmem:[%s3 + $0x188] sm:$0xff]
  %v3810 = vld [vmem:[%s3 + $0x190] sm:$0xff]
  %v3811 = vld [vmem:[%s3 + $0x198] sm:$0xff]
  %v3812 = vld [vmem:[%s3 + $0x1a0] sm:$0xff]
  %v3813 = vld [vmem:[%s3 + $0x1a8] sm:$0xff]
  %v3814 = vld [vmem:[%s3 + $0x1b0] sm:$0xff]
  %v3815 = vld [vmem:[%s3 + $0x1b8] sm:$0xff]
  %v3816 = vld [vmem:[%s3 + $0x1c0] sm:$0xff]
  %v3817 = vld [vmem:[%s3 + $0x1c8] sm:$0xff]
  %v3818 = vld [vmem:[%s3 + $0x1d0] sm:$0xff]
  %v3819 = vld [vmem:[%s3 + $0x1d8] sm:$0xff]
  %v3820 = vld [vmem:[%s3 + $0x1e0] sm:$0xff]
  %v3821 = vld [vmem:[%s3 + $0x1e8] sm:$0xff]
  %v3822 = vld [vmem:[%s3 + $0x1f0] sm:$0xff]
  %v3823 = vld [vmem:[%s3 + $0x1f8] sm:$0xff]
  %3824 = vmatprep.subr.mxu0 %v3761
  %3825 = vmatpush1.msra.mxu0 %v3760
  %3826 = vmatprep.subr.mxu0 %v3765
  %3827 = vmatpush1.msra.mxu0 %v3764
  %3828 = vmatprep.subr.mxu0 %v3769
  %3829 = vmatpush1.msra.mxu0 %v3768
  %3830 = vmatprep.subr.mxu0 %v3773
  %3831 = vmatpush1.msra.mxu0 %v3772
  %3832 = vmatprep.subr.mxu0 %v3777
  %3833 = vmatpush1.msra.mxu0 %v3776
  %3834 = vmatprep.subr.mxu0 %v3781
  %3835 = vmatpush1.msra.mxu0 %v3780
  %3836 = vmatprep.subr.mxu0 %v3785
  %3837 = vmatpush1.msra.mxu0 %v3784
  %3838 = vmatprep.subr.mxu0 %v3789
  %3839 = vmatpush1.msra.mxu0 %v3788
  %3840 = vmatprep.subr.mxu0 %v3793
  %3841 = vmatpush1.msra.mxu0 %v3792
  %3842 = vmatprep.subr.mxu0 %v3797
  %3843 = vmatpush1.msra.mxu0 %v3796
  %3844 = vmatprep.subr.mxu0 %v3801
  %3845 = vmatpush1.msra.mxu0 %v3800
  %3846 = vmatprep.subr.mxu0 %v3805
  %3847 = vmatpush1.msra.mxu0 %v3804
  %3848 = vmatprep.subr.mxu0 %v3809
  %3849 = vmatpush1.msra.mxu0 %v3808
  %3850 = vmatprep.subr.mxu0 %v3813
  %3851 = vmatpush1.msra.mxu0 %v3812
  %3852 = vmatprep.subr.mxu0 %v3817
  %3853 = vmatpush1.msra.mxu0 %v3816
  %3854 = vmatprep.subr.mxu0 %v3821
  %3855 = vmatpush1.msra.mxu0 %v3820
  %3856 = vmatprep.subr.mxu0 0.0
  %3857 = vmatpush1.msra.mxu0 0.0
  %3858 = vmatprep.subr.mxu0 0.0
  %3859 = vmatpush1.msra.mxu0 0.0
  %3860 = vmatprep.subr.mxu0 0.0
  %3861 = vmatpush1.msra.mxu0 0.0
  %3862 = vmatprep.subr.mxu0 0.0
  %3863 = vmatpush1.msra.mxu0 0.0
  %3864 = vmatprep.subr.mxu0 0.0
  %3865 = vmatpush1.msra.mxu0 0.0
  %3866 = vmatprep.subr.mxu0 0.0
  %3867 = vmatpush1.msra.mxu0 0.0
  %3868 = vmatprep.subr.mxu0 0.0
  %3869 = vmatpush1.msra.mxu0 0.0
  %3870 = vmatprep.subr.mxu0 0.0
  %3871 = vmatpush1.msra.mxu0 0.0
  %3872 = vmatprep.subr.mxu0 0.0
  %3873 = vmatpush1.msra.mxu0 0.0
  %3874 = vmatprep.subr.mxu0 0.0
  %3875 = vmatpush1.msra.mxu0 0.0
  %3876 = vmatprep.subr.mxu0 0.0
  %3877 = vmatpush1.msra.mxu0 0.0
  %3878 = vmatprep.subr.mxu0 0.0
  %3879 = vmatpush1.msra.mxu0 0.0
  %3880 = vmatprep.subr.mxu0 0.0
  %3881 = vmatpush1.msra.mxu0 0.0
  %3882 = vmatprep.subr.mxu0 0.0
  %3883 = vmatpush1.msra.mxu0 0.0
  %3884 = vmatprep.subr.mxu0 0.0
  %3885 = vmatpush1.msra.mxu0 0.0
  %3886 = vmatprep.subr.mxu0 0.0
  %3887 = vmatpush1.msra.mxu0 0.0
  %3888 = vmatprep.mubr.f32.mxu0 0.0
  %3889 = vmatmul.mubr.f32.gmra.mrb[0].mxu0 %v3539
  %v3890 = vpop.f32.mrb[0].mxu0
  %v3891 = vadd.f32 0.0, %v3890
  %v3892 = vpop.f32.mrb[0].mxu0
  %v3893 = vadd.f32 0.0, %v3892
  %3894 = vdwg.mxu0
  %3895 = vmatprep.subr.mxu0 %v3763
  %3896 = vmatpush1.msra.mxu0 %v3762
  %3897 = vmatprep.subr.mxu0 %v3767
  %3898 = vmatpush1.msra.mxu0 %v3766
  %3899 = vmatprep.subr.mxu0 %v3771
  %3900 = vmatpush1.msra.mxu0 %v3770
  %3901 = vmatprep.subr.mxu0 %v3775
  %3902 = vmatpush1.msra.mxu0 %v3774
  %3903 = vmatprep.subr.mxu0 %v3779
  %3904 = vmatpush1.msra.mxu0 %v3778
  %3905 = vmatprep.subr.mxu0 %v3783
  %3906 = vmatpush1.msra.mxu0 %v3782
  %3907 = vmatprep.subr.mxu0 %v3787
  %3908 = vmatpush1.msra.mxu0 %v3786
  %3909 = vmatprep.subr.mxu0 %v3791
  %3910 = vmatpush1.msra.mxu0 %v3790
  %3911 = vmatprep.subr.mxu0 %v3795
  %3912 = vmatpush1.msra.mxu0 %v3794
  %3913 = vmatprep.subr.mxu0 %v3799
  %3914 = vmatpush1.msra.mxu0 %v3798
  %3915 = vmatprep.subr.mxu0 %v3803
  %3916 = vmatpush1.msra.mxu0 %v3802
  %3917 = vmatprep.subr.mxu0 %v3807
  %3918 = vmatpush1.msra.mxu0 %v3806
  %3919 = vmatprep.subr.mxu0 %v3811
  %3920 = vmatpush1.msra.mxu0 %v3810
  %3921 = vmatprep.subr.mxu0 %v3815
  %3922 = vmatpush1.msra.mxu0 %v3814
  %3923 = vmatprep.subr.mxu0 %v3819
  %3924 = vmatpush1.msra.mxu0 %v3818
  %3925 = vmatprep.subr.mxu0 %v3823
  %3926 = vmatpush1.msra.mxu0 %v3822
  %3927 = vmatprep.subr.mxu0 0.0
  %3928 = vmatpush1.msra.mxu0 0.0
  %3929 = vmatprep.subr.mxu0 0.0
  %3930 = vmatpush1.msra.mxu0 0.0
  %3931 = vmatprep.subr.mxu0 0.0
  %3932 = vmatpush1.msra.mxu0 0.0
  %3933 = vmatprep.subr.mxu0 0.0
  %3934 = vmatpush1.msra.mxu0 0.0
  %3935 = vmatprep.subr.mxu0 0.0
  %3936 = vmatpush1.msra.mxu0 0.0
  %3937 = vmatprep.subr.mxu0 0.0
  %3938 = vmatpush1.msra.mxu0 0.0
  %3939 = vmatprep.subr.mxu0 0.0
  %3940 = vmatpush1.msra.mxu0 0.0
  %3941 = vmatprep.subr.mxu0 0.0
  %3942 = vmatpush1.msra.mxu0 0.0
  %3943 = vmatprep.subr.mxu0 0.0
  %3944 = vmatpush1.msra.mxu0 0.0
  %3945 = vmatprep.subr.mxu0 0.0
  %3946 = vmatpush1.msra.mxu0 0.0
  %3947 = vmatprep.subr.mxu0 0.0
  %3948 = vmatpush1.msra.mxu0 0.0
  %3949 = vmatprep.subr.mxu0 0.0
  %3950 = vmatpush1.msra.mxu0 0.0
  %3951 = vmatprep.subr.mxu0 0.0
  %3952 = vmatpush1.msra.mxu0 0.0
  %3953 = vmatprep.subr.mxu0 0.0
  %3954 = vmatpush1.msra.mxu0 0.0
  %3955 = vmatprep.subr.mxu0 0.0
  %3956 = vmatpush1.msra.mxu0 0.0
  %3957 = vmatprep.subr.mxu0 0.0
  %3958 = vmatpush1.msra.mxu0 0.0
  %3959 = vmatprep.mubr.f32.mxu0 0.0
  %3960 = vmatmul.mubr.f32.gmra.mrb[0].mxu0 %v3539
  %v3961 = vpop.f32.mrb[0].mxu0
  %v3962 = vadd.f32 0.0, %v3961
  %v3963 = vpop.f32.mrb[0].mxu0
  %v3964 = vadd.f32 0.0, %v3963
  %3965 = vdwg.mxu0
  %v3966 = vadd.f32 %v3756, %v3891
  %v3967 = vadd.f32 %v3757, %v3893
  %v3968 = vadd.f32 %v3758, %v3962
  %v3969 = vadd.f32 %v3759, %v3964
  %v3970 = vxor.u32 %v3752, 2147483648
  %v3971 = vxor.u32 %v3753, 2147483648
  %v3972 = vxor.u32 %v3754, 2147483648
  %v3973 = vmul.f32 %v3970, 1.442695
  %v3974 = vpow.pop %v3973
  %v3975 = vmul.f32 %v3971, 1.442695
  %v3976 = vpow.pop %v3975
  %v3977 = vmul.f32 %v3972, 1.442695
  %v3978 = vpow.pop %v3977
  %v3979 = vadd.f32 %v3974, 1.0
  %v3980 = vadd.f32 %v3976, 1.0
  %v3981 = vadd.f32 %v3978, 1.0
  %v3982 = vrcp.pop %v3979
  %v3983 = vmul.f32 1.0, %v3982
  %v3984 = vrcp.pop %v3980
  %v3985 = vmul.f32 1.0, %v3984
  %v3986 = vrcp.pop %v3981
  %v3987 = vmul.f32 1.0, %v3986
  %v3988 = vtanh.pop %v3755
  %v3989 = vmul.f32 %v3985, %v3513
  %v3990 = vmul.f32 %v3983, %v3988
  %v3991 = vadd.f32 %v3989, %v3990
  %v3992 = vtanh.pop %v3991
  %v3993 = vmul.f32 %v3987, %v3992
  %v3994 = vxor.u32 %v3966, 2147483648
  %v3995 = vxor.u32 %v3967, 2147483648
  %v3996 = vxor.u32 %v3968, 2147483648
  %v3997 = vmul.f32 %v3994, 1.442695
  %v3998 = vpow.pop %v3997
  %v3999 = vmul.f32 %v3995, 1.442695
  %v4000 = vpow.pop %v3999
  %v4001 = vmul.f32 %v3996, 1.442695
  %v4002 = vpow.pop %v4001
  %v4003 = vadd.f32 %v3998, 1.0
  %v4004 = vadd.f32 %v4000, 1.0
  %v4005 = vadd.f32 %v4002, 1.0
  %v4006 = vrcp.pop %v4003
  %v4007 = vmul.f32 1.0, %v4006
  %v4008 = vrcp.pop %v4004
  %v4009 = vmul.f32 1.0, %v4008
  %v4010 = vrcp.pop %v4005
  %v4011 = vmul.f32 1.0, %v4010
  %v4012 = vtanh.pop %v3969
  %v4013 = vmul.f32 %v4009, %v3537
  %v4014 = vmul.f32 %v4007, %v4012
  %v4015 = vadd.f32 %v4013, %v4014
  %v4016 = vtanh.pop %v4015
  %v4017 = vmul.f32 %v4011, %v4016
  %4018 = vst [vmem:[#allocation3 + $0x70] sm:$0xff] %v3993
  %4019 = vst [vmem:[#allocation3 + $0x8] sm:$0xff] %v4017
  %v4020 = vld [vmem:[#allocation3] sm:$0xff]
  %v4021 = vld [vmem:[#allocation3 + $0x8] sm:$0xff]
  %v4022 = vld [vmem:[#allocation3 + $0x10] sm:$0xff]
  %v4023 = vld [vmem:[#allocation3 + $0x18] sm:$0xff]
  %v4024 = vld [vmem:[#allocation3 + $0x20] sm:$0xff]
  %v4025 = vld [vmem:[#allocation3 + $0x28] sm:$0xff]
  %v4026 = vld [vmem:[#allocation3 + $0x30] sm:$0xff]
  %v4027 = vld [vmem:[#allocation3 + $0x38] sm:$0xff]
  %v4028 = vld [vmem:[#allocation3 + $0x40] sm:$0xff]
  %v4029 = vld [vmem:[#allocation3 + $0x48] sm:$0xff]
  %v4030 = vld [vmem:[#allocation3 + $0x50] sm:$0xff]
  %v4031 = vld [vmem:[#allocation3 + $0x58] sm:$0xff]
  %v4032 = vld [vmem:[#allocation3 + $0x60] sm:$0xff]
  %v4033 = vld [vmem:[#allocation3 + $0x68] sm:$0xff]
  %v4034 = vld [vmem:[#allocation3 + $0x70] sm:$0xff]
  %v4035 = vld [vmem:[#allocation3 + $0x78] sm:$0xff]
  %v4036 = vld [vmem:[%s5] sm:$0xff]
  %v4037 = vld [vmem:[%s5 + $0x8] sm:$0xff]
  %v4038 = vld [vmem:[%s5 + $0x10] sm:$0xff]
  %v4039 = vld [vmem:[%s5 + $0x18] sm:$0xff]
  %v4040 = vld [vmem:[%s5 + $0x20] sm:$0xff]
  %v4041 = vld [vmem:[%s5 + $0x28] sm:$0xff]
  %v4042 = vld [vmem:[%s5 + $0x30] sm:$0xff]
  %v4043 = vld [vmem:[%s5 + $0x38] sm:$0xff]
  %v4044 = vld [vmem:[%s5 + $0x40] sm:$0xff]
  %v4045 = vld [vmem:[%s5 + $0x48] sm:$0xff]
  %v4046 = vld [vmem:[%s5 + $0x50] sm:$0xff]
  %v4047 = vld [vmem:[%s5 + $0x58] sm:$0xff]
  %v4048 = vld [vmem:[%s5 + $0x60] sm:$0xff]
  %v4049 = vld [vmem:[%s5 + $0x68] sm:$0xff]
  %v4050 = vld [vmem:[%s5 + $0x70] sm:$0xff]
  %v4051 = vld [vmem:[%s5 + $0x78] sm:$0xff]
  %v4052 = vld [vmem:[%s5 + $0x80] sm:$0xff]
  %v4053 = vld [vmem:[%s5 + $0x88] sm:$0xff]
  %v4054 = vld [vmem:[%s5 + $0x90] sm:$0xff]
  %v4055 = vld [vmem:[%s5 + $0x98] sm:$0xff]
  %v4056 = vld [vmem:[%s5 + $0xa0] sm:$0xff]
  %v4057 = vld [vmem:[%s5 + $0xa8] sm:$0xff]
  %v4058 = vld [vmem:[%s5 + $0xb0] sm:$0xff]
  %v4059 = vld [vmem:[%s5 + $0xb8] sm:$0xff]
  %v4060 = vld [vmem:[%s5 + $0xc0] sm:$0xff]
  %v4061 = vld [vmem:[%s5 + $0xc8] sm:$0xff]
  %v4062 = vld [vmem:[%s5 + $0xd0] sm:$0xff]
  %v4063 = vld [vmem:[%s5 + $0xd8] sm:$0xff]
  %v4064 = vld [vmem:[%s5 + $0xe0] sm:$0xff]
  %v4065 = vld [vmem:[%s5 + $0xe8] sm:$0xff]
  %v4066 = vld [vmem:[%s5 + $0xf0] sm:$0xff]
  %v4067 = vld [vmem:[%s5 + $0xf8] sm:$0xff]
  %v4068 = vld [vmem:[%s5 + $0x100] sm:$0xff]
  %v4069 = vld [vmem:[%s5 + $0x108] sm:$0xff]
  %v4070 = vld [vmem:[%s5 + $0x110] sm:$0xff]
  %v4071 = vld [vmem:[%s5 + $0x118] sm:$0xff]
  %v4072 = vld [vmem:[%s5 + $0x120] sm:$0xff]
  %v4073 = vld [vmem:[%s5 + $0x128] sm:$0xff]
  %v4074 = vld [vmem:[%s5 + $0x130] sm:$0xff]
  %v4075 = vld [vmem:[%s5 + $0x138] sm:$0xff]
  %v4076 = vld [vmem:[%s5 + $0x140] sm:$0xff]
  %v4077 = vld [vmem:[%s5 + $0x148] sm:$0xff]
  %v4078 = vld [vmem:[%s5 + $0x150] sm:$0xff]
  %v4079 = vld [vmem:[%s5 + $0x158] sm:$0xff]
  %v4080 = vld [vmem:[%s5 + $0x160] sm:$0xff]
  %v4081 = vld [vmem:[%s5 + $0x168] sm:$0xff]
  %v4082 = vld [vmem:[%s5 + $0x170] sm:$0xff]
  %v4083 = vld [vmem:[%s5 + $0x178] sm:$0xff]
  %v4084 = vld [vmem:[%s5 + $0x180] sm:$0xff]
  %v4085 = vld [vmem:[%s5 + $0x188] sm:$0xff]
  %v4086 = vld [vmem:[%s5 + $0x190] sm:$0xff]
  %v4087 = vld [vmem:[%s5 + $0x198] sm:$0xff]
  %v4088 = vld [vmem:[%s5 + $0x1a0] sm:$0xff]
  %v4089 = vld [vmem:[%s5 + $0x1a8] sm:$0xff]
  %v4090 = vld [vmem:[%s5 + $0x1b0] sm:$0xff]
  %v4091 = vld [vmem:[%s5 + $0x1b8] sm:$0xff]
  %v4092 = vld [vmem:[%s5 + $0x1c0] sm:$0xff]
  %v4093 = vld [vmem:[%s5 + $0x1c8] sm:$0xff]
  %v4094 = vld [vmem:[%s5 + $0x1d0] sm:$0xff]
  %v4095 = vld [vmem:[%s5 + $0x1d8] sm:$0xff]
  %v4096 = vld [vmem:[%s5 + $0x1e0] sm:$0xff]
  %v4097 = vld [vmem:[%s5 + $0x1e8] sm:$0xff]
  %v4098 = vld [vmem:[%s5 + $0x1f0] sm:$0xff]
  %v4099 = vld [vmem:[%s5 + $0x1f8] sm:$0xff]
  %v4100 = vld [vmem:[%s5 + $0x200] sm:$0xff]
  %v4101 = vld [vmem:[%s5 + $0x208] sm:$0xff]
  %v4102 = vld [vmem:[%s5 + $0x210] sm:$0xff]
  %v4103 = vld [vmem:[%s5 + $0x218] sm:$0xff]
  %v4104 = vld [vmem:[%s5 + $0x220] sm:$0xff]
  %v4105 = vld [vmem:[%s5 + $0x228] sm:$0xff]
  %v4106 = vld [vmem:[%s5 + $0x230] sm:$0xff]
  %v4107 = vld [vmem:[%s5 + $0x238] sm:$0xff]
  %v4108 = vld [vmem:[%s5 + $0x240] sm:$0xff]
  %v4109 = vld [vmem:[%s5 + $0x248] sm:$0xff]
  %v4110 = vld [vmem:[%s5 + $0x250] sm:$0xff]
  %v4111 = vld [vmem:[%s5 + $0x258] sm:$0xff]
  %v4112 = vld [vmem:[%s5 + $0x260] sm:$0xff]
  %v4113 = vld [vmem:[%s5 + $0x268] sm:$0xff]
  %v4114 = vld [vmem:[%s5 + $0x270] sm:$0xff]
  %v4115 = vld [vmem:[%s5 + $0x278] sm:$0xff]
  %v4116 = vld [vmem:[%s5 + $0x280] sm:$0xff]
  %v4117 = vld [vmem:[%s5 + $0x288] sm:$0xff]
  %v4118 = vld [vmem:[%s5 + $0x290] sm:$0xff]
  %v4119 = vld [vmem:[%s5 + $0x298] sm:$0xff]
  %v4120 = vld [vmem:[%s5 + $0x2a0] sm:$0xff]
  %v4121 = vld [vmem:[%s5 + $0x2a8] sm:$0xff]
  %v4122 = vld [vmem:[%s5 + $0x2b0] sm:$0xff]
  %v4123 = vld [vmem:[%s5 + $0x2b8] sm:$0xff]
  %v4124 = vld [vmem:[%s5 + $0x2c0] sm:$0xff]
  %v4125 = vld [vmem:[%s5 + $0x2c8] sm:$0xff]
  %v4126 = vld [vmem:[%s5 + $0x2d0] sm:$0xff]
  %v4127 = vld [vmem:[%s5 + $0x2d8] sm:$0xff]
  %v4128 = vld [vmem:[%s5 + $0x2e0] sm:$0xff]
  %v4129 = vld [vmem:[%s5 + $0x2e8] sm:$0xff]
  %v4130 = vld [vmem:[%s5 + $0x2f0] sm:$0xff]
  %v4131 = vld [vmem:[%s5 + $0x2f8] sm:$0xff]
  %v4132 = vld [vmem:[%s5 + $0x300] sm:$0xff]
  %v4133 = vld [vmem:[%s5 + $0x308] sm:$0xff]
  %v4134 = vld [vmem:[%s5 + $0x310] sm:$0xff]
  %v4135 = vld [vmem:[%s5 + $0x318] sm:$0xff]
  %v4136 = vld [vmem:[%s5 + $0x320] sm:$0xff]
  %v4137 = vld [vmem:[%s5 + $0x328] sm:$0xff]
  %v4138 = vld [vmem:[%s5 + $0x330] sm:$0xff]
  %v4139 = vld [vmem:[%s5 + $0x338] sm:$0xff]
  %v4140 = vld [vmem:[%s5 + $0x340] sm:$0xff]
  %v4141 = vld [vmem:[%s5 + $0x348] sm:$0xff]
  %v4142 = vld [vmem:[%s5 + $0x350] sm:$0xff]
  %v4143 = vld [vmem:[%s5 + $0x358] sm:$0xff]
  %v4144 = vld [vmem:[%s5 + $0x360] sm:$0xff]
  %v4145 = vld [vmem:[%s5 + $0x368] sm:$0xff]
  %v4146 = vld [vmem:[%s5 + $0x370] sm:$0xff]
  %v4147 = vld [vmem:[%s5 + $0x378] sm:$0xff]
  %v4148 = vld [vmem:[%s5 + $0x380] sm:$0xff]
  %v4149 = vld [vmem:[%s5 + $0x388] sm:$0xff]
  %v4150 = vld [vmem:[%s5 + $0x390] sm:$0xff]
  %v4151 = vld [vmem:[%s5 + $0x398] sm:$0xff]
  %v4152 = vld [vmem:[%s5 + $0x3a0] sm:$0xff]
  %v4153 = vld [vmem:[%s5 + $0x3a8] sm:$0xff]
  %v4154 = vld [vmem:[%s5 + $0x3b0] sm:$0xff]
  %v4155 = vld [vmem:[%s5 + $0x3b8] sm:$0xff]
  %v4156 = vld [vmem:[%s5 + $0x3c0] sm:$0xff]
  %v4157 = vld [vmem:[%s5 + $0x3c8] sm:$0xff]
  %v4158 = vld [vmem:[%s5 + $0x3d0] sm:$0xff]
  %v4159 = vld [vmem:[%s5 + $0x3d8] sm:$0xff]
  %v4160 = vld [vmem:[%s5 + $0x3e0] sm:$0xff]
  %v4161 = vld [vmem:[%s5 + $0x3e8] sm:$0xff]
  %v4162 = vld [vmem:[%s5 + $0x3f0] sm:$0xff]
  %v4163 = vld [vmem:[%s5 + $0x3f8] sm:$0xff]
  %v4164 = vld [vmem:[%s8] sm:$0xf]
  %v4166 = vlaneseq
  %v4167 = vshrl.u32 %v4166, 7
  %v4168 = vsub.s32 0, %v4167
  %v4169 = vrot.slane %v4164, %v4168
  %v4170 = vlaneseq
  %v4171 = vshrl.u32 %v4170, 7
  %v4172 = vsub.s32 1, %v4171
  %v4173 = vrot.slane %v4164, %v4172
  %v4174 = vlaneseq
  %v4175 = vshrl.u32 %v4174, 7
  %v4176 = vsub.s32 2, %v4175
  %v4177 = vrot.slane %v4164, %v4176
  %v4178 = vlaneseq
  %v4179 = vshrl.u32 %v4178, 7
  %v4180 = vsub.s32 3, %v4179
  %v4181 = vrot.slane %v4164, %v4180
  %4186 = vmatprep.subr.mxu0 %v4037
  %4187 = vmatpush1.msra.mxu0 %v4036
  %4188 = vmatprep.subr.mxu0 %v4041
  %4189 = vmatpush1.msra.mxu0 %v4040
  %4190 = vmatprep.subr.mxu0 %v4045
  %4191 = vmatpush1.msra.mxu0 %v4044
  %4192 = vmatprep.subr.mxu0 %v4049
  %4193 = vmatpush1.msra.mxu0 %v4048
  %4194 = vmatprep.subr.mxu0 %v4053
  %4195 = vmatpush1.msra.mxu0 %v4052
  %4196 = vmatprep.subr.mxu0 %v4057
  %4197 = vmatpush1.msra.mxu0 %v4056
  %4198 = vmatprep.subr.mxu0 %v4061
  %4199 = vmatpush1.msra.mxu0 %v4060
  %4200 = vmatprep.subr.mxu0 %v4065
  %4201 = vmatpush1.msra.mxu0 %v4064
  %4202 = vmatprep.subr.mxu0 %v4069
  %4203 = vmatpush1.msra.mxu0 %v4068
  %4204 = vmatprep.subr.mxu0 %v4073
  %4205 = vmatpush1.msra.mxu0 %v4072
  %4206 = vmatprep.subr.mxu0 %v4077
  %4207 = vmatpush1.msra.mxu0 %v4076
  %4208 = vmatprep.subr.mxu0 %v4081
  %4209 = vmatpush1.msra.mxu0 %v4080
  %4210 = vmatprep.subr.mxu0 %v4085
  %4211 = vmatpush1.msra.mxu0 %v4084
  %4212 = vmatprep.subr.mxu0 %v4089
  %4213 = vmatpush1.msra.mxu0 %v4088
  %4214 = vmatprep.subr.mxu0 %v4093
  %4215 = vmatpush1.msra.mxu0 %v4092
  %4216 = vmatprep.subr.mxu0 %v4097
  %4217 = vmatpush1.msra.mxu0 %v4096
  %4218 = vmatprep.subr.mxu0 %v4101
  %4219 = vmatpush1.msra.mxu0 %v4100
  %4220 = vmatprep.subr.mxu0 %v4105
  %4221 = vmatpush1.msra.mxu0 %v4104
  %4222 = vmatprep.subr.mxu0 %v4109
  %4223 = vmatpush1.msra.mxu0 %v4108
  %4224 = vmatprep.subr.mxu0 %v4113
  %4225 = vmatpush1.msra.mxu0 %v4112
  %4226 = vmatprep.subr.mxu0 %v4117
  %4227 = vmatpush1.msra.mxu0 %v4116
  %4228 = vmatprep.subr.mxu0 %v4121
  %4229 = vmatpush1.msra.mxu0 %v4120
  %4230 = vmatprep.subr.mxu0 %v4125
  %4231 = vmatpush1.msra.mxu0 %v4124
  %4232 = vmatprep.subr.mxu0 %v4129
  %4233 = vmatpush1.msra.mxu0 %v4128
  %4234 = vmatprep.subr.mxu0 %v4133
  %4235 = vmatpush1.msra.mxu0 %v4132
  %4236 = vmatprep.subr.mxu0 %v4137
  %4237 = vmatpush1.msra.mxu0 %v4136
  %4238 = vmatprep.subr.mxu0 %v4141
  %4239 = vmatpush1.msra.mxu0 %v4140
  %4240 = vmatprep.subr.mxu0 %v4145
  %4241 = vmatpush1.msra.mxu0 %v4144
  %4242 = vmatprep.subr.mxu0 %v4149
  %4243 = vmatpush1.msra.mxu0 %v4148
  %4244 = vmatprep.subr.mxu0 %v4153
  %4245 = vmatpush1.msra.mxu0 %v4152
  %4246 = vmatprep.subr.mxu0 %v4157
  %4247 = vmatpush1.msra.mxu0 %v4156
  %4248 = vmatprep.subr.mxu0 %v4161
  %4249 = vmatpush1.msra.mxu0 %v4160
  %4250 = vmatprep.mubr.f32.mxu0 %v4021
  %4251 = vmatmul.mubr.f32.gmra.mrb[0].mxu0 %v4020
  %v4252 = vpop.f32.mrb[0].mxu0
  %v4253 = vadd.f32 %v4169, %v4252
  %v4254 = vpop.f32.mrb[0].mxu0
  %v4255 = vadd.f32 %v4173, %v4254
  %4256 = vmatprep.mubr.f32.mxu0 %v4023
  %4257 = vmatmul.mubr.f32.gmra.mrb[0].mxu0 %v4022
  %v4258 = vpop.f32.mrb[0].mxu0
  %v4259 = vadd.f32 %v4169, %v4258
  %v4260 = vpop.f32.mrb[0].mxu0
  %v4261 = vadd.f32 %v4173, %v4260
  %4262 = vmatprep.mubr.f32.mxu0 %v4025
  %4263 = vmatmul.mubr.f32.gmra.mrb[0].mxu0 %v4024
  %v4264 = vpop.f32.mrb[0].mxu0
  %v4265 = vadd.f32 %v4169, %v4264
  %v4266 = vpop.f32.mrb[0].mxu0
  %v4267 = vadd.f32 %v4173, %v4266
  %4268 = vmatprep.mubr.f32.mxu0 %v4027
  %4269 = vmatmul.mubr.f32.gmra.mrb[0].mxu0 %v4026
  %v4270 = vpop.f32.mrb[0].mxu0
  %v4271 = vadd.f32 %v4169, %v4270
  %v4272 = vpop.f32.mrb[0].mxu0
  %v4273 = vadd.f32 %v4173, %v4272
  %4274 = vmatprep.mubr.f32.mxu0 %v4029
  %4275 = vmatmul.mubr.f32.gmra.mrb[0].mxu0 %v4028
  %v4276 = vpop.f32.mrb[0].mxu0
  %v4277 = vadd.f32 %v4169, %v4276
  %v4278 = vpop.f32.mrb[0].mxu0
  %v4279 = vadd.f32 %v4173, %v4278
  %4280 = vmatprep.mubr.f32.mxu0 %v4031
  %4281 = vmatmul.mubr.f32.gmra.mrb[0].mxu0 %v4030
  %v4282 = vpop.f32.mrb[0].mxu0
  %v4283 = vadd.f32 %v4169, %v4282
  %v4284 = vpop.f32.mrb[0].mxu0
  %v4285 = vadd.f32 %v4173, %v4284
  %4286 = vmatprep.mubr.f32.mxu0 %v4033
  %4287 = vmatmul.mubr.f32.gmra.mrb[0].mxu0 %v4032
  %v4288 = vpop.f32.mrb[0].mxu0
  %v4289 = vadd.f32 %v4169, %v4288
  %v4290 = vpop.f32.mrb[0].mxu0
  %v4291 = vadd.f32 %v4173, %v4290
  %4292 = vmatprep.mubr.f32.mxu0 %v4035
  %4293 = vmatmul.mubr.f32.gmra.mrb[0].mxu0 %v4034
  %v4294 = vpop.f32.mrb[0].mxu0
  %v4295 = vadd.f32 %v4169, %v4294
  %v4296 = vpop.f32.mrb[0].mxu0
  %v4297 = vadd.f32 %v4173, %v4296
  %4298 = vdwg.mxu0
  %4299 = vmatprep.subr.mxu0 %v4039
  %4300 = vmatpush1.msra.mxu0 %v4038
  %4301 = vmatprep.subr.mxu0 %v4043
  %4302 = vmatpush1.msra.mxu0 %v4042
  %4303 = vmatprep.subr.mxu0 %v4047
  %4304 = vmatpush1.msra.mxu0 %v4046
  %4305 = vmatprep.subr.mxu0 %v4051
  %4306 = vmatpush1.msra.mxu0 %v4050
  %4307 = vmatprep.subr.mxu0 %v4055
  %4308 = vmatpush1.msra.mxu0 %v4054
  %4309 = vmatprep.subr.mxu0 %v4059
  %4310 = vmatpush1.msra.mxu0 %v4058
  %4311 = vmatprep.subr.mxu0 %v4063
  %4312 = vmatpush1.msra.mxu0 %v4062
  %4313 = vmatprep.subr.mxu0 %v4067
  %4314 = vmatpush1.msra.mxu0 %v4066
  %4315 = vmatprep.subr.mxu0 %v4071
  %4316 = vmatpush1.msra.mxu0 %v4070
  %4317 = vmatprep.subr.mxu0 %v4075
  %4318 = vmatpush1.msra.mxu0 %v4074
  %4319 = vmatprep.subr.mxu0 %v4079
  %4320 = vmatpush1.msra.mxu0 %v4078
  %4321 = vmatprep.subr.mxu0 %v4083
  %4322 = vmatpush1.msra.mxu0 %v4082
  %4323 = vmatprep.subr.mxu0 %v4087
  %4324 = vmatpush1.msra.mxu0 %v4086
  %4325 = vmatprep.subr.mxu0 %v4091
  %4326 = vmatpush1.msra.mxu0 %v4090
  %4327 = vmatprep.subr.mxu0 %v4095
  %4328 = vmatpush1.msra.mxu0 %v4094
  %4329 = vmatprep.subr.mxu0 %v4099
  %4330 = vmatpush1.msra.mxu0 %v4098
  %4331 = vmatprep.subr.mxu0 %v4103
  %4332 = vmatpush1.msra.mxu0 %v4102
  %4333 = vmatprep.subr.mxu0 %v4107
  %4334 = vmatpush1.msra.mxu0 %v4106
  %4335 = vmatprep.subr.mxu0 %v4111
  %4336 = vmatpush1.msra.mxu0 %v4110
  %4337 = vmatprep.subr.mxu0 %v4115
  %4338 = vmatpush1.msra.mxu0 %v4114
  %4339 = vmatprep.subr.mxu0 %v4119
  %4340 = vmatpush1.msra.mxu0 %v4118
  %4341 = vmatprep.subr.mxu0 %v4123
  %4342 = vmatpush1.msra.mxu0 %v4122
  %4343 = vmatprep.subr.mxu0 %v4127
  %4344 = vmatpush1.msra.mxu0 %v4126
  %4345 = vmatprep.subr.mxu0 %v4131
  %4346 = vmatpush1.msra.mxu0 %v4130
  %4347 = vmatprep.subr.mxu0 %v4135
  %4348 = vmatpush1.msra.mxu0 %v4134
  %4349 = vmatprep.subr.mxu0 %v4139
  %4350 = vmatpush1.msra.mxu0 %v4138
  %4351 = vmatprep.subr.mxu0 %v4143
  %4352 = vmatpush1.msra.mxu0 %v4142
  %4353 = vmatprep.subr.mxu0 %v4147
  %4354 = vmatpush1.msra.mxu0 %v4146
  %4355 = vmatprep.subr.mxu0 %v4151
  %4356 = vmatpush1.msra.mxu0 %v4150
  %4357 = vmatprep.subr.mxu0 %v4155
  %4358 = vmatpush1.msra.mxu0 %v4154
  %4359 = vmatprep.subr.mxu0 %v4159
  %4360 = vmatpush1.msra.mxu0 %v4158
  %4361 = vmatprep.subr.mxu0 %v4163
  %4362 = vmatpush1.msra.mxu0 %v4162
  %4363 = vmatprep.mubr.f32.mxu0 %v4021
  %4364 = vmatmul.mubr.f32.gmra.mrb[0].mxu0 %v4020
  %v4365 = vpop.f32.mrb[0].mxu0
  %v4366 = vadd.f32 %v4177, %v4365
  %v4367 = vpop.f32.mrb[0].mxu0
  %v4368 = vadd.f32 %v4181, %v4367
  %4369 = vmatprep.mubr.f32.mxu0 %v4023
  %4370 = vmatmul.mubr.f32.gmra.mrb[0].mxu0 %v4022
  %v4371 = vpop.f32.mrb[0].mxu0
  %v4372 = vadd.f32 %v4177, %v4371
  %v4373 = vpop.f32.mrb[0].mxu0
  %v4374 = vadd.f32 %v4181, %v4373
  %4375 = vmatprep.mubr.f32.mxu0 %v4025
  %4376 = vmatmul.mubr.f32.gmra.mrb[0].mxu0 %v4024
  %v4377 = vpop.f32.mrb[0].mxu0
  %v4378 = vadd.f32 %v4177, %v4377
  %v4379 = vpop.f32.mrb[0].mxu0
  %v4380 = vadd.f32 %v4181, %v4379
  %4381 = vmatprep.mubr.f32.mxu0 %v4027
  %4382 = vmatmul.mubr.f32.gmra.mrb[0].mxu0 %v4026
  %v4383 = vpop.f32.mrb[0].mxu0
  %v4384 = vadd.f32 %v4177, %v4383
  %v4385 = vpop.f32.mrb[0].mxu0
  %v4386 = vadd.f32 %v4181, %v4385
  %4387 = vmatprep.mubr.f32.mxu0 %v4029
  %4388 = vmatmul.mubr.f32.gmra.mrb[0].mxu0 %v4028
  %v4389 = vpop.f32.mrb[0].mxu0
  %v4390 = vadd.f32 %v4177, %v4389
  %v4391 = vpop.f32.mrb[0].mxu0
  %v4392 = vadd.f32 %v4181, %v4391
  %4393 = vmatprep.mubr.f32.mxu0 %v4031
  %4394 = vmatmul.mubr.f32.gmra.mrb[0].mxu0 %v4030
  %v4395 = vpop.f32.mrb[0].mxu0
  %v4396 = vadd.f32 %v4177, %v4395
  %v4397 = vpop.f32.mrb[0].mxu0
  %v4398 = vadd.f32 %v4181, %v4397
  %4399 = vmatprep.mubr.f32.mxu0 %v4033
  %4400 = vmatmul.mubr.f32.gmra.mrb[0].mxu0 %v4032
  %v4401 = vpop.f32.mrb[0].mxu0
  %v4402 = vadd.f32 %v4177, %v4401
  %v4403 = vpop.f32.mrb[0].mxu0
  %v4404 = vadd.f32 %v4181, %v4403
  %4405 = vmatprep.mubr.f32.mxu0 %v4035
  %4406 = vmatmul.mubr.f32.gmra.mrb[0].mxu0 %v4034
  %v4407 = vpop.f32.mrb[0].mxu0
  %v4408 = vadd.f32 %v4177, %v4407
  %v4409 = vpop.f32.mrb[0].mxu0
  %v4410 = vadd.f32 %v4181, %v4409
  %4411 = vdwg.mxu0
  %4412 = vst [vmem:[#allocation4] sm:$0xff] %v4253
  %4413 = vst [vmem:[#allocation4 + $0x8] sm:$0xff] %v4255
  %4414 = vst [vmem:[#allocation4 + $0x10] sm:$0xff] %v4366
  %4415 = vst [vmem:[#allocation4 + $0x18] sm:$0xff] %v4368
  %4416 = vst [vmem:[#allocation4 + $0x20] sm:$0xff] %v4259
  %4417 = vst [vmem:[#allocation4 + $0x28] sm:$0xff] %v4261
  %4418 = vst [vmem:[#allocation4 + $0x30] sm:$0xff] %v4372
  %4419 = vst [vmem:[#allocation4 + $0x38] sm:$0xff] %v4374
  %4420 = vst [vmem:[#allocation4 + $0x40] sm:$0xff] %v4265
  %4421 = vst [vmem:[#allocation4 + $0x48] sm:$0xff] %v4267
  %4422 = vst [vmem:[#allocation4 + $0x50] sm:$0xff] %v4378
  %4423 = vst [vmem:[#allocation4 + $0x58] sm:$0xff] %v4380
  %4424 = vst [vmem:[#allocation4 + $0x60] sm:$0xff] %v4271
  %4425 = vst [vmem:[#allocation4 + $0x68] sm:$0xff] %v4273
  %4426 = vst [vmem:[#allocation4 + $0x70] sm:$0xff] %v4384
  %4427 = vst [vmem:[#allocation4 + $0x78] sm:$0xff] %v4386
  %4428 = vst [vmem:[#allocation4 + $0x80] sm:$0xff] %v4277
  %4429 = vst [vmem:[#allocation4 + $0x88] sm:$0xff] %v4279
  %4430 = vst [vmem:[#allocation4 + $0x90] sm:$0xff] %v4390
  %4431 = vst [vmem:[#allocation4 + $0x98] sm:$0xff] %v4392
  %4432 = vst [vmem:[#allocation4 + $0xa0] sm:$0xff] %v4283
  %4433 = vst [vmem:[#allocation4 + $0xa8] sm:$0xff] %v4285
  %4434 = vst [vmem:[#allocation4 + $0xb0] sm:$0xff] %v4396
  %4435 = vst [vmem:[#allocation4 + $0xb8] sm:$0xff] %v4398
  %4436 = vst [vmem:[#allocation4 + $0xc0] sm:$0xff] %v4289
  %4437 = vst [vmem:[#allocation4 + $0xc8] sm:$0xff] %v4291
  %4438 = vst [vmem:[#allocation4 + $0xd0] sm:$0xff] %v4402
  %4439 = vst [vmem:[#allocation4 + $0xd8] sm:$0xff] %v4404
  %4440 = vst [vmem:[#allocation4 + $0xe0] sm:$0xff] %v4295
  %4441 = vst [vmem:[#allocation4 + $0xe8] sm:$0xff] %v4297
  %4442 = vst [vmem:[#allocation4 + $0xf0] sm:$0xff] %v4408
  %4443 = vst [vmem:[#allocation4 + $0xf8] sm:$0xff] %v4410
  %v4444 = vld [vmem:[#allocation4] sm:$0xff]
  %v4445 = vld [vmem:[#allocation4 + $0x8] sm:$0xff]
  %v4446 = vxor.u32 %v4444, 2147483648
  %v4447 = vxor.u32 %v4445, 2147483648
  %v4448 = vmul.f32 %v4446, 1.442695
  %v4449 = vpow.pop %v4448
  %v4450 = vmul.f32 %v4447, 1.442695
  %v4451 = vpow.pop %v4450
  %v4452 = vadd.f32 %v4449, 1.0
  %v4453 = vadd.f32 %v4451, 1.0
  %v4454 = vrcp.pop %v4452
  %v4455 = vmul.f32 1.0, %v4454
  %v4456 = vrcp.pop %v4453
  %v4457 = vmul.f32 1.0, %v4456
  %v4458 = vtanh.pop %v4445
  %4460 = vrot.lane.b32.xlu0 %v4458, 64
  %v4461 = vpop.permute.xlu0 %4460
  %v4463 = vmul.f32 %v4455, %v4461
  %v4464 = vtanh.pop %v4463
  %v4465 = vmul.f32 %v4457, %v4464
  %v4466 = vld [vmem:[#allocation4 + $0xf0] sm:$0xff]
  %v4467 = vld [vmem:[#allocation4 + $0xf8] sm:$0xff]
  %v4468 = vxor.u32 %v4466, 2147483648
  %v4469 = vxor.u32 %v4467, 2147483648
  %v4470 = vmul.f32 %v4468, 1.442695
  %v4471 = vpow.pop %v4470
  %v4472 = vmul.f32 %v4469, 1.442695
  %v4473 = vpow.pop %v4472
  %v4474 = vadd.f32 %v4471, 1.0
  %v4475 = vadd.f32 %v4473, 1.0
  %v4476 = vrcp.pop %v4474
  %v4477 = vmul.f32 1.0, %v4476
  %v4478 = vrcp.pop %v4475
  %v4479 = vmul.f32 1.0, %v4478
  %v4480 = vtanh.pop %v4467
  %4482 = vrot.lane.b32.xlu0 %v4480, 64
  %v4483 = vpop.permute.xlu0 %4482
  %v4485 = vmul.f32 %v4477, %v4483
  %v4486 = vtanh.pop %v4485
  %v4487 = vmul.f32 %v4479, %v4486
  %vm4488 = vcmask 523264
  %4489 = vst.msk [vmem:[%s9] sm:$0xff] %vm4488, %v4465
  %4491 = vrot.lane.b32.xlu0 %v4487, 64
  %v4492 = vpop.permute.xlu0 %4491
  %vm4494 = vcmask 1048064
  %4495 = vst.msk [vmem:[%s9 + $0x38] sm:$0xff] %vm4494, %v4492
  %v4496 = vld [vmem:[#allocation4 + $0x20] sm:$0xff]
  %v4497 = vld [vmem:[#allocation4 + $0x28] sm:$0xff]
  %v4498 = vld [vmem:[%s6] sm:$0xff]
  %v4499 = vld [vmem:[%s6 + $0x8] sm:$0xff]
  %v4500 = vld [vmem:[%s6 + $0x10] sm:$0xff]
  %v4501 = vld [vmem:[%s6 + $0x18] sm:$0xff]
  %v4502 = vld [vmem:[%s6 + $0x20] sm:$0xff]
  %v4503 = vld [vmem:[%s6 + $0x28] sm:$0xff]
  %v4504 = vld [vmem:[%s6 + $0x30] sm:$0xff]
  %v4505 = vld [vmem:[%s6 + $0x38] sm:$0xff]
  %v4506 = vld [vmem:[%s6 + $0x40] sm:$0xff]
  %v4507 = vld [vmem:[%s6 + $0x48] sm:$0xff]
  %v4508 = vld [vmem:[%s6 + $0x50] sm:$0xff]
  %v4509 = vld [vmem:[%s6 + $0x58] sm:$0xff]
  %v4510 = vld [vmem:[%s6 + $0x60] sm:$0xff]
  %v4511 = vld [vmem:[%s6 + $0x68] sm:$0xff]
  %v4512 = vld [vmem:[%s6 + $0x70] sm:$0xff]
  %v4513 = vld [vmem:[%s6 + $0x78] sm:$0xff]
  %v4515 = vsel %vm4488, %v4465, 0
  %4517 = vmatprep.subr.mxu0 %v4499
  %4518 = vmatpush1.msra.mxu0 %v4498
  %4519 = vmatprep.subr.mxu0 %v4501
  %4520 = vmatpush1.msra.mxu0 %v4500
  %4521 = vmatprep.subr.mxu0 %v4503
  %4522 = vmatpush1.msra.mxu0 %v4502
  %4523 = vmatprep.subr.mxu0 %v4505
  %4524 = vmatpush1.msra.mxu0 %v4504
  %4525 = vmatprep.subr.mxu0 %v4507
  %4526 = vmatpush1.msra.mxu0 %v4506
  %4527 = vmatprep.subr.mxu0 %v4509
  %4528 = vmatpush1.msra.mxu0 %v4508
  %4529 = vmatprep.subr.mxu0 %v4511
  %4530 = vmatpush1.msra.mxu0 %v4510
  %4531 = vmatprep.subr.mxu0 %v4513
  %4532 = vmatpush1.msra.mxu0 %v4512
  %4533 = vmatprep.subr.mxu0 0.0
  %4534 = vmatpush1.msra.mxu0 0.0
  %4535 = vmatprep.subr.mxu0 0.0
  %4536 = vmatpush1.msra.mxu0 0.0
  %4537 = vmatprep.subr.mxu0 0.0
  %4538 = vmatpush1.msra.mxu0 0.0
  %4539 = vmatprep.subr.mxu0 0.0
  %4540 = vmatpush1.msra.mxu0 0.0
  %4541 = vmatprep.subr.mxu0 0.0
  %4542 = vmatpush1.msra.mxu0 0.0
  %4543 = vmatprep.subr.mxu0 0.0
  %4544 = vmatpush1.msra.mxu0 0.0
  %4545 = vmatprep.subr.mxu0 0.0
  %4546 = vmatpush1.msra.mxu0 0.0
  %4547 = vmatprep.subr.mxu0 0.0
  %4548 = vmatpush1.msra.mxu0 0.0
  %4549 = vmatprep.subr.mxu0 0.0
  %4550 = vmatpush1.msra.mxu0 0.0
  %4551 = vmatprep.subr.mxu0 0.0
  %4552 = vmatpush1.msra.mxu0 0.0
  %4553 = vmatprep.subr.mxu0 0.0
  %4554 = vmatpush1.msra.mxu0 0.0
  %4555 = vmatprep.subr.mxu0 0.0
  %4556 = vmatpush1.msra.mxu0 0.0
  %4557 = vmatprep.subr.mxu0 0.0
  %4558 = vmatpush1.msra.mxu0 0.0
  %4559 = vmatprep.subr.mxu0 0.0
  %4560 = vmatpush1.msra.mxu0 0.0
  %4561 = vmatprep.subr.mxu0 0.0
  %4562 = vmatpush1.msra.mxu0 0.0
  %4563 = vmatprep.subr.mxu0 0.0
  %4564 = vmatpush1.msra.mxu0 0.0
  %4565 = vmatprep.subr.mxu0 0.0
  %4566 = vmatpush1.msra.mxu0 0.0
  %4567 = vmatprep.subr.mxu0 0.0
  %4568 = vmatpush1.msra.mxu0 0.0
  %4569 = vmatprep.subr.mxu0 0.0
  %4570 = vmatpush1.msra.mxu0 0.0
  %4571 = vmatprep.subr.mxu0 0.0
  %4572 = vmatpush1.msra.mxu0 0.0
  %4573 = vmatprep.subr.mxu0 0.0
  %4574 = vmatpush1.msra.mxu0 0.0
  %4575 = vmatprep.subr.mxu0 0.0
  %4576 = vmatpush1.msra.mxu0 0.0
  %4577 = vmatprep.subr.mxu0 0.0
  %4578 = vmatpush1.msra.mxu0 0.0
  %4579 = vmatprep.subr.mxu0 0.0
  %4580 = vmatpush1.msra.mxu0 0.0
  %4581 = vmatprep.mubr.f32.mxu0 0.0
  %4582 = vmatmul.mubr.f32.gmra.mrb[0].mxu0 %v4515
  %v4583 = vpop.f32.mrb[0].mxu0
  %v4584 = vadd.f32 0.0, %v4583
  %v4585 = vpop.f32.mrb[0].mxu0
  %v4586 = vadd.f32 0.0, %v4585
  %4587 = vdwg.mxu0
  %v4588 = vadd.f32 %v4496, %v4584
  %v4589 = vadd.f32 %v4497, %v4586
  %v4590 = vld [vmem:[#allocation4 + $0xd0] sm:$0xff]
  %v4591 = vld [vmem:[#allocation4 + $0xd8] sm:$0xff]
  %v4592 = vld [vmem:[%s7] sm:$0xff]
  %v4593 = vld [vmem:[%s7 + $0x8] sm:$0xff]
  %v4594 = vld [vmem:[%s7 + $0x10] sm:$0xff]
  %v4595 = vld [vmem:[%s7 + $0x18] sm:$0xff]
  %v4596 = vld [vmem:[%s7 + $0x20] sm:$0xff]
  %v4597 = vld [vmem:[%s7 + $0x28] sm:$0xff]
  %v4598 = vld [vmem:[%s7 + $0x30] sm:$0xff]
  %v4599 = vld [vmem:[%s7 + $0x38] sm:$0xff]
  %v4600 = vld [vmem:[%s7 + $0x40] sm:$0xff]
  %v4601 = vld [vmem:[%s7 + $0x48] sm:$0xff]
  %v4602 = vld [vmem:[%s7 + $0x50] sm:$0xff]
  %v4603 = vld [vmem:[%s7 + $0x58] sm:$0xff]
  %v4604 = vld [vmem:[%s7 + $0x60] sm:$0xff]
  %v4605 = vld [vmem:[%s7 + $0x68] sm:$0xff]
  %v4606 = vld [vmem:[%s7 + $0x70] sm:$0xff]
  %v4607 = vld [vmem:[%s7 + $0x78] sm:$0xff]
  %v4608 = vsel %vm4488, %v4487, 0
  %4610 = vmatprep.subr.mxu0 %v4593
  %4611 = vmatpush1.msra.mxu0 %v4592
  %4612 = vmatprep.subr.mxu0 %v4595
  %4613 = vmatpush1.msra.mxu0 %v4594
  %4614 = vmatprep.subr.mxu0 %v4597
  %4615 = vmatpush1.msra.mxu0 %v4596
  %4616 = vmatprep.subr.mxu0 %v4599
  %4617 = vmatpush1.msra.mxu0 %v4598
  %4618 = vmatprep.subr.mxu0 %v4601
  %4619 = vmatpush1.msra.mxu0 %v4600
  %4620 = vmatprep.subr.mxu0 %v4603
  %4621 = vmatpush1.msra.mxu0 %v4602
  %4622 = vmatprep.subr.mxu0 %v4605
  %4623 = vmatpush1.msra.mxu0 %v4604
  %4624 = vmatprep.subr.mxu0 %v4607
  %4625 = vmatpush1.msra.mxu0 %v4606
  %4626 = vmatprep.subr.mxu0 0.0
  %4627 = vmatpush1.msra.mxu0 0.0
  %4628 = vmatprep.subr.mxu0 0.0
  %4629 = vmatpush1.msra.mxu0 0.0
  %4630 = vmatprep.subr.mxu0 0.0
  %4631 = vmatpush1.msra.mxu0 0.0
  %4632 = vmatprep.subr.mxu0 0.0
  %4633 = vmatpush1.msra.mxu0 0.0
  %4634 = vmatprep.subr.mxu0 0.0
  %4635 = vmatpush1.msra.mxu0 0.0
  %4636 = vmatprep.subr.mxu0 0.0
  %4637 = vmatpush1.msra.mxu0 0.0
  %4638 = vmatprep.subr.mxu0 0.0
  %4639 = vmatpush1.msra.mxu0 0.0
  %4640 = vmatprep.subr.mxu0 0.0
  %4641 = vmatpush1.msra.mxu0 0.0
  %4642 = vmatprep.subr.mxu0 0.0
  %4643 = vmatpush1.msra.mxu0 0.0
  %4644 = vmatprep.subr.mxu0 0.0
  %4645 = vmatpush1.msra.mxu0 0.0
  %4646 = vmatprep.subr.mxu0 0.0
  %4647 = vmatpush1.msra.mxu0 0.0
  %4648 = vmatprep.subr.mxu0 0.0
  %4649 = vmatpush1.msra.mxu0 0.0
  %4650 = vmatprep.subr.mxu0 0.0
  %4651 = vmatpush1.msra.mxu0 0.0
  %4652 = vmatprep.subr.mxu0 0.0
  %4653 = vmatpush1.msra.mxu0 0.0
  %4654 = vmatprep.subr.mxu0 0.0
  %4655 = vmatpush1.msra.mxu0 0.0
  %4656 = vmatprep.subr.mxu0 0.0
  %4657 = vmatpush1.msra.mxu0 0.0
  %4658 = vmatprep.subr.mxu0 0.0
  %4659 = vmatpush1.msra.mxu0 0.0
  %4660 = vmatprep.subr.mxu0 0.0
  %4661 = vmatpush1.msra.mxu0 0.0
  %4662 = vmatprep.subr.mxu0 0.0
  %4663 = vmatpush1.msra.mxu0 0.0
  %4664 = vmatprep.subr.mxu0 0.0
  %4665 = vmatpush1.msra.mxu0 0.0
  %4666 = vmatprep.subr.mxu0 0.0
  %4667 = vmatpush1.msra.mxu0 0.0
  %4668 = vmatprep.subr.mxu0 0.0
  %4669 = vmatpush1.msra.mxu0 0.0
  %4670 = vmatprep.subr.mxu0 0.0
  %4671 = vmatpush1.msra.mxu0 0.0
  %4672 = vmatprep.subr.mxu0 0.0
  %4673 = vmatpush1.msra.mxu0 0.0
  %4674 = vmatprep.mubr.f32.mxu0 0.0
  %4675 = vmatmul.mubr.f32.gmra.mrb[0].mxu0 %v4608
  %v4676 = vpop.f32.mrb[0].mxu0
  %v4677 = vadd.f32 0.0, %v4676
  %v4678 = vpop.f32.mrb[0].mxu0
  %v4679 = vadd.f32 0.0, %v4678
  %4680 = vdwg.mxu0
  %v4681 = vadd.f32 %v4590, %v4677
  %v4682 = vadd.f32 %v4591, %v4679
  %v4683 = vxor.u32 %v4588, 2147483648
  %v4684 = vxor.u32 %v4589, 2147483648
  %v4685 = vmul.f32 %v4683, 1.442695
  %v4686 = vpow.pop %v4685
  %v4687 = vmul.f32 %v4684, 1.442695
  %v4688 = vpow.pop %v4687
  %v4689 = vadd.f32 %v4686, 1.0
  %v4690 = vadd.f32 %v4688, 1.0
  %v4691 = vrcp.pop %v4689
  %v4692 = vmul.f32 1.0, %v4691
  %v4693 = vrcp.pop %v4690
  %v4694 = vmul.f32 1.0, %v4693
  %v4695 = vtanh.pop %v4589
  %4697 = vrot.lane.b32.xlu0 %v4463, 64
  %v4698 = vpop.permute.xlu0 %4697
  %v4700 = vmul.f32 %v4692, %v4698
  %4702 = vrot.lane.b32.xlu0 %v4695, 64
  %v4703 = vpop.permute.xlu0 %4702
  %v4705 = vmul.f32 %v4692, %v4703
  %4707 = vrot.lane.b32.xlu0 %v4705, 64
  %v4708 = vpop.permute.xlu0 %4707
  %v4710 = vadd.f32 %v4700, %v4708
  %v4711 = vtanh.pop %v4710
  %4713 = vrot.lane.b32.xlu0 %v4711, 64
  %v4714 = vpop.permute.xlu0 %4713
  %v4716 = vmul.f32 %v4694, %v4714
  %v4717 = vxor.u32 %v4681, 2147483648
  %v4718 = vxor.u32 %v4682, 2147483648
  %v4719 = vmul.f32 %v4717, 1.442695
  %v4720 = vpow.pop %v4719
  %v4721 = vmul.f32 %v4718, 1.442695
  %v4722 = vpow.pop %v4721
  %v4723 = vadd.f32 %v4720, 1.0
  %v4724 = vadd.f32 %v4722, 1.0
  %v4725 = vrcp.pop %v4723
  %v4726 = vmul.f32 1.0, %v4725
  %v4727 = vrcp.pop %v4724
  %v4728 = vmul.f32 1.0, %v4727
  %v4729 = vtanh.pop %v4682
  %4731 = vrot.lane.b32.xlu0 %v4485, 64
  %v4732 = vpop.permute.xlu0 %4731
  %v4734 = vmul.f32 %v4726, %v4732
  %4736 = vrot.lane.b32.xlu0 %v4729, 64
  %v4737 = vpop.permute.xlu0 %4736
  %v4739 = vmul.f32 %v4726, %v4737
  %4741 = vrot.lane.b32.xlu0 %v4739, 64
  %v4742 = vpop.permute.xlu0 %4741
  %v4744 = vadd.f32 %v4734, %v4742
  %v4745 = vtanh.pop %v4744
  %4747 = vrot.lane.b32.xlu0 %v4745, 64
  %v4748 = vpop.permute.xlu0 %4747
  %v4750 = vmul.f32 %v4728, %v4748
  %4751 = vst.msk [vmem:[%s9 + $0x8] sm:$0xff] %vm4488, %v4716
  %4753 = vrot.lane.b32.xlu0 %v4750, 64
  %v4754 = vpop.permute.xlu0 %4753
  %4756 = vst.msk [vmem:[%s9 + $0x30] sm:$0xff] %vm4494, %v4754
  %v4757 = vld [vmem:[#allocation4 + $0x40] sm:$0xff]
  %v4758 = vld [vmem:[#allocation4 + $0x48] sm:$0xff]
  %v4759 = vld [vmem:[%s6] sm:$0xff]
  %v4760 = vld [vmem:[%s6 + $0x8] sm:$0xff]
  %v4761 = vld [vmem:[%s6 + $0x10] sm:$0xff]
  %v4762 = vld [vmem:[%s6 + $0x18] sm:$0xff]
  %v4763 = vld [vmem:[%s6 + $0x20] sm:$0xff]
  %v4764 = vld [vmem:[%s6 + $0x28] sm:$0xff]
  %v4765 = vld [vmem:[%s6 + $0x30] sm:$0xff]
  %v4766 = vld [vmem:[%s6 + $0x38] sm:$0xff]
  %v4767 = vld [vmem:[%s6 + $0x40] sm:$0xff]
  %v4768 = vld [vmem:[%s6 + $0x48] sm:$0xff]
  %v4769 = vld [vmem:[%s6 + $0x50] sm:$0xff]
  %v4770 = vld [vmem:[%s6 + $0x58] sm:$0xff]
  %v4771 = vld [vmem:[%s6 + $0x60] sm:$0xff]
  %v4772 = vld [vmem:[%s6 + $0x68] sm:$0xff]
  %v4773 = vld [vmem:[%s6 + $0x70] sm:$0xff]
  %v4774 = vld [vmem:[%s6 + $0x78] sm:$0xff]
  %v4776 = vsel %vm4488, %v4716, 0
  %4778 = vmatprep.subr.mxu0 %v4760
  %4779 = vmatpush1.msra.mxu0 %v4759
  %4780 = vmatprep.subr.mxu0 %v4762
  %4781 = vmatpush1.msra.mxu0 %v4761
  %4782 = vmatprep.subr.mxu0 %v4764
  %4783 = vmatpush1.msra.mxu0 %v4763
  %4784 = vmatprep.subr.mxu0 %v4766
  %4785 = vmatpush1.msra.mxu0 %v4765
  %4786 = vmatprep.subr.mxu0 %v4768
  %4787 = vmatpush1.msra.mxu0 %v4767
  %4788 = vmatprep.subr.mxu0 %v4770
  %4789 = vmatpush1.msra.mxu0 %v4769
  %4790 = vmatprep.subr.mxu0 %v4772
  %4791 = vmatpush1.msra.mxu0 %v4771
  %4792 = vmatprep.subr.mxu0 %v4774
  %4793 = vmatpush1.msra.mxu0 %v4773
  %4794 = vmatprep.subr.mxu0 0.0
  %4795 = vmatpush1.msra.mxu0 0.0
  %4796 = vmatprep.subr.mxu0 0.0
  %4797 = vmatpush1.msra.mxu0 0.0
  %4798 = vmatprep.subr.mxu0 0.0
  %4799 = vmatpush1.msra.mxu0 0.0
  %4800 = vmatprep.subr.mxu0 0.0
  %4801 = vmatpush1.msra.mxu0 0.0
  %4802 = vmatprep.subr.mxu0 0.0
  %4803 = vmatpush1.msra.mxu0 0.0
  %4804 = vmatprep.subr.mxu0 0.0
  %4805 = vmatpush1.msra.mxu0 0.0
  %4806 = vmatprep.subr.mxu0 0.0
  %4807 = vmatpush1.msra.mxu0 0.0
  %4808 = vmatprep.subr.mxu0 0.0
  %4809 = vmatpush1.msra.mxu0 0.0
  %4810 = vmatprep.subr.mxu0 0.0
  %4811 = vmatpush1.msra.mxu0 0.0
  %4812 = vmatprep.subr.mxu0 0.0
  %4813 = vmatpush1.msra.mxu0 0.0
  %4814 = vmatprep.subr.mxu0 0.0
  %4815 = vmatpush1.msra.mxu0 0.0
  %4816 = vmatprep.subr.mxu0 0.0
  %4817 = vmatpush1.msra.mxu0 0.0
  %4818 = vmatprep.subr.mxu0 0.0
  %4819 = vmatpush1.msra.mxu0 0.0
  %4820 = vmatprep.subr.mxu0 0.0
  %4821 = vmatpush1.msra.mxu0 0.0
  %4822 = vmatprep.subr.mxu0 0.0
  %4823 = vmatpush1.msra.mxu0 0.0
  %4824 = vmatprep.subr.mxu0 0.0
  %4825 = vmatpush1.msra.mxu0 0.0
  %4826 = vmatprep.subr.mxu0 0.0
  %4827 = vmatpush1.msra.mxu0 0.0
  %4828 = vmatprep.subr.mxu0 0.0
  %4829 = vmatpush1.msra.mxu0 0.0
  %4830 = vmatprep.subr.mxu0 0.0
  %4831 = vmatpush1.msra.mxu0 0.0
  %4832 = vmatprep.subr.mxu0 0.0
  %4833 = vmatpush1.msra.mxu0 0.0
  %4834 = vmatprep.subr.mxu0 0.0
  %4835 = vmatpush1.msra.mxu0 0.0
  %4836 = vmatprep.subr.mxu0 0.0
  %4837 = vmatpush1.msra.mxu0 0.0
  %4838 = vmatprep.subr.mxu0 0.0
  %4839 = vmatpush1.msra.mxu0 0.0
  %4840 = vmatprep.subr.mxu0 0.0
  %4841 = vmatpush1.msra.mxu0 0.0
  %4842 = vmatprep.mubr.f32.mxu0 0.0
  %4843 = vmatmul.mubr.f32.gmra.mrb[0].mxu0 %v4776
  %v4844 = vpop.f32.mrb[0].mxu0
  %v4845 = vadd.f32 0.0, %v4844
  %v4846 = vpop.f32.mrb[0].mxu0
  %v4847 = vadd.f32 0.0, %v4846
  %4848 = vdwg.mxu0
  %v4849 = vadd.f32 %v4757, %v4845
  %v4850 = vadd.f32 %v4758, %v4847
  %v4851 = vld [vmem:[#allocation4 + $0xb0] sm:$0xff]
  %v4852 = vld [vmem:[#allocation4 + $0xb8] sm:$0xff]
  %v4853 = vld [vmem:[%s7] sm:$0xff]
  %v4854 = vld [vmem:[%s7 + $0x8] sm:$0xff]
  %v4855 = vld [vmem:[%s7 + $0x10] sm:$0xff]
  %v4856 = vld [vmem:[%s7 + $0x18] sm:$0xff]
  %v4857 = vld [vmem:[%s7 + $0x20] sm:$0xff]
  %v4858 = vld [vmem:[%s7 + $0x28] sm:$0xff]
  %v4859 = vld [vmem:[%s7 + $0x30] sm:$0xff]
  %v4860 = vld [vmem:[%s7 + $0x38] sm:$0xff]
  %v4861 = vld [vmem:[%s7 + $0x40] sm:$0xff]
  %v4862 = vld [vmem:[%s7 + $0x48] sm:$0xff]
  %v4863 = vld [vmem:[%s7 + $0x50] sm:$0xff]
  %v4864 = vld [vmem:[%s7 + $0x58] sm:$0xff]
  %v4865 = vld [vmem:[%s7 + $0x60] sm:$0xff]
  %v4866 = vld [vmem:[%s7 + $0x68] sm:$0xff]
  %v4867 = vld [vmem:[%s7 + $0x70] sm:$0xff]
  %v4868 = vld [vmem:[%s7 + $0x78] sm:$0xff]
  %v4869 = vsel %vm4488, %v4750, 0
  %4871 = vmatprep.subr.mxu0 %v4854
  %4872 = vmatpush1.msra.mxu0 %v4853
  %4873 = vmatprep.subr.mxu0 %v4856
  %4874 = vmatpush1.msra.mxu0 %v4855
  %4875 = vmatprep.subr.mxu0 %v4858
  %4876 = vmatpush1.msra.mxu0 %v4857
  %4877 = vmatprep.subr.mxu0 %v4860
  %4878 = vmatpush1.msra.mxu0 %v4859
  %4879 = vmatprep.subr.mxu0 %v4862
  %4880 = vmatpush1.msra.mxu0 %v4861
  %4881 = vmatprep.subr.mxu0 %v4864
  %4882 = vmatpush1.msra.mxu0 %v4863
  %4883 = vmatprep.subr.mxu0 %v4866
  %4884 = vmatpush1.msra.mxu0 %v4865
  %4885 = vmatprep.subr.mxu0 %v4868
  %4886 = vmatpush1.msra.mxu0 %v4867
  %4887 = vmatprep.subr.mxu0 0.0
  %4888 = vmatpush1.msra.mxu0 0.0
  %4889 = vmatprep.subr.mxu0 0.0
  %4890 = vmatpush1.msra.mxu0 0.0
  %4891 = vmatprep.subr.mxu0 0.0
  %4892 = vmatpush1.msra.mxu0 0.0
  %4893 = vmatprep.subr.mxu0 0.0
  %4894 = vmatpush1.msra.mxu0 0.0
  %4895 = vmatprep.subr.mxu0 0.0
  %4896 = vmatpush1.msra.mxu0 0.0
  %4897 = vmatprep.subr.mxu0 0.0
  %4898 = vmatpush1.msra.mxu0 0.0
  %4899 = vmatprep.subr.mxu0 0.0
  %4900 = vmatpush1.msra.mxu0 0.0
  %4901 = vmatprep.subr.mxu0 0.0
  %4902 = vmatpush1.msra.mxu0 0.0
  %4903 = vmatprep.subr.mxu0 0.0
  %4904 = vmatpush1.msra.mxu0 0.0
  %4905 = vmatprep.subr.mxu0 0.0
  %4906 = vmatpush1.msra.mxu0 0.0
  %4907 = vmatprep.subr.mxu0 0.0
  %4908 = vmatpush1.msra.mxu0 0.0
  %4909 = vmatprep.subr.mxu0 0.0
  %4910 = vmatpush1.msra.mxu0 0.0
  %4911 = vmatprep.subr.mxu0 0.0
  %4912 = vmatpush1.msra.mxu0 0.0
  %4913 = vmatprep.subr.mxu0 0.0
  %4914 = vmatpush1.msra.mxu0 0.0
  %4915 = vmatprep.subr.mxu0 0.0
  %4916 = vmatpush1.msra.mxu0 0.0
  %4917 = vmatprep.subr.mxu0 0.0
  %4918 = vmatpush1.msra.mxu0 0.0
  %4919 = vmatprep.subr.mxu0 0.0
  %4920 = vmatpush1.msra.mxu0 0.0
  %4921 = vmatprep.subr.mxu0 0.0
  %4922 = vmatpush1.msra.mxu0 0.0
  %4923 = vmatprep.subr.mxu0 0.0
  %4924 = vmatpush1.msra.mxu0 0.0
  %4925 = vmatprep.subr.mxu0 0.0
  %4926 = vmatpush1.msra.mxu0 0.0
  %4927 = vmatprep.subr.mxu0 0.0
  %4928 = vmatpush1.msra.mxu0 0.0
  %4929 = vmatprep.subr.mxu0 0.0
  %4930 = vmatpush1.msra.mxu0 0.0
  %4931 = vmatprep.subr.mxu0 0.0
  %4932 = vmatpush1.msra.mxu0 0.0
  %4933 = vmatprep.subr.mxu0 0.0
  %4934 = vmatpush1.msra.mxu0 0.0
  %4935 = vmatprep.mubr.f32.mxu0 0.0
  %4936 = vmatmul.mubr.f32.gmra.mrb[0].mxu0 %v4869
  %v4937 = vpop.f32.mrb[0].mxu0
  %v4938 = vadd.f32 0.0, %v4937
  %v4939 = vpop.f32.mrb[0].mxu0
  %v4940 = vadd.f32 0.0, %v4939
  %4941 = vdwg.mxu0
  %v4942 = vadd.f32 %v4851, %v4938
  %v4943 = vadd.f32 %v4852, %v4940
  %v4944 = vxor.u32 %v4849, 2147483648
  %v4945 = vxor.u32 %v4850, 2147483648
  %v4946 = vmul.f32 %v4944, 1.442695
  %v4947 = vpow.pop %v4946
  %v4948 = vmul.f32 %v4945, 1.442695
  %v4949 = vpow.pop %v4948
  %v4950 = vadd.f32 %v4947, 1.0
  %v4951 = vadd.f32 %v4949, 1.0
  %v4952 = vrcp.pop %v4950
  %v4953 = vmul.f32 1.0, %v4952
  %v4954 = vrcp.pop %v4951
  %v4955 = vmul.f32 1.0, %v4954
  %v4956 = vtanh.pop %v4850
  %v4957 = vmul.f32 %v4953, %v4710
  %4959 = vrot.lane.b32.xlu0 %v4956, 64
  %v4960 = vpop.permute.xlu0 %4959
  %v4962 = vmul.f32 %v4953, %v4960
  %4964 = vrot.lane.b32.xlu0 %v4962, 64
  %v4965 = vpop.permute.xlu0 %4964
  %v4967 = vadd.f32 %v4957, %v4965
  %v4968 = vtanh.pop %v4967
  %4970 = vrot.lane.b32.xlu0 %v4968, 64
  %v4971 = vpop.permute.xlu0 %4970
  %v4973 = vmul.f32 %v4955, %v4971
  %v4974 = vxor.u32 %v4942, 2147483648
  %v4975 = vxor.u32 %v4943, 2147483648
  %v4976 = vmul.f32 %v4974, 1.442695
  %v4977 = vpow.pop %v4976
  %v4978 = vmul.f32 %v4975, 1.442695
  %v4979 = vpow.pop %v4978
  %v4980 = vadd.f32 %v4977, 1.0
  %v4981 = vadd.f32 %v4979, 1.0
  %v4982 = vrcp.pop %v4980
  %v4983 = vmul.f32 1.0, %v4982
  %v4984 = vrcp.pop %v4981
  %v4985 = vmul.f32 1.0, %v4984
  %v4986 = vtanh.pop %v4943
  %v4987 = vmul.f32 %v4983, %v4744
  %4989 = vrot.lane.b32.xlu0 %v4986, 64
  %v4990 = vpop.permute.xlu0 %4989
  %v4992 = vmul.f32 %v4983, %v4990
  %4994 = vrot.lane.b32.xlu0 %v4992, 64
  %v4995 = vpop.permute.xlu0 %4994
  %v4997 = vadd.f32 %v4987, %v4995
  %v4998 = vtanh.pop %v4997
  %5000 = vrot.lane.b32.xlu0 %v4998, 64
  %v5001 = vpop.permute.xlu0 %5000
  %v5003 = vmul.f32 %v4985, %v5001
  %5004 = vst.msk [vmem:[%s9 + $0x10] sm:$0xff] %vm4488, %v4973
  %5006 = vrot.lane.b32.xlu0 %v5003, 64
  %v5007 = vpop.permute.xlu0 %5006
  %5009 = vst.msk [vmem:[%s9 + $0x28] sm:$0xff] %vm4494, %v5007
  %v5010 = vld [vmem:[#allocation4 + $0x60] sm:$0xff]
  %v5011 = vld [vmem:[#allocation4 + $0x68] sm:$0xff]
  %v5012 = vld [vmem:[%s6] sm:$0xff]
  %v5013 = vld [vmem:[%s6 + $0x8] sm:$0xff]
  %v5014 = vld [vmem:[%s6 + $0x10] sm:$0xff]
  %v5015 = vld [vmem:[%s6 + $0x18] sm:$0xff]
  %v5016 = vld [vmem:[%s6 + $0x20] sm:$0xff]
  %v5017 = vld [vmem:[%s6 + $0x28] sm:$0xff]
  %v5018 = vld [vmem:[%s6 + $0x30] sm:$0xff]
  %v5019 = vld [vmem:[%s6 + $0x38] sm:$0xff]
  %v5020 = vld [vmem:[%s6 + $0x40] sm:$0xff]
  %v5021 = vld [vmem:[%s6 + $0x48] sm:$0xff]
  %v5022 = vld [vmem:[%s6 + $0x50] sm:$0xff]
  %v5023 = vld [vmem:[%s6 + $0x58] sm:$0xff]
  %v5024 = vld [vmem:[%s6 + $0x60] sm:$0xff]
  %v5025 = vld [vmem:[%s6 + $0x68] sm:$0xff]
  %v5026 = vld [vmem:[%s6 + $0x70] sm:$0xff]
  %v5027 = vld [vmem:[%s6 + $0x78] sm:$0xff]
  %v5029 = vsel %vm4488, %v4973, 0
  %5031 = vmatprep.subr.mxu0 %v5013
  %5032 = vmatpush1.msra.mxu0 %v5012
  %5033 = vmatprep.subr.mxu0 %v5015
  %5034 = vmatpush1.msra.mxu0 %v5014
  %5035 = vmatprep.subr.mxu0 %v5017
  %5036 = vmatpush1.msra.mxu0 %v5016
  %5037 = vmatprep.subr.mxu0 %v5019
  %5038 = vmatpush1.msra.mxu0 %v5018
  %5039 = vmatprep.subr.mxu0 %v5021
  %5040 = vmatpush1.msra.mxu0 %v5020
  %5041 = vmatprep.subr.mxu0 %v5023
  %5042 = vmatpush1.msra.mxu0 %v5022
  %5043 = vmatprep.subr.mxu0 %v5025
  %5044 = vmatpush1.msra.mxu0 %v5024
  %5045 = vmatprep.subr.mxu0 %v5027
  %5046 = vmatpush1.msra.mxu0 %v5026
  %5047 = vmatprep.subr.mxu0 0.0
  %5048 = vmatpush1.msra.mxu0 0.0
  %5049 = vmatprep.subr.mxu0 0.0
  %5050 = vmatpush1.msra.mxu0 0.0
  %5051 = vmatprep.subr.mxu0 0.0
  %5052 = vmatpush1.msra.mxu0 0.0
  %5053 = vmatprep.subr.mxu0 0.0
  %5054 = vmatpush1.msra.mxu0 0.0
  %5055 = vmatprep.subr.mxu0 0.0
  %5056 = vmatpush1.msra.mxu0 0.0
  %5057 = vmatprep.subr.mxu0 0.0
  %5058 = vmatpush1.msra.mxu0 0.0
  %5059 = vmatprep.subr.mxu0 0.0
  %5060 = vmatpush1.msra.mxu0 0.0
  %5061 = vmatprep.subr.mxu0 0.0
  %5062 = vmatpush1.msra.mxu0 0.0
  %5063 = vmatprep.subr.mxu0 0.0
  %5064 = vmatpush1.msra.mxu0 0.0
  %5065 = vmatprep.subr.mxu0 0.0
  %5066 = vmatpush1.msra.mxu0 0.0
  %5067 = vmatprep.subr.mxu0 0.0
  %5068 = vmatpush1.msra.mxu0 0.0
  %5069 = vmatprep.subr.mxu0 0.0
  %5070 = vmatpush1.msra.mxu0 0.0
  %5071 = vmatprep.subr.mxu0 0.0
  %5072 = vmatpush1.msra.mxu0 0.0
  %5073 = vmatprep.subr.mxu0 0.0
  %5074 = vmatpush1.msra.mxu0 0.0
  %5075 = vmatprep.subr.mxu0 0.0
  %5076 = vmatpush1.msra.mxu0 0.0
  %5077 = vmatprep.subr.mxu0 0.0
  %5078 = vmatpush1.msra.mxu0 0.0
  %5079 = vmatprep.subr.mxu0 0.0
  %5080 = vmatpush1.msra.mxu0 0.0
  %5081 = vmatprep.subr.mxu0 0.0
  %5082 = vmatpush1.msra.mxu0 0.0
  %5083 = vmatprep.subr.mxu0 0.0
  %5084 = vmatpush1.msra.mxu0 0.0
  %5085 = vmatprep.subr.mxu0 0.0
  %5086 = vmatpush1.msra.mxu0 0.0
  %5087 = vmatprep.subr.mxu0 0.0
  %5088 = vmatpush1.msra.mxu0 0.0
  %5089 = vmatprep.subr.mxu0 0.0
  %5090 = vmatpush1.msra.mxu0 0.0
  %5091 = vmatprep.subr.mxu0 0.0
  %5092 = vmatpush1.msra.mxu0 0.0
  %5093 = vmatprep.subr.mxu0 0.0
  %5094 = vmatpush1.msra.mxu0 0.0
  %5095 = vmatprep.mubr.f32.mxu0 0.0
  %5096 = vmatmul.mubr.f32.gmra.mrb[0].mxu0 %v5029
  %v5097 = vpop.f32.mrb[0].mxu0
  %v5098 = vadd.f32 0.0, %v5097
  %v5099 = vpop.f32.mrb[0].mxu0
  %v5100 = vadd.f32 0.0, %v5099
  %5101 = vdwg.mxu0
  %v5102 = vadd.f32 %v5010, %v5098
  %v5103 = vadd.f32 %v5011, %v5100
  %v5104 = vld [vmem:[#allocation4 + $0x90] sm:$0xff]
  %v5105 = vld [vmem:[#allocation4 + $0x98] sm:$0xff]
  %v5106 = vld [vmem:[%s7] sm:$0xff]
  %v5107 = vld [vmem:[%s7 + $0x8] sm:$0xff]
  %v5108 = vld [vmem:[%s7 + $0x10] sm:$0xff]
  %v5109 = vld [vmem:[%s7 + $0x18] sm:$0xff]
  %v5110 = vld [vmem:[%s7 + $0x20] sm:$0xff]
  %v5111 = vld [vmem:[%s7 + $0x28] sm:$0xff]
  %v5112 = vld [vmem:[%s7 + $0x30] sm:$0xff]
  %v5113 = vld [vmem:[%s7 + $0x38] sm:$0xff]
  %v5114 = vld [vmem:[%s7 + $0x40] sm:$0xff]
  %v5115 = vld [vmem:[%s7 + $0x48] sm:$0xff]
  %v5116 = vld [vmem:[%s7 + $0x50] sm:$0xff]
  %v5117 = vld [vmem:[%s7 + $0x58] sm:$0xff]
  %v5118 = vld [vmem:[%s7 + $0x60] sm:$0xff]
  %v5119 = vld [vmem:[%s7 + $0x68] sm:$0xff]
  %v5120 = vld [vmem:[%s7 + $0x70] sm:$0xff]
  %v5121 = vld [vmem:[%s7 + $0x78] sm:$0xff]
  %v5122 = vsel %vm4488, %v5003, 0
  %5124 = vmatprep.subr.mxu0 %v5107
  %5125 = vmatpush1.msra.mxu0 %v5106
  %5126 = vmatprep.subr.mxu0 %v5109
  %5127 = vmatpush1.msra.mxu0 %v5108
  %5128 = vmatprep.subr.mxu0 %v5111
  %5129 = vmatpush1.msra.mxu0 %v5110
  %5130 = vmatprep.subr.mxu0 %v5113
  %5131 = vmatpush1.msra.mxu0 %v5112
  %5132 = vmatprep.subr.mxu0 %v5115
  %5133 = vmatpush1.msra.mxu0 %v5114
  %5134 = vmatprep.subr.mxu0 %v5117
  %5135 = vmatpush1.msra.mxu0 %v5116
  %5136 = vmatprep.subr.mxu0 %v5119
  %5137 = vmatpush1.msra.mxu0 %v5118
  %5138 = vmatprep.subr.mxu0 %v5121
  %5139 = vmatpush1.msra.mxu0 %v5120
  %5140 = vmatprep.subr.mxu0 0.0
  %5141 = vmatpush1.msra.mxu0 0.0
  %5142 = vmatprep.subr.mxu0 0.0
  %5143 = vmatpush1.msra.mxu0 0.0
  %5144 = vmatprep.subr.mxu0 0.0
  %5145 = vmatpush1.msra.mxu0 0.0
  %5146 = vmatprep.subr.mxu0 0.0
  %5147 = vmatpush1.msra.mxu0 0.0
  %5148 = vmatprep.subr.mxu0 0.0
  %5149 = vmatpush1.msra.mxu0 0.0
  %5150 = vmatprep.subr.mxu0 0.0
  %5151 = vmatpush1.msra.mxu0 0.0
  %5152 = vmatprep.subr.mxu0 0.0
  %5153 = vmatpush1.msra.mxu0 0.0
  %5154 = vmatprep.subr.mxu0 0.0
  %5155 = vmatpush1.msra.mxu0 0.0
  %5156 = vmatprep.subr.mxu0 0.0
  %5157 = vmatpush1.msra.mxu0 0.0
  %5158 = vmatprep.subr.mxu0 0.0
  %5159 = vmatpush1.msra.mxu0 0.0
  %5160 = vmatprep.subr.mxu0 0.0
  %5161 = vmatpush1.msra.mxu0 0.0
  %5162 = vmatprep.subr.mxu0 0.0
  %5163 = vmatpush1.msra.mxu0 0.0
  %5164 = vmatprep.subr.mxu0 0.0
  %5165 = vmatpush1.msra.mxu0 0.0
  %5166 = vmatprep.subr.mxu0 0.0
  %5167 = vmatpush1.msra.mxu0 0.0
  %5168 = vmatprep.subr.mxu0 0.0
  %5169 = vmatpush1.msra.mxu0 0.0
  %5170 = vmatprep.subr.mxu0 0.0
  %5171 = vmatpush1.msra.mxu0 0.0
  %5172 = vmatprep.subr.mxu0 0.0
  %5173 = vmatpush1.msra.mxu0 0.0
  %5174 = vmatprep.subr.mxu0 0.0
  %5175 = vmatpush1.msra.mxu0 0.0
  %5176 = vmatprep.subr.mxu0 0.0
  %5177 = vmatpush1.msra.mxu0 0.0
  %5178 = vmatprep.subr.mxu0 0.0
  %5179 = vmatpush1.msra.mxu0 0.0
  %5180 = vmatprep.subr.mxu0 0.0
  %5181 = vmatpush1.msra.mxu0 0.0
  %5182 = vmatprep.subr.mxu0 0.0
  %5183 = vmatpush1.msra.mxu0 0.0
  %5184 = vmatprep.subr.mxu0 0.0
  %5185 = vmatpush1.msra.mxu0 0.0
  %5186 = vmatprep.subr.mxu0 0.0
  %5187 = vmatpush1.msra.mxu0 0.0
  %5188 = vmatprep.mubr.f32.mxu0 0.0
  %5189 = vmatmul.mubr.f32.gmra.mrb[0].mxu0 %v5122
  %v5190 = vpop.f32.mrb[0].mxu0
  %v5191 = vadd.f32 0.0, %v5190
  %v5192 = vpop.f32.mrb[0].mxu0
  %v5193 = vadd.f32 0.0, %v5192
  %5194 = vdwg.mxu0
  %v5195 = vadd.f32 %v5104, %v5191
  %v5196 = vadd.f32 %v5105, %v5193
  %v5197 = vxor.u32 %v5102, 2147483648
  %v5198 = vxor.u32 %v5103, 2147483648
  %v5199 = vmul.f32 %v5197, 1.442695
  %v5200 = vpow.pop %v5199
  %v5201 = vmul.f32 %v5198, 1.442695
  %v5202 = vpow.pop %v5201
  %v5203 = vadd.f32 %v5200, 1.0
  %v5204 = vadd.f32 %v5202, 1.0
  %v5205 = vrcp.pop %v5203
  %v5206 = vmul.f32 1.0, %v5205
  %v5207 = vrcp.pop %v5204
  %v5208 = vmul.f32 1.0, %v5207
  %v5209 = vtanh.pop %v5103
  %v5210 = vmul.f32 %v5206, %v4967
  %5212 = vrot.lane.b32.xlu0 %v5209, 64
  %v5213 = vpop.permute.xlu0 %5212
  %v5215 = vmul.f32 %v5206, %v5213
  %5217 = vrot.lane.b32.xlu0 %v5215, 64
  %v5218 = vpop.permute.xlu0 %5217
  %v5220 = vadd.f32 %v5210, %v5218
  %v5221 = vtanh.pop %v5220
  %5223 = vrot.lane.b32.xlu0 %v5221, 64
  %v5224 = vpop.permute.xlu0 %5223
  %v5226 = vmul.f32 %v5208, %v5224
  %v5227 = vxor.u32 %v5195, 2147483648
  %v5228 = vxor.u32 %v5196, 2147483648
  %v5229 = vmul.f32 %v5227, 1.442695
  %v5230 = vpow.pop %v5229
  %v5231 = vmul.f32 %v5228, 1.442695
  %v5232 = vpow.pop %v5231
  %v5233 = vadd.f32 %v5230, 1.0
  %v5234 = vadd.f32 %v5232, 1.0
  %v5235 = vrcp.pop %v5233
  %v5236 = vmul.f32 1.0, %v5235
  %v5237 = vrcp.pop %v5234
  %v5238 = vmul.f32 1.0, %v5237
  %v5239 = vtanh.pop %v5196
  %v5240 = vmul.f32 %v5236, %v4997
  %5242 = vrot.lane.b32.xlu0 %v5239, 64
  %v5243 = vpop.permute.xlu0 %5242
  %v5245 = vmul.f32 %v5236, %v5243
  %5247 = vrot.lane.b32.xlu0 %v5245, 64
  %v5248 = vpop.permute.xlu0 %5247
  %v5250 = vadd.f32 %v5240, %v5248
  %v5251 = vtanh.pop %v5250
  %5253 = vrot.lane.b32.xlu0 %v5251, 64
  %v5254 = vpop.permute.xlu0 %5253
  %v5256 = vmul.f32 %v5238, %v5254
  %5257 = vst.msk [vmem:[%s9 + $0x18] sm:$0xff] %vm4488, %v5226
  %5259 = vrot.lane.b32.xlu0 %v5256, 64
  %v5260 = vpop.permute.xlu0 %5259
  %5262 = vst.msk [vmem:[%s9 + $0x20] sm:$0xff] %vm4494, %v5260
  %v5263 = vld [vmem:[#allocation4 + $0x80] sm:$0xff]
  %v5264 = vld [vmem:[#allocation4 + $0x88] sm:$0xff]
  %v5265 = vld [vmem:[%s6] sm:$0xff]
  %v5266 = vld [vmem:[%s6 + $0x8] sm:$0xff]
  %v5267 = vld [vmem:[%s6 + $0x10] sm:$0xff]
  %v5268 = vld [vmem:[%s6 + $0x18] sm:$0xff]
  %v5269 = vld [vmem:[%s6 + $0x20] sm:$0xff]
  %v5270 = vld [vmem:[%s6 + $0x28] sm:$0xff]
  %v5271 = vld [vmem:[%s6 + $0x30] sm:$0xff]
  %v5272 = vld [vmem:[%s6 + $0x38] sm:$0xff]
  %v5273 = vld [vmem:[%s6 + $0x40] sm:$0xff]
  %v5274 = vld [vmem:[%s6 + $0x48] sm:$0xff]
  %v5275 = vld [vmem:[%s6 + $0x50] sm:$0xff]
  %v5276 = vld [vmem:[%s6 + $0x58] sm:$0xff]
  %v5277 = vld [vmem:[%s6 + $0x60] sm:$0xff]
  %v5278 = vld [vmem:[%s6 + $0x68] sm:$0xff]
  %v5279 = vld [vmem:[%s6 + $0x70] sm:$0xff]
  %v5280 = vld [vmem:[%s6 + $0x78] sm:$0xff]
  %v5282 = vsel %vm4488, %v5226, 0
  %5284 = vmatprep.subr.mxu0 %v5266
  %5285 = vmatpush1.msra.mxu0 %v5265
  %5286 = vmatprep.subr.mxu0 %v5268
  %5287 = vmatpush1.msra.mxu0 %v5267
  %5288 = vmatprep.subr.mxu0 %v5270
  %5289 = vmatpush1.msra.mxu0 %v5269
  %5290 = vmatprep.subr.mxu0 %v5272
  %5291 = vmatpush1.msra.mxu0 %v5271
  %5292 = vmatprep.subr.mxu0 %v5274
  %5293 = vmatpush1.msra.mxu0 %v5273
  %5294 = vmatprep.subr.mxu0 %v5276
  %5295 = vmatpush1.msra.mxu0 %v5275
  %5296 = vmatprep.subr.mxu0 %v5278
  %5297 = vmatpush1.msra.mxu0 %v5277
  %5298 = vmatprep.subr.mxu0 %v5280
  %5299 = vmatpush1.msra.mxu0 %v5279
  %5300 = vmatprep.subr.mxu0 0.0
  %5301 = vmatpush1.msra.mxu0 0.0
  %5302 = vmatprep.subr.mxu0 0.0
  %5303 = vmatpush1.msra.mxu0 0.0
  %5304 = vmatprep.subr.mxu0 0.0
  %5305 = vmatpush1.msra.mxu0 0.0
  %5306 = vmatprep.subr.mxu0 0.0
  %5307 = vmatpush1.msra.mxu0 0.0
  %5308 = vmatprep.subr.mxu0 0.0
  %5309 = vmatpush1.msra.mxu0 0.0
  %5310 = vmatprep.subr.mxu0 0.0
  %5311 = vmatpush1.msra.mxu0 0.0
  %5312 = vmatprep.subr.mxu0 0.0
  %5313 = vmatpush1.msra.mxu0 0.0
  %5314 = vmatprep.subr.mxu0 0.0
  %5315 = vmatpush1.msra.mxu0 0.0
  %5316 = vmatprep.subr.mxu0 0.0
  %5317 = vmatpush1.msra.mxu0 0.0
  %5318 = vmatprep.subr.mxu0 0.0
  %5319 = vmatpush1.msra.mxu0 0.0
  %5320 = vmatprep.subr.mxu0 0.0
  %5321 = vmatpush1.msra.mxu0 0.0
  %5322 = vmatprep.subr.mxu0 0.0
  %5323 = vmatpush1.msra.mxu0 0.0
  %5324 = vmatprep.subr.mxu0 0.0
  %5325 = vmatpush1.msra.mxu0 0.0
  %5326 = vmatprep.subr.mxu0 0.0
  %5327 = vmatpush1.msra.mxu0 0.0
  %5328 = vmatprep.subr.mxu0 0.0
  %5329 = vmatpush1.msra.mxu0 0.0
  %5330 = vmatprep.subr.mxu0 0.0
  %5331 = vmatpush1.msra.mxu0 0.0
  %5332 = vmatprep.subr.mxu0 0.0
  %5333 = vmatpush1.msra.mxu0 0.0
  %5334 = vmatprep.subr.mxu0 0.0
  %5335 = vmatpush1.msra.mxu0 0.0
  %5336 = vmatprep.subr.mxu0 0.0
  %5337 = vmatpush1.msra.mxu0 0.0
  %5338 = vmatprep.subr.mxu0 0.0
  %5339 = vmatpush1.msra.mxu0 0.0
  %5340 = vmatprep.subr.mxu0 0.0
  %5341 = vmatpush1.msra.mxu0 0.0
  %5342 = vmatprep.subr.mxu0 0.0
  %5343 = vmatpush1.msra.mxu0 0.0
  %5344 = vmatprep.subr.mxu0 0.0
  %5345 = vmatpush1.msra.mxu0 0.0
  %5346 = vmatprep.subr.mxu0 0.0
  %5347 = vmatpush1.msra.mxu0 0.0
  %5348 = vmatprep.mubr.f32.mxu0 0.0
  %5349 = vmatmul.mubr.f32.gmra.mrb[0].mxu0 %v5282
  %v5350 = vpop.f32.mrb[0].mxu0
  %v5351 = vadd.f32 0.0, %v5350
  %v5352 = vpop.f32.mrb[0].mxu0
  %v5353 = vadd.f32 0.0, %v5352
  %5354 = vdwg.mxu0
  %v5355 = vadd.f32 %v5263, %v5351
  %v5356 = vadd.f32 %v5264, %v5353
  %v5357 = vld [vmem:[#allocation4 + $0x70] sm:$0xff]
  %v5358 = vld [vmem:[#allocation4 + $0x78] sm:$0xff]
  %v5359 = vld [vmem:[%s7] sm:$0xff]
  %v5360 = vld [vmem:[%s7 + $0x8] sm:$0xff]
  %v5361 = vld [vmem:[%s7 + $0x10] sm:$0xff]
  %v5362 = vld [vmem:[%s7 + $0x18] sm:$0xff]
  %v5363 = vld [vmem:[%s7 + $0x20] sm:$0xff]
  %v5364 = vld [vmem:[%s7 + $0x28] sm:$0xff]
  %v5365 = vld [vmem:[%s7 + $0x30] sm:$0xff]
  %v5366 = vld [vmem:[%s7 + $0x38] sm:$0xff]
  %v5367 = vld [vmem:[%s7 + $0x40] sm:$0xff]
  %v5368 = vld [vmem:[%s7 + $0x48] sm:$0xff]
  %v5369 = vld [vmem:[%s7 + $0x50] sm:$0xff]
  %v5370 = vld [vmem:[%s7 + $0x58] sm:$0xff]
  %v5371 = vld [vmem:[%s7 + $0x60] sm:$0xff]
  %v5372 = vld [vmem:[%s7 + $0x68] sm:$0xff]
  %v5373 = vld [vmem:[%s7 + $0x70] sm:$0xff]
  %v5374 = vld [vmem:[%s7 + $0x78] sm:$0xff]
  %v5375 = vsel %vm4488, %v5256, 0
  %5377 = vmatprep.subr.mxu0 %v5360
  %5378 = vmatpush1.msra.mxu0 %v5359
  %5379 = vmatprep.subr.mxu0 %v5362
  %5380 = vmatpush1.msra.mxu0 %v5361
  %5381 = vmatprep.subr.mxu0 %v5364
  %5382 = vmatpush1.msra.mxu0 %v5363
  %5383 = vmatprep.subr.mxu0 %v5366
  %5384 = vmatpush1.msra.mxu0 %v5365
  %5385 = vmatprep.subr.mxu0 %v5368
  %5386 = vmatpush1.msra.mxu0 %v5367
  %5387 = vmatprep.subr.mxu0 %v5370
  %5388 = vmatpush1.msra.mxu0 %v5369
  %5389 = vmatprep.subr.mxu0 %v5372
  %5390 = vmatpush1.msra.mxu0 %v5371
  %5391 = vmatprep.subr.mxu0 %v5374
  %5392 = vmatpush1.msra.mxu0 %v5373
  %5393 = vmatprep.subr.mxu0 0.0
  %5394 = vmatpush1.msra.mxu0 0.0
  %5395 = vmatprep.subr.mxu0 0.0
  %5396 = vmatpush1.msra.mxu0 0.0
  %5397 = vmatprep.subr.mxu0 0.0
  %5398 = vmatpush1.msra.mxu0 0.0
  %5399 = vmatprep.subr.mxu0 0.0
  %5400 = vmatpush1.msra.mxu0 0.0
  %5401 = vmatprep.subr.mxu0 0.0
  %5402 = vmatpush1.msra.mxu0 0.0
  %5403 = vmatprep.subr.mxu0 0.0
  %5404 = vmatpush1.msra.mxu0 0.0
  %5405 = vmatprep.subr.mxu0 0.0
  %5406 = vmatpush1.msra.mxu0 0.0
  %5407 = vmatprep.subr.mxu0 0.0
  %5408 = vmatpush1.msra.mxu0 0.0
  %5409 = vmatprep.subr.mxu0 0.0
  %5410 = vmatpush1.msra.mxu0 0.0
  %5411 = vmatprep.subr.mxu0 0.0
  %5412 = vmatpush1.msra.mxu0 0.0
  %5413 = vmatprep.subr.mxu0 0.0
  %5414 = vmatpush1.msra.mxu0 0.0
  %5415 = vmatprep.subr.mxu0 0.0
  %5416 = vmatpush1.msra.mxu0 0.0
  %5417 = vmatprep.subr.mxu0 0.0
  %5418 = vmatpush1.msra.mxu0 0.0
  %5419 = vmatprep.subr.mxu0 0.0
  %5420 = vmatpush1.msra.mxu0 0.0
  %5421 = vmatprep.subr.mxu0 0.0
  %5422 = vmatpush1.msra.mxu0 0.0
  %5423 = vmatprep.subr.mxu0 0.0
  %5424 = vmatpush1.msra.mxu0 0.0
  %5425 = vmatprep.subr.mxu0 0.0
  %5426 = vmatpush1.msra.mxu0 0.0
  %5427 = vmatprep.subr.mxu0 0.0
  %5428 = vmatpush1.msra.mxu0 0.0
  %5429 = vmatprep.subr.mxu0 0.0
  %5430 = vmatpush1.msra.mxu0 0.0
  %5431 = vmatprep.subr.mxu0 0.0
  %5432 = vmatpush1.msra.mxu0 0.0
  %5433 = vmatprep.subr.mxu0 0.0
  %5434 = vmatpush1.msra.mxu0 0.0
  %5435 = vmatprep.subr.mxu0 0.0
  %5436 = vmatpush1.msra.mxu0 0.0
  %5437 = vmatprep.subr.mxu0 0.0
  %5438 = vmatpush1.msra.mxu0 0.0
  %5439 = vmatprep.subr.mxu0 0.0
  %5440 = vmatpush1.msra.mxu0 0.0
  %5441 = vmatprep.mubr.f32.mxu0 0.0
  %5442 = vmatmul.mubr.f32.gmra.mrb[0].mxu0 %v5375
  %v5443 = vpop.f32.mrb[0].mxu0
  %v5444 = vadd.f32 0.0, %v5443
  %v5445 = vpop.f32.mrb[0].mxu0
  %v5446 = vadd.f32 0.0, %v5445
  %5447 = vdwg.mxu0
  %v5448 = vadd.f32 %v5357, %v5444
  %v5449 = vadd.f32 %v5358, %v5446
  %v5450 = vxor.u32 %v5355, 2147483648
  %v5451 = vxor.u32 %v5356, 2147483648
  %v5452 = vmul.f32 %v5450, 1.442695
  %v5453 = vpow.pop %v5452
  %v5454 = vmul.f32 %v5451, 1.442695
  %v5455 = vpow.pop %v5454
  %v5456 = vadd.f32 %v5453, 1.0
  %v5457 = vadd.f32 %v5455, 1.0
  %v5458 = vrcp.pop %v5456
  %v5459 = vmul.f32 1.0, %v5458
  %v5460 = vrcp.pop %v5457
  %v5461 = vmul.f32 1.0, %v5460
  %v5462 = vtanh.pop %v5356
  %v5463 = vmul.f32 %v5459, %v5220
  %5465 = vrot.lane.b32.xlu0 %v5462, 64
  %v5466 = vpop.permute.xlu0 %5465
  %v5468 = vmul.f32 %v5459, %v5466
  %5470 = vrot.lane.b32.xlu0 %v5468, 64
  %v5471 = vpop.permute.xlu0 %5470
  %v5473 = vadd.f32 %v5463, %v5471
  %v5474 = vtanh.pop %v5473
  %5476 = vrot.lane.b32.xlu0 %v5474, 64
  %v5477 = vpop.permute.xlu0 %5476
  %v5479 = vmul.f32 %v5461, %v5477
  %v5480 = vxor.u32 %v5448, 2147483648
  %v5481 = vxor.u32 %v5449, 2147483648
  %v5482 = vmul.f32 %v5480, 1.442695
  %v5483 = vpow.pop %v5482
  %v5484 = vmul.f32 %v5481, 1.442695
  %v5485 = vpow.pop %v5484
  %v5486 = vadd.f32 %v5483, 1.0
  %v5487 = vadd.f32 %v5485, 1.0
  %v5488 = vrcp.pop %v5486
  %v5489 = vmul.f32 1.0, %v5488
  %v5490 = vrcp.pop %v5487
  %v5491 = vmul.f32 1.0, %v5490
  %v5492 = vtanh.pop %v5449
  %v5493 = vmul.f32 %v5489, %v5250
  %5495 = vrot.lane.b32.xlu0 %v5492, 64
  %v5496 = vpop.permute.xlu0 %5495
  %v5498 = vmul.f32 %v5489, %v5496
  %5500 = vrot.lane.b32.xlu0 %v5498, 64
  %v5501 = vpop.permute.xlu0 %5500
  %v5503 = vadd.f32 %v5493, %v5501
  %v5504 = vtanh.pop %v5503
  %5506 = vrot.lane.b32.xlu0 %v5504, 64
  %v5507 = vpop.permute.xlu0 %5506
  %v5509 = vmul.f32 %v5491, %v5507
  %5510 = vst.msk [vmem:[%s9 + $0x20] sm:$0xff] %vm4488, %v5479
  %5512 = vrot.lane.b32.xlu0 %v5509, 64
  %v5513 = vpop.permute.xlu0 %5512
  %5515 = vst.msk [vmem:[%s9 + $0x18] sm:$0xff] %vm4494, %v5513
  %v5516 = vld [vmem:[#allocation4 + $0xa0] sm:$0xff]
  %v5517 = vld [vmem:[#allocation4 + $0xa8] sm:$0xff]
  %v5518 = vld [vmem:[%s6] sm:$0xff]
  %v5519 = vld [vmem:[%s6 + $0x8] sm:$0xff]
  %v5520 = vld [vmem:[%s6 + $0x10] sm:$0xff]
  %v5521 = vld [vmem:[%s6 + $0x18] sm:$0xff]
  %v5522 = vld [vmem:[%s6 + $0x20] sm:$0xff]
  %v5523 = vld [vmem:[%s6 + $0x28] sm:$0xff]
  %v5524 = vld [vmem:[%s6 + $0x30] sm:$0xff]
  %v5525 = vld [vmem:[%s6 + $0x38] sm:$0xff]
  %v5526 = vld [vmem:[%s6 + $0x40] sm:$0xff]
  %v5527 = vld [vmem:[%s6 + $0x48] sm:$0xff]
  %v5528 = vld [vmem:[%s6 + $0x50] sm:$0xff]
  %v5529 = vld [vmem:[%s6 + $0x58] sm:$0xff]
  %v5530 = vld [vmem:[%s6 + $0x60] sm:$0xff]
  %v5531 = vld [vmem:[%s6 + $0x68] sm:$0xff]
  %v5532 = vld [vmem:[%s6 + $0x70] sm:$0xff]
  %v5533 = vld [vmem:[%s6 + $0x78] sm:$0xff]
  %v5535 = vsel %vm4488, %v5479, 0
  %5537 = vmatprep.subr.mxu0 %v5519
  %5538 = vmatpush1.msra.mxu0 %v5518
  %5539 = vmatprep.subr.mxu0 %v5521
  %5540 = vmatpush1.msra.mxu0 %v5520
  %5541 = vmatprep.subr.mxu0 %v5523
  %5542 = vmatpush1.msra.mxu0 %v5522
  %5543 = vmatprep.subr.mxu0 %v5525
  %5544 = vmatpush1.msra.mxu0 %v5524
  %5545 = vmatprep.subr.mxu0 %v5527
  %5546 = vmatpush1.msra.mxu0 %v5526
  %5547 = vmatprep.subr.mxu0 %v5529
  %5548 = vmatpush1.msra.mxu0 %v5528
  %5549 = vmatprep.subr.mxu0 %v5531
  %5550 = vmatpush1.msra.mxu0 %v5530
  %5551 = vmatprep.subr.mxu0 %v5533
  %5552 = vmatpush1.msra.mxu0 %v5532
  %5553 = vmatprep.subr.mxu0 0.0
  %5554 = vmatpush1.msra.mxu0 0.0
  %5555 = vmatprep.subr.mxu0 0.0
  %5556 = vmatpush1.msra.mxu0 0.0
  %5557 = vmatprep.subr.mxu0 0.0
  %5558 = vmatpush1.msra.mxu0 0.0
  %5559 = vmatprep.subr.mxu0 0.0
  %5560 = vmatpush1.msra.mxu0 0.0
  %5561 = vmatprep.subr.mxu0 0.0
  %5562 = vmatpush1.msra.mxu0 0.0
  %5563 = vmatprep.subr.mxu0 0.0
  %5564 = vmatpush1.msra.mxu0 0.0
  %5565 = vmatprep.subr.mxu0 0.0
  %5566 = vmatpush1.msra.mxu0 0.0
  %5567 = vmatprep.subr.mxu0 0.0
  %5568 = vmatpush1.msra.mxu0 0.0
  %5569 = vmatprep.subr.mxu0 0.0
  %5570 = vmatpush1.msra.mxu0 0.0
  %5571 = vmatprep.subr.mxu0 0.0
  %5572 = vmatpush1.msra.mxu0 0.0
  %5573 = vmatprep.subr.mxu0 0.0
  %5574 = vmatpush1.msra.mxu0 0.0
  %5575 = vmatprep.subr.mxu0 0.0
  %5576 = vmatpush1.msra.mxu0 0.0
  %5577 = vmatprep.subr.mxu0 0.0
  %5578 = vmatpush1.msra.mxu0 0.0
  %5579 = vmatprep.subr.mxu0 0.0
  %5580 = vmatpush1.msra.mxu0 0.0
  %5581 = vmatprep.subr.mxu0 0.0
  %5582 = vmatpush1.msra.mxu0 0.0
  %5583 = vmatprep.subr.mxu0 0.0
  %5584 = vmatpush1.msra.mxu0 0.0
  %5585 = vmatprep.subr.mxu0 0.0
  %5586 = vmatpush1.msra.mxu0 0.0
  %5587 = vmatprep.subr.mxu0 0.0
  %5588 = vmatpush1.msra.mxu0 0.0
  %5589 = vmatprep.subr.mxu0 0.0
  %5590 = vmatpush1.msra.mxu0 0.0
  %5591 = vmatprep.subr.mxu0 0.0
  %5592 = vmatpush1.msra.mxu0 0.0
  %5593 = vmatprep.subr.mxu0 0.0
  %5594 = vmatpush1.msra.mxu0 0.0
  %5595 = vmatprep.subr.mxu0 0.0
  %5596 = vmatpush1.msra.mxu0 0.0
  %5597 = vmatprep.subr.mxu0 0.0
  %5598 = vmatpush1.msra.mxu0 0.0
  %5599 = vmatprep.subr.mxu0 0.0
  %5600 = vmatpush1.msra.mxu0 0.0
  %5601 = vmatprep.mubr.f32.mxu0 0.0
  %5602 = vmatmul.mubr.f32.gmra.mrb[0].mxu0 %v5535
  %v5603 = vpop.f32.mrb[0].mxu0
  %v5604 = vadd.f32 0.0, %v5603
  %v5605 = vpop.f32.mrb[0].mxu0
  %v5606 = vadd.f32 0.0, %v5605
  %5607 = vdwg.mxu0
  %v5608 = vadd.f32 %v5516, %v5604
  %v5609 = vadd.f32 %v5517, %v5606
  %v5610 = vld [vmem:[#allocation4 + $0x50] sm:$0xff]
  %v5611 = vld [vmem:[#allocation4 + $0x58] sm:$0xff]
  %v5612 = vld [vmem:[%s7] sm:$0xff]
  %v5613 = vld [vmem:[%s7 + $0x8] sm:$0xff]
  %v5614 = vld [vmem:[%s7 + $0x10] sm:$0xff]
  %v5615 = vld [vmem:[%s7 + $0x18] sm:$0xff]
  %v5616 = vld [vmem:[%s7 + $0x20] sm:$0xff]
  %v5617 = vld [vmem:[%s7 + $0x28] sm:$0xff]
  %v5618 = vld [vmem:[%s7 + $0x30] sm:$0xff]
  %v5619 = vld [vmem:[%s7 + $0x38] sm:$0xff]
  %v5620 = vld [vmem:[%s7 + $0x40] sm:$0xff]
  %v5621 = vld [vmem:[%s7 + $0x48] sm:$0xff]
  %v5622 = vld [vmem:[%s7 + $0x50] sm:$0xff]
  %v5623 = vld [vmem:[%s7 + $0x58] sm:$0xff]
  %v5624 = vld [vmem:[%s7 + $0x60] sm:$0xff]
  %v5625 = vld [vmem:[%s7 + $0x68] sm:$0xff]
  %v5626 = vld [vmem:[%s7 + $0x70] sm:$0xff]
  %v5627 = vld [vmem:[%s7 + $0x78] sm:$0xff]
  %v5628 = vsel %vm4488, %v5509, 0
  %5630 = vmatprep.subr.mxu0 %v5613
  %5631 = vmatpush1.msra.mxu0 %v5612
  %5632 = vmatprep.subr.mxu0 %v5615
  %5633 = vmatpush1.msra.mxu0 %v5614
  %5634 = vmatprep.subr.mxu0 %v5617
  %5635 = vmatpush1.msra.mxu0 %v5616
  %5636 = vmatprep.subr.mxu0 %v5619
  %5637 = vmatpush1.msra.mxu0 %v5618
  %5638 = vmatprep.subr.mxu0 %v5621
  %5639 = vmatpush1.msra.mxu0 %v5620
  %5640 = vmatprep.subr.mxu0 %v5623
  %5641 = vmatpush1.msra.mxu0 %v5622
  %5642 = vmatprep.subr.mxu0 %v5625
  %5643 = vmatpush1.msra.mxu0 %v5624
  %5644 = vmatprep.subr.mxu0 %v5627
  %5645 = vmatpush1.msra.mxu0 %v5626
  %5646 = vmatprep.subr.mxu0 0.0
  %5647 = vmatpush1.msra.mxu0 0.0
  %5648 = vmatprep.subr.mxu0 0.0
  %5649 = vmatpush1.msra.mxu0 0.0
  %5650 = vmatprep.subr.mxu0 0.0
  %5651 = vmatpush1.msra.mxu0 0.0
  %5652 = vmatprep.subr.mxu0 0.0
  %5653 = vmatpush1.msra.mxu0 0.0
  %5654 = vmatprep.subr.mxu0 0.0
  %5655 = vmatpush1.msra.mxu0 0.0
  %5656 = vmatprep.subr.mxu0 0.0
  %5657 = vmatpush1.msra.mxu0 0.0
  %5658 = vmatprep.subr.mxu0 0.0
  %5659 = vmatpush1.msra.mxu0 0.0
  %5660 = vmatprep.subr.mxu0 0.0
  %5661 = vmatpush1.msra.mxu0 0.0
  %5662 = vmatprep.subr.mxu0 0.0
  %5663 = vmatpush1.msra.mxu0 0.0
  %5664 = vmatprep.subr.mxu0 0.0
  %5665 = vmatpush1.msra.mxu0 0.0
  %5666 = vmatprep.subr.mxu0 0.0
  %5667 = vmatpush1.msra.mxu0 0.0
  %5668 = vmatprep.subr.mxu0 0.0
  %5669 = vmatpush1.msra.mxu0 0.0
  %5670 = vmatprep.subr.mxu0 0.0
  %5671 = vmatpush1.msra.mxu0 0.0
  %5672 = vmatprep.subr.mxu0 0.0
  %5673 = vmatpush1.msra.mxu0 0.0
  %5674 = vmatprep.subr.mxu0 0.0
  %5675 = vmatpush1.msra.mxu0 0.0
  %5676 = vmatprep.subr.mxu0 0.0
  %5677 = vmatpush1.msra.mxu0 0.0
  %5678 = vmatprep.subr.mxu0 0.0
  %5679 = vmatpush1.msra.mxu0 0.0
  %5680 = vmatprep.subr.mxu0 0.0
  %5681 = vmatpush1.msra.mxu0 0.0
  %5682 = vmatprep.subr.mxu0 0.0
  %5683 = vmatpush1.msra.mxu0 0.0
  %5684 = vmatprep.subr.mxu0 0.0
  %5685 = vmatpush1.msra.mxu0 0.0
  %5686 = vmatprep.subr.mxu0 0.0
  %5687 = vmatpush1.msra.mxu0 0.0
  %5688 = vmatprep.subr.mxu0 0.0
  %5689 = vmatpush1.msra.mxu0 0.0
  %5690 = vmatprep.subr.mxu0 0.0
  %5691 = vmatpush1.msra.mxu0 0.0
  %5692 = vmatprep.subr.mxu0 0.0
  %5693 = vmatpush1.msra.mxu0 0.0
  %5694 = vmatprep.mubr.f32.mxu0 0.0
  %5695 = vmatmul.mubr.f32.gmra.mrb[0].mxu0 %v5628
  %v5696 = vpop.f32.mrb[0].mxu0
  %v5697 = vadd.f32 0.0, %v5696
  %v5698 = vpop.f32.mrb[0].mxu0
  %v5699 = vadd.f32 0.0, %v5698
  %5700 = vdwg.mxu0
  %v5701 = vadd.f32 %v5610, %v5697
  %v5702 = vadd.f32 %v5611, %v5699
  %v5703 = vxor.u32 %v5608, 2147483648
  %v5704 = vxor.u32 %v5609, 2147483648
  %v5705 = vmul.f32 %v5703, 1.442695
  %v5706 = vpow.pop %v5705
  %v5707 = vmul.f32 %v5704, 1.442695
  %v5708 = vpow.pop %v5707
  %v5709 = vadd.f32 %v5706, 1.0
  %v5710 = vadd.f32 %v5708, 1.0
  %v5711 = vrcp.pop %v5709
  %v5712 = vmul.f32 1.0, %v5711
  %v5713 = vrcp.pop %v5710
  %v5714 = vmul.f32 1.0, %v5713
  %v5715 = vtanh.pop %v5609
  %v5716 = vmul.f32 %v5712, %v5473
  %5718 = vrot.lane.b32.xlu0 %v5715, 64
  %v5719 = vpop.permute.xlu0 %5718
  %v5721 = vmul.f32 %v5712, %v5719
  %5723 = vrot.lane.b32.xlu0 %v5721, 64
  %v5724 = vpop.permute.xlu0 %5723
  %v5726 = vadd.f32 %v5716, %v5724
  %v5727 = vtanh.pop %v5726
  %5729 = vrot.lane.b32.xlu0 %v5727, 64
  %v5730 = vpop.permute.xlu0 %5729
  %v5732 = vmul.f32 %v5714, %v5730
  %v5733 = vxor.u32 %v5701, 2147483648
  %v5734 = vxor.u32 %v5702, 2147483648
  %v5735 = vmul.f32 %v5733, 1.442695
  %v5736 = vpow.pop %v5735
  %v5737 = vmul.f32 %v5734, 1.442695
  %v5738 = vpow.pop %v5737
  %v5739 = vadd.f32 %v5736, 1.0
  %v5740 = vadd.f32 %v5738, 1.0
  %v5741 = vrcp.pop %v5739
  %v5742 = vmul.f32 1.0, %v5741
  %v5743 = vrcp.pop %v5740
  %v5744 = vmul.f32 1.0, %v5743
  %v5745 = vtanh.pop %v5702
  %v5746 = vmul.f32 %v5742, %v5503
  %5748 = vrot.lane.b32.xlu0 %v5745, 64
  %v5749 = vpop.permute.xlu0 %5748
  %v5751 = vmul.f32 %v5742, %v5749
  %5753 = vrot.lane.b32.xlu0 %v5751, 64
  %v5754 = vpop.permute.xlu0 %5753
  %v5756 = vadd.f32 %v5746, %v5754
  %v5757 = vtanh.pop %v5756
  %5759 = vrot.lane.b32.xlu0 %v5757, 64
  %v5760 = vpop.permute.xlu0 %5759
  %v5762 = vmul.f32 %v5744, %v5760
  %5763 = vst.msk [vmem:[%s9 + $0x28] sm:$0xff] %vm4488, %v5732
  %5765 = vrot.lane.b32.xlu0 %v5762, 64
  %v5766 = vpop.permute.xlu0 %5765
  %5768 = vst.msk [vmem:[%s9 + $0x10] sm:$0xff] %vm4494, %v5766
  %v5769 = vld [vmem:[#allocation4 + $0xc0] sm:$0xff]
  %v5770 = vld [vmem:[#allocation4 + $0xc8] sm:$0xff]
  %v5771 = vld [vmem:[%s6] sm:$0xff]
  %v5772 = vld [vmem:[%s6 + $0x8] sm:$0xff]
  %v5773 = vld [vmem:[%s6 + $0x10] sm:$0xff]
  %v5774 = vld [vmem:[%s6 + $0x18] sm:$0xff]
  %v5775 = vld [vmem:[%s6 + $0x20] sm:$0xff]
  %v5776 = vld [vmem:[%s6 + $0x28] sm:$0xff]
  %v5777 = vld [vmem:[%s6 + $0x30] sm:$0xff]
  %v5778 = vld [vmem:[%s6 + $0x38] sm:$0xff]
  %v5779 = vld [vmem:[%s6 + $0x40] sm:$0xff]
  %v5780 = vld [vmem:[%s6 + $0x48] sm:$0xff]
  %v5781 = vld [vmem:[%s6 + $0x50] sm:$0xff]
  %v5782 = vld [vmem:[%s6 + $0x58] sm:$0xff]
  %v5783 = vld [vmem:[%s6 + $0x60] sm:$0xff]
  %v5784 = vld [vmem:[%s6 + $0x68] sm:$0xff]
  %v5785 = vld [vmem:[%s6 + $0x70] sm:$0xff]
  %v5786 = vld [vmem:[%s6 + $0x78] sm:$0xff]
  %v5788 = vsel %vm4488, %v5732, 0
  %5790 = vmatprep.subr.mxu0 %v5772
  %5791 = vmatpush1.msra.mxu0 %v5771
  %5792 = vmatprep.subr.mxu0 %v5774
  %5793 = vmatpush1.msra.mxu0 %v5773
  %5794 = vmatprep.subr.mxu0 %v5776
  %5795 = vmatpush1.msra.mxu0 %v5775
  %5796 = vmatprep.subr.mxu0 %v5778
  %5797 = vmatpush1.msra.mxu0 %v5777
  %5798 = vmatprep.subr.mxu0 %v5780
  %5799 = vmatpush1.msra.mxu0 %v5779
  %5800 = vmatprep.subr.mxu0 %v5782
  %5801 = vmatpush1.msra.mxu0 %v5781
  %5802 = vmatprep.subr.mxu0 %v5784
  %5803 = vmatpush1.msra.mxu0 %v5783
  %5804 = vmatprep.subr.mxu0 %v5786
  %5805 = vmatpush1.msra.mxu0 %v5785
  %5806 = vmatprep.subr.mxu0 0.0
  %5807 = vmatpush1.msra.mxu0 0.0
  %5808 = vmatprep.subr.mxu0 0.0
  %5809 = vmatpush1.msra.mxu0 0.0
  %5810 = vmatprep.subr.mxu0 0.0
  %5811 = vmatpush1.msra.mxu0 0.0
  %5812 = vmatprep.subr.mxu0 0.0
  %5813 = vmatpush1.msra.mxu0 0.0
  %5814 = vmatprep.subr.mxu0 0.0
  %5815 = vmatpush1.msra.mxu0 0.0
  %5816 = vmatprep.subr.mxu0 0.0
  %5817 = vmatpush1.msra.mxu0 0.0
  %5818 = vmatprep.subr.mxu0 0.0
  %5819 = vmatpush1.msra.mxu0 0.0
  %5820 = vmatprep.subr.mxu0 0.0
  %5821 = vmatpush1.msra.mxu0 0.0
  %5822 = vmatprep.subr.mxu0 0.0
  %5823 = vmatpush1.msra.mxu0 0.0
  %5824 = vmatprep.subr.mxu0 0.0
  %5825 = vmatpush1.msra.mxu0 0.0
  %5826 = vmatprep.subr.mxu0 0.0
  %5827 = vmatpush1.msra.mxu0 0.0
  %5828 = vmatprep.subr.mxu0 0.0
  %5829 = vmatpush1.msra.mxu0 0.0
  %5830 = vmatprep.subr.mxu0 0.0
  %5831 = vmatpush1.msra.mxu0 0.0
  %5832 = vmatprep.subr.mxu0 0.0
  %5833 = vmatpush1.msra.mxu0 0.0
  %5834 = vmatprep.subr.mxu0 0.0
  %5835 = vmatpush1.msra.mxu0 0.0
  %5836 = vmatprep.subr.mxu0 0.0
  %5837 = vmatpush1.msra.mxu0 0.0
  %5838 = vmatprep.subr.mxu0 0.0
  %5839 = vmatpush1.msra.mxu0 0.0
  %5840 = vmatprep.subr.mxu0 0.0
  %5841 = vmatpush1.msra.mxu0 0.0
  %5842 = vmatprep.subr.mxu0 0.0
  %5843 = vmatpush1.msra.mxu0 0.0
  %5844 = vmatprep.subr.mxu0 0.0
  %5845 = vmatpush1.msra.mxu0 0.0
  %5846 = vmatprep.subr.mxu0 0.0
  %5847 = vmatpush1.msra.mxu0 0.0
  %5848 = vmatprep.subr.mxu0 0.0
  %5849 = vmatpush1.msra.mxu0 0.0
  %5850 = vmatprep.subr.mxu0 0.0
  %5851 = vmatpush1.msra.mxu0 0.0
  %5852 = vmatprep.subr.mxu0 0.0
  %5853 = vmatpush1.msra.mxu0 0.0
  %5854 = vmatprep.mubr.f32.mxu0 0.0
  %5855 = vmatmul.mubr.f32.gmra.mrb[0].mxu0 %v5788
  %v5856 = vpop.f32.mrb[0].mxu0
  %v5857 = vadd.f32 0.0, %v5856
  %v5858 = vpop.f32.mrb[0].mxu0
  %v5859 = vadd.f32 0.0, %v5858
  %5860 = vdwg.mxu0
  %v5861 = vadd.f32 %v5769, %v5857
  %v5862 = vadd.f32 %v5770, %v5859
  %v5863 = vld [vmem:[#allocation4 + $0x30] sm:$0xff]
  %v5864 = vld [vmem:[#allocation4 + $0x38] sm:$0xff]
  %v5865 = vld [vmem:[%s7] sm:$0xff]
  %v5866 = vld [vmem:[%s7 + $0x8] sm:$0xff]
  %v5867 = vld [vmem:[%s7 + $0x10] sm:$0xff]
  %v5868 = vld [vmem:[%s7 + $0x18] sm:$0xff]
  %v5869 = vld [vmem:[%s7 + $0x20] sm:$0xff]
  %v5870 = vld [vmem:[%s7 + $0x28] sm:$0xff]
  %v5871 = vld [vmem:[%s7 + $0x30] sm:$0xff]
  %v5872 = vld [vmem:[%s7 + $0x38] sm:$0xff]
  %v5873 = vld [vmem:[%s7 + $0x40] sm:$0xff]
  %v5874 = vld [vmem:[%s7 + $0x48] sm:$0xff]
  %v5875 = vld [vmem:[%s7 + $0x50] sm:$0xff]
  %v5876 = vld [vmem:[%s7 + $0x58] sm:$0xff]
  %v5877 = vld [vmem:[%s7 + $0x60] sm:$0xff]
  %v5878 = vld [vmem:[%s7 + $0x68] sm:$0xff]
  %v5879 = vld [vmem:[%s7 + $0x70] sm:$0xff]
  %v5880 = vld [vmem:[%s7 + $0x78] sm:$0xff]
  %v5881 = vsel %vm4488, %v5762, 0
  %5883 = vmatprep.subr.mxu0 %v5866
  %5884 = vmatpush1.msra.mxu0 %v5865
  %5885 = vmatprep.subr.mxu0 %v5868
  %5886 = vmatpush1.msra.mxu0 %v5867
  %5887 = vmatprep.subr.mxu0 %v5870
  %5888 = vmatpush1.msra.mxu0 %v5869
  %5889 = vmatprep.subr.mxu0 %v5872
  %5890 = vmatpush1.msra.mxu0 %v5871
  %5891 = vmatprep.subr.mxu0 %v5874
  %5892 = vmatpush1.msra.mxu0 %v5873
  %5893 = vmatprep.subr.mxu0 %v5876
  %5894 = vmatpush1.msra.mxu0 %v5875
  %5895 = vmatprep.subr.mxu0 %v5878
  %5896 = vmatpush1.msra.mxu0 %v5877
  %5897 = vmatprep.subr.mxu0 %v5880
  %5898 = vmatpush1.msra.mxu0 %v5879
  %5899 = vmatprep.subr.mxu0 0.0
  %5900 = vmatpush1.msra.mxu0 0.0
  %5901 = vmatprep.subr.mxu0 0.0
  %5902 = vmatpush1.msra.mxu0 0.0
  %5903 = vmatprep.subr.mxu0 0.0
  %5904 = vmatpush1.msra.mxu0 0.0
  %5905 = vmatprep.subr.mxu0 0.0
  %5906 = vmatpush1.msra.mxu0 0.0
  %5907 = vmatprep.subr.mxu0 0.0
  %5908 = vmatpush1.msra.mxu0 0.0
  %5909 = vmatprep.subr.mxu0 0.0
  %5910 = vmatpush1.msra.mxu0 0.0
  %5911 = vmatprep.subr.mxu0 0.0
  %5912 = vmatpush1.msra.mxu0 0.0
  %5913 = vmatprep.subr.mxu0 0.0
  %5914 = vmatpush1.msra.mxu0 0.0
  %5915 = vmatprep.subr.mxu0 0.0
  %5916 = vmatpush1.msra.mxu0 0.0
  %5917 = vmatprep.subr.mxu0 0.0
  %5918 = vmatpush1.msra.mxu0 0.0
  %5919 = vmatprep.subr.mxu0 0.0
  %5920 = vmatpush1.msra.mxu0 0.0
  %5921 = vmatprep.subr.mxu0 0.0
  %5922 = vmatpush1.msra.mxu0 0.0
  %5923 = vmatprep.subr.mxu0 0.0
  %5924 = vmatpush1.msra.mxu0 0.0
  %5925 = vmatprep.subr.mxu0 0.0
  %5926 = vmatpush1.msra.mxu0 0.0
  %5927 = vmatprep.subr.mxu0 0.0
  %5928 = vmatpush1.msra.mxu0 0.0
  %5929 = vmatprep.subr.mxu0 0.0
  %5930 = vmatpush1.msra.mxu0 0.0
  %5931 = vmatprep.subr.mxu0 0.0
  %5932 = vmatpush1.msra.mxu0 0.0
  %5933 = vmatprep.subr.mxu0 0.0
  %5934 = vmatpush1.msra.mxu0 0.0
  %5935 = vmatprep.subr.mxu0 0.0
  %5936 = vmatpush1.msra.mxu0 0.0
  %5937 = vmatprep.subr.mxu0 0.0
  %5938 = vmatpush1.msra.mxu0 0.0
  %5939 = vmatprep.subr.mxu0 0.0
  %5940 = vmatpush1.msra.mxu0 0.0
  %5941 = vmatprep.subr.mxu0 0.0
  %5942 = vmatpush1.msra.mxu0 0.0
  %5943 = vmatprep.subr.mxu0 0.0
  %5944 = vmatpush1.msra.mxu0 0.0
  %5945 = vmatprep.subr.mxu0 0.0
  %5946 = vmatpush1.msra.mxu0 0.0
  %5947 = vmatprep.mubr.f32.mxu0 0.0
  %5948 = vmatmul.mubr.f32.gmra.mrb[0].mxu0 %v5881
  %v5949 = vpop.f32.mrb[0].mxu0
  %v5950 = vadd.f32 0.0, %v5949
  %v5951 = vpop.f32.mrb[0].mxu0
  %v5952 = vadd.f32 0.0, %v5951
  %5953 = vdwg.mxu0
  %v5954 = vadd.f32 %v5863, %v5950
  %v5955 = vadd.f32 %v5864, %v5952
  %v5956 = vxor.u32 %v5861, 2147483648
  %v5957 = vxor.u32 %v5862, 2147483648
  %v5958 = vmul.f32 %v5956, 1.442695
  %v5959 = vpow.pop %v5958
  %v5960 = vmul.f32 %v5957, 1.442695
  %v5961 = vpow.pop %v5960
  %v5962 = vadd.f32 %v5959, 1.0
  %v5963 = vadd.f32 %v5961, 1.0
  %v5964 = vrcp.pop %v5962
  %v5965 = vmul.f32 1.0, %v5964
  %v5966 = vrcp.pop %v5963
  %v5967 = vmul.f32 1.0, %v5966
  %v5968 = vtanh.pop %v5862
  %v5969 = vmul.f32 %v5965, %v5726
  %5971 = vrot.lane.b32.xlu0 %v5968, 64
  %v5972 = vpop.permute.xlu0 %5971
  %v5974 = vmul.f32 %v5965, %v5972
  %5976 = vrot.lane.b32.xlu0 %v5974, 64
  %v5977 = vpop.permute.xlu0 %5976
  %v5979 = vadd.f32 %v5969, %v5977
  %v5980 = vtanh.pop %v5979
  %5982 = vrot.lane.b32.xlu0 %v5980, 64
  %v5983 = vpop.permute.xlu0 %5982
  %v5985 = vmul.f32 %v5967, %v5983
  %v5986 = vxor.u32 %v5954, 2147483648
  %v5987 = vxor.u32 %v5955, 2147483648
  %v5988 = vmul.f32 %v5986, 1.442695
  %v5989 = vpow.pop %v5988
  %v5990 = vmul.f32 %v5987, 1.442695
  %v5991 = vpow.pop %v5990
  %v5992 = vadd.f32 %v5989, 1.0
  %v5993 = vadd.f32 %v5991, 1.0
  %v5994 = vrcp.pop %v5992
  %v5995 = vmul.f32 1.0, %v5994
  %v5996 = vrcp.pop %v5993
  %v5997 = vmul.f32 1.0, %v5996
  %v5998 = vtanh.pop %v5955
  %v5999 = vmul.f32 %v5995, %v5756
  %6001 = vrot.lane.b32.xlu0 %v5998, 64
  %v6002 = vpop.permute.xlu0 %6001
  %v6004 = vmul.f32 %v5995, %v6002
  %6006 = vrot.lane.b32.xlu0 %v6004, 64
  %v6007 = vpop.permute.xlu0 %6006
  %v6009 = vadd.f32 %v5999, %v6007
  %v6010 = vtanh.pop %v6009
  %6012 = vrot.lane.b32.xlu0 %v6010, 64
  %v6013 = vpop.permute.xlu0 %6012
  %v6015 = vmul.f32 %v5997, %v6013
  %6016 = vst.msk [vmem:[%s9 + $0x30] sm:$0xff] %vm4488, %v5985
  %6018 = vrot.lane.b32.xlu0 %v6015, 64
  %v6019 = vpop.permute.xlu0 %6018
  %6021 = vst.msk [vmem:[%s9 + $0x8] sm:$0xff] %vm4494, %v6019
  %v6022 = vld [vmem:[#allocation4 + $0xe0] sm:$0xff]
  %v6023 = vld [vmem:[#allocation4 + $0xe8] sm:$0xff]
  %v6024 = vld [vmem:[%s6] sm:$0xff]
  %v6025 = vld [vmem:[%s6 + $0x8] sm:$0xff]
  %v6026 = vld [vmem:[%s6 + $0x10] sm:$0xff]
  %v6027 = vld [vmem:[%s6 + $0x18] sm:$0xff]
  %v6028 = vld [vmem:[%s6 + $0x20] sm:$0xff]
  %v6029 = vld [vmem:[%s6 + $0x28] sm:$0xff]
  %v6030 = vld [vmem:[%s6 + $0x30] sm:$0xff]
  %v6031 = vld [vmem:[%s6 + $0x38] sm:$0xff]
  %v6032 = vld [vmem:[%s6 + $0x40] sm:$0xff]
  %v6033 = vld [vmem:[%s6 + $0x48] sm:$0xff]
  %v6034 = vld [vmem:[%s6 + $0x50] sm:$0xff]
  %v6035 = vld [vmem:[%s6 + $0x58] sm:$0xff]
  %v6036 = vld [vmem:[%s6 + $0x60] sm:$0xff]
  %v6037 = vld [vmem:[%s6 + $0x68] sm:$0xff]
  %v6038 = vld [vmem:[%s6 + $0x70] sm:$0xff]
  %v6039 = vld [vmem:[%s6 + $0x78] sm:$0xff]
  %v6041 = vsel %vm4488, %v5985, 0
  %6043 = vmatprep.subr.mxu0 %v6025
  %6044 = vmatpush1.msra.mxu0 %v6024
  %6045 = vmatprep.subr.mxu0 %v6027
  %6046 = vmatpush1.msra.mxu0 %v6026
  %6047 = vmatprep.subr.mxu0 %v6029
  %6048 = vmatpush1.msra.mxu0 %v6028
  %6049 = vmatprep.subr.mxu0 %v6031
  %6050 = vmatpush1.msra.mxu0 %v6030
  %6051 = vmatprep.subr.mxu0 %v6033
  %6052 = vmatpush1.msra.mxu0 %v6032
  %6053 = vmatprep.subr.mxu0 %v6035
  %6054 = vmatpush1.msra.mxu0 %v6034
  %6055 = vmatprep.subr.mxu0 %v6037
  %6056 = vmatpush1.msra.mxu0 %v6036
  %6057 = vmatprep.subr.mxu0 %v6039
  %6058 = vmatpush1.msra.mxu0 %v6038
  %6059 = vmatprep.subr.mxu0 0.0
  %6060 = vmatpush1.msra.mxu0 0.0
  %6061 = vmatprep.subr.mxu0 0.0
  %6062 = vmatpush1.msra.mxu0 0.0
  %6063 = vmatprep.subr.mxu0 0.0
  %6064 = vmatpush1.msra.mxu0 0.0
  %6065 = vmatprep.subr.mxu0 0.0
  %6066 = vmatpush1.msra.mxu0 0.0
  %6067 = vmatprep.subr.mxu0 0.0
  %6068 = vmatpush1.msra.mxu0 0.0
  %6069 = vmatprep.subr.mxu0 0.0
  %6070 = vmatpush1.msra.mxu0 0.0
  %6071 = vmatprep.subr.mxu0 0.0
  %6072 = vmatpush1.msra.mxu0 0.0
  %6073 = vmatprep.subr.mxu0 0.0
  %6074 = vmatpush1.msra.mxu0 0.0
  %6075 = vmatprep.subr.mxu0 0.0
  %6076 = vmatpush1.msra.mxu0 0.0
  %6077 = vmatprep.subr.mxu0 0.0
  %6078 = vmatpush1.msra.mxu0 0.0
  %6079 = vmatprep.subr.mxu0 0.0
  %6080 = vmatpush1.msra.mxu0 0.0
  %6081 = vmatprep.subr.mxu0 0.0
  %6082 = vmatpush1.msra.mxu0 0.0
  %6083 = vmatprep.subr.mxu0 0.0
  %6084 = vmatpush1.msra.mxu0 0.0
  %6085 = vmatprep.subr.mxu0 0.0
  %6086 = vmatpush1.msra.mxu0 0.0
  %6087 = vmatprep.subr.mxu0 0.0
  %6088 = vmatpush1.msra.mxu0 0.0
  %6089 = vmatprep.subr.mxu0 0.0
  %6090 = vmatpush1.msra.mxu0 0.0
  %6091 = vmatprep.subr.mxu0 0.0
  %6092 = vmatpush1.msra.mxu0 0.0
  %6093 = vmatprep.subr.mxu0 0.0
  %6094 = vmatpush1.msra.mxu0 0.0
  %6095 = vmatprep.subr.mxu0 0.0
  %6096 = vmatpush1.msra.mxu0 0.0
  %6097 = vmatprep.subr.mxu0 0.0
  %6098 = vmatpush1.msra.mxu0 0.0
  %6099 = vmatprep.subr.mxu0 0.0
  %6100 = vmatpush1.msra.mxu0 0.0
  %6101 = vmatprep.subr.mxu0 0.0
  %6102 = vmatpush1.msra.mxu0 0.0
  %6103 = vmatprep.subr.mxu0 0.0
  %6104 = vmatpush1.msra.mxu0 0.0
  %6105 = vmatprep.subr.mxu0 0.0
  %6106 = vmatpush1.msra.mxu0 0.0
  %6107 = vmatprep.mubr.f32.mxu0 0.0
  %6108 = vmatmul.mubr.f32.gmra.mrb[0].mxu0 %v6041
  %v6109 = vpop.f32.mrb[0].mxu0
  %v6110 = vadd.f32 0.0, %v6109
  %v6111 = vpop.f32.mrb[0].mxu0
  %v6112 = vadd.f32 0.0, %v6111
  %6113 = vdwg.mxu0
  %v6114 = vadd.f32 %v6022, %v6110
  %v6115 = vadd.f32 %v6023, %v6112
  %v6116 = vld [vmem:[#allocation4 + $0x10] sm:$0xff]
  %v6117 = vld [vmem:[#allocation4 + $0x18] sm:$0xff]
  %v6118 = vld [vmem:[%s7] sm:$0xff]
  %v6119 = vld [vmem:[%s7 + $0x8] sm:$0xff]
  %v6120 = vld [vmem:[%s7 + $0x10] sm:$0xff]
  %v6121 = vld [vmem:[%s7 + $0x18] sm:$0xff]
  %v6122 = vld [vmem:[%s7 + $0x20] sm:$0xff]
  %v6123 = vld [vmem:[%s7 + $0x28] sm:$0xff]
  %v6124 = vld [vmem:[%s7 + $0x30] sm:$0xff]
  %v6125 = vld [vmem:[%s7 + $0x38] sm:$0xff]
  %v6126 = vld [vmem:[%s7 + $0x40] sm:$0xff]
  %v6127 = vld [vmem:[%s7 + $0x48] sm:$0xff]
  %v6128 = vld [vmem:[%s7 + $0x50] sm:$0xff]
  %v6129 = vld [vmem:[%s7 + $0x58] sm:$0xff]
  %v6130 = vld [vmem:[%s7 + $0x60] sm:$0xff]
  %v6131 = vld [vmem:[%s7 + $0x68] sm:$0xff]
  %v6132 = vld [vmem:[%s7 + $0x70] sm:$0xff]
  %v6133 = vld [vmem:[%s7 + $0x78] sm:$0xff]
  %v6134 = vsel %vm4488, %v6015, 0
  %6136 = vmatprep.subr.mxu0 %v6119
  %6137 = vmatpush1.msra.mxu0 %v6118
  %6138 = vmatprep.subr.mxu0 %v6121
  %6139 = vmatpush1.msra.mxu0 %v6120
  %6140 = vmatprep.subr.mxu0 %v6123
  %6141 = vmatpush1.msra.mxu0 %v6122
  %6142 = vmatprep.subr.mxu0 %v6125
  %6143 = vmatpush1.msra.mxu0 %v6124
  %6144 = vmatprep.subr.mxu0 %v6127
  %6145 = vmatpush1.msra.mxu0 %v6126
  %6146 = vmatprep.subr.mxu0 %v6129
  %6147 = vmatpush1.msra.mxu0 %v6128
  %6148 = vmatprep.subr.mxu0 %v6131
  %6149 = vmatpush1.msra.mxu0 %v6130
  %6150 = vmatprep.subr.mxu0 %v6133
  %6151 = vmatpush1.msra.mxu0 %v6132
  %6152 = vmatprep.subr.mxu0 0.0
  %6153 = vmatpush1.msra.mxu0 0.0
  %6154 = vmatprep.subr.mxu0 0.0
  %6155 = vmatpush1.msra.mxu0 0.0
  %6156 = vmatprep.subr.mxu0 0.0
  %6157 = vmatpush1.msra.mxu0 0.0
  %6158 = vmatprep.subr.mxu0 0.0
  %6159 = vmatpush1.msra.mxu0 0.0
  %6160 = vmatprep.subr.mxu0 0.0
  %6161 = vmatpush1.msra.mxu0 0.0
  %6162 = vmatprep.subr.mxu0 0.0
  %6163 = vmatpush1.msra.mxu0 0.0
  %6164 = vmatprep.subr.mxu0 0.0
  %6165 = vmatpush1.msra.mxu0 0.0
  %6166 = vmatprep.subr.mxu0 0.0
  %6167 = vmatpush1.msra.mxu0 0.0
  %6168 = vmatprep.subr.mxu0 0.0
  %6169 = vmatpush1.msra.mxu0 0.0
  %6170 = vmatprep.subr.mxu0 0.0
  %6171 = vmatpush1.msra.mxu0 0.0
  %6172 = vmatprep.subr.mxu0 0.0
  %6173 = vmatpush1.msra.mxu0 0.0
  %6174 = vmatprep.subr.mxu0 0.0
  %6175 = vmatpush1.msra.mxu0 0.0
  %6176 = vmatprep.subr.mxu0 0.0
  %6177 = vmatpush1.msra.mxu0 0.0
  %6178 = vmatprep.subr.mxu0 0.0
  %6179 = vmatpush1.msra.mxu0 0.0
  %6180 = vmatprep.subr.mxu0 0.0
  %6181 = vmatpush1.msra.mxu0 0.0
  %6182 = vmatprep.subr.mxu0 0.0
  %6183 = vmatpush1.msra.mxu0 0.0
  %6184 = vmatprep.subr.mxu0 0.0
  %6185 = vmatpush1.msra.mxu0 0.0
  %6186 = vmatprep.subr.mxu0 0.0
  %6187 = vmatpush1.msra.mxu0 0.0
  %6188 = vmatprep.subr.mxu0 0.0
  %6189 = vmatpush1.msra.mxu0 0.0
  %6190 = vmatprep.subr.mxu0 0.0
  %6191 = vmatpush1.msra.mxu0 0.0
  %6192 = vmatprep.subr.mxu0 0.0
  %6193 = vmatpush1.msra.mxu0 0.0
  %6194 = vmatprep.subr.mxu0 0.0
  %6195 = vmatpush1.msra.mxu0 0.0
  %6196 = vmatprep.subr.mxu0 0.0
  %6197 = vmatpush1.msra.mxu0 0.0
  %6198 = vmatprep.subr.mxu0 0.0
  %6199 = vmatpush1.msra.mxu0 0.0
  %6200 = vmatprep.mubr.f32.mxu0 0.0
  %6201 = vmatmul.mubr.f32.gmra.mrb[0].mxu0 %v6134
  %v6202 = vpop.f32.mrb[0].mxu0
  %v6203 = vadd.f32 0.0, %v6202
  %v6204 = vpop.f32.mrb[0].mxu0
  %v6205 = vadd.f32 0.0, %v6204
  %6206 = vdwg.mxu0
  %v6207 = vadd.f32 %v6116, %v6203
  %v6208 = vadd.f32 %v6117, %v6205
  %v6209 = vxor.u32 %v6114, 2147483648
  %v6210 = vxor.u32 %v6115, 2147483648
  %v6211 = vmul.f32 %v6209, 1.442695
  %v6212 = vpow.pop %v6211
  %v6213 = vmul.f32 %v6210, 1.442695
  %v6214 = vpow.pop %v6213
  %v6215 = vadd.f32 %v6212, 1.0
  %v6216 = vadd.f32 %v6214, 1.0
  %v6217 = vrcp.pop %v6215
  %v6218 = vmul.f32 1.0, %v6217
  %v6219 = vrcp.pop %v6216
  %v6220 = vmul.f32 1.0, %v6219
  %v6221 = vtanh.pop %v6115
  %v6222 = vmul.f32 %v6218, %v5979
  %6224 = vrot.lane.b32.xlu0 %v6221, 64
  %v6225 = vpop.permute.xlu0 %6224
  %v6227 = vmul.f32 %v6218, %v6225
  %6229 = vrot.lane.b32.xlu0 %v6227, 64
  %v6230 = vpop.permute.xlu0 %6229
  %v6232 = vadd.f32 %v6222, %v6230
  %v6233 = vtanh.pop %v6232
  %6235 = vrot.lane.b32.xlu0 %v6233, 64
  %v6236 = vpop.permute.xlu0 %6235
  %v6238 = vmul.f32 %v6220, %v6236
  %v6239 = vxor.u32 %v6207, 2147483648
  %v6240 = vxor.u32 %v6208, 2147483648
  %v6241 = vmul.f32 %v6239, 1.442695
  %v6242 = vpow.pop %v6241
  %v6243 = vmul.f32 %v6240, 1.442695
  %v6244 = vpow.pop %v6243
  %v6245 = vadd.f32 %v6242, 1.0
  %v6246 = vadd.f32 %v6244, 1.0
  %v6247 = vrcp.pop %v6245
  %v6248 = vmul.f32 1.0, %v6247
  %v6249 = vrcp.pop %v6246
  %v6250 = vmul.f32 1.0, %v6249
  %v6251 = vtanh.pop %v6208
  %v6252 = vmul.f32 %v6248, %v6009
  %6254 = vrot.lane.b32.xlu0 %v6251, 64
  %v6255 = vpop.permute.xlu0 %6254
  %v6257 = vmul.f32 %v6248, %v6255
  %6259 = vrot.lane.b32.xlu0 %v6257, 64
  %v6260 = vpop.permute.xlu0 %6259
  %v6262 = vadd.f32 %v6252, %v6260
  %v6263 = vtanh.pop %v6262
  %6265 = vrot.lane.b32.xlu0 %v6263, 64
  %v6266 = vpop.permute.xlu0 %6265
  %v6268 = vmul.f32 %v6250, %v6266
  %6269 = vst.msk [vmem:[%s9 + $0x38] sm:$0xff] %vm4488, %v6238
  %6271 = vrot.lane.b32.xlu0 %v6268, 64
  %v6272 = vpop.permute.xlu0 %6271
  %6274 = vst.msk [vmem:[%s9] sm:$0xff] %vm4494, %v6272
  %6275 = vst.msk [vmem:[%s10] sm:$0xff] %vm4488, %v6238
  %s6276 = scalar_lea.vmem %s10, 8
  %6277 = vst.msk [vmem:[%s6276] sm:$0xff] %vm4488, %v6268
  %6279 = vrot.lane.b32.xlu0 %v6232, 64
  %v6280 = vpop.permute.xlu0 %6279
  %6282 = vst.msk [vmem:[%s11] sm:$0xff] %vm4488, %v6280
  %6284 = vrot.lane.b32.xlu0 %v6262, 64
  %v6285 = vpop.permute.xlu0 %6284
  %s6287 = scalar_lea.vmem %s11, 8
  %6288 = vst.msk [vmem:[%s6287] sm:$0xff] %vm4488, %v6285
  // Predicated region
  $region38: #{encoder_forward.1} parent=0 // pred_check
    _
  $region39: #{encoder_forward.1} parent=0 // pred_check_branch
    %6290 = sbr.rel (0) target = $region41
  $region40: #{encoder_forward.1} parent=0 // pred_region
    _
  $region41: #{encoder_forward.1} parent=0 // pred_fallthru
    _
  // Predicated region
  $region42: #{encoder_forward.1} parent=0 // pred_check
    _
  $region43: #{encoder_forward.1} parent=0 // pred_check_branch
    %6292 = sbr.rel (0) target = $region45
  $region44: #{encoder_forward.1} parent=0 // pred_region
    _
  $region45: #{encoder_forward.1} parent=0 // pred_fallthru
    _
  // Predicated region
  $region46: #{encoder_forward.1} parent=0 // pred_check
    _
  $region47: #{encoder_forward.1} parent=0 // pred_check_branch
    %6294 = sbr.rel (0) target = $region49
  $region48: #{encoder_forward.1} parent=0 // pred_region
    _
  $region49: #{encoder_forward.1} parent=0 // pred_fallthru
    _
  // Predicated region
  $region50: #{encoder_forward.1} parent=0 // pred_check
    _
  $region51: #{encoder_forward.1} parent=0 // pred_check_branch
    %6296 = sbr.rel (0) target = $region53
  $region52: #{encoder_forward.1} parent=0 // pred_region
    _
  $region53: #{encoder_forward.1} parent=0 // pred_fallthru
    _
  // Predicated region
  $region54: #{encoder_forward.1} parent=0 // pred_check
    _
  $region55: #{encoder_forward.1} parent=0 // pred_check_branch
    %6298 = sbr.rel (0) target = $region57
  $region56: #{encoder_forward.1} parent=0 // pred_region
    _
  $region57: #{encoder_forward.1} parent=0 // pred_fallthru
    _
  // Predicated region
  $region58: #{encoder_forward.1} parent=0 // pred_check
    _
  $region59: #{encoder_forward.1} parent=0 // pred_check_branch
    %6300 = sbr.rel (0) target = $region61
  $region60: #{encoder_forward.1} parent=0 // pred_region
    _
  $region61: #{encoder_forward.1} parent=0 // pred_fallthru
    _

</llo_original>
